<compile_context>
chip_gen: v6e
topology: v6e:2x2x1
jax: 0.10.0
libtpu: 0.0.40
codegen_flags: <defaults>
</compile_context>

<pallas_src>
import functools
import math

import numpy as np
import jax
import jax.numpy as jnp
from jax import lax
from jax.experimental import pallas as pl
from jax.experimental.pallas import tpu as pltpu

F32 = jnp.float32
BF16 = jnp.bfloat16


# ----------------------------- helpers --------------------------------------

def _row_tile(n):
    """Largest row tile (multiple of 8, <=1024) that divides n."""
    for c in (1024, 512, 256, 128, 64, 32, 16, 8):
        if n % c == 0:
            return c
    return n


def _cparams():
    return pltpu.CompilerParams(
        dimension_semantics=("parallel",),
        vmem_limit_bytes=64 * 1024 * 1024,
    )


def _n_shift_bits(T):
    return (T - 1).bit_length()


def _padded_rel_len(T):
    return T + (1 << _n_shift_bits(T)) - 1


# ----------------------------- Pallas kernels -------------------------------

def _qkv_kernel(x_ref, s_ref, b_ref, wq_ref, wk_ref, wv_ref,
                bq_ref, bk_ref, bv_ref, q_ref, k_ref, v_ref):
    # fused: (x*scale + bias) read once, three MXU matmuls in bf16.
    xs = (x_ref[...] * s_ref[...] + b_ref[...]).astype(BF16)
    q_ref[...] = jnp.dot(xs, wq_ref[...], preferred_element_type=F32) + bq_ref[...]
    k_ref[...] = jnp.dot(xs, wk_ref[...], preferred_element_type=F32) + bk_ref[...]
    v_ref[...] = jnp.dot(xs, wv_ref[...], preferred_element_type=F32) + bv_ref[...]


def _posproj_kernel(pe_ref, wp_ref, o_ref):
    o_ref[...] = jnp.dot(pe_ref[...].astype(BF16), wp_ref[...],
                         preferred_element_type=F32)


def _rel_shift_inkernel(pos, T, n_bits):
    """Transformer-XL relative shift done fully in VMEM.

    shifted[i, j] = pos[i, j + (T-1-i)]  implemented as log2(T) rounds of a
    conditional static left-shift (static slices + iota + where only).
    pos has width T + 2**n_bits - 1.
    """
    cur = pos
    for b in range(n_bits):
        step = 1 << b
        width = cur.shape[1] - step
        row = lax.broadcasted_iota(jnp.int32, (T, width), 0)
        bit = jnp.bitwise_and(jnp.right_shift(T - 1 - row, b), 1)
        cur = jnp.where(bit == 1, cur[:, step:step + width], cur[:, :width])
    return cur[:, :T]


def _attn_kernel(mr_ref, mc_ref, xr_ref, q_ref, k_ref, v_ref, pe_ref,
                 u_ref, vb_ref, wo_ref, bo_ref, o_ref, *, H, Dh, T, n_bits):
    # One batch per grid step; heads are sliced in-kernel along D (no XLA
    # transposes), scores stay in VMEM, output is a lane-dense (1, T, D) block
    # that already contains the out-projection, its bias and the residual.
    # TODO(synk): for very long T the query axis should additionally be tiled.
    scale = 1.0 / math.sqrt(Dh)
    mrow = mr_ref[0]                      # (1, T) valid-key mask
    mcol = mc_ref[0]                      # (T, 1) valid-query mask
    keep = (mcol * mrow) > 0.5            # (T, T) built in-kernel
    q = q_ref[0]                          # (T, D) f32
    k = k_ref[0].astype(BF16)
    v = v_ref[0].astype(BF16)
    pe = pe_ref[...].astype(BF16)         # (Lpad, D)
    u = u_ref[...]                        # (H, Dh)
    vb = vb_ref[...]
    wo = wo_ref[...]                      # (D, D) bf16
    acc = xr_ref[0] + bo_ref[...]         # residual + out-proj bias
    dims = (((1,), (1,)), ((), ()))       # A @ B^T
    for h in range(H):
        lo = h * Dh
        qh = q[:, lo:lo + Dh]
        kh = k[:, lo:lo + Dh]
        vh = v[:, lo:lo + Dh]
        peh = pe[:, lo:lo + Dh]
        qu = (qh + u[h:h + 1, :]).astype(BF16)
        qv = (qh + vb[h:h + 1, :]).astype(BF16)
        content = lax.dot_general(qu, kh, dims, preferred_element_type=F32)
        pos = lax.dot_general(qv, peh, dims, preferred_element_type=F32)
        pos = _rel_shift_inkernel(pos, T, n_bits)
        score = (content + pos) * scale
        score = jnp.where(keep, score, -1e9)          # same -1e9 as reference
        score = score - jnp.max(score, axis=-1, keepdims=True)
        p = jnp.exp(score)
        p = p * pl.reciprocal(jnp.sum(p, axis=-1, keepdims=True), approx=True)
        ctx = jnp.dot(p.astype(BF16), vh, preferred_element_type=F32)
        # out projection decomposed per head: ctx @ Wo[h*Dh:(h+1)*Dh, :]
        acc = acc + jnp.dot(ctx.astype(BF16), wo[lo:lo + Dh, :],
                            preferred_element_type=F32)
    o_ref[...] = acc[None]


def _ln_ffn_kernel(x_ref, m_ref, g1_ref, b1_ref, s_ref, sb_ref,
                   w1_ref, wb1_ref, w2_ref, wb2_ref, g2_ref, b2_ref, o_ref):
    # fused: LN -> (scale/bias) -> FFN(Swish) -> +residual -> LN -> masked
    # write-back (equivalent to the reference's x_skip[mask] gather/scatter).
    x = x_ref[...]
    mu = jnp.mean(x, axis=-1, keepdims=True)
    var = jnp.mean((x - mu) ** 2, axis=-1, keepdims=True)
    ln1 = (x - mu) * lax.rsqrt(var + 1e-5) * g1_ref[...] + b1_ref[...]
    h = (ln1 * s_ref[...] + sb_ref[...]).astype(BF16)
    h = jnp.dot(h, w1_ref[...], preferred_element_type=F32) + wb1_ref[...]
    h = h * jax.nn.sigmoid(h)                                   # Swish
    y = jnp.dot(h.astype(BF16), w2_ref[...],
                preferred_element_type=F32) + wb2_ref[...]
    y = ln1 + y
    mu2 = jnp.mean(y, axis=-1, keepdims=True)
    var2 = jnp.mean((y - mu2) ** 2, axis=-1, keepdims=True)
    y = (y - mu2) * lax.rsqrt(var2 + 1e-5) * g2_ref[...] + b2_ref[...]
    o_ref[...] = jnp.where(m_ref[...] > 0.5, y, x)


def _conv_front_kernel(mc_ref, x_ref, s_ref, sb_ref, wa_ref, ba_ref,
                       wg_ref, bg_ref, dww_ref, o_ref, sum_ref, sq_ref,
                       hpad_ref, *, T, K, PA):
    # fused: scale/bias + mask + pw1 + GLU + mask + depthwise conv (+ masked
    # BN partial sums).  Depthwise 'SAME' zero padding lives in a VMEM scratch.
    vcol = mc_ref[0]                                            # (T, 1)
    xs = (x_ref[0] * s_ref[...] + sb_ref[...]) * vcol
    xb = xs.astype(BF16)
    a = jnp.dot(xb, wa_ref[...], preferred_element_type=F32) + ba_ref[...]
    g = jnp.dot(xb, wg_ref[...], preferred_element_type=F32) + bg_ref[...]
    h = a * jax.nn.sigmoid(g) * vcol                            # GLU + mask
    hpad_ref[...] = jnp.zeros_like(hpad_ref)
    hpad_ref[PA:PA + T, :] = h                                  # aligned store
    pad = (K - 1) // 2
    acc = jnp.zeros_like(h)
    for kk in range(K):                                         # static taps
        off = PA - pad + kk
        acc = acc + hpad_ref[off:off + T, :] * dww_ref[kk:kk + 1, :]
    o_ref[...] = acc[None]
    accm = acc * vcol                                           # valid rows
    sum_ref[...] = jnp.sum(accm, axis=0, keepdims=True)[None]
    sq_ref[...] = jnp.sum(accm * acc, axis=0, keepdims=True)[None]


def _conv_back_kernel(x0_ref, dw_ref, m_ref, mu_ref, var_ref, g_ref, b_ref,
                      w2_ref, b2_ref, o_ref):
    # fused: BN (rsqrt in-kernel) + Swish + pw2 + mask + residual add.
    inv = lax.rsqrt(var_ref[...] + 1e-5)
    xn = (dw_ref[...] - mu_ref[...]) * inv * g_ref[...] + b_ref[...]
    h = xn * jax.nn.sigmoid(xn)                                 # Swish
    y = jnp.dot(h.astype(BF16), w2_ref[...],
                preferred_element_type=F32) + b2_ref[...]
    o_ref[...] = x0_ref[...] + y * m_ref[...]


# ----------------------------- kernel wrappers ------------------------------

def qkv_proj(x2, scale, bias, wq, wk, wv, bq, bk, bv):
    BT, D = x2.shape
    TR = _row_tile(BT)
    row = pl.BlockSpec((TR, D), lambda i: (i, 0))
    cD = lambda: pl.BlockSpec((1, D), lambda i: (0, 0))
    cW = lambda: pl.BlockSpec((D, D), lambda i: (0, 0))
    return pl.pallas_call(
        _qkv_kernel,
        grid=(BT // TR,),
        in_specs=[row, cD(), cD(), cW(), cW(), cW(), cD(), cD(), cD()],
        out_specs=[row, row, row],
        out_shape=[jax.ShapeDtypeStruct((BT, D), F32)] * 3,
        compiler_params=_cparams(),
    )(x2, scale, bias, wq, wk, wv, bq, bk, bv)


def pos_proj(pe_pad, wp):
    L, D = pe_pad.shape
    return pl.pallas_call(
        _posproj_kernel,
        out_shape=jax.ShapeDtypeStruct((L, D), F32),
    )(pe_pad, wp)


def attention(mask_row, mask_col, x_res, q, k, v, pe_proj, u, vb, wo, bo, H):
    B, T, D = x_res.shape
    Dh = D // H
    L = pe_proj.shape[0]
    n_bits = _n_shift_bits(T)
    assert L == T + (1 << n_bits) - 1
    b_td = pl.BlockSpec((1, T, D), lambda b: (b, 0, 0))
    return pl.pallas_call(
        functools.partial(_attn_kernel, H=H, Dh=Dh, T=T, n_bits=n_bits),
        grid=(B,),
        in_specs=[pl.BlockSpec((1, 1, T), lambda b: (b, 0, 0)),
                  pl.BlockSpec((1, T, 1), lambda b: (b, 0, 0)),
                  b_td, b_td, b_td, b_td,
                  pl.BlockSpec((L, D), lambda b: (0, 0)),
                  pl.BlockSpec((H, Dh), lambda b: (0, 0)),
                  pl.BlockSpec((H, Dh), lambda b: (0, 0)),
                  pl.BlockSpec((D, D), lambda b: (0, 0)),
                  pl.BlockSpec((1, D), lambda b: (0, 0))],
        out_specs=b_td,
        out_shape=jax.ShapeDtypeStruct((B, T, D), F32),
        compiler_params=_cparams(),
    )(mask_row, mask_col, x_res, q, k, v, pe_proj, u, vb, wo, bo)


def ln_ffn(x2, mask_flat, g1, b1, s, sb, w1, wb1, w2, wb2, g2, b2):
    BT, D = x2.shape
    FF = w1.shape[1]
    TR = _row_tile(BT)
    row = pl.BlockSpec((TR, D), lambda i: (i, 0))
    mrow = pl.BlockSpec((TR, 1), lambda i: (i, 0))
    cD = lambda: pl.BlockSpec((1, D), lambda i: (0, 0))
    return pl.pallas_call(
        _ln_ffn_kernel,
        grid=(BT // TR,),
        in_specs=[row, mrow, cD(), cD(), cD(), cD(),
                  pl.BlockSpec((D, FF), lambda i: (0, 0)),
                  pl.BlockSpec((1, FF), lambda i: (0, 0)),
                  pl.BlockSpec((FF, D), lambda i: (0, 0)),
                  cD(), cD(), cD()],
        out_specs=row,
        out_shape=jax.ShapeDtypeStruct((BT, D), F32),
        compiler_params=_cparams(),
    )(x2, mask_flat, g1, b1, s, sb, w1, wb1, w2, wb2, g2, b2)


def conv_front(mask_col, x, scale, bias, wa, ba, wg, bg, dww, K):
    B, T, D = x.shape
    pad = (K - 1) // 2
    pad_align = ((pad + 7) // 8) * 8
    b_td = pl.BlockSpec((1, T, D), lambda b: (b, 0, 0))
    cD = lambda: pl.BlockSpec((1, D), lambda b: (0, 0))
    cW = lambda: pl.BlockSpec((D, D), lambda b: (0, 0))
    return pl.pallas_call(
        functools.partial(_conv_front_kernel, T=T, K=K, PA=pad_align),
        grid=(B,),
        in_specs=[pl.BlockSpec((1, T, 1), lambda b: (b, 0, 0)),
                  b_td, cD(), cD(), cW(), cD(), cW(), cD(),
                  pl.BlockSpec((K, D), lambda b: (0, 0))],
        out_specs=[b_td,
                   pl.BlockSpec((1, 1, D), lambda b: (b, 0, 0)),
                   pl.BlockSpec((1, 1, D), lambda b: (b, 0, 0))],
        out_shape=[jax.ShapeDtypeStruct((B, T, D), F32),
                   jax.ShapeDtypeStruct((B, 1, D), F32),
                   jax.ShapeDtypeStruct((B, 1, D), F32)],
        scratch_shapes=[pltpu.VMEM((T + 2 * pad_align, D), F32)],
        compiler_params=_cparams(),
    )(mask_col, x, scale, bias, wa, ba, wg, bg, dww)


def conv_back(x0, dw, mask_flat, mu, var, g, b, w2, b2):
    BT, D = x0.shape
    TR = _row_tile(BT)
    row = pl.BlockSpec((TR, D), lambda i: (i, 0))
    mrow = pl.BlockSpec((TR, 1), lambda i: (i, 0))
    cD = lambda: pl.BlockSpec((1, D), lambda i: (0, 0))
    return pl.pallas_call(
        _conv_back_kernel,
        grid=(BT // TR,),
        in_specs=[row, row, mrow, cD(), cD(), cD(), cD(),
                  pl.BlockSpec((D, D), lambda i: (0, 0)), cD()],
        out_specs=row,
        out_shape=jax.ShapeDtypeStruct((BT, D), F32),
        compiler_params=_cparams(),
    )(x0, dw, mask_flat, mu, var, g, b, w2, b2)


# ----------------------------- JAX glue -------------------------------------

def rel_positional_encoding(T, D):
    """Matches RelPositionalEncoding for length T: returns (2T-1, D)."""
    pos = np.arange(T, dtype=np.float32)[:, None]
    div = np.exp(np.arange(0, D, 2, dtype=np.float32) * -(math.log(10000.0) / D))
    pe_pos = np.zeros((T, D), np.float32)
    pe_neg = np.zeros((T, D), np.float32)
    pe_pos[:, 0::2] = np.sin(pos * div)
    pe_pos[:, 1::2] = np.cos(pos * div)
    pe_neg[:, 0::2] = np.sin(-pos * div)
    pe_neg[:, 1::2] = np.cos(-pos * div)
    return np.concatenate([pe_pos[::-1], pe_neg[1:]], axis=0)


def padded_rel_pos_emb(T, D):
    """(2T-1, D) PE zero-padded to T + 2**ceil(log2(T)) - 1 rows (shift trick)."""
    L = _padded_rel_len(T)
    pe = rel_positional_encoding(T, D)
    out = np.zeros((L, D), np.float32)
    out[:2 * T - 1] = pe
    return jnp.asarray(out)


def block_forward(x, mask, params, pe_pad, *, H, K):
    B, T, D = x.shape
    BT = B * T
    mask_f = mask.astype(F32)
    mask_flat = mask_f.reshape(BT, 1)
    mask_row = mask_f.reshape(B, 1, T)
    mask_col = mask_f.reshape(B, T, 1)
    bf = lambda w: w.astype(BF16)

    # ------- MHSA (scale/bias fused into QKV; residual/out-proj in attn) -----
    q, k, v = qkv_proj(x.reshape(BT, D), params['scale_mhsa'], params['bias_mhsa'],
                       bf(params['Wq']), bf(params['Wk']), bf(params['Wv']),
                       params['bq'], params['bk'], params['bv'])
    pe_proj = pos_proj(pe_pad, bf(params['Wp']))
    x = attention(mask_row, mask_col, x,
                  q.reshape(B, T, D), k.reshape(B, T, D), v.reshape(B, T, D),
                  pe_proj, params['u_bias'], params['v_bias'],
                  bf(params['Wo']), params['bo'], H)

    # ------- LN + FF + LN + masked write-back (post-MHSA) --------------------
    x2 = ln_ffn(x.reshape(BT, D), mask_flat,
                params['ln_mhsa_g'], params['ln_mhsa_b'],
                params['scale_ff_mhsa'], params['bias_ff_mhsa'],
                bf(params['ff_mhsa_W1']), params['ff_mhsa_b1'],
                bf(params['ff_mhsa_W2']), params['ff_mhsa_b2'],
                params['ln_ff_mhsa_g'], params['ln_ff_mhsa_b'])
    x = x2.reshape(B, T, D)

    # ------- Conv module ------------------------------------------------------
    dw, s_b, sq_b = conv_front(mask_col, x,
                               params['scale_conv'], params['bias_conv'],
                               bf(params['Wa']), params['ba'],
                               bf(params['Wg']), params['bg'],
                               params['dw_w'], K)
    cnt = jnp.maximum(jnp.sum(mask_f), 1.0)
    mean = jnp.sum(s_b, axis=0) / cnt                       # (1, D)
    var = jnp.maximum(jnp.sum(sq_b, axis=0) / cnt - mean * mean, 0.0)
    x2 = conv_back(x.reshape(BT, D), dw.reshape(BT, D), mask_flat,
                   mean, var, params['bn_g'], params['bn_b'],
                   bf(params['Wp2']), params['bp2'])

    # ------- LN + FF + LN + masked write-back (post-conv) --------------------
    x2 = ln_ffn(x2, mask_flat,
                params['ln_conv_g'], params['ln_conv_b'],
                params['scale_ff_conv'], params['bias_ff_conv'],
                bf(params['ff_conv_W1']), params['ff_conv_b1'],
                bf(params['ff_conv_W2']), params['ff_conv_b2'],
                params['ln_ff_conv_g'], params['ln_ff_conv_b'])
    return x2.reshape(B, T, D)


# ----------------------------- parameters -----------------------------------

def init_params(key, D, H, FF, K):
    keys = iter(jax.random.split(key, 64))
    nrm = lambda shape, s=0.05: (s * jax.random.normal(next(keys), shape)).astype(F32)
    p = {}
    for name in ('mhsa', 'ff_mhsa', 'conv', 'ff_conv'):
        p[f'scale_{name}'] = 1.0 + nrm((1, D), 0.1)
        p[f'bias_{name}'] = nrm((1, D), 0.1)
    for n in ('q', 'k', 'v', 'o'):
        p[f'W{n}'] = nrm((D, D))
        p[f'b{n}'] = nrm((1, D))
    p['Wp'] = nrm((D, D))
    p['u_bias'] = nrm((H, D // H))
    p['v_bias'] = nrm((H, D // H))
    for n in ('ln_mhsa', 'ln_ff_mhsa', 'ln_conv', 'ln_ff_conv'):
        p[f'{n}_g'] = 1.0 + nrm((1, D), 0.1)
        p[f'{n}_b'] = nrm((1, D), 0.1)
    for n in ('ff_mhsa', 'ff_conv'):
        p[f'{n}_W1'] = nrm((D, FF))
        p[f'{n}_b1'] = nrm((1, FF))
        p[f'{n}_W2'] = nrm((FF, D))
        p[f'{n}_b2'] = nrm((1, D))
    p['Wa'] = nrm((D, D)); p['ba'] = nrm((1, D))
    p['Wg'] = nrm((D, D)); p['bg'] = nrm((1, D))
    p['dw_w'] = nrm((K, D))
    p['bn_g'] = 1.0 + nrm((1, D), 0.1)
    p['bn_b'] = nrm((1, D), 0.1)
    p['Wp2'] = nrm((D, D)); p['bp2'] = nrm((1, D))
    return p


# ----------------------------- main ------------------------------------------

if __name__ == "__main__":
    B, T, D, H, K = 2, 16, 64, 4, 7
    FF = 4 * D

    key = jax.random.PRNGKey(0)
    k_params, k_x = jax.random.split(key)
    params = init_params(k_params, D, H, FF, K)

    x = jax.random.normal(k_x, (B, T, D), dtype=jnp.float32)
    mask = jnp.ones((B, T), dtype=jnp.int32).at[1, 12:].set(0)   # batch 1 padded
    pe_pad = padded_rel_pos_emb(T, D)

    fwd = jax.jit(functools.partial(block_forward, H=H, K=K))
    out = fwd(x, mask, params, pe_pad)
    out = jax.block_until_ready(out)
    assert out.shape == (B, T, D)
    assert bool(jnp.all(jnp.isfinite(out)))
    print("KERNEL_OK")
</pallas_src>

<mosaic_0001>
module attributes {stable_mosaic.version = 11 : i64} {
  func.func @_qkv_kernel(%arg0: i32, %arg1: memref<32x64xf32, #tpu.memory_space<vmem>>, %arg2: memref<1x64xf32, #tpu.memory_space<vmem>>, %arg3: memref<1x64xf32, #tpu.memory_space<vmem>>, %arg4: memref<64x64xbf16, #tpu.memory_space<vmem>>, %arg5: memref<64x64xbf16, #tpu.memory_space<vmem>>, %arg6: memref<64x64xbf16, #tpu.memory_space<vmem>>, %arg7: memref<1x64xf32, #tpu.memory_space<vmem>>, %arg8: memref<1x64xf32, #tpu.memory_space<vmem>>, %arg9: memref<1x64xf32, #tpu.memory_space<vmem>>, %arg10: memref<32x64xf32, #tpu.memory_space<vmem>>, %arg11: memref<32x64xf32, #tpu.memory_space<vmem>>, %arg12: memref<32x64xf32, #tpu.memory_space<vmem>>) attributes {dimension_semantics = [#tpu.dimension_semantics<parallel>], iteration_bounds = array<i64: 1>, scalar_prefetch = 0 : i64, scratch_operands = 0 : i64, tpu.core_type = #tpu.core_type<tc>, window_params = [{transform_indices = @transform_0, window_bounds = array<i64: 32, 64>}, {pipeline_mode = #tpu.pipeline_mode<synchronous>, transform_indices = @transform_1, window_bounds = array<i64: 1, 64>}, {pipeline_mode = #tpu.pipeline_mode<synchronous>, transform_indices = @transform_2, window_bounds = array<i64: 1, 64>}, {pipeline_mode = #tpu.pipeline_mode<synchronous>, transform_indices = @transform_3, window_bounds = array<i64: 64, 64>}, {pipeline_mode = #tpu.pipeline_mode<synchronous>, transform_indices = @transform_4, window_bounds = array<i64: 64, 64>}, {pipeline_mode = #tpu.pipeline_mode<synchronous>, transform_indices = @transform_5, window_bounds = array<i64: 64, 64>}, {pipeline_mode = #tpu.pipeline_mode<synchronous>, transform_indices = @transform_6, window_bounds = array<i64: 1, 64>}, {pipeline_mode = #tpu.pipeline_mode<synchronous>, transform_indices = @transform_7, window_bounds = array<i64: 1, 64>}, {pipeline_mode = #tpu.pipeline_mode<synchronous>, transform_indices = @transform_8, window_bounds = array<i64: 1, 64>}, {transform_indices = @transform_9, window_bounds = array<i64: 32, 64>}, {transform_indices = @transform_10, window_bounds = array<i64: 32, 64>}, {transform_indices = @transform_11, window_bounds = array<i64: 32, 64>}]} {
    %c0 = arith.constant 0 : index
    %c0_0 = arith.constant 0 : index
    %0 = vector.load %arg1[%c0, %c0_0] : memref<32x64xf32, #tpu.memory_space<vmem>>, vector<32x64xf32>
    %c0_1 = arith.constant 0 : index
    %c0_2 = arith.constant 0 : index
    %1 = vector.load %arg2[%c0_1, %c0_2] : memref<1x64xf32, #tpu.memory_space<vmem>>, vector<1x64xf32>
    %2 = vector.broadcast %1 : vector<1x64xf32> to vector<32x64xf32>
    %3 = arith.mulf %0, %2 : vector<32x64xf32>
    %c0_3 = arith.constant 0 : index
    %c0_4 = arith.constant 0 : index
    %4 = vector.load %arg3[%c0_3, %c0_4] : memref<1x64xf32, #tpu.memory_space<vmem>>, vector<1x64xf32>
    %5 = vector.broadcast %4 : vector<1x64xf32> to vector<32x64xf32>
    %6 = arith.addf %3, %5 : vector<32x64xf32>
    %7 = arith.truncf %6 : vector<32x64xf32> to vector<32x64xbf16>
    %c0_5 = arith.constant 0 : index
    %c0_6 = arith.constant 0 : index
    %8 = vector.load %arg4[%c0_5, %c0_6] : memref<64x64xbf16, #tpu.memory_space<vmem>>, vector<64x64xbf16>
    %cst = arith.constant dense<0.000000e+00> : vector<32x64xf32>
    %9 = tpu.matmul %7, %8, %cst {dimension_numbers = #tpu.dot_dimension_numbers<[1], [0], [0], [1], [0, 0, 1, 1], [], []>} : vector<32x64xbf16>, vector<64x64xbf16>, vector<32x64xf32> -> vector<32x64xf32>
    %c0_7 = arith.constant 0 : index
    %c0_8 = arith.constant 0 : index
    %10 = vector.load %arg7[%c0_7, %c0_8] : memref<1x64xf32, #tpu.memory_space<vmem>>, vector<1x64xf32>
    %11 = vector.broadcast %10 : vector<1x64xf32> to vector<32x64xf32>
    %12 = arith.addf %9, %11 : vector<32x64xf32>
    %c0_9 = arith.constant 0 : index
    %c0_10 = arith.constant 0 : index
    %13 = vector.load %arg10[%c0_9, %c0_10] : memref<32x64xf32, #tpu.memory_space<vmem>>, vector<32x64xf32>
    tpu.vector_store %arg10[%c0_9, %c0_10], %12 {strides = array<i32>} : memref<32x64xf32, #tpu.memory_space<vmem>>, vector<32x64xf32>,
    %c0_11 = arith.constant 0 : index
    %c0_12 = arith.constant 0 : index
    %14 = vector.load %arg5[%c0_11, %c0_12] : memref<64x64xbf16, #tpu.memory_space<vmem>>, vector<64x64xbf16>
    %cst_13 = arith.constant dense<0.000000e+00> : vector<32x64xf32>
    %15 = tpu.matmul %7, %14, %cst_13 {dimension_numbers = #tpu.dot_dimension_numbers<[1], [0], [0], [1], [0, 0, 1, 1], [], []>} : vector<32x64xbf16>, vector<64x64xbf16>, vector<32x64xf32> -> vector<32x64xf32>
    %c0_14 = arith.constant 0 : index
    %c0_15 = arith.constant 0 : index
    %16 = vector.load %arg8[%c0_14, %c0_15] : memref<1x64xf32, #tpu.memory_space<vmem>>, vector<1x64xf32>
    %17 = vector.broadcast %16 : vector<1x64xf32> to vector<32x64xf32>
    %18 = arith.addf %15, %17 : vector<32x64xf32>
    %c0_16 = arith.constant 0 : index
    %c0_17 = arith.constant 0 : index
    %19 = vector.load %arg11[%c0_16, %c0_17] : memref<32x64xf32, #tpu.memory_space<vmem>>, vector<32x64xf32>
    tpu.vector_store %arg11[%c0_16, %c0_17], %18 {strides = array<i32>} : memref<32x64xf32, #tpu.memory_space<vmem>>, vector<32x64xf32>,
    %c0_18 = arith.constant 0 : index
    %c0_19 = arith.constant 0 : index
    %20 = vector.load %arg6[%c0_18, %c0_19] : memref<64x64xbf16, #tpu.memory_space<vmem>>, vector<64x64xbf16>
    %cst_20 = arith.constant dense<0.000000e+00> : vector<32x64xf32>
    %21 = tpu.matmul %7, %20, %cst_20 {dimension_numbers = #tpu.dot_dimension_numbers<[1], [0], [0], [1], [0, 0, 1, 1], [], []>} : vector<32x64xbf16>, vector<64x64xbf16>, vector<32x64xf32> -> vector<32x64xf32>
    %c0_21 = arith.constant 0 : index
    %c0_22 = arith.constant 0 : index
    %22 = vector.load %arg9[%c0_21, %c0_22] : memref<1x64xf32, #tpu.memory_space<vmem>>, vector<1x64xf32>
    %23 = vector.broadcast %22 : vector<1x64xf32> to vector<32x64xf32>
    %24 = arith.addf %21, %23 : vector<32x64xf32>
    %c0_23 = arith.constant 0 : index
    %c0_24 = arith.constant 0 : index
    %25 = vector.load %arg12[%c0_23, %c0_24] : memref<32x64xf32, #tpu.memory_space<vmem>>, vector<32x64xf32>
    tpu.vector_store %arg12[%c0_23, %c0_24], %24 {strides = array<i32>} : memref<32x64xf32, #tpu.memory_space<vmem>>, vector<32x64xf32>,
    return
  }
  func.func @transform_0(%arg0: i32) -> (i32, i32) {
    %c0_i32 = arith.constant 0 : i32
    %c0_i32_0 = arith.constant 0 : i32
    return %arg0, %c0_i32 : i32, i32
  }
  func.func @transform_1(%arg0: i32) -> (i32, i32) {
    %c0_i32 = arith.constant 0 : i32
    %c0_i32_0 = arith.constant 0 : i32
    %c0_i32_1 = arith.constant 0 : i32
    return %c0_i32, %c0_i32_0 : i32, i32
  }
  func.func @transform_2(%arg0: i32) -> (i32, i32) {
    %c0_i32 = arith.constant 0 : i32
    %c0_i32_0 = arith.constant 0 : i32
    %c0_i32_1 = arith.constant 0 : i32
    return %c0_i32, %c0_i32_0 : i32, i32
  }
  func.func @transform_3(%arg0: i32) -> (i32, i32) {
    %c0_i32 = arith.constant 0 : i32
    %c0_i32_0 = arith.constant 0 : i32
    %c0_i32_1 = arith.constant 0 : i32
    return %c0_i32, %c0_i32_0 : i32, i32
  }
  func.func @transform_4(%arg0: i32) -> (i32, i32) {
    %c0_i32 = arith.constant 0 : i32
    %c0_i32_0 = arith.constant 0 : i32
    %c0_i32_1 = arith.constant 0 : i32
    return %c0_i32, %c0_i32_0 : i32, i32
  }
  func.func @transform_5(%arg0: i32) -> (i32, i32) {
    %c0_i32 = arith.constant 0 : i32
    %c0_i32_0 = arith.constant 0 : i32
    %c0_i32_1 = arith.constant 0 : i32
    return %c0_i32, %c0_i32_0 : i32, i32
  }
  func.func @transform_6(%arg0: i32) -> (i32, i32) {
    %c0_i32 = arith.constant 0 : i32
    %c0_i32_0 = arith.constant 0 : i32
    %c0_i32_1 = arith.constant 0 : i32
    return %c0_i32, %c0_i32_0 : i32, i32
  }
  func.func @transform_7(%arg0: i32) -> (i32, i32) {
    %c0_i32 = arith.constant 0 : i32
    %c0_i32_0 = arith.constant 0 : i32
    %c0_i32_1 = arith.constant 0 : i32
    return %c0_i32, %c0_i32_0 : i32, i32
  }
  func.func @transform_8(%arg0: i32) -> (i32, i32) {
    %c0_i32 = arith.constant 0 : i32
    %c0_i32_0 = arith.constant 0 : i32
    %c0_i32_1 = arith.constant 0 : i32
    return %c0_i32, %c0_i32_0 : i32, i32
  }
  func.func @transform_9(%arg0: i32) -> (i32, i32) {
    %c0_i32 = arith.constant 0 : i32
    %c0_i32_0 = arith.constant 0 : i32
    return %arg0, %c0_i32 : i32, i32
  }
  func.func @transform_10(%arg0: i32) -> (i32, i32) {
    %c0_i32 = arith.constant 0 : i32
    %c0_i32_0 = arith.constant 0 : i32
    return %arg0, %c0_i32 : i32, i32
  }
  func.func @transform_11(%arg0: i32) -> (i32, i32) {
    %c0_i32 = arith.constant 0 : i32
    %c0_i32_0 = arith.constant 0 : i32
    return %arg0, %c0_i32 : i32, i32
  }
}

module attributes {stable_mosaic.version = 11 : i64} {
  func.func @_posproj_kernel(%arg0: memref<31x64xf32, #tpu.memory_space<vmem>>, %arg1: memref<64x64xbf16, #tpu.memory_space<vmem>>, %arg2: memref<31x64xf32, #tpu.memory_space<vmem>>) attributes {dimension_semantics = [], scalar_prefetch = 0 : i64, scratch_operands = 0 : i64, tpu.core_type = #tpu.core_type<tc>} {
    %c0 = arith.constant 0 : index
    %c0_0 = arith.constant 0 : index
    %0 = vector.load %arg0[%c0, %c0_0] : memref<31x64xf32, #tpu.memory_space<vmem>>, vector<31x64xf32>
    %1 = arith.truncf %0 : vector<31x64xf32> to vector<31x64xbf16>
    %c0_1 = arith.constant 0 : index
    %c0_2 = arith.constant 0 : index
    %2 = vector.load %arg1[%c0_1, %c0_2] : memref<64x64xbf16, #tpu.memory_space<vmem>>, vector<64x64xbf16>
    %cst = arith.constant dense<0.000000e+00> : vector<31x64xf32>
    %3 = tpu.matmul %1, %2, %cst {dimension_numbers = #tpu.dot_dimension_numbers<[1], [0], [0], [1], [0, 0, 1, 1], [], []>} : vector<31x64xbf16>, vector<64x64xbf16>, vector<31x64xf32> -> vector<31x64xf32>
    %c0_3 = arith.constant 0 : index
    %c0_4 = arith.constant 0 : index
    %4 = vector.load %arg2[%c0_3, %c0_4] : memref<31x64xf32, #tpu.memory_space<vmem>>, vector<31x64xf32>
    tpu.vector_store %arg2[%c0_3, %c0_4], %3 {strides = array<i32>} : memref<31x64xf32, #tpu.memory_space<vmem>>, vector<31x64xf32>,
    return
  }
}

module attributes {stable_mosaic.version = 11 : i64} {
  func.func @_attn_kernel(%arg0: i32, %arg1: memref<1x1x16xf32, #tpu.memory_space<vmem>>, %arg2: memref<1x16x1xf32, #tpu.memory_space<vmem>>, %arg3: memref<1x16x64xf32, #tpu.memory_space<vmem>>, %arg4: memref<1x16x64xf32, #tpu.memory_space<vmem>>, %arg5: memref<1x16x64xf32, #tpu.memory_space<vmem>>, %arg6: memref<1x16x64xf32, #tpu.memory_space<vmem>>, %arg7: memref<31x64xf32, #tpu.memory_space<vmem>>, %arg8: memref<4x16xf32, #tpu.memory_space<vmem>>, %arg9: memref<4x16xf32, #tpu.memory_space<vmem>>, %arg10: memref<64x64xbf16, #tpu.memory_space<vmem>>, %arg11: memref<1x64xf32, #tpu.memory_space<vmem>>, %arg12: memref<1x16x64xf32, #tpu.memory_space<vmem>>) attributes {dimension_semantics = [#tpu.dimension_semantics<parallel>], iteration_bounds = array<i64: 2>, scalar_prefetch = 0 : i64, scratch_operands = 0 : i64, tpu.core_type = #tpu.core_type<tc>, window_params = [{transform_indices = @transform_0, window_bounds = array<i64: 1, 1, 16>}, {transform_indices = @transform_1, window_bounds = array<i64: 1, 16, 1>}, {transform_indices = @transform_2, window_bounds = array<i64: 1, 16, 64>}, {transform_indices = @transform_3, window_bounds = array<i64: 1, 16, 64>}, {transform_indices = @transform_4, window_bounds = array<i64: 1, 16, 64>}, {transform_indices = @transform_5, window_bounds = array<i64: 1, 16, 64>}, {pipeline_mode = #tpu.pipeline_mode<synchronous>, transform_indices = @transform_6, window_bounds = array<i64: 31, 64>}, {pipeline_mode = #tpu.pipeline_mode<synchronous>, transform_indices = @transform_7, window_bounds = array<i64: 4, 16>}, {pipeline_mode = #tpu.pipeline_mode<synchronous>, transform_indices = @transform_8, window_bounds = array<i64: 4, 16>}, {pipeline_mode = #tpu.pipeline_mode<synchronous>, transform_indices = @transform_9, window_bounds = array<i64: 64, 64>}, {pipeline_mode = #tpu.pipeline_mode<synchronous>, transform_indices = @transform_10, window_bounds = array<i64: 1, 64>}, {transform_indices = @transform_11, window_bounds = array<i64: 1, 16, 64>}]} {
    %c0 = arith.constant 0 : index
    %c0_0 = arith.constant 0 : index
    %c0_1 = arith.constant 0 : index
    %0 = vector.load %arg1[%c0, %c0_0, %c0_1] : memref<1x1x16xf32, #tpu.memory_space<vmem>>, vector<1x1x16xf32>
    %1 = vector.shape_cast %0 : vector<1x1x16xf32> to vector<1x16xf32>
    %c0_2 = arith.constant 0 : index
    %c0_3 = arith.constant 0 : index
    %c0_4 = arith.constant 0 : index
    %2 = vector.load %arg2[%c0_2, %c0_3, %c0_4] : memref<1x16x1xf32, #tpu.memory_space<vmem>>, vector<1x16x1xf32>
    %3 = vector.shape_cast %2 : vector<1x16x1xf32> to vector<16x1xf32>
    %4 = vector.broadcast %3 : vector<16x1xf32> to vector<16x16xf32>
    %5 = vector.broadcast %1 : vector<1x16xf32> to vector<16x16xf32>
    %6 = arith.mulf %4, %5 : vector<16x16xf32>
    %cst = arith.constant 5.000000e-01 : f32
    %7 = vector.broadcast %cst : f32 to vector<16x16xf32>
    %8 = arith.cmpf ogt, %6, %7 : vector<16x16xf32>
    %c0_5 = arith.constant 0 : index
    %c0_6 = arith.constant 0 : index
    %c0_7 = arith.constant 0 : index
    %9 = vector.load %arg4[%c0_5, %c0_6, %c0_7] : memref<1x16x64xf32, #tpu.memory_space<vmem>>, vector<1x16x64xf32>
    %10 = vector.shape_cast %9 : vector<1x16x64xf32> to vector<16x64xf32>
    %c0_8 = arith.constant 0 : index
    %c0_9 = arith.constant 0 : index
    %c0_10 = arith.constant 0 : index
    %11 = vector.load %arg5[%c0_8, %c0_9, %c0_10] : memref<1x16x64xf32, #tpu.memory_space<vmem>>, vector<1x16x64xf32>
    %12 = vector.shape_cast %11 : vector<1x16x64xf32> to vector<16x64xf32>
    %13 = arith.truncf %12 : vector<16x64xf32> to vector<16x64xbf16>
    %c0_11 = arith.constant 0 : index
    %c0_12 = arith.constant 0 : index
    %c0_13 = arith.constant 0 : index
    %14 = vector.load %arg6[%c0_11, %c0_12, %c0_13] : memref<1x16x64xf32, #tpu.memory_space<vmem>>, vector<1x16x64xf32>
    %15 = vector.shape_cast %14 : vector<1x16x64xf32> to vector<16x64xf32>
    %16 = arith.truncf %15 : vector<16x64xf32> to vector<16x64xbf16>
    %c0_14 = arith.constant 0 : index
    %c0_15 = arith.constant 0 : index
    %17 = vector.load %arg7[%c0_14, %c0_15] : memref<31x64xf32, #tpu.memory_space<vmem>>, vector<31x64xf32>
    %18 = arith.truncf %17 : vector<31x64xf32> to vector<31x64xbf16>
    %c0_16 = arith.constant 0 : index
    %c0_17 = arith.constant 0 : index
    %19 = vector.load %arg8[%c0_16, %c0_17] : memref<4x16xf32, #tpu.memory_space<vmem>>, vector<4x16xf32>
    %c0_18 = arith.constant 0 : index
    %c0_19 = arith.constant 0 : index
    %20 = vector.load %arg9[%c0_18, %c0_19] : memref<4x16xf32, #tpu.memory_space<vmem>>, vector<4x16xf32>
    %c0_20 = arith.constant 0 : index
    %c0_21 = arith.constant 0 : index
    %21 = vector.load %arg10[%c0_20, %c0_21] : memref<64x64xbf16, #tpu.memory_space<vmem>>, vector<64x64xbf16>
    %c0_22 = arith.constant 0 : index
    %c0_23 = arith.constant 0 : index
    %c0_24 = arith.constant 0 : index
    %22 = vector.load %arg3[%c0_22, %c0_23, %c0_24] : memref<1x16x64xf32, #tpu.memory_space<vmem>>, vector<1x16x64xf32>
    %23 = vector.shape_cast %22 : vector<1x16x64xf32> to vector<16x64xf32>
    %c0_25 = arith.constant 0 : index
    %c0_26 = arith.constant 0 : index
    %24 = vector.load %arg11[%c0_25, %c0_26] : memref<1x64xf32, #tpu.memory_space<vmem>>, vector<1x64xf32>
    %25 = vector.broadcast %24 : vector<1x64xf32> to vector<16x64xf32>
    %26 = arith.addf %23, %25 : vector<16x64xf32>
    %27 = vector.extract_strided_slice %10 {offsets = [0, 0], sizes = [16, 16], strides = [1, 1]} : vector<16x64xf32> to vector<16x16xf32>
    %28 = vector.extract_strided_slice %13 {offsets = [0, 0], sizes = [16, 16], strides = [1, 1]} : vector<16x64xbf16> to vector<16x16xbf16>
    %29 = vector.extract_strided_slice %16 {offsets = [0, 0], sizes = [16, 16], strides = [1, 1]} : vector<16x64xbf16> to vector<16x16xbf16>
    %30 = vector.extract_strided_slice %18 {offsets = [0, 0], sizes = [31, 16], strides = [1, 1]} : vector<31x64xbf16> to vector<31x16xbf16>
    %31 = vector.extract_strided_slice %19 {offsets = [0, 0], sizes = [1, 16], strides = [1, 1]} : vector<4x16xf32> to vector<1x16xf32>
    %32 = vector.broadcast %31 : vector<1x16xf32> to vector<16x16xf32>
    %33 = arith.addf %27, %32 : vector<16x16xf32>
    %34 = arith.truncf %33 : vector<16x16xf32> to vector<16x16xbf16>
    %35 = vector.extract_strided_slice %20 {offsets = [0, 0], sizes = [1, 16], strides = [1, 1]} : vector<4x16xf32> to vector<1x16xf32>
    %36 = vector.broadcast %35 : vector<1x16xf32> to vector<16x16xf32>
    %37 = arith.addf %27, %36 : vector<16x16xf32>
    %38 = arith.truncf %37 : vector<16x16xf32> to vector<16x16xbf16>
    %cst_27 = arith.constant dense<0.000000e+00> : vector<16x16xf32>
    %39 = tpu.matmul %34, %28, %cst_27 {dimension_numbers = #tpu.dot_dimension_numbers<[1], [1], [0], [0], [0, 0, 1, 0], [], []>} : vector<16x16xbf16>, vector<16x16xbf16>, vector<16x16xf32> -> vector<16x16xf32>
    %cst_28 = arith.constant dense<0.000000e+00> : vector<16x31xf32>
    %40 = tpu.matmul %38, %30, %cst_28 {dimension_numbers = #tpu.dot_dimension_numbers<[1], [1], [0], [0], [0, 0, 1, 0], [], []>} : vector<16x16xbf16>, vector<31x16xbf16>, vector<16x31xf32> -> vector<16x31xf32>
    %41 = tpu.iota {dimensions = array<i32: 0>} : vector<16x30xi32>
    %c15_i32 = arith.constant 15 : i32
    %42 = vector.broadcast %c15_i32 : i32 to vector<16x30xi32>
    %43 = arith.subi %42, %41 : vector<16x30xi32>
    %c0_i32 = arith.constant 0 : i32
    %44 = vector.broadcast %c0_i32 : i32 to vector<16x30xi32>
    %45 = arith.shrsi %43, %44 : vector<16x30xi32>
    %c1_i32 = arith.constant 1 : i32
    %46 = vector.broadcast %c1_i32 : i32 to vector<16x30xi32>
    %47 = arith.andi %45, %46 : vector<16x30xi32>
    %c1_i32_29 = arith.constant 1 : i32
    %48 = vector.broadcast %c1_i32_29 : i32 to vector<16x30xi32>
    %49 = arith.cmpi eq, %47, %48 : vector<16x30xi32>
    %50 = vector.extract_strided_slice %40 {offsets = [0, 1], sizes = [16, 30], strides = [1, 1]} : vector<16x31xf32> to vector<16x30xf32>
    %51 = vector.extract_strided_slice %40 {offsets = [0, 0], sizes = [16, 30], strides = [1, 1]} : vector<16x31xf32> to vector<16x30xf32>
    %52 = arith.select %49, %50, %51 : vector<16x30xi1>, vector<16x30xf32>
    %53 = tpu.iota {dimensions = array<i32: 0>} : vector<16x28xi32>
    %c15_i32_30 = arith.constant 15 : i32
    %54 = vector.broadcast %c15_i32_30 : i32 to vector<16x28xi32>
    %55 = arith.subi %54, %53 : vector<16x28xi32>
    %c1_i32_31 = arith.constant 1 : i32
    %56 = vector.broadcast %c1_i32_31 : i32 to vector<16x28xi32>
    %57 = arith.shrsi %55, %56 : vector<16x28xi32>
    %c1_i32_32 = arith.constant 1 : i32
    %58 = vector.broadcast %c1_i32_32 : i32 to vector<16x28xi32>
    %59 = arith.andi %57, %58 : vector<16x28xi32>
    %c1_i32_33 = arith.constant 1 : i32
    %60 = vector.broadcast %c1_i32_33 : i32 to vector<16x28xi32>
    %61 = arith.cmpi eq, %59, %60 : vector<16x28xi32>
    %62 = vector.extract_strided_slice %52 {offsets = [0, 2], sizes = [16, 28], strides = [1, 1]} : vector<16x30xf32> to vector<16x28xf32>
    %63 = vector.extract_strided_slice %52 {offsets = [0, 0], sizes = [16, 28], strides = [1, 1]} : vector<16x30xf32> to vector<16x28xf32>
    %64 = arith.select %61, %62, %63 : vector<16x28xi1>, vector<16x28xf32>
    %65 = tpu.iota {dimensions = array<i32: 0>} : vector<16x24xi32>
    %c15_i32_34 = arith.constant 15 : i32
    %66 = vector.broadcast %c15_i32_34 : i32 to vector<16x24xi32>
    %67 = arith.subi %66, %65 : vector<16x24xi32>
    %c2_i32 = arith.constant 2 : i32
    %68 = vector.broadcast %c2_i32 : i32 to vector<16x24xi32>
    %69 = arith.shrsi %67, %68 : vector<16x24xi32>
    %c1_i32_35 = arith.constant 1 : i32
    %70 = vector.broadcast %c1_i32_35 : i32 to vector<16x24xi32>
    %71 = arith.andi %69, %70 : vector<16x24xi32>
    %c1_i32_36 = arith.constant 1 : i32
    %72 = vector.broadcast %c1_i32_36 : i32 to vector<16x24xi32>
    %73 = arith.cmpi eq, %71, %72 : vector<16x24xi32>
    %74 = vector.extract_strided_slice %64 {offsets = [0, 4], sizes = [16, 24], strides = [1, 1]} : vector<16x28xf32> to vector<16x24xf32>
    %75 = vector.extract_strided_slice %64 {offsets = [0, 0], sizes = [16, 24], strides = [1, 1]} : vector<16x28xf32> to vector<16x24xf32>
    %76 = arith.select %73, %74, %75 : vector<16x24xi1>, vector<16x24xf32>
    %77 = tpu.iota {dimensions = array<i32: 0>} : vector<16x16xi32>
    %c15_i32_37 = arith.constant 15 : i32
    %78 = vector.broadcast %c15_i32_37 : i32 to vector<16x16xi32>
    %79 = arith.subi %78, %77 : vector<16x16xi32>
    %c3_i32 = arith.constant 3 : i32
    %80 = vector.broadcast %c3_i32 : i32 to vector<16x16xi32>
    %81 = arith.shrsi %79, %80 : vector<16x16xi32>
    %c1_i32_38 = arith.constant 1 : i32
    %82 = vector.broadcast %c1_i32_38 : i32 to vector<16x16xi32>
    %83 = arith.andi %81, %82 : vector<16x16xi32>
    %c1_i32_39 = arith.constant 1 : i32
    %84 = vector.broadcast %c1_i32_39 : i32 to vector<16x16xi32>
    %85 = arith.cmpi eq, %83, %84 : vector<16x16xi32>
    %86 = vector.extract_strided_slice %76 {offsets = [0, 8], sizes = [16, 16], strides = [1, 1]} : vector<16x24xf32> to vector<16x16xf32>
    %87 = vector.extract_strided_slice %76 {offsets = [0, 0], sizes = [16, 16], strides = [1, 1]} : vector<16x24xf32> to vector<16x16xf32>
    %88 = arith.select %85, %86, %87 : vector<16x16xi1>, vector<16x16xf32>
    %89 = arith.addf %39, %88 : vector<16x16xf32>
    %cst_40 = arith.constant 2.500000e-01 : f32
    %90 = vector.broadcast %cst_40 : f32 to vector<16x16xf32>
    %91 = arith.mulf %89, %90 : vector<16x16xf32>
    %cst_41 = arith.constant -1.000000e+09 : f32
    %92 = vector.broadcast %cst_41 : f32 to vector<16x16xf32>
    %93 = arith.select %8, %91, %92 : vector<16x16xi1>, vector<16x16xf32>
    %cst_42 = arith.constant dense<0xFF800000> : vector<16xf32>
    %94 = vector.multi_reduction <maximumf>, %93, %cst_42 [1] : vector<16x16xf32> to vector<16xf32>
    %95 = vector.shape_cast %94 : vector<16xf32> to vector<16x1xf32>
    %96 = vector.broadcast %95 : vector<16x1xf32> to vector<16x16xf32>
    %97 = arith.subf %93, %96 : vector<16x16xf32>
    %98 = math.exp %97 : vector<16x16xf32>
    %cst_43 = arith.constant dense<0.000000e+00> : vector<16xf32>
    %99 = vector.multi_reduction <add>, %98, %cst_43 [1] : vector<16x16xf32> to vector<16xf32>
    %100 = vector.shape_cast %99 : vector<16xf32> to vector<16x1xf32>
    %101 = tpu.reciprocal %100 {approx = true} : vector<16x1xf32> -> vector<16x1xf32>
    %102 = vector.broadcast %101 : vector<16x1xf32> to vector<16x16xf32>
    %103 = arith.mulf %98, %102 : vector<16x16xf32>
    %104 = arith.truncf %103 : vector<16x16xf32> to vector<16x16xbf16>
    %cst_44 = arith.constant dense<0.000000e+00> : vector<16x16xf32>
    %105 = tpu.matmul %104, %29, %cst_44 {dimension_numbers = #tpu.dot_dimension_numbers<[1], [0], [0], [1], [0, 0, 1, 1], [], []>} : vector<16x16xbf16>, vector<16x16xbf16>, vector<16x16xf32> -> vector<16x16xf32>
    %106 = arith.truncf %105 : vector<16x16xf32> to vector<16x16xbf16>
    %107 = vector.extract_strided_slice %21 {offsets = [0, 0], sizes = [16, 64], strides = [1, 1]} : vector<64x64xbf16> to vector<16x64xbf16>
    %cst_45 = arith.constant dense<0.000000e+00> : vector<16x64xf32>
    %108 = tpu.matmul %106, %107, %cst_45 {dimension_numbers = #tpu.dot_dimension_numbers<[1], [0], [0], [1], [0, 0, 1, 1], [], []>} : vector<16x16xbf16>, vector<16x64xbf16>, vector<16x64xf32> -> vector<16x64xf32>
    %109 = arith.addf %26, %108 : vector<16x64xf32>
    %110 = vector.extract_strided_slice %10 {offsets = [0, 16], sizes = [16, 16], strides = [1, 1]} : vector<16x64xf32> to vector<16x16xf32>
    %111 = vector.extract_strided_slice %13 {offsets = [0, 16], sizes = [16, 16], strides = [1, 1]} : vector<16x64xbf16> to vector<16x16xbf16>
    %112 = vector.extract_strided_slice %16 {offsets = [0, 16], sizes = [16, 16], strides = [1, 1]} : vector<16x64xbf16> to vector<16x16xbf16>
    %113 = vector.extract_strided_slice %18 {offsets = [0, 16], sizes = [31, 16], strides = [1, 1]} : vector<31x64xbf16> to vector<31x16xbf16>
    %114 = vector.extract_strided_slice %19 {offsets = [1, 0], sizes = [1, 16], strides = [1, 1]} : vector<4x16xf32> to vector<1x16xf32>
    %115 = vector.broadcast %114 : vector<1x16xf32> to vector<16x16xf32>
    %116 = arith.addf %110, %115 : vector<16x16xf32>
    %117 = arith.truncf %116 : vector<16x16xf32> to vector<16x16xbf16>
    %118 = vector.extract_strided_slice %20 {offsets = [1, 0], sizes = [1, 16], strides = [1, 1]} : vector<4x16xf32> to vector<1x16xf32>
    %119 = vector.broadcast %118 : vector<1x16xf32> to vector<16x16xf32>
    %120 = arith.addf %110, %119 : vector<16x16xf32>
    %121 = arith.truncf %120 : vector<16x16xf32> to vector<16x16xbf16>
    %cst_46 = arith.constant dense<0.000000e+00> : vector<16x16xf32>
    %122 = tpu.matmul %117, %111, %cst_46 {dimension_numbers = #tpu.dot_dimension_numbers<[1], [1], [0], [0], [0, 0, 1, 0], [], []>} : vector<16x16xbf16>, vector<16x16xbf16>, vector<16x16xf32> -> vector<16x16xf32>
    %cst_47 = arith.constant dense<0.000000e+00> : vector<16x31xf32>
    %123 = tpu.matmul %121, %113, %cst_47 {dimension_numbers = #tpu.dot_dimension_numbers<[1], [1], [0], [0], [0, 0, 1, 0], [], []>} : vector<16x16xbf16>, vector<31x16xbf16>, vector<16x31xf32> -> vector<16x31xf32>
    %124 = tpu.iota {dimensions = array<i32: 0>} : vector<16x30xi32>
    %c15_i32_48 = arith.constant 15 : i32
    %125 = vector.broadcast %c15_i32_48 : i32 to vector<16x30xi32>
    %126 = arith.subi %125, %124 : vector<16x30xi32>
    %c0_i32_49 = arith.constant 0 : i32
    %127 = vector.broadcast %c0_i32_49 : i32 to vector<16x30xi32>
    %128 = arith.shrsi %126, %127 : vector<16x30xi32>
    %c1_i32_50 = arith.constant 1 : i32
    %129 = vector.broadcast %c1_i32_50 : i32 to vector<16x30xi32>
    %130 = arith.andi %128, %129 : vector<16x30xi32>
    %c1_i32_51 = arith.constant 1 : i32
    %131 = vector.broadcast %c1_i32_51 : i32 to vector<16x30xi32>
    %132 = arith.cmpi eq, %130, %131 : vector<16x30xi32>
    %133 = vector.extract_strided_slice %123 {offsets = [0, 1], sizes = [16, 30], strides = [1, 1]} : vector<16x31xf32> to vector<16x30xf32>
    %134 = vector.extract_strided_slice %123 {offsets = [0, 0], sizes = [16, 30], strides = [1, 1]} : vector<16x31xf32> to vector<16x30xf32>
    %135 = arith.select %132, %133, %134 : vector<16x30xi1>, vector<16x30xf32>
    %136 = tpu.iota {dimensions = array<i32: 0>} : vector<16x28xi32>
    %c15_i32_52 = arith.constant 15 : i32
    %137 = vector.broadcast %c15_i32_52 : i32 to vector<16x28xi32>
    %138 = arith.subi %137, %136 : vector<16x28xi32>
    %c1_i32_53 = arith.constant 1 : i32
    %139 = vector.broadcast %c1_i32_53 : i32 to vector<16x28xi32>
    %140 = arith.shrsi %138, %139 : vector<16x28xi32>
    %c1_i32_54 = arith.constant 1 : i32
    %141 = vector.broadcast %c1_i32_54 : i32 to vector<16x28xi32>
    %142 = arith.andi %140, %141 : vector<16x28xi32>
    %c1_i32_55 = arith.constant 1 : i32
    %143 = vector.broadcast %c1_i32_55 : i32 to vector<16x28xi32>
    %144 = arith.cmpi eq, %142, %143 : vector<16x28xi32>
    %145 = vector.extract_strided_slice %135 {offsets = [0, 2], sizes = [16, 28], strides = [1, 1]} : vector<16x30xf32> to vector<16x28xf32>
    %146 = vector.extract_strided_slice %135 {offsets = [0, 0], sizes = [16, 28], strides = [1, 1]} : vector<16x30xf32> to vector<16x28xf32>
    %147 = arith.select %144, %145, %146 : vector<16x28xi1>, vector<16x28xf32>
    %148 = tpu.iota {dimensions = array<i32: 0>} : vector<16x24xi32>
    %c15_i32_56 = arith.constant 15 : i32
    %149 = vector.broadcast %c15_i32_56 : i32 to vector<16x24xi32>
    %150 = arith.subi %149, %148 : vector<16x24xi32>
    %c2_i32_57 = arith.constant 2 : i32
    %151 = vector.broadcast %c2_i32_57 : i32 to vector<16x24xi32>
    %152 = arith.shrsi %150, %151 : vector<16x24xi32>
    %c1_i32_58 = arith.constant 1 : i32
    %153 = vector.broadcast %c1_i32_58 : i32 to vector<16x24xi32>
    %154 = arith.andi %152, %153 : vector<16x24xi32>
    %c1_i32_59 = arith.constant 1 : i32
    %155 = vector.broadcast %c1_i32_59 : i32 to vector<16x24xi32>
    %156 = arith.cmpi eq, %154, %155 : vector<16x24xi32>
    %157 = vector.extract_strided_slice %147 {offsets = [0, 4], sizes = [16, 24], strides = [1, 1]} : vector<16x28xf32> to vector<16x24xf32>
    %158 = vector.extract_strided_slice %147 {offsets = [0, 0], sizes = [16, 24], strides = [1, 1]} : vector<16x28xf32> to vector<16x24xf32>
    %159 = arith.select %156, %157, %158 : vector<16x24xi1>, vector<16x24xf32>
    %160 = tpu.iota {dimensions = array<i32: 0>} : vector<16x16xi32>
    %c15_i32_60 = arith.constant 15 : i32
    %161 = vector.broadcast %c15_i32_60 : i32 to vector<16x16xi32>
    %162 = arith.subi %161, %160 : vector<16x16xi32>
    %c3_i32_61 = arith.constant 3 : i32
    %163 = vector.broadcast %c3_i32_61 : i32 to vector<16x16xi32>
    %164 = arith.shrsi %162, %163 : vector<16x16xi32>
    %c1_i32_62 = arith.constant 1 : i32
    %165 = vector.broadcast %c1_i32_62 : i32 to vector<16x16xi32>
    %166 = arith.andi %164, %165 : vector<16x16xi32>
    %c1_i32_63 = arith.constant 1 : i32
    %167 = vector.broadcast %c1_i32_63 : i32 to vector<16x16xi32>
    %168 = arith.cmpi eq, %166, %167 : vector<16x16xi32>
    %169 = vector.extract_strided_slice %159 {offsets = [0, 8], sizes = [16, 16], strides = [1, 1]} : vector<16x24xf32> to vector<16x16xf32>
    %170 = vector.extract_strided_slice %159 {offsets = [0, 0], sizes = [16, 16], strides = [1, 1]} : vector<16x24xf32> to vector<16x16xf32>
    %171 = arith.select %168, %169, %170 : vector<16x16xi1>, vector<16x16xf32>
    %172 = arith.addf %122, %171 : vector<16x16xf32>
    %cst_64 = arith.constant 2.500000e-01 : f32
    %173 = vector.broadcast %cst_64 : f32 to vector<16x16xf32>
    %174 = arith.mulf %172, %173 : vector<16x16xf32>
    %cst_65 = arith.constant -1.000000e+09 : f32
    %175 = vector.broadcast %cst_65 : f32 to vector<16x16xf32>
    %176 = arith.select %8, %174, %175 : vector<16x16xi1>, vector<16x16xf32>
    %cst_66 = arith.constant dense<0xFF800000> : vector<16xf32>
    %177 = vector.multi_reduction <maximumf>, %176, %cst_66 [1] : vector<16x16xf32> to vector<16xf32>
    %178 = vector.shape_cast %177 : vector<16xf32> to vector<16x1xf32>
    %179 = vector.broadcast %178 : vector<16x1xf32> to vector<16x16xf32>
    %180 = arith.subf %176, %179 : vector<16x16xf32>
    %181 = math.exp %180 : vector<16x16xf32>
    %cst_67 = arith.constant dense<0.000000e+00> : vector<16xf32>
    %182 = vector.multi_reduction <add>, %181, %cst_67 [1] : vector<16x16xf32> to vector<16xf32>
    %183 = vector.shape_cast %182 : vector<16xf32> to vector<16x1xf32>
    %184 = tpu.reciprocal %183 {approx = true} : vector<16x1xf32> -> vector<16x1xf32>
    %185 = vector.broadcast %184 : vector<16x1xf32> to vector<16x16xf32>
    %186 = arith.mulf %181, %185 : vector<16x16xf32>
    %187 = arith.truncf %186 : vector<16x16xf32> to vector<16x16xbf16>
    %cst_68 = arith.constant dense<0.000000e+00> : vector<16x16xf32>
    %188 = tpu.matmul %187, %112, %cst_68 {dimension_numbers = #tpu.dot_dimension_numbers<[1], [0], [0], [1], [0, 0, 1, 1], [], []>} : vector<16x16xbf16>, vector<16x16xbf16>, vector<16x16xf32> -> vector<16x16xf32>
    %189 = arith.truncf %188 : vector<16x16xf32> to vector<16x16xbf16>
    %190 = vector.extract_strided_slice %21 {offsets = [16, 0], sizes = [16, 64], strides = [1, 1]} : vector<64x64xbf16> to vector<16x64xbf16>
    %cst_69 = arith.constant dense<0.000000e+00> : vector<16x64xf32>
    %191 = tpu.matmul %189, %190, %cst_69 {dimension_numbers = #tpu.dot_dimension_numbers<[1], [0], [0], [1], [0, 0, 1, 1], [], []>} : vector<16x16xbf16>, vector<16x64xbf16>, vector<16x64xf32> -> vector<16x64xf32>
    %192 = arith.addf %109, %191 : vector<16x64xf32>
    %193 = vector.extract_strided_slice %10 {offsets = [0, 32], sizes = [16, 16], strides = [1, 1]} : vector<16x64xf32> to vector<16x16xf32>
    %194 = vector.extract_strided_slice %13 {offsets = [0, 32], sizes = [16, 16], strides = [1, 1]} : vector<16x64xbf16> to vector<16x16xbf16>
    %195 = vector.extract_strided_slice %16 {offsets = [0, 32], sizes = [16, 16], strides = [1, 1]} : vector<16x64xbf16> to vector<16x16xbf16>
    %196 = vector.extract_strided_slice %18 {offsets = [0, 32], sizes = [31, 16], strides = [1, 1]} : vector<31x64xbf16> to vector<31x16xbf16>
    %197 = vector.extract_strided_slice %19 {offsets = [2, 0], sizes = [1, 16], strides = [1, 1]} : vector<4x16xf32> to vector<1x16xf32>
    %198 = vector.broadcast %197 : vector<1x16xf32> to vector<16x16xf32>
    %199 = arith.addf %193, %198 : vector<16x16xf32>
    %200 = arith.truncf %199 : vector<16x16xf32> to vector<16x16xbf16>
    %201 = vector.extract_strided_slice %20 {offsets = [2, 0], sizes = [1, 16], strides = [1, 1]} : vector<4x16xf32> to vector<1x16xf32>
    %202 = vector.broadcast %201 : vector<1x16xf32> to vector<16x16xf32>
    %203 = arith.addf %193, %202 : vector<16x16xf32>
    %204 = arith.truncf %203 : vector<16x16xf32> to vector<16x16xbf16>
    %cst_70 = arith.constant dense<0.000000e+00> : vector<16x16xf32>
    %205 = tpu.matmul %200, %194, %cst_70 {dimension_numbers = #tpu.dot_dimension_numbers<[1], [1], [0], [0], [0, 0, 1, 0], [], []>} : vector<16x16xbf16>, vector<16x16xbf16>, vector<16x16xf32> -> vector<16x16xf32>
    %cst_71 = arith.constant dense<0.000000e+00> : vector<16x31xf32>
    %206 = tpu.matmul %204, %196, %cst_71 {dimension_numbers = #tpu.dot_dimension_numbers<[1], [1], [0], [0], [0, 0, 1, 0], [], []>} : vector<16x16xbf16>, vector<31x16xbf16>, vector<16x31xf32> -> vector<16x31xf32>
    %207 = tpu.iota {dimensions = array<i32: 0>} : vector<16x30xi32>
    %c15_i32_72 = arith.constant 15 : i32
    %208 = vector.broadcast %c15_i32_72 : i32 to vector<16x30xi32>
    %209 = arith.subi %208, %207 : vector<16x30xi32>
    %c0_i32_73 = arith.constant 0 : i32
    %210 = vector.broadcast %c0_i32_73 : i32 to vector<16x30xi32>
    %211 = arith.shrsi %209, %210 : vector<16x30xi32>
    %c1_i32_74 = arith.constant 1 : i32
    %212 = vector.broadcast %c1_i32_74 : i32 to vector<16x30xi32>
    %213 = arith.andi %211, %212 : vector<16x30xi32>
    %c1_i32_75 = arith.constant 1 : i32
    %214 = vector.broadcast %c1_i32_75 : i32 to vector<16x30xi32>
    %215 = arith.cmpi eq, %213, %214 : vector<16x30xi32>
    %216 = vector.extract_strided_slice %206 {offsets = [0, 1], sizes = [16, 30], strides = [1, 1]} : vector<16x31xf32> to vector<16x30xf32>
    %217 = vector.extract_strided_slice %206 {offsets = [0, 0], sizes = [16, 30], strides = [1, 1]} : vector<16x31xf32> to vector<16x30xf32>
    %218 = arith.select %215, %216, %217 : vector<16x30xi1>, vector<16x30xf32>
    %219 = tpu.iota {dimensions = array<i32: 0>} : vector<16x28xi32>
    %c15_i32_76 = arith.constant 15 : i32
    %220 = vector.broadcast %c15_i32_76 : i32 to vector<16x28xi32>
    %221 = arith.subi %220, %219 : vector<16x28xi32>
    %c1_i32_77 = arith.constant 1 : i32
    %222 = vector.broadcast %c1_i32_77 : i32 to vector<16x28xi32>
    %223 = arith.shrsi %221, %222 : vector<16x28xi32>
    %c1_i32_78 = arith.constant 1 : i32
    %224 = vector.broadcast %c1_i32_78 : i32 to vector<16x28xi32>
    %225 = arith.andi %223, %224 : vector<16x28xi32>
    %c1_i32_79 = arith.constant 1 : i32
    %226 = vector.broadcast %c1_i32_79 : i32 to vector<16x28xi32>
    %227 = arith.cmpi eq, %225, %226 : vector<16x28xi32>
    %228 = vector.extract_strided_slice %218 {offsets = [0, 2], sizes = [16, 28], strides = [1, 1]} : vector<16x30xf32> to vector<16x28xf32>
    %229 = vector.extract_strided_slice %218 {offsets = [0, 0], sizes = [16, 28], strides = [1, 1]} : vector<16x30xf32> to vector<16x28xf32>
    %230 = arith.select %227, %228, %229 : vector<16x28xi1>, vector<16x28xf32>
    %231 = tpu.iota {dimensions = array<i32: 0>} : vector<16x24xi32>
    %c15_i32_80 = arith.constant 15 : i32
    %232 = vector.broadcast %c15_i32_80 : i32 to vector<16x24xi32>
    %233 = arith.subi %232, %231 : vector<16x24xi32>
    %c2_i32_81 = arith.constant 2 : i32
    %234 = vector.broadcast %c2_i32_81 : i32 to vector<16x24xi32>
    %235 = arith.shrsi %233, %234 : vector<16x24xi32>
    %c1_i32_82 = arith.constant 1 : i32
    %236 = vector.broadcast %c1_i32_82 : i32 to vector<16x24xi32>
    %237 = arith.andi %235, %236 : vector<16x24xi32>
    %c1_i32_83 = arith.constant 1 : i32
    %238 = vector.broadcast %c1_i32_83 : i32 to vector<16x24xi32>
    %239 = arith.cmpi eq, %237, %238 : vector<16x24xi32>
    %240 = vector.extract_strided_slice %230 {offsets = [0, 4], sizes = [16, 24], strides = [1, 1]} : vector<16x28xf32> to vector<16x24xf32>
    %241 = vector.extract_strided_slice %230 {offsets = [0, 0], sizes = [16, 24], strides = [1, 1]} : vector<16x28xf32> to vector<16x24xf32>
    %242 = arith.select %239, %240, %241 : vector<16x24xi1>, vector<16x24xf32>
    %243 = tpu.iota {dimensions = array<i32: 0>} : vector<16x16xi32>
    %c15_i32_84 = arith.constant 15 : i32
    %244 = vector.broadcast %c15_i32_84 : i32 to vector<16x16xi32>
    %245 = arith.subi %244, %243 : vector<16x16xi32>
    %c3_i32_85 = arith.constant 3 : i32
    %246 = vector.broadcast %c3_i32_85 : i32 to vector<16x16xi32>
    %247 = arith.shrsi %245, %246 : vector<16x16xi32>
    %c1_i32_86 = arith.constant 1 : i32
    %248 = vector.broadcast %c1_i32_86 : i32 to vector<16x16xi32>
    %249 = arith.andi %247, %248 : vector<16x16xi32>
    %c1_i32_87 = arith.constant 1 : i32
    %250 = vector.broadcast %c1_i32_87 : i32 to vector<16x16xi32>
    %251 = arith.cmpi eq, %249, %250 : vector<16x16xi32>
    %252 = vector.extract_strided_slice %242 {offsets = [0, 8], sizes = [16, 16], strides = [1, 1]} : vector<16x24xf32> to vector<16x16xf32>
    %253 = vector.extract_strided_slice %242 {offsets = [0, 0], sizes = [16, 16], strides = [1, 1]} : vector<16x24xf32> to vector<16x16xf32>
    %254 = arith.select %251, %252, %253 : vector<16x16xi1>, vector<16x16xf32>
    %255 = arith.addf %205, %254 : vector<16x16xf32>
    %cst_88 = arith.constant 2.500000e-01 : f32
    %256 = vector.broadcast %cst_88 : f32 to vector<16x16xf32>
    %257 = arith.mulf %255, %256 : vector<16x16xf32>
    %cst_89 = arith.constant -1.000000e+09 : f32
    %258 = vector.broadcast %cst_89 : f32 to vector<16x16xf32>
    %259 = arith.select %8, %257, %258 : vector<16x16xi1>, vector<16x16xf32>
    %cst_90 = arith.constant dense<0xFF800000> : vector<16xf32>
    %260 = vector.multi_reduction <maximumf>, %259, %cst_90 [1] : vector<16x16xf32> to vector<16xf32>
    %261 = vector.shape_cast %260 : vector<16xf32> to vector<16x1xf32>
    %262 = vector.broadcast %261 : vector<16x1xf32> to vector<16x16xf32>
    %263 = arith.subf %259, %262 : vector<16x16xf32>
    %264 = math.exp %263 : vector<16x16xf32>
    %cst_91 = arith.constant dense<0.000000e+00> : vector<16xf32>
    %265 = vector.multi_reduction <add>, %264, %cst_91 [1] : vector<16x16xf32> to vector<16xf32>
    %266 = vector.shape_cast %265 : vector<16xf32> to vector<16x1xf32>
    %267 = tpu.reciprocal %266 {approx = true} : vector<16x1xf32> -> vector<16x1xf32>
    %268 = vector.broadcast %267 : vector<16x1xf32> to vector<16x16xf32>
    %269 = arith.mulf %264, %268 : vector<16x16xf32>
    %270 = arith.truncf %269 : vector<16x16xf32> to vector<16x16xbf16>
    %cst_92 = arith.constant dense<0.000000e+00> : vector<16x16xf32>
    %271 = tpu.matmul %270, %195, %cst_92 {dimension_numbers = #tpu.dot_dimension_numbers<[1], [0], [0], [1], [0, 0, 1, 1], [], []>} : vector<16x16xbf16>, vector<16x16xbf16>, vector<16x16xf32> -> vector<16x16xf32>
    %272 = arith.truncf %271 : vector<16x16xf32> to vector<16x16xbf16>
    %273 = vector.extract_strided_slice %21 {offsets = [32, 0], sizes = [16, 64], strides = [1, 1]} : vector<64x64xbf16> to vector<16x64xbf16>
    %cst_93 = arith.constant dense<0.000000e+00> : vector<16x64xf32>
    %274 = tpu.matmul %272, %273, %cst_93 {dimension_numbers = #tpu.dot_dimension_numbers<[1], [0], [0], [1], [0, 0, 1, 1], [], []>} : vector<16x16xbf16>, vector<16x64xbf16>, vector<16x64xf32> -> vector<16x64xf32>
    %275 = arith.addf %192, %274 : vector<16x64xf32>
    %276 = vector.extract_strided_slice %10 {offsets = [0, 48], sizes = [16, 16], strides = [1, 1]} : vector<16x64xf32> to vector<16x16xf32>
    %277 = vector.extract_strided_slice %13 {offsets = [0, 48], sizes = [16, 16], strides = [1, 1]} : vector<16x64xbf16> to vector<16x16xbf16>
    %278 = vector.extract_strided_slice %16 {offsets = [0, 48], sizes = [16, 16], strides = [1, 1]} : vector<16x64xbf16> to vector<16x16xbf16>
    %279 = vector.extract_strided_slice %18 {offsets = [0, 48], sizes = [31, 16], strides = [1, 1]} : vector<31x64xbf16> to vector<31x16xbf16>
    %280 = vector.extract_strided_slice %19 {offsets = [3, 0], sizes = [1, 16], strides = [1, 1]} : vector<4x16xf32> to vector<1x16xf32>
    %281 = vector.broadcast %280 : vector<1x16xf32> to vector<16x16xf32>
    %282 = arith.addf %276, %281 : vector<16x16xf32>
    %283 = arith.truncf %282 : vector<16x16xf32> to vector<16x16xbf16>
    %284 = vector.extract_strided_slice %20 {offsets = [3, 0], sizes = [1, 16], strides = [1, 1]} : vector<4x16xf32> to vector<1x16xf32>
    %285 = vector.broadcast %284 : vector<1x16xf32> to vector<16x16xf32>
    %286 = arith.addf %276, %285 : vector<16x16xf32>
    %287 = arith.truncf %286 : vector<16x16xf32> to vector<16x16xbf16>
    %cst_94 = arith.constant dense<0.000000e+00> : vector<16x16xf32>
    %288 = tpu.matmul %283, %277, %cst_94 {dimension_numbers = #tpu.dot_dimension_numbers<[1], [1], [0], [0], [0, 0, 1, 0], [], []>} : vector<16x16xbf16>, vector<16x16xbf16>, vector<16x16xf32> -> vector<16x16xf32>
    %cst_95 = arith.constant dense<0.000000e+00> : vector<16x31xf32>
    %289 = tpu.matmul %287, %279, %cst_95 {dimension_numbers = #tpu.dot_dimension_numbers<[1], [1], [0], [0], [0, 0, 1, 0], [], []>} : vector<16x16xbf16>, vector<31x16xbf16>, vector<16x31xf32> -> vector<16x31xf32>
    %290 = tpu.iota {dimensions = array<i32: 0>} : vector<16x30xi32>
    %c15_i32_96 = arith.constant 15 : i32
    %291 = vector.broadcast %c15_i32_96 : i32 to vector<16x30xi32>
    %292 = arith.subi %291, %290 : vector<16x30xi32>
    %c0_i32_97 = arith.constant 0 : i32
    %293 = vector.broadcast %c0_i32_97 : i32 to vector<16x30xi32>
    %294 = arith.shrsi %292, %293 : vector<16x30xi32>
    %c1_i32_98 = arith.constant 1 : i32
    %295 = vector.broadcast %c1_i32_98 : i32 to vector<16x30xi32>
    %296 = arith.andi %294, %295 : vector<16x30xi32>
    %c1_i32_99 = arith.constant 1 : i32
    %297 = vector.broadcast %c1_i32_99 : i32 to vector<16x30xi32>
    %298 = arith.cmpi eq, %296, %297 : vector<16x30xi32>
    %299 = vector.extract_strided_slice %289 {offsets = [0, 1], sizes = [16, 30], strides = [1, 1]} : vector<16x31xf32> to vector<16x30xf32>
    %300 = vector.extract_strided_slice %289 {offsets = [0, 0], sizes = [16, 30], strides = [1, 1]} : vector<16x31xf32> to vector<16x30xf32>
    %301 = arith.select %298, %299, %300 : vector<16x30xi1>, vector<16x30xf32>
    %302 = tpu.iota {dimensions = array<i32: 0>} : vector<16x28xi32>
    %c15_i32_100 = arith.constant 15 : i32
    %303 = vector.broadcast %c15_i32_100 : i32 to vector<16x28xi32>
    %304 = arith.subi %303, %302 : vector<16x28xi32>
    %c1_i32_101 = arith.constant 1 : i32
    %305 = vector.broadcast %c1_i32_101 : i32 to vector<16x28xi32>
    %306 = arith.shrsi %304, %305 : vector<16x28xi32>
    %c1_i32_102 = arith.constant 1 : i32
    %307 = vector.broadcast %c1_i32_102 : i32 to vector<16x28xi32>
    %308 = arith.andi %306, %307 : vector<16x28xi32>
    %c1_i32_103 = arith.constant 1 : i32
    %309 = vector.broadcast %c1_i32_103 : i32 to vector<16x28xi32>
    %310 = arith.cmpi eq, %308, %309 : vector<16x28xi32>
    %311 = vector.extract_strided_slice %301 {offsets = [0, 2], sizes = [16, 28], strides = [1, 1]} : vector<16x30xf32> to vector<16x28xf32>
    %312 = vector.extract_strided_slice %301 {offsets = [0, 0], sizes = [16, 28], strides = [1, 1]} : vector<16x30xf32> to vector<16x28xf32>
    %313 = arith.select %310, %311, %312 : vector<16x28xi1>, vector<16x28xf32>
    %314 = tpu.iota {dimensions = array<i32: 0>} : vector<16x24xi32>
    %c15_i32_104 = arith.constant 15 : i32
    %315 = vector.broadcast %c15_i32_104 : i32 to vector<16x24xi32>
    %316 = arith.subi %315, %314 : vector<16x24xi32>
    %c2_i32_105 = arith.constant 2 : i32
    %317 = vector.broadcast %c2_i32_105 : i32 to vector<16x24xi32>
    %318 = arith.shrsi %316, %317 : vector<16x24xi32>
    %c1_i32_106 = arith.constant 1 : i32
    %319 = vector.broadcast %c1_i32_106 : i32 to vector<16x24xi32>
    %320 = arith.andi %318, %319 : vector<16x24xi32>
    %c1_i32_107 = arith.constant 1 : i32
    %321 = vector.broadcast %c1_i32_107 : i32 to vector<16x24xi32>
    %322 = arith.cmpi eq, %320, %321 : vector<16x24xi32>
    %323 = vector.extract_strided_slice %313 {offsets = [0, 4], sizes = [16, 24], strides = [1, 1]} : vector<16x28xf32> to vector<16x24xf32>
    %324 = vector.extract_strided_slice %313 {offsets = [0, 0], sizes = [16, 24], strides = [1, 1]} : vector<16x28xf32> to vector<16x24xf32>
    %325 = arith.select %322, %323, %324 : vector<16x24xi1>, vector<16x24xf32>
    %326 = tpu.iota {dimensions = array<i32: 0>} : vector<16x16xi32>
    %c15_i32_108 = arith.constant 15 : i32
    %327 = vector.broadcast %c15_i32_108 : i32 to vector<16x16xi32>
    %328 = arith.subi %327, %326 : vector<16x16xi32>
    %c3_i32_109 = arith.constant 3 : i32
    %329 = vector.broadcast %c3_i32_109 : i32 to vector<16x16xi32>
    %330 = arith.shrsi %328, %329 : vector<16x16xi32>
    %c1_i32_110 = arith.constant 1 : i32
    %331 = vector.broadcast %c1_i32_110 : i32 to vector<16x16xi32>
    %332 = arith.andi %330, %331 : vector<16x16xi32>
    %c1_i32_111 = arith.constant 1 : i32
    %333 = vector.broadcast %c1_i32_111 : i32 to vector<16x16xi32>
    %334 = arith.cmpi eq, %332, %333 : vector<16x16xi32>
    %335 = vector.extract_strided_slice %325 {offsets = [0, 8], sizes = [16, 16], strides = [1, 1]} : vector<16x24xf32> to vector<16x16xf32>
    %336 = vector.extract_strided_slice %325 {offsets = [0, 0], sizes = [16, 16], strides = [1, 1]} : vector<16x24xf32> to vector<16x16xf32>
    %337 = arith.select %334, %335, %336 : vector<16x16xi1>, vector<16x16xf32>
    %338 = arith.addf %288, %337 : vector<16x16xf32>
    %cst_112 = arith.constant 2.500000e-01 : f32
    %339 = vector.broadcast %cst_112 : f32 to vector<16x16xf32>
    %340 = arith.mulf %338, %339 : vector<16x16xf32>
    %cst_113 = arith.constant -1.000000e+09 : f32
    %341 = vector.broadcast %cst_113 : f32 to vector<16x16xf32>
    %342 = arith.select %8, %340, %341 : vector<16x16xi1>, vector<16x16xf32>
    %cst_114 = arith.constant dense<0xFF800000> : vector<16xf32>
    %343 = vector.multi_reduction <maximumf>, %342, %cst_114 [1] : vector<16x16xf32> to vector<16xf32>
    %344 = vector.shape_cast %343 : vector<16xf32> to vector<16x1xf32>
    %345 = vector.broadcast %344 : vector<16x1xf32> to vector<16x16xf32>
    %346 = arith.subf %342, %345 : vector<16x16xf32>
    %347 = math.exp %346 : vector<16x16xf32>
    %cst_115 = arith.constant dense<0.000000e+00> : vector<16xf32>
    %348 = vector.multi_reduction <add>, %347, %cst_115 [1] : vector<16x16xf32> to vector<16xf32>
    %349 = vector.shape_cast %348 : vector<16xf32> to vector<16x1xf32>
    %350 = tpu.reciprocal %349 {approx = true} : vector<16x1xf32> -> vector<16x1xf32>
    %351 = vector.broadcast %350 : vector<16x1xf32> to vector<16x16xf32>
    %352 = arith.mulf %347, %351 : vector<16x16xf32>
    %353 = arith.truncf %352 : vector<16x16xf32> to vector<16x16xbf16>
    %cst_116 = arith.constant dense<0.000000e+00> : vector<16x16xf32>
    %354 = tpu.matmul %353, %278, %cst_116 {dimension_numbers = #tpu.dot_dimension_numbers<[1], [0], [0], [1], [0, 0, 1, 1], [], []>} : vector<16x16xbf16>, vector<16x16xbf16>, vector<16x16xf32> -> vector<16x16xf32>
    %355 = arith.truncf %354 : vector<16x16xf32> to vector<16x16xbf16>
    %356 = vector.extract_strided_slice %21 {offsets = [48, 0], sizes = [16, 64], strides = [1, 1]} : vector<64x64xbf16> to vector<16x64xbf16>
    %cst_117 = arith.constant dense<0.000000e+00> : vector<16x64xf32>
    %357 = tpu.matmul %355, %356, %cst_117 {dimension_numbers = #tpu.dot_dimension_numbers<[1], [0], [0], [1], [0, 0, 1, 1], [], []>} : vector<16x16xbf16>, vector<16x64xbf16>, vector<16x64xf32> -> vector<16x64xf32>
    %358 = arith.addf %275, %357 : vector<16x64xf32>
    %359 = vector.shape_cast %358 : vector<16x64xf32> to vector<1x16x64xf32>
    %c0_118 = arith.constant 0 : index
    %c0_119 = arith.constant 0 : index
    %c0_120 = arith.constant 0 : index
    %360 = vector.load %arg12[%c0_118, %c0_119, %c0_120] : memref<1x16x64xf32, #tpu.memory_space<vmem>>, vector<1x16x64xf32>
    tpu.vector_store %arg12[%c0_118, %c0_119, %c0_120], %359 {strides = array<i32>} : memref<1x16x64xf32, #tpu.memory_space<vmem>>, vector<1x16x64xf32>,
    return
  }
  func.func @transform_0(%arg0: i32) -> (i32, i32, i32) {
    %c0_i32 = arith.constant 0 : i32
    %c0_i32_0 = arith.constant 0 : i32
    %c0_i32_1 = arith.constant 0 : i32
    return %arg0, %c0_i32, %c0_i32_0 : i32, i32, i32
  }
  func.func @transform_1(%arg0: i32) -> (i32, i32, i32) {
    %c0_i32 = arith.constant 0 : i32
    %c0_i32_0 = arith.constant 0 : i32
    %c0_i32_1 = arith.constant 0 : i32
    return %arg0, %c0_i32, %c0_i32_0 : i32, i32, i32
  }
  func.func @transform_2(%arg0: i32) -> (i32, i32, i32) {
    %c0_i32 = arith.constant 0 : i32
    %c0_i32_0 = arith.constant 0 : i32
    %c0_i32_1 = arith.constant 0 : i32
    return %arg0, %c0_i32, %c0_i32_0 : i32, i32, i32
  }
  func.func @transform_3(%arg0: i32) -> (i32, i32, i32) {
    %c0_i32 = arith.constant 0 : i32
    %c0_i32_0 = arith.constant 0 : i32
    %c0_i32_1 = arith.constant 0 : i32
    return %arg0, %c0_i32, %c0_i32_0 : i32, i32, i32
  }
  func.func @transform_4(%arg0: i32) -> (i32, i32, i32) {
    %c0_i32 = arith.constant 0 : i32
    %c0_i32_0 = arith.constant 0 : i32
    %c0_i32_1 = arith.constant 0 : i32
    return %arg0, %c0_i32, %c0_i32_0 : i32, i32, i32
  }
  func.func @transform_5(%arg0: i32) -> (i32, i32, i32) {
    %c0_i32 = arith.constant 0 : i32
    %c0_i32_0 = arith.constant 0 : i32
    %c0_i32_1 = arith.constant 0 : i32
    return %arg0, %c0_i32, %c0_i32_0 : i32, i32, i32
  }
  func.func @transform_6(%arg0: i32) -> (i32, i32) {
    %c0_i32 = arith.constant 0 : i32
    %c0_i32_0 = arith.constant 0 : i32
    %c0_i32_1 = arith.constant 0 : i32
    return %c0_i32, %c0_i32_0 : i32, i32
  }
  func.func @transform_7(%arg0: i32) -> (i32, i32) {
    %c0_i32 = arith.constant 0 : i32
    %c0_i32_0 = arith.constant 0 : i32
    %c0_i32_1 = arith.constant 0 : i32
    return %c0_i32, %c0_i32_0 : i32, i32
  }
  func.func @transform_8(%arg0: i32) -> (i32, i32) {
    %c0_i32 = arith.constant 0 : i32
    %c0_i32_0 = arith.constant 0 : i32
    %c0_i32_1 = arith.constant 0 : i32
    return %c0_i32, %c0_i32_0 : i32, i32
  }
  func.func @transform_9(%arg0: i32) -> (i32, i32) {
    %c0_i32 = arith.constant 0 : i32
    %c0_i32_0 = arith.constant 0 : i32
    %c0_i32_1 = arith.constant 0 : i32
    return %c0_i32, %c0_i32_0 : i32, i32
  }
  func.func @transform_10(%arg0: i32) -> (i32, i32) {
    %c0_i32 = arith.constant 0 : i32
    %c0_i32_0 = arith.constant 0 : i32
    %c0_i32_1 = arith.constant 0 : i32
    return %c0_i32, %c0_i32_0 : i32, i32
  }
  func.func @transform_11(%arg0: i32) -> (i32, i32, i32) {
    %c0_i32 = arith.constant 0 : i32
    %c0_i32_0 = arith.constant 0 : i32
    %c0_i32_1 = arith.constant 0 : i32
    return %arg0, %c0_i32, %c0_i32_0 : i32, i32, i32
  }
}

module attributes {stable_mosaic.version = 11 : i64} {
  func.func @_conv_front_kernel(%arg0: i32, %arg1: memref<1x16x1xf32, #tpu.memory_space<vmem>>, %arg2: memref<1x16x64xf32, #tpu.memory_space<vmem>>, %arg3: memref<1x64xf32, #tpu.memory_space<vmem>>, %arg4: memref<1x64xf32, #tpu.memory_space<vmem>>, %arg5: memref<64x64xbf16, #tpu.memory_space<vmem>>, %arg6: memref<1x64xf32, #tpu.memory_space<vmem>>, %arg7: memref<64x64xbf16, #tpu.memory_space<vmem>>, %arg8: memref<1x64xf32, #tpu.memory_space<vmem>>, %arg9: memref<7x64xf32, #tpu.memory_space<vmem>>, %arg10: memref<1x16x64xf32, #tpu.memory_space<vmem>>, %arg11: memref<1x1x64xf32, #tpu.memory_space<vmem>>, %arg12: memref<1x1x64xf32, #tpu.memory_space<vmem>>, %arg13: memref<32x64xf32, #tpu.memory_space<vmem>>) attributes {dimension_semantics = [#tpu.dimension_semantics<parallel>], iteration_bounds = array<i64: 2>, scalar_prefetch = 0 : i64, scratch_operands = 1 : i64, tpu.core_type = #tpu.core_type<tc>, window_params = [{transform_indices = @transform_0, window_bounds = array<i64: 1, 16, 1>}, {transform_indices = @transform_1, window_bounds = array<i64: 1, 16, 64>}, {pipeline_mode = #tpu.pipeline_mode<synchronous>, transform_indices = @transform_2, window_bounds = array<i64: 1, 64>}, {pipeline_mode = #tpu.pipeline_mode<synchronous>, transform_indices = @transform_3, window_bounds = array<i64: 1, 64>}, {pipeline_mode = #tpu.pipeline_mode<synchronous>, transform_indices = @transform_4, window_bounds = array<i64: 64, 64>}, {pipeline_mode = #tpu.pipeline_mode<synchronous>, transform_indices = @transform_5, window_bounds = array<i64: 1, 64>}, {pipeline_mode = #tpu.pipeline_mode<synchronous>, transform_indices = @transform_6, window_bounds = array<i64: 64, 64>}, {pipeline_mode = #tpu.pipeline_mode<synchronous>, transform_indices = @transform_7, window_bounds = array<i64: 1, 64>}, {pipeline_mode = #tpu.pipeline_mode<synchronous>, transform_indices = @transform_8, window_bounds = array<i64: 7, 64>}, {transform_indices = @transform_9, window_bounds = array<i64: 1, 16, 64>}, {transform_indices = @transform_10, window_bounds = array<i64: 1, 1, 64>}, {transform_indices = @transform_11, window_bounds = array<i64: 1, 1, 64>}]} {
    %c0 = arith.constant 0 : index
    %c0_0 = arith.constant 0 : index
    %c0_1 = arith.constant 0 : index
    %0 = vector.load %arg1[%c0, %c0_0, %c0_1] : memref<1x16x1xf32, #tpu.memory_space<vmem>>, vector<1x16x1xf32>
    %1 = vector.shape_cast %0 : vector<1x16x1xf32> to vector<16x1xf32>
    %c0_2 = arith.constant 0 : index
    %c0_3 = arith.constant 0 : index
    %c0_4 = arith.constant 0 : index
    %2 = vector.load %arg2[%c0_2, %c0_3, %c0_4] : memref<1x16x64xf32, #tpu.memory_space<vmem>>, vector<1x16x64xf32>
    %3 = vector.shape_cast %2 : vector<1x16x64xf32> to vector<16x64xf32>
    %c0_5 = arith.constant 0 : index
    %c0_6 = arith.constant 0 : index
    %4 = vector.load %arg3[%c0_5, %c0_6] : memref<1x64xf32, #tpu.memory_space<vmem>>, vector<1x64xf32>
    %5 = vector.broadcast %4 : vector<1x64xf32> to vector<16x64xf32>
    %6 = arith.mulf %3, %5 : vector<16x64xf32>
    %c0_7 = arith.constant 0 : index
    %c0_8 = arith.constant 0 : index
    %7 = vector.load %arg4[%c0_7, %c0_8] : memref<1x64xf32, #tpu.memory_space<vmem>>, vector<1x64xf32>
    %8 = vector.broadcast %7 : vector<1x64xf32> to vector<16x64xf32>
    %9 = arith.addf %6, %8 : vector<16x64xf32>
    %10 = vector.broadcast %1 : vector<16x1xf32> to vector<16x64xf32>
    %11 = arith.mulf %9, %10 : vector<16x64xf32>
    %12 = arith.truncf %11 : vector<16x64xf32> to vector<16x64xbf16>
    %c0_9 = arith.constant 0 : index
    %c0_10 = arith.constant 0 : index
    %13 = vector.load %arg5[%c0_9, %c0_10] : memref<64x64xbf16, #tpu.memory_space<vmem>>, vector<64x64xbf16>
    %cst = arith.constant dense<0.000000e+00> : vector<16x64xf32>
    %14 = tpu.matmul %12, %13, %cst {dimension_numbers = #tpu.dot_dimension_numbers<[1], [0], [0], [1], [0, 0, 1, 1], [], []>} : vector<16x64xbf16>, vector<64x64xbf16>, vector<16x64xf32> -> vector<16x64xf32>
    %c0_11 = arith.constant 0 : index
    %c0_12 = arith.constant 0 : index
    %15 = vector.load %arg6[%c0_11, %c0_12] : memref<1x64xf32, #tpu.memory_space<vmem>>, vector<1x64xf32>
    %16 = vector.broadcast %15 : vector<1x64xf32> to vector<16x64xf32>
    %17 = arith.addf %14, %16 : vector<16x64xf32>
    %c0_13 = arith.constant 0 : index
    %c0_14 = arith.constant 0 : index
    %18 = vector.load %arg7[%c0_13, %c0_14] : memref<64x64xbf16, #tpu.memory_space<vmem>>, vector<64x64xbf16>
    %cst_15 = arith.constant dense<0.000000e+00> : vector<16x64xf32>
    %19 = tpu.matmul %12, %18, %cst_15 {dimension_numbers = #tpu.dot_dimension_numbers<[1], [0], [0], [1], [0, 0, 1, 1], [], []>} : vector<16x64xbf16>, vector<64x64xbf16>, vector<16x64xf32> -> vector<16x64xf32>
    %c0_16 = arith.constant 0 : index
    %c0_17 = arith.constant 0 : index
    %20 = vector.load %arg8[%c0_16, %c0_17] : memref<1x64xf32, #tpu.memory_space<vmem>>, vector<1x64xf32>
    %21 = vector.broadcast %20 : vector<1x64xf32> to vector<16x64xf32>
    %22 = arith.addf %19, %21 : vector<16x64xf32>
    %23 = arith.negf %22 : vector<16x64xf32>
    %24 = math.exp %23 : vector<16x64xf32>
    %cst_18 = arith.constant 1.000000e+00 : f32
    %25 = vector.broadcast %cst_18 : f32 to vector<16x64xf32>
    %26 = arith.addf %25, %24 : vector<16x64xf32>
    %27 = arith.divf %25, %26 : vector<16x64xf32>
    %28 = arith.mulf %17, %27 : vector<16x64xf32>
    %29 = vector.broadcast %1 : vector<16x1xf32> to vector<16x64xf32>
    %30 = arith.mulf %28, %29 : vector<16x64xf32>
    %cst_19 = arith.constant 0.000000e+00 : f32
    %31 = vector.broadcast %cst_19 : f32 to vector<32x64xf32>
    %c0_20 = arith.constant 0 : index
    %c0_21 = arith.constant 0 : index
    %32 = vector.load %arg13[%c0_20, %c0_21] : memref<32x64xf32, #tpu.memory_space<vmem>>, vector<32x64xf32>
    tpu.vector_store %arg13[%c0_20, %c0_21], %31 {strides = array<i32>} : memref<32x64xf32, #tpu.memory_space<vmem>>, vector<32x64xf32>,
    %c8 = arith.constant 8 : index
    %c0_22 = arith.constant 0 : index
    %33 = vector.load %arg13[%c8, %c0_22] : memref<32x64xf32, #tpu.memory_space<vmem>>, vector<16x64xf32>
    tpu.vector_store %arg13[%c8, %c0_22], %30 {strides = array<i32>} : memref<32x64xf32, #tpu.memory_space<vmem>>, vector<16x64xf32>,
    %cst_23 = arith.constant 0.000000e+00 : f32
    %34 = vector.broadcast %cst_23 : f32 to vector<16x64xf32>
    %c5 = arith.constant 5 : index
    %c0_24 = arith.constant 0 : index
    %35 = vector.load %arg13[%c5, %c0_24] : memref<32x64xf32, #tpu.memory_space<vmem>>, vector<16x64xf32>
    %c0_25 = arith.constant 0 : index
    %c0_26 = arith.constant 0 : index
    %36 = vector.load %arg9[%c0_25, %c0_26] : memref<7x64xf32, #tpu.memory_space<vmem>>, vector<1x64xf32>
    %37 = vector.broadcast %36 : vector<1x64xf32> to vector<16x64xf32>
    %38 = arith.mulf %35, %37 : vector<16x64xf32>
    %39 = arith.addf %34, %38 : vector<16x64xf32>
    %c6 = arith.constant 6 : index
    %c0_27 = arith.constant 0 : index
    %40 = vector.load %arg13[%c6, %c0_27] : memref<32x64xf32, #tpu.memory_space<vmem>>, vector<16x64xf32>
    %c1 = arith.constant 1 : index
    %c0_28 = arith.constant 0 : index
    %41 = vector.load %arg9[%c1, %c0_28] : memref<7x64xf32, #tpu.memory_space<vmem>>, vector<1x64xf32>
    %42 = vector.broadcast %41 : vector<1x64xf32> to vector<16x64xf32>
    %43 = arith.mulf %40, %42 : vector<16x64xf32>
    %44 = arith.addf %39, %43 : vector<16x64xf32>
    %c7 = arith.constant 7 : index
    %c0_29 = arith.constant 0 : index
    %45 = vector.load %arg13[%c7, %c0_29] : memref<32x64xf32, #tpu.memory_space<vmem>>, vector<16x64xf32>
    %c2 = arith.constant 2 : index
    %c0_30 = arith.constant 0 : index
    %46 = vector.load %arg9[%c2, %c0_30] : memref<7x64xf32, #tpu.memory_space<vmem>>, vector<1x64xf32>
    %47 = vector.broadcast %46 : vector<1x64xf32> to vector<16x64xf32>
    %48 = arith.mulf %45, %47 : vector<16x64xf32>
    %49 = arith.addf %44, %48 : vector<16x64xf32>
    %c8_31 = arith.constant 8 : index
    %c0_32 = arith.constant 0 : index
    %50 = vector.load %arg13[%c8_31, %c0_32] : memref<32x64xf32, #tpu.memory_space<vmem>>, vector<16x64xf32>
    %c3 = arith.constant 3 : index
    %c0_33 = arith.constant 0 : index
    %51 = vector.load %arg9[%c3, %c0_33] : memref<7x64xf32, #tpu.memory_space<vmem>>, vector<1x64xf32>
    %52 = vector.broadcast %51 : vector<1x64xf32> to vector<16x64xf32>
    %53 = arith.mulf %50, %52 : vector<16x64xf32>
    %54 = arith.addf %49, %53 : vector<16x64xf32>
    %c9 = arith.constant 9 : index
    %c0_34 = arith.constant 0 : index
    %55 = vector.load %arg13[%c9, %c0_34] : memref<32x64xf32, #tpu.memory_space<vmem>>, vector<16x64xf32>
    %c4 = arith.constant 4 : index
    %c0_35 = arith.constant 0 : index
    %56 = vector.load %arg9[%c4, %c0_35] : memref<7x64xf32, #tpu.memory_space<vmem>>, vector<1x64xf32>
    %57 = vector.broadcast %56 : vector<1x64xf32> to vector<16x64xf32>
    %58 = arith.mulf %55, %57 : vector<16x64xf32>
    %59 = arith.addf %54, %58 : vector<16x64xf32>
    %c10 = arith.constant 10 : index
    %c0_36 = arith.constant 0 : index
    %60 = vector.load %arg13[%c10, %c0_36] : memref<32x64xf32, #tpu.memory_space<vmem>>, vector<16x64xf32>
    %c5_37 = arith.constant 5 : index
    %c0_38 = arith.constant 0 : index
    %61 = vector.load %arg9[%c5_37, %c0_38] : memref<7x64xf32, #tpu.memory_space<vmem>>, vector<1x64xf32>
    %62 = vector.broadcast %61 : vector<1x64xf32> to vector<16x64xf32>
    %63 = arith.mulf %60, %62 : vector<16x64xf32>
    %64 = arith.addf %59, %63 : vector<16x64xf32>
    %c11 = arith.constant 11 : index
    %c0_39 = arith.constant 0 : index
    %65 = vector.load %arg13[%c11, %c0_39] : memref<32x64xf32, #tpu.memory_space<vmem>>, vector<16x64xf32>
    %c6_40 = arith.constant 6 : index
    %c0_41 = arith.constant 0 : index
    %66 = vector.load %arg9[%c6_40, %c0_41] : memref<7x64xf32, #tpu.memory_space<vmem>>, vector<1x64xf32>
    %67 = vector.broadcast %66 : vector<1x64xf32> to vector<16x64xf32>
    %68 = arith.mulf %65, %67 : vector<16x64xf32>
    %69 = arith.addf %64, %68 : vector<16x64xf32>
    %70 = vector.shape_cast %69 : vector<16x64xf32> to vector<1x16x64xf32>
    %c0_42 = arith.constant 0 : index
    %c0_43 = arith.constant 0 : index
    %c0_44 = arith.constant 0 : index
    %71 = vector.load %arg10[%c0_42, %c0_43, %c0_44] : memref<1x16x64xf32, #tpu.memory_space<vmem>>, vector<1x16x64xf32>
    tpu.vector_store %arg10[%c0_42, %c0_43, %c0_44], %70 {strides = array<i32>} : memref<1x16x64xf32, #tpu.memory_space<vmem>>, vector<1x16x64xf32>,
    %72 = vector.broadcast %1 : vector<16x1xf32> to vector<16x64xf32>
    %73 = arith.mulf %69, %72 : vector<16x64xf32>
    %cst_45 = arith.constant dense<0.000000e+00> : vector<64xf32>
    %74 = vector.multi_reduction <add>, %73, %cst_45 [0] : vector<16x64xf32> to vector<64xf32>
    %75 = vector.shape_cast %74 : vector<64xf32> to vector<1x64xf32>
    %76 = vector.shape_cast %75 : vector<1x64xf32> to vector<1x1x64xf32>
    %c0_46 = arith.constant 0 : index
    %c0_47 = arith.constant 0 : index
    %c0_48 = arith.constant 0 : index
    %77 = vector.load %arg11[%c0_46, %c0_47, %c0_48] : memref<1x1x64xf32, #tpu.memory_space<vmem>>, vector<1x1x64xf32>
    tpu.vector_store %arg11[%c0_46, %c0_47, %c0_48], %76 {strides = array<i32>} : memref<1x1x64xf32, #tpu.memory_space<vmem>>, vector<1x1x64xf32>,
    %78 = arith.mulf %73, %69 : vector<16x64xf32>
    %cst_49 = arith.constant dense<0.000000e+00> : vector<64xf32>
    %79 = vector.multi_reduction <add>, %78, %cst_49 [0] : vector<16x64xf32> to vector<64xf32>
    %80 = vector.shape_cast %79 : vector<64xf32> to vector<1x64xf32>
    %81 = vector.shape_cast %80 : vector<1x64xf32> to vector<1x1x64xf32>
    %c0_50 = arith.constant 0 : index
    %c0_51 = arith.constant 0 : index
    %c0_52 = arith.constant 0 : index
    %82 = vector.load %arg12[%c0_50, %c0_51, %c0_52] : memref<1x1x64xf32, #tpu.memory_space<vmem>>, vector<1x1x64xf32>
    tpu.vector_store %arg12[%c0_50, %c0_51, %c0_52], %81 {strides = array<i32>} : memref<1x1x64xf32, #tpu.memory_space<vmem>>, vector<1x1x64xf32>,
    return
  }
  func.func @transform_0(%arg0: i32) -> (i32, i32, i32) {
    %c0_i32 = arith.constant 0 : i32
    %c0_i32_0 = arith.constant 0 : i32
    %c0_i32_1 = arith.constant 0 : i32
    return %arg0, %c0_i32, %c0_i32_0 : i32, i32, i32
  }
  func.func @transform_1(%arg0: i32) -> (i32, i32, i32) {
    %c0_i32 = arith.constant 0 : i32
    %c0_i32_0 = arith.constant 0 : i32
    %c0_i32_1 = arith.constant 0 : i32
    return %arg0, %c0_i32, %c0_i32_0 : i32, i32, i32
  }
  func.func @transform_2(%arg0: i32) -> (i32, i32) {
    %c0_i32 = arith.constant 0 : i32
    %c0_i32_0 = arith.constant 0 : i32
    %c0_i32_1 = arith.constant 0 : i32
    return %c0_i32, %c0_i32_0 : i32, i32
  }
  func.func @transform_3(%arg0: i32) -> (i32, i32) {
    %c0_i32 = arith.constant 0 : i32
    %c0_i32_0 = arith.constant 0 : i32
    %c0_i32_1 = arith.constant 0 : i32
    return %c0_i32, %c0_i32_0 : i32, i32
  }
  func.func @transform_4(%arg0: i32) -> (i32, i32) {
    %c0_i32 = arith.constant 0 : i32
    %c0_i32_0 = arith.constant 0 : i32
    %c0_i32_1 = arith.constant 0 : i32
    return %c0_i32, %c0_i32_0 : i32, i32
  }
  func.func @transform_5(%arg0: i32) -> (i32, i32) {
    %c0_i32 = arith.constant 0 : i32
    %c0_i32_0 = arith.constant 0 : i32
    %c0_i32_1 = arith.constant 0 : i32
    return %c0_i32, %c0_i32_0 : i32, i32
  }
  func.func @transform_6(%arg0: i32) -> (i32, i32) {
    %c0_i32 = arith.constant 0 : i32
    %c0_i32_0 = arith.constant 0 : i32
    %c0_i32_1 = arith.constant 0 : i32
    return %c0_i32, %c0_i32_0 : i32, i32
  }
  func.func @transform_7(%arg0: i32) -> (i32, i32) {
    %c0_i32 = arith.constant 0 : i32
    %c0_i32_0 = arith.constant 0 : i32
    %c0_i32_1 = arith.constant 0 : i32
    return %c0_i32, %c0_i32_0 : i32, i32
  }
  func.func @transform_8(%arg0: i32) -> (i32, i32) {
    %c0_i32 = arith.constant 0 : i32
    %c0_i32_0 = arith.constant 0 : i32
    %c0_i32_1 = arith.constant 0 : i32
    return %c0_i32, %c0_i32_0 : i32, i32
  }
  func.func @transform_9(%arg0: i32) -> (i32, i32, i32) {
    %c0_i32 = arith.constant 0 : i32
    %c0_i32_0 = arith.constant 0 : i32
    %c0_i32_1 = arith.constant 0 : i32
    return %arg0, %c0_i32, %c0_i32_0 : i32, i32, i32
  }
  func.func @transform_10(%arg0: i32) -> (i32, i32, i32) {
    %c0_i32 = arith.constant 0 : i32
    %c0_i32_0 = arith.constant 0 : i32
    %c0_i32_1 = arith.constant 0 : i32
    return %arg0, %c0_i32, %c0_i32_0 : i32, i32, i32
  }
  func.func @transform_11(%arg0: i32) -> (i32, i32, i32) {
    %c0_i32 = arith.constant 0 : i32
    %c0_i32_0 = arith.constant 0 : i32
    %c0_i32_1 = arith.constant 0 : i32
    return %arg0, %c0_i32, %c0_i32_0 : i32, i32, i32
  }
}

module attributes {stable_mosaic.version = 11 : i64} {
  func.func @_ln_ffn_kernel(%arg0: i32, %arg1: memref<32x64xf32, #tpu.memory_space<vmem>>, %arg2: memref<32x1xf32, #tpu.memory_space<vmem>>, %arg3: memref<1x64xf32, #tpu.memory_space<vmem>>, %arg4: memref<1x64xf32, #tpu.memory_space<vmem>>, %arg5: memref<1x64xf32, #tpu.memory_space<vmem>>, %arg6: memref<1x64xf32, #tpu.memory_space<vmem>>, %arg7: memref<64x256xbf16, #tpu.memory_space<vmem>>, %arg8: memref<1x256xf32, #tpu.memory_space<vmem>>, %arg9: memref<256x64xbf16, #tpu.memory_space<vmem>>, %arg10: memref<1x64xf32, #tpu.memory_space<vmem>>, %arg11: memref<1x64xf32, #tpu.memory_space<vmem>>, %arg12: memref<1x64xf32, #tpu.memory_space<vmem>>, %arg13: memref<32x64xf32, #tpu.memory_space<vmem>>) attributes {dimension_semantics = [#tpu.dimension_semantics<parallel>], iteration_bounds = array<i64: 1>, scalar_prefetch = 0 : i64, scratch_operands = 0 : i64, tpu.core_type = #tpu.core_type<tc>, window_params = [{transform_indices = @transform_0, window_bounds = array<i64: 32, 64>}, {transform_indices = @transform_1, window_bounds = array<i64: 32, 1>}, {pipeline_mode = #tpu.pipeline_mode<synchronous>, transform_indices = @transform_2, window_bounds = array<i64: 1, 64>}, {pipeline_mode = #tpu.pipeline_mode<synchronous>, transform_indices = @transform_3, window_bounds = array<i64: 1, 64>}, {pipeline_mode = #tpu.pipeline_mode<synchronous>, transform_indices = @transform_4, window_bounds = array<i64: 1, 64>}, {pipeline_mode = #tpu.pipeline_mode<synchronous>, transform_indices = @transform_5, window_bounds = array<i64: 1, 64>}, {pipeline_mode = #tpu.pipeline_mode<synchronous>, transform_indices = @transform_6, window_bounds = array<i64: 64, 256>}, {pipeline_mode = #tpu.pipeline_mode<synchronous>, transform_indices = @transform_7, window_bounds = array<i64: 1, 256>}, {pipeline_mode = #tpu.pipeline_mode<synchronous>, transform_indices = @transform_8, window_bounds = array<i64: 256, 64>}, {pipeline_mode = #tpu.pipeline_mode<synchronous>, transform_indices = @transform_9, window_bounds = array<i64: 1, 64>}, {pipeline_mode = #tpu.pipeline_mode<synchronous>, transform_indices = @transform_10, window_bounds = array<i64: 1, 64>}, {pipeline_mode = #tpu.pipeline_mode<synchronous>, transform_indices = @transform_11, window_bounds = array<i64: 1, 64>}, {transform_indices = @transform_12, window_bounds = array<i64: 32, 64>}]} {
    %c0 = arith.constant 0 : index
    %c0_0 = arith.constant 0 : index
    %0 = vector.load %arg1[%c0, %c0_0] : memref<32x64xf32, #tpu.memory_space<vmem>>, vector<32x64xf32>
    %cst = arith.constant dense<0.000000e+00> : vector<32xf32>
    %1 = vector.multi_reduction <add>, %0, %cst [1] : vector<32x64xf32> to vector<32xf32>
    %2 = vector.shape_cast %1 : vector<32xf32> to vector<32x1xf32>
    %cst_1 = arith.constant 6.400000e+01 : f32
    %3 = vector.broadcast %cst_1 : f32 to vector<32x1xf32>
    %4 = arith.divf %2, %3 : vector<32x1xf32>
    %5 = vector.broadcast %4 : vector<32x1xf32> to vector<32x64xf32>
    %6 = arith.subf %0, %5 : vector<32x64xf32>
    %7 = arith.mulf %6, %6 : vector<32x64xf32>
    %cst_2 = arith.constant dense<0.000000e+00> : vector<32xf32>
    %8 = vector.multi_reduction <add>, %7, %cst_2 [1] : vector<32x64xf32> to vector<32xf32>
    %9 = vector.shape_cast %8 : vector<32xf32> to vector<32x1xf32>
    %cst_3 = arith.constant 6.400000e+01 : f32
    %10 = vector.broadcast %cst_3 : f32 to vector<32x1xf32>
    %11 = arith.divf %9, %10 : vector<32x1xf32>
    %12 = vector.broadcast %4 : vector<32x1xf32> to vector<32x64xf32>
    %13 = arith.subf %0, %12 : vector<32x64xf32>
    %cst_4 = arith.constant 9.99999974E-6 : f32
    %14 = vector.broadcast %cst_4 : f32 to vector<32x1xf32>
    %15 = arith.addf %11, %14 : vector<32x1xf32>
    %16 = math.rsqrt %15 : vector<32x1xf32>
    %17 = vector.broadcast %16 : vector<32x1xf32> to vector<32x64xf32>
    %18 = arith.mulf %13, %17 : vector<32x64xf32>
    %c0_5 = arith.constant 0 : index
    %c0_6 = arith.constant 0 : index
    %19 = vector.load %arg3[%c0_5, %c0_6] : memref<1x64xf32, #tpu.memory_space<vmem>>, vector<1x64xf32>
    %20 = vector.broadcast %19 : vector<1x64xf32> to vector<32x64xf32>
    %21 = arith.mulf %18, %20 : vector<32x64xf32>
    %c0_7 = arith.constant 0 : index
    %c0_8 = arith.constant 0 : index
    %22 = vector.load %arg4[%c0_7, %c0_8] : memref<1x64xf32, #tpu.memory_space<vmem>>, vector<1x64xf32>
    %23 = vector.broadcast %22 : vector<1x64xf32> to vector<32x64xf32>
    %24 = arith.addf %21, %23 : vector<32x64xf32>
    %c0_9 = arith.constant 0 : index
    %c0_10 = arith.constant 0 : index
    %25 = vector.load %arg5[%c0_9, %c0_10] : memref<1x64xf32, #tpu.memory_space<vmem>>, vector<1x64xf32>
    %26 = vector.broadcast %25 : vector<1x64xf32> to vector<32x64xf32>
    %27 = arith.mulf %24, %26 : vector<32x64xf32>
    %c0_11 = arith.constant 0 : index
    %c0_12 = arith.constant 0 : index
    %28 = vector.load %arg6[%c0_11, %c0_12] : memref<1x64xf32, #tpu.memory_space<vmem>>, vector<1x64xf32>
    %29 = vector.broadcast %28 : vector<1x64xf32> to vector<32x64xf32>
    %30 = arith.addf %27, %29 : vector<32x64xf32>
    %31 = arith.truncf %30 : vector<32x64xf32> to vector<32x64xbf16>
    %c0_13 = arith.constant 0 : index
    %c0_14 = arith.constant 0 : index
    %32 = vector.load %arg7[%c0_13, %c0_14] : memref<64x256xbf16, #tpu.memory_space<vmem>>, vector<64x256xbf16>
    %cst_15 = arith.constant dense<0.000000e+00> : vector<32x256xf32>
    %33 = tpu.matmul %31, %32, %cst_15 {dimension_numbers = #tpu.dot_dimension_numbers<[1], [0], [0], [1], [0, 0, 1, 1], [], []>} : vector<32x64xbf16>, vector<64x256xbf16>, vector<32x256xf32> -> vector<32x256xf32>
    %c0_16 = arith.constant 0 : index
    %c0_17 = arith.constant 0 : index
    %34 = vector.load %arg8[%c0_16, %c0_17] : memref<1x256xf32, #tpu.memory_space<vmem>>, vector<1x256xf32>
    %35 = vector.broadcast %34 : vector<1x256xf32> to vector<32x256xf32>
    %36 = arith.addf %33, %35 : vector<32x256xf32>
    %37 = arith.negf %36 : vector<32x256xf32>
    %38 = math.exp %37 : vector<32x256xf32>
    %cst_18 = arith.constant 1.000000e+00 : f32
    %39 = vector.broadcast %cst_18 : f32 to vector<32x256xf32>
    %40 = arith.addf %39, %38 : vector<32x256xf32>
    %41 = arith.divf %39, %40 : vector<32x256xf32>
    %42 = arith.mulf %36, %41 : vector<32x256xf32>
    %43 = arith.truncf %42 : vector<32x256xf32> to vector<32x256xbf16>
    %c0_19 = arith.constant 0 : index
    %c0_20 = arith.constant 0 : index
    %44 = vector.load %arg9[%c0_19, %c0_20] : memref<256x64xbf16, #tpu.memory_space<vmem>>, vector<256x64xbf16>
    %cst_21 = arith.constant dense<0.000000e+00> : vector<32x64xf32>
    %45 = tpu.matmul %43, %44, %cst_21 {dimension_numbers = #tpu.dot_dimension_numbers<[1], [0], [0], [1], [0, 0, 1, 1], [], []>} : vector<32x256xbf16>, vector<256x64xbf16>, vector<32x64xf32> -> vector<32x64xf32>
    %c0_22 = arith.constant 0 : index
    %c0_23 = arith.constant 0 : index
    %46 = vector.load %arg10[%c0_22, %c0_23] : memref<1x64xf32, #tpu.memory_space<vmem>>, vector<1x64xf32>
    %47 = vector.broadcast %46 : vector<1x64xf32> to vector<32x64xf32>
    %48 = arith.addf %45, %47 : vector<32x64xf32>
    %49 = arith.addf %24, %48 : vector<32x64xf32>
    %cst_24 = arith.constant dense<0.000000e+00> : vector<32xf32>
    %50 = vector.multi_reduction <add>, %49, %cst_24 [1] : vector<32x64xf32> to vector<32xf32>
    %51 = vector.shape_cast %50 : vector<32xf32> to vector<32x1xf32>
    %cst_25 = arith.constant 6.400000e+01 : f32
    %52 = vector.broadcast %cst_25 : f32 to vector<32x1xf32>
    %53 = arith.divf %51, %52 : vector<32x1xf32>
    %54 = vector.broadcast %53 : vector<32x1xf32> to vector<32x64xf32>
    %55 = arith.subf %49, %54 : vector<32x64xf32>
    %56 = arith.mulf %55, %55 : vector<32x64xf32>
    %cst_26 = arith.constant dense<0.000000e+00> : vector<32xf32>
    %57 = vector.multi_reduction <add>, %56, %cst_26 [1] : vector<32x64xf32> to vector<32xf32>
    %58 = vector.shape_cast %57 : vector<32xf32> to vector<32x1xf32>
    %cst_27 = arith.constant 6.400000e+01 : f32
    %59 = vector.broadcast %cst_27 : f32 to vector<32x1xf32>
    %60 = arith.divf %58, %59 : vector<32x1xf32>
    %61 = vector.broadcast %53 : vector<32x1xf32> to vector<32x64xf32>
    %62 = arith.subf %49, %61 : vector<32x64xf32>
    %cst_28 = arith.constant 9.99999974E-6 : f32
    %63 = vector.broadcast %cst_28 : f32 to vector<32x1xf32>
    %64 = arith.addf %60, %63 : vector<32x1xf32>
    %65 = math.rsqrt %64 : vector<32x1xf32>
    %66 = vector.broadcast %65 : vector<32x1xf32> to vector<32x64xf32>
    %67 = arith.mulf %62, %66 : vector<32x64xf32>
    %c0_29 = arith.constant 0 : index
    %c0_30 = arith.constant 0 : index
    %68 = vector.load %arg11[%c0_29, %c0_30] : memref<1x64xf32, #tpu.memory_space<vmem>>, vector<1x64xf32>
    %69 = vector.broadcast %68 : vector<1x64xf32> to vector<32x64xf32>
    %70 = arith.mulf %67, %69 : vector<32x64xf32>
    %c0_31 = arith.constant 0 : index
    %c0_32 = arith.constant 0 : index
    %71 = vector.load %arg12[%c0_31, %c0_32] : memref<1x64xf32, #tpu.memory_space<vmem>>, vector<1x64xf32>
    %72 = vector.broadcast %71 : vector<1x64xf32> to vector<32x64xf32>
    %73 = arith.addf %70, %72 : vector<32x64xf32>
    %c0_33 = arith.constant 0 : index
    %c0_34 = arith.constant 0 : index
    %74 = vector.load %arg2[%c0_33, %c0_34] : memref<32x1xf32, #tpu.memory_space<vmem>>, vector<32x1xf32>
    %cst_35 = arith.constant 5.000000e-01 : f32
    %75 = vector.broadcast %cst_35 : f32 to vector<32x1xf32>
    %76 = arith.cmpf ogt, %74, %75 : vector<32x1xf32>
    %77 = vector.shape_cast %76 : vector<32x1xi1> to vector<32x1xi1>
    %78 = vector.broadcast %77 : vector<32x1xi1> to vector<32x64xi1>
    %79 = arith.select %78, %73, %0 : vector<32x64xi1>, vector<32x64xf32>
    %c0_36 = arith.constant 0 : index
    %c0_37 = arith.constant 0 : index
    %80 = vector.load %arg13[%c0_36, %c0_37] : memref<32x64xf32, #tpu.memory_space<vmem>>, vector<32x64xf32>
    tpu.vector_store %arg13[%c0_36, %c0_37], %79 {strides = array<i32>} : memref<32x64xf32, #tpu.memory_space<vmem>>, vector<32x64xf32>,
    return
  }
  func.func @transform_0(%arg0: i32) -> (i32, i32) {
    %c0_i32 = arith.constant 0 : i32
    %c0_i32_0 = arith.constant 0 : i32
    return %arg0, %c0_i32 : i32, i32
  }
  func.func @transform_1(%arg0: i32) -> (i32, i32) {
    %c0_i32 = arith.constant 0 : i32
    %c0_i32_0 = arith.constant 0 : i32
    return %arg0, %c0_i32 : i32, i32
  }
  func.func @transform_2(%arg0: i32) -> (i32, i32) {
    %c0_i32 = arith.constant 0 : i32
    %c0_i32_0 = arith.constant 0 : i32
    %c0_i32_1 = arith.constant 0 : i32
    return %c0_i32, %c0_i32_0 : i32, i32
  }
  func.func @transform_3(%arg0: i32) -> (i32, i32) {
    %c0_i32 = arith.constant 0 : i32
    %c0_i32_0 = arith.constant 0 : i32
    %c0_i32_1 = arith.constant 0 : i32
    return %c0_i32, %c0_i32_0 : i32, i32
  }
  func.func @transform_4(%arg0: i32) -> (i32, i32) {
    %c0_i32 = arith.constant 0 : i32
    %c0_i32_0 = arith.constant 0 : i32
    %c0_i32_1 = arith.constant 0 : i32
    return %c0_i32, %c0_i32_0 : i32, i32
  }
  func.func @transform_5(%arg0: i32) -> (i32, i32) {
    %c0_i32 = arith.constant 0 : i32
    %c0_i32_0 = arith.constant 0 : i32
    %c0_i32_1 = arith.constant 0 : i32
    return %c0_i32, %c0_i32_0 : i32, i32
  }
  func.func @transform_6(%arg0: i32) -> (i32, i32) {
    %c0_i32 = arith.constant 0 : i32
    %c0_i32_0 = arith.constant 0 : i32
    %c0_i32_1 = arith.constant 0 : i32
    return %c0_i32, %c0_i32_0 : i32, i32
  }
  func.func @transform_7(%arg0: i32) -> (i32, i32) {
    %c0_i32 = arith.constant 0 : i32
    %c0_i32_0 = arith.constant 0 : i32
    %c0_i32_1 = arith.constant 0 : i32
    return %c0_i32, %c0_i32_0 : i32, i32
  }
  func.func @transform_8(%arg0: i32) -> (i32, i32) {
    %c0_i32 = arith.constant 0 : i32
    %c0_i32_0 = arith.constant 0 : i32
    %c0_i32_1 = arith.constant 0 : i32
    return %c0_i32, %c0_i32_0 : i32, i32
  }
  func.func @transform_9(%arg0: i32) -> (i32, i32) {
    %c0_i32 = arith.constant 0 : i32
    %c0_i32_0 = arith.constant 0 : i32
    %c0_i32_1 = arith.constant 0 : i32
    return %c0_i32, %c0_i32_0 : i32, i32
  }
  func.func @transform_10(%arg0: i32) -> (i32, i32) {
    %c0_i32 = arith.constant 0 : i32
    %c0_i32_0 = arith.constant 0 : i32
    %c0_i32_1 = arith.constant 0 : i32
    return %c0_i32, %c0_i32_0 : i32, i32
  }
  func.func @transform_11(%arg0: i32) -> (i32, i32) {
    %c0_i32 = arith.constant 0 : i32
    %c0_i32_0 = arith.constant 0 : i32
    %c0_i32_1 = arith.constant 0 : i32
    return %c0_i32, %c0_i32_0 : i32, i32
  }
  func.func @transform_12(%arg0: i32) -> (i32, i32) {
    %c0_i32 = arith.constant 0 : i32
    %c0_i32_0 = arith.constant 0 : i32
    return %arg0, %c0_i32 : i32, i32
  }
}

module attributes {stable_mosaic.version = 11 : i64} {
  func.func @_conv_back_kernel(%arg0: i32, %arg1: memref<32x64xf32, #tpu.memory_space<vmem>>, %arg2: memref<32x64xf32, #tpu.memory_space<vmem>>, %arg3: memref<32x1xf32, #tpu.memory_space<vmem>>, %arg4: memref<1x64xf32, #tpu.memory_space<vmem>>, %arg5: memref<1x64xf32, #tpu.memory_space<vmem>>, %arg6: memref<1x64xf32, #tpu.memory_space<vmem>>, %arg7: memref<1x64xf32, #tpu.memory_space<vmem>>, %arg8: memref<64x64xbf16, #tpu.memory_space<vmem>>, %arg9: memref<1x64xf32, #tpu.memory_space<vmem>>, %arg10: memref<32x64xf32, #tpu.memory_space<vmem>>) attributes {dimension_semantics = [#tpu.dimension_semantics<parallel>], iteration_bounds = array<i64: 1>, scalar_prefetch = 0 : i64, scratch_operands = 0 : i64, tpu.core_type = #tpu.core_type<tc>, window_params = [{transform_indices = @transform_0, window_bounds = array<i64: 32, 64>}, {transform_indices = @transform_1, window_bounds = array<i64: 32, 64>}, {transform_indices = @transform_2, window_bounds = array<i64: 32, 1>}, {pipeline_mode = #tpu.pipeline_mode<synchronous>, transform_indices = @transform_3, window_bounds = array<i64: 1, 64>}, {pipeline_mode = #tpu.pipeline_mode<synchronous>, transform_indices = @transform_4, window_bounds = array<i64: 1, 64>}, {pipeline_mode = #tpu.pipeline_mode<synchronous>, transform_indices = @transform_5, window_bounds = array<i64: 1, 64>}, {pipeline_mode = #tpu.pipeline_mode<synchronous>, transform_indices = @transform_6, window_bounds = array<i64: 1, 64>}, {pipeline_mode = #tpu.pipeline_mode<synchronous>, transform_indices = @transform_7, window_bounds = array<i64: 64, 64>}, {pipeline_mode = #tpu.pipeline_mode<synchronous>, transform_indices = @transform_8, window_bounds = array<i64: 1, 64>}, {transform_indices = @transform_9, window_bounds = array<i64: 32, 64>}]} {
    %c0 = arith.constant 0 : index
    %c0_0 = arith.constant 0 : index
    %0 = vector.load %arg5[%c0, %c0_0] : memref<1x64xf32, #tpu.memory_space<vmem>>, vector<1x64xf32>
    %cst = arith.constant 9.99999974E-6 : f32
    %1 = vector.broadcast %cst : f32 to vector<1x64xf32>
    %2 = arith.addf %0, %1 : vector<1x64xf32>
    %3 = math.rsqrt %2 : vector<1x64xf32>
    %c0_1 = arith.constant 0 : index
    %c0_2 = arith.constant 0 : index
    %4 = vector.load %arg2[%c0_1, %c0_2] : memref<32x64xf32, #tpu.memory_space<vmem>>, vector<32x64xf32>
    %c0_3 = arith.constant 0 : index
    %c0_4 = arith.constant 0 : index
    %5 = vector.load %arg4[%c0_3, %c0_4] : memref<1x64xf32, #tpu.memory_space<vmem>>, vector<1x64xf32>
    %6 = vector.broadcast %5 : vector<1x64xf32> to vector<32x64xf32>
    %7 = arith.subf %4, %6 : vector<32x64xf32>
    %8 = vector.broadcast %3 : vector<1x64xf32> to vector<32x64xf32>
    %9 = arith.mulf %7, %8 : vector<32x64xf32>
    %c0_5 = arith.constant 0 : index
    %c0_6 = arith.constant 0 : index
    %10 = vector.load %arg6[%c0_5, %c0_6] : memref<1x64xf32, #tpu.memory_space<vmem>>, vector<1x64xf32>
    %11 = vector.broadcast %10 : vector<1x64xf32> to vector<32x64xf32>
    %12 = arith.mulf %9, %11 : vector<32x64xf32>
    %c0_7 = arith.constant 0 : index
    %c0_8 = arith.constant 0 : index
    %13 = vector.load %arg7[%c0_7, %c0_8] : memref<1x64xf32, #tpu.memory_space<vmem>>, vector<1x64xf32>
    %14 = vector.broadcast %13 : vector<1x64xf32> to vector<32x64xf32>
    %15 = arith.addf %12, %14 : vector<32x64xf32>
    %16 = arith.negf %15 : vector<32x64xf32>
    %17 = math.exp %16 : vector<32x64xf32>
    %cst_9 = arith.constant 1.000000e+00 : f32
    %18 = vector.broadcast %cst_9 : f32 to vector<32x64xf32>
    %19 = arith.addf %18, %17 : vector<32x64xf32>
    %20 = arith.divf %18, %19 : vector<32x64xf32>
    %21 = arith.mulf %15, %20 : vector<32x64xf32>
    %22 = arith.truncf %21 : vector<32x64xf32> to vector<32x64xbf16>
    %c0_10 = arith.constant 0 : index
    %c0_11 = arith.constant 0 : index
    %23 = vector.load %arg8[%c0_10, %c0_11] : memref<64x64xbf16, #tpu.memory_space<vmem>>, vector<64x64xbf16>
    %cst_12 = arith.constant dense<0.000000e+00> : vector<32x64xf32>
    %24 = tpu.matmul %22, %23, %cst_12 {dimension_numbers = #tpu.dot_dimension_numbers<[1], [0], [0], [1], [0, 0, 1, 1], [], []>} : vector<32x64xbf16>, vector<64x64xbf16>, vector<32x64xf32> -> vector<32x64xf32>
    %c0_13 = arith.constant 0 : index
    %c0_14 = arith.constant 0 : index
    %25 = vector.load %arg9[%c0_13, %c0_14] : memref<1x64xf32, #tpu.memory_space<vmem>>, vector<1x64xf32>
    %26 = vector.broadcast %25 : vector<1x64xf32> to vector<32x64xf32>
    %27 = arith.addf %24, %26 : vector<32x64xf32>
    %c0_15 = arith.constant 0 : index
    %c0_16 = arith.constant 0 : index
    %28 = vector.load %arg1[%c0_15, %c0_16] : memref<32x64xf32, #tpu.memory_space<vmem>>, vector<32x64xf32>
    %c0_17 = arith.constant 0 : index
    %c0_18 = arith.constant 0 : index
    %29 = vector.load %arg3[%c0_17, %c0_18] : memref<32x1xf32, #tpu.memory_space<vmem>>, vector<32x1xf32>
    %30 = vector.broadcast %29 : vector<32x1xf32> to vector<32x64xf32>
    %31 = arith.mulf %27, %30 : vector<32x64xf32>
    %32 = arith.addf %28, %31 : vector<32x64xf32>
    %c0_19 = arith.constant 0 : index
    %c0_20 = arith.constant 0 : index
    %33 = vector.load %arg10[%c0_19, %c0_20] : memref<32x64xf32, #tpu.memory_space<vmem>>, vector<32x64xf32>
    tpu.vector_store %arg10[%c0_19, %c0_20], %32 {strides = array<i32>} : memref<32x64xf32, #tpu.memory_space<vmem>>, vector<32x64xf32>,
    return
  }
  func.func @transform_0(%arg0: i32) -> (i32, i32) {
    %c0_i32 = arith.constant 0 : i32
    %c0_i32_0 = arith.constant 0 : i32
    return %arg0, %c0_i32 : i32, i32
  }
  func.func @transform_1(%arg0: i32) -> (i32, i32) {
    %c0_i32 = arith.constant 0 : i32
    %c0_i32_0 = arith.constant 0 : i32
    return %arg0, %c0_i32 : i32, i32
  }
  func.func @transform_2(%arg0: i32) -> (i32, i32) {
    %c0_i32 = arith.constant 0 : i32
    %c0_i32_0 = arith.constant 0 : i32
    return %arg0, %c0_i32 : i32, i32
  }
  func.func @transform_3(%arg0: i32) -> (i32, i32) {
    %c0_i32 = arith.constant 0 : i32
    %c0_i32_0 = arith.constant 0 : i32
    %c0_i32_1 = arith.constant 0 : i32
    return %c0_i32, %c0_i32_0 : i32, i32
  }
  func.func @transform_4(%arg0: i32) -> (i32, i32) {
    %c0_i32 = arith.constant 0 : i32
    %c0_i32_0 = arith.constant 0 : i32
    %c0_i32_1 = arith.constant 0 : i32
    return %c0_i32, %c0_i32_0 : i32, i32
  }
  func.func @transform_5(%arg0: i32) -> (i32, i32) {
    %c0_i32 = arith.constant 0 : i32
    %c0_i32_0 = arith.constant 0 : i32
    %c0_i32_1 = arith.constant 0 : i32
    return %c0_i32, %c0_i32_0 : i32, i32
  }
  func.func @transform_6(%arg0: i32) -> (i32, i32) {
    %c0_i32 = arith.constant 0 : i32
    %c0_i32_0 = arith.constant 0 : i32
    %c0_i32_1 = arith.constant 0 : i32
    return %c0_i32, %c0_i32_0 : i32, i32
  }
  func.func @transform_7(%arg0: i32) -> (i32, i32) {
    %c0_i32 = arith.constant 0 : i32
    %c0_i32_0 = arith.constant 0 : i32
    %c0_i32_1 = arith.constant 0 : i32
    return %c0_i32, %c0_i32_0 : i32, i32
  }
  func.func @transform_8(%arg0: i32) -> (i32, i32) {
    %c0_i32 = arith.constant 0 : i32
    %c0_i32_0 = arith.constant 0 : i32
    %c0_i32_1 = arith.constant 0 : i32
    return %c0_i32, %c0_i32_0 : i32, i32
  }
  func.func @transform_9(%arg0: i32) -> (i32, i32) {
    %c0_i32 = arith.constant 0 : i32
    %c0_i32_0 = arith.constant 0 : i32
    return %arg0, %c0_i32 : i32, i32
  }
}

module attributes {stable_mosaic.version = 11 : i64} {
  func.func @_ln_ffn_kernel(%arg0: i32, %arg1: memref<32x64xf32, #tpu.memory_space<vmem>>, %arg2: memref<32x1xf32, #tpu.memory_space<vmem>>, %arg3: memref<1x64xf32, #tpu.memory_space<vmem>>, %arg4: memref<1x64xf32, #tpu.memory_space<vmem>>, %arg5: memref<1x64xf32, #tpu.memory_space<vmem>>, %arg6: memref<1x64xf32, #tpu.memory_space<vmem>>, %arg7: memref<64x256xbf16, #tpu.memory_space<vmem>>, %arg8: memref<1x256xf32, #tpu.memory_space<vmem>>, %arg9: memref<256x64xbf16, #tpu.memory_space<vmem>>, %arg10: memref<1x64xf32, #tpu.memory_space<vmem>>, %arg11: memref<1x64xf32, #tpu.memory_space<vmem>>, %arg12: memref<1x64xf32, #tpu.memory_space<vmem>>, %arg13: memref<32x64xf32, #tpu.memory_space<vmem>>) attributes {dimension_semantics = [#tpu.dimension_semantics<parallel>], iteration_bounds = array<i64: 1>, scalar_prefetch = 0 : i64, scratch_operands = 0 : i64, tpu.core_type = #tpu.core_type<tc>, window_params = [{transform_indices = @transform_0, window_bounds = array<i64: 32, 64>}, {transform_indices = @transform_1, window_bounds = array<i64: 32, 1>}, {pipeline_mode = #tpu.pipeline_mode<synchronous>, transform_indices = @transform_2, window_bounds = array<i64: 1, 64>}, {pipeline_mode = #tpu.pipeline_mode<synchronous>, transform_indices = @transform_3, window_bounds = array<i64: 1, 64>}, {pipeline_mode = #tpu.pipeline_mode<synchronous>, transform_indices = @transform_4, window_bounds = array<i64: 1, 64>}, {pipeline_mode = #tpu.pipeline_mode<synchronous>, transform_indices = @transform_5, window_bounds = array<i64: 1, 64>}, {pipeline_mode = #tpu.pipeline_mode<synchronous>, transform_indices = @transform_6, window_bounds = array<i64: 64, 256>}, {pipeline_mode = #tpu.pipeline_mode<synchronous>, transform_indices = @transform_7, window_bounds = array<i64: 1, 256>}, {pipeline_mode = #tpu.pipeline_mode<synchronous>, transform_indices = @transform_8, window_bounds = array<i64: 256, 64>}, {pipeline_mode = #tpu.pipeline_mode<synchronous>, transform_indices = @transform_9, window_bounds = array<i64: 1, 64>}, {pipeline_mode = #tpu.pipeline_mode<synchronous>, transform_indices = @transform_10, window_bounds = array<i64: 1, 64>}, {pipeline_mode = #tpu.pipeline_mode<synchronous>, transform_indices = @transform_11, window_bounds = array<i64: 1, 64>}, {transform_indices = @transform_12, window_bounds = array<i64: 32, 64>}]} {
    %c0 = arith.constant 0 : index
    %c0_0 = arith.constant 0 : index
    %0 = vector.load %arg1[%c0, %c0_0] : memref<32x64xf32, #tpu.memory_space<vmem>>, vector<32x64xf32>
    %cst = arith.constant dense<0.000000e+00> : vector<32xf32>
    %1 = vector.multi_reduction <add>, %0, %cst [1] : vector<32x64xf32> to vector<32xf32>
    %2 = vector.shape_cast %1 : vector<32xf32> to vector<32x1xf32>
    %cst_1 = arith.constant 6.400000e+01 : f32
    %3 = vector.broadcast %cst_1 : f32 to vector<32x1xf32>
    %4 = arith.divf %2, %3 : vector<32x1xf32>
    %5 = vector.broadcast %4 : vector<32x1xf32> to vector<32x64xf32>
    %6 = arith.subf %0, %5 : vector<32x64xf32>
    %7 = arith.mulf %6, %6 : vector<32x64xf32>
    %cst_2 = arith.constant dense<0.000000e+00> : vector<32xf32>
    %8 = vector.multi_reduction <add>, %7, %cst_2 [1] : vector<32x64xf32> to vector<32xf32>
    %9 = vector.shape_cast %8 : vector<32xf32> to vector<32x1xf32>
    %cst_3 = arith.constant 6.400000e+01 : f32
    %10 = vector.broadcast %cst_3 : f32 to vector<32x1xf32>
    %11 = arith.divf %9, %10 : vector<32x1xf32>
    %12 = vector.broadcast %4 : vector<32x1xf32> to vector<32x64xf32>
    %13 = arith.subf %0, %12 : vector<32x64xf32>
    %cst_4 = arith.constant 9.99999974E-6 : f32
    %14 = vector.broadcast %cst_4 : f32 to vector<32x1xf32>
    %15 = arith.addf %11, %14 : vector<32x1xf32>
    %16 = math.rsqrt %15 : vector<32x1xf32>
    %17 = vector.broadcast %16 : vector<32x1xf32> to vector<32x64xf32>
    %18 = arith.mulf %13, %17 : vector<32x64xf32>
    %c0_5 = arith.constant 0 : index
    %c0_6 = arith.constant 0 : index
    %19 = vector.load %arg3[%c0_5, %c0_6] : memref<1x64xf32, #tpu.memory_space<vmem>>, vector<1x64xf32>
    %20 = vector.broadcast %19 : vector<1x64xf32> to vector<32x64xf32>
    %21 = arith.mulf %18, %20 : vector<32x64xf32>
    %c0_7 = arith.constant 0 : index
    %c0_8 = arith.constant 0 : index
    %22 = vector.load %arg4[%c0_7, %c0_8] : memref<1x64xf32, #tpu.memory_space<vmem>>, vector<1x64xf32>
    %23 = vector.broadcast %22 : vector<1x64xf32> to vector<32x64xf32>
    %24 = arith.addf %21, %23 : vector<32x64xf32>
    %c0_9 = arith.constant 0 : index
    %c0_10 = arith.constant 0 : index
    %25 = vector.load %arg5[%c0_9, %c0_10] : memref<1x64xf32, #tpu.memory_space<vmem>>, vector<1x64xf32>
    %26 = vector.broadcast %25 : vector<1x64xf32> to vector<32x64xf32>
    %27 = arith.mulf %24, %26 : vector<32x64xf32>
    %c0_11 = arith.constant 0 : index
    %c0_12 = arith.constant 0 : index
    %28 = vector.load %arg6[%c0_11, %c0_12] : memref<1x64xf32, #tpu.memory_space<vmem>>, vector<1x64xf32>
    %29 = vector.broadcast %28 : vector<1x64xf32> to vector<32x64xf32>
    %30 = arith.addf %27, %29 : vector<32x64xf32>
    %31 = arith.truncf %30 : vector<32x64xf32> to vector<32x64xbf16>
    %c0_13 = arith.constant 0 : index
    %c0_14 = arith.constant 0 : index
    %32 = vector.load %arg7[%c0_13, %c0_14] : memref<64x256xbf16, #tpu.memory_space<vmem>>, vector<64x256xbf16>
    %cst_15 = arith.constant dense<0.000000e+00> : vector<32x256xf32>
    %33 = tpu.matmul %31, %32, %cst_15 {dimension_numbers = #tpu.dot_dimension_numbers<[1], [0], [0], [1], [0, 0, 1, 1], [], []>} : vector<32x64xbf16>, vector<64x256xbf16>, vector<32x256xf32> -> vector<32x256xf32>
    %c0_16 = arith.constant 0 : index
    %c0_17 = arith.constant 0 : index
    %34 = vector.load %arg8[%c0_16, %c0_17] : memref<1x256xf32, #tpu.memory_space<vmem>>, vector<1x256xf32>
    %35 = vector.broadcast %34 : vector<1x256xf32> to vector<32x256xf32>
    %36 = arith.addf %33, %35 : vector<32x256xf32>
    %37 = arith.negf %36 : vector<32x256xf32>
    %38 = math.exp %37 : vector<32x256xf32>
    %cst_18 = arith.constant 1.000000e+00 : f32
    %39 = vector.broadcast %cst_18 : f32 to vector<32x256xf32>
    %40 = arith.addf %39, %38 : vector<32x256xf32>
    %41 = arith.divf %39, %40 : vector<32x256xf32>
    %42 = arith.mulf %36, %41 : vector<32x256xf32>
    %43 = arith.truncf %42 : vector<32x256xf32> to vector<32x256xbf16>
    %c0_19 = arith.constant 0 : index
    %c0_20 = arith.constant 0 : index
    %44 = vector.load %arg9[%c0_19, %c0_20] : memref<256x64xbf16, #tpu.memory_space<vmem>>, vector<256x64xbf16>
    %cst_21 = arith.constant dense<0.000000e+00> : vector<32x64xf32>
    %45 = tpu.matmul %43, %44, %cst_21 {dimension_numbers = #tpu.dot_dimension_numbers<[1], [0], [0], [1], [0, 0, 1, 1], [], []>} : vector<32x256xbf16>, vector<256x64xbf16>, vector<32x64xf32> -> vector<32x64xf32>
    %c0_22 = arith.constant 0 : index
    %c0_23 = arith.constant 0 : index
    %46 = vector.load %arg10[%c0_22, %c0_23] : memref<1x64xf32, #tpu.memory_space<vmem>>, vector<1x64xf32>
    %47 = vector.broadcast %46 : vector<1x64xf32> to vector<32x64xf32>
    %48 = arith.addf %45, %47 : vector<32x64xf32>
    %49 = arith.addf %24, %48 : vector<32x64xf32>
    %cst_24 = arith.constant dense<0.000000e+00> : vector<32xf32>
    %50 = vector.multi_reduction <add>, %49, %cst_24 [1] : vector<32x64xf32> to vector<32xf32>
    %51 = vector.shape_cast %50 : vector<32xf32> to vector<32x1xf32>
    %cst_25 = arith.constant 6.400000e+01 : f32
    %52 = vector.broadcast %cst_25 : f32 to vector<32x1xf32>
    %53 = arith.divf %51, %52 : vector<32x1xf32>
    %54 = vector.broadcast %53 : vector<32x1xf32> to vector<32x64xf32>
    %55 = arith.subf %49, %54 : vector<32x64xf32>
    %56 = arith.mulf %55, %55 : vector<32x64xf32>
    %cst_26 = arith.constant dense<0.000000e+00> : vector<32xf32>
    %57 = vector.multi_reduction <add>, %56, %cst_26 [1] : vector<32x64xf32> to vector<32xf32>
    %58 = vector.shape_cast %57 : vector<32xf32> to vector<32x1xf32>
    %cst_27 = arith.constant 6.400000e+01 : f32
    %59 = vector.broadcast %cst_27 : f32 to vector<32x1xf32>
    %60 = arith.divf %58, %59 : vector<32x1xf32>
    %61 = vector.broadcast %53 : vector<32x1xf32> to vector<32x64xf32>
    %62 = arith.subf %49, %61 : vector<32x64xf32>
    %cst_28 = arith.constant 9.99999974E-6 : f32
    %63 = vector.broadcast %cst_28 : f32 to vector<32x1xf32>
    %64 = arith.addf %60, %63 : vector<32x1xf32>
    %65 = math.rsqrt %64 : vector<32x1xf32>
    %66 = vector.broadcast %65 : vector<32x1xf32> to vector<32x64xf32>
    %67 = arith.mulf %62, %66 : vector<32x64xf32>
    %c0_29 = arith.constant 0 : index
    %c0_30 = arith.constant 0 : index
    %68 = vector.load %arg11[%c0_29, %c0_30] : memref<1x64xf32, #tpu.memory_space<vmem>>, vector<1x64xf32>
    %69 = vector.broadcast %68 : vector<1x64xf32> to vector<32x64xf32>
    %70 = arith.mulf %67, %69 : vector<32x64xf32>
    %c0_31 = arith.constant 0 : index
    %c0_32 = arith.constant 0 : index
    %71 = vector.load %arg12[%c0_31, %c0_32] : memref<1x64xf32, #tpu.memory_space<vmem>>, vector<1x64xf32>
    %72 = vector.broadcast %71 : vector<1x64xf32> to vector<32x64xf32>
    %73 = arith.addf %70, %72 : vector<32x64xf32>
    %c0_33 = arith.constant 0 : index
    %c0_34 = arith.constant 0 : index
    %74 = vector.load %arg2[%c0_33, %c0_34] : memref<32x1xf32, #tpu.memory_space<vmem>>, vector<32x1xf32>
    %cst_35 = arith.constant 5.000000e-01 : f32
    %75 = vector.broadcast %cst_35 : f32 to vector<32x1xf32>
    %76 = arith.cmpf ogt, %74, %75 : vector<32x1xf32>
    %77 = vector.shape_cast %76 : vector<32x1xi1> to vector<32x1xi1>
    %78 = vector.broadcast %77 : vector<32x1xi1> to vector<32x64xi1>
    %79 = arith.select %78, %73, %0 : vector<32x64xi1>, vector<32x64xf32>
    %c0_36 = arith.constant 0 : index
    %c0_37 = arith.constant 0 : index
    %80 = vector.load %arg13[%c0_36, %c0_37] : memref<32x64xf32, #tpu.memory_space<vmem>>, vector<32x64xf32>
    tpu.vector_store %arg13[%c0_36, %c0_37], %79 {strides = array<i32>} : memref<32x64xf32, #tpu.memory_space<vmem>>, vector<32x64xf32>,
    return
  }
  func.func @transform_0(%arg0: i32) -> (i32, i32) {
    %c0_i32 = arith.constant 0 : i32
    %c0_i32_0 = arith.constant 0 : i32
    return %arg0, %c0_i32 : i32, i32
  }
  func.func @transform_1(%arg0: i32) -> (i32, i32) {
    %c0_i32 = arith.constant 0 : i32
    %c0_i32_0 = arith.constant 0 : i32
    return %arg0, %c0_i32 : i32, i32
  }
  func.func @transform_2(%arg0: i32) -> (i32, i32) {
    %c0_i32 = arith.constant 0 : i32
    %c0_i32_0 = arith.constant 0 : i32
    %c0_i32_1 = arith.constant 0 : i32
    return %c0_i32, %c0_i32_0 : i32, i32
  }
  func.func @transform_3(%arg0: i32) -> (i32, i32) {
    %c0_i32 = arith.constant 0 : i32
    %c0_i32_0 = arith.constant 0 : i32
    %c0_i32_1 = arith.constant 0 : i32
    return %c0_i32, %c0_i32_0 : i32, i32
  }
  func.func @transform_4(%arg0: i32) -> (i32, i32) {
    %c0_i32 = arith.constant 0 : i32
    %c0_i32_0 = arith.constant 0 : i32
    %c0_i32_1 = arith.constant 0 : i32
    return %c0_i32, %c0_i32_0 : i32, i32
  }
  func.func @transform_5(%arg0: i32) -> (i32, i32) {
    %c0_i32 = arith.constant 0 : i32
    %c0_i32_0 = arith.constant 0 : i32
    %c0_i32_1 = arith.constant 0 : i32
    return %c0_i32, %c0_i32_0 : i32, i32
  }
  func.func @transform_6(%arg0: i32) -> (i32, i32) {
    %c0_i32 = arith.constant 0 : i32
    %c0_i32_0 = arith.constant 0 : i32
    %c0_i32_1 = arith.constant 0 : i32
    return %c0_i32, %c0_i32_0 : i32, i32
  }
  func.func @transform_7(%arg0: i32) -> (i32, i32) {
    %c0_i32 = arith.constant 0 : i32
    %c0_i32_0 = arith.constant 0 : i32
    %c0_i32_1 = arith.constant 0 : i32
    return %c0_i32, %c0_i32_0 : i32, i32
  }
  func.func @transform_8(%arg0: i32) -> (i32, i32) {
    %c0_i32 = arith.constant 0 : i32
    %c0_i32_0 = arith.constant 0 : i32
    %c0_i32_1 = arith.constant 0 : i32
    return %c0_i32, %c0_i32_0 : i32, i32
  }
  func.func @transform_9(%arg0: i32) -> (i32, i32) {
    %c0_i32 = arith.constant 0 : i32
    %c0_i32_0 = arith.constant 0 : i32
    %c0_i32_1 = arith.constant 0 : i32
    return %c0_i32, %c0_i32_0 : i32, i32
  }
  func.func @transform_10(%arg0: i32) -> (i32, i32) {
    %c0_i32 = arith.constant 0 : i32
    %c0_i32_0 = arith.constant 0 : i32
    %c0_i32_1 = arith.constant 0 : i32
    return %c0_i32, %c0_i32_0 : i32, i32
  }
  func.func @transform_11(%arg0: i32) -> (i32, i32) {
    %c0_i32 = arith.constant 0 : i32
    %c0_i32_0 = arith.constant 0 : i32
    %c0_i32_1 = arith.constant 0 : i32
    return %c0_i32, %c0_i32_0 : i32, i32
  }
  func.func @transform_12(%arg0: i32) -> (i32, i32) {
    %c0_i32 = arith.constant 0 : i32
    %c0_i32_0 = arith.constant 0 : i32
    return %arg0, %c0_i32 : i32, i32
  }
}

</mosaic_0001>

<llo_original>
// kernel: block_forward.8
$region0: #{block_forward.8}
  #allocation0 [shape = 'u32[]', space=smem, size = 0x4, offset = 0x4, fixed_abs, tag = 'smem constant byte address 0x4 - core index']
  #allocation1 [shape = 'u32[144,128]{1,0:T(1,128)}', space=vmem, size = 0x12000, scoped, tag = 'internal scratch']
  %s0 = inlined_call_operand.vmem [shape: f32[31,64], index: 0, kind: input, shape index: {}]
  %s1 = inlined_call_operand.vmem [shape: bf16[64,64], index: 1, kind: input, shape index: {}]
  %s2 = inlined_call_operand.vmem [shape: f32[31,64], index: 2, kind: output, shape index: {}]
  %s3 = sld [smem:[#allocation0]]
  $region18: #{block_forward.8} parent=0
    _
  %s5 = ssub.s32 1, %s3
  %s6 = scalar_select 0, %s5, %s3
  // Predicated region
  $region2: #{block_forward.8} parent=0 // pred_check
    _
  $region3: #{block_forward.8} parent=0 // pred_check_branch
    %8 = sbr.rel (0) target = $region5
  $region4: #{block_forward.8} parent=0 // pred_region
    _
  $region5: #{block_forward.8} parent=0 // pred_fallthru
    _
  // Predicated region
  $region6: #{block_forward.8} parent=0 // pred_check
    _
  $region7: #{block_forward.8} parent=0 // pred_check_branch
    %10 = sbr.rel (0) target = $region9
  $region8: #{block_forward.8} parent=0 // pred_region
    _
  $region9: #{block_forward.8} parent=0 // pred_fallthru
    _
  %v12 = vld [vmem:[%s0] sm:$0xff]
  %v13 = vld [vmem:[%s0 + $0x8] sm:$0xff]
  %v14 = vld [vmem:[%s0 + $0x10] sm:$0xff]
  %v15 = vld [vmem:[%s0 + $0x18] sm:$0x7f]
  %v16 = vpack.c.bf16 %v13, %v12
  %v17 = vpack.c.bf16 %v15, %v14
  %v18 = vld [vmem:[%s1] sm:$0xf]
  %v19 = vld [vmem:[%s1 + $0x4] sm:$0xf]
  %v20 = vld [vmem:[%s1 + $0x8] sm:$0xf]
  %v21 = vld [vmem:[%s1 + $0xc] sm:$0xf]
  %v22 = vld [vmem:[%s1 + $0x10] sm:$0xf]
  %v23 = vld [vmem:[%s1 + $0x14] sm:$0xf]
  %v24 = vld [vmem:[%s1 + $0x18] sm:$0xf]
  %v25 = vld [vmem:[%s1 + $0x1c] sm:$0xf]
  %v34 = vunpack.c.l.b16 %v18
  %v35 = vunpack.c.l.b16 %v19
  %v36 = vunpack.c.l.b16 %v20
  %v37 = vunpack.c.l.b16 %v21
  %v38 = vunpack.c.l.b16 %v22
  %v39 = vunpack.c.l.b16 %v23
  %v40 = vunpack.c.l.b16 %v24
  %v41 = vunpack.c.l.b16 %v25
  %v42 = vpack.c.b16 %v35, %v34
  %v43 = vpack.c.b16 %v37, %v36
  %v44 = vpack.c.b16 %v39, %v38
  %v45 = vpack.c.b16 %v41, %v40
  %vm50 = vcmask 523264
  %v52 = vsel %vm50, %v16, 0
  %v55 = vsel %vm50, %v17, 0
  %57 = vmatprep.subr.bf16.mxu0 0
  %58 = vmatpush1.bf16.msra.mxu0 0
  %59 = vmatprep.subr.bf16.mxu0 0
  %60 = vmatpush1.bf16.msra.mxu0 0
  %61 = vmatprep.subr.bf16.mxu0 0
  %62 = vmatpush1.bf16.msra.mxu0 0
  %63 = vmatprep.subr.bf16.mxu0 0
  %64 = vmatpush1.bf16.msra.mxu0 0
  %65 = vmatprep.subr.bf16.mxu0 0
  %66 = vmatpush1.bf16.msra.mxu0 %v45
  %67 = vmatprep.subr.bf16.mxu0 0
  %68 = vmatpush1.bf16.msra.mxu0 %v44
  %69 = vmatprep.subr.bf16.mxu0 0
  %70 = vmatpush1.bf16.msra.mxu0 %v43
  %71 = vmatprep.subr.bf16.mxu0 0
  %72 = vmatpush1.bf16.msra.mxu0 %v42
  %73 = vmatprep.subr.bf16.mxu0 0
  %74 = vmatpush2.bf16.msra.mxu0 0
  %75 = vmatprep.subr.bf16.mxu0 0
  %76 = vmatpush2.bf16.msra.mxu0 0
  %77 = vmatprep.subr.bf16.mxu0 0
  %78 = vmatpush2.bf16.msra.mxu0 0
  %79 = vmatprep.subr.bf16.mxu0 0
  %80 = vmatpush2.bf16.msra.mxu0 0
  %81 = vmatprep.subr.bf16.mxu0 0
  %82 = vmatpush2.bf16.msra.mxu0 0
  %83 = vmatprep.subr.bf16.mxu0 0
  %84 = vmatpush2.bf16.msra.mxu0 0
  %85 = vmatprep.subr.bf16.mxu0 0
  %86 = vmatpush2.bf16.msra.mxu0 0
  %87 = vmatprep.subr.bf16.mxu0 0
  %88 = vmatpush2.bf16.msra.mxu0 0
  %89 = vmatprep.mubr.bf16.mxu0 0
  %90 = vmatmul.mubr.bf16.gmra.mxu0 %v52
  %v91 = vpop.f32.mrf.mxu0
  %v92 = vadd.f32 0.0, %v91
  %v93 = vpop.f32.mrf.mxu0
  %v94 = vpop.f32.mrf.mxu0
  %v95 = vadd.f32 0.0, %v94
  %v96 = vpop.f32.mrf.mxu0
  %97 = vmatprep.mubr.bf16.mxu0 0
  %98 = vmatmul.mubr.bf16.gmra.mxu0 %v55
  %v99 = vpop.f32.mrf.mxu0
  %v100 = vadd.f32 0.0, %v99
  %v101 = vpop.f32.mrf.mxu0
  %v102 = vpop.f32.mrf.mxu0
  %v103 = vadd.f32 0.0, %v102
  %v104 = vpop.f32.mrf.mxu0
  %105 = vdwg.mxu0
  %106 = vst.msk [vmem:[%s2] sm:$0xff] %vm50, %v92
  %107 = vst.msk [vmem:[%s2 + $0x8] sm:$0xff] %vm50, %v95
  %108 = vst.msk [vmem:[%s2 + $0x10] sm:$0xff] %vm50, %v100
  %vm109 = vcmask 522240
  %110 = vst.msk [vmem:[%s2 + $0x18] sm:$0x7f] %vm109, %v103
  // Predicated region
  $region10: #{block_forward.8} parent=0 // pred_check
    _
  $region11: #{block_forward.8} parent=0 // pred_check_branch
    %112 = sbr.rel (0) target = $region13
  $region12: #{block_forward.8} parent=0 // pred_region
    _
  $region13: #{block_forward.8} parent=0 // pred_fallthru
    _
  // Predicated region
  $region14: #{block_forward.8} parent=0 // pred_check
    _
  $region15: #{block_forward.8} parent=0 // pred_check_branch
    %114 = sbr.rel (0) target = $region17
  $region16: #{block_forward.8} parent=0 // pred_region
    _
  $region17: #{block_forward.8} parent=0 // pred_fallthru
    _

// kernel: block_forward.7
$region0: #{block_forward.7}
  #allocation0 [shape = 'u32[]', space=smem, size = 0x4, offset = 0x4, fixed_abs, tag = 'smem constant byte address 0x4 - core index']
  #allocation1 [shape = 'u32[144,128]{1,0:T(1,128)}', space=vmem, size = 0x12000, scoped, tag = 'internal scratch']
  %s0 = inlined_call_operand.vmem [shape: f32[32,64], index: 0, kind: input, shape index: {}]
  %s1 = inlined_call_operand.vmem [shape: f32[1,64], index: 1, kind: input, shape index: {}]
  %s2 = inlined_call_operand.vmem [shape: f32[1,64], index: 2, kind: input, shape index: {}]
  %s3 = inlined_call_operand.vmem [shape: bf16[64,64], index: 3, kind: input, shape index: {}]
  %s4 = inlined_call_operand.vmem [shape: bf16[64,64], index: 4, kind: input, shape index: {}]
  %s5 = inlined_call_operand.vmem [shape: bf16[64,64], index: 5, kind: input, shape index: {}]
  %s6 = inlined_call_operand.vmem [shape: f32[1,64], index: 6, kind: input, shape index: {}]
  %s7 = inlined_call_operand.vmem [shape: f32[1,64], index: 7, kind: input, shape index: {}]
  %s8 = inlined_call_operand.vmem [shape: f32[1,64], index: 8, kind: input, shape index: {}]
  %s9 = inlined_call_operand.vmem [shape: f32[32,64], index: 9, kind: output, shape index: {0}]
  %s10 = inlined_call_operand.vmem [shape: f32[32,64], index: 10, kind: output, shape index: {1}]
  %s11 = inlined_call_operand.vmem [shape: f32[32,64], index: 11, kind: output, shape index: {2}]
  %12 = xla_tuple %s9, %s10, %s11
  %s13 = sld [smem:[#allocation0]]
  $region62: #{block_forward.7} parent=0
    _
  %s15 = ssub.s32 1, %s13
  %s16 = scalar_select 0, %s15, %s13
  // Predicated region
  $region2: #{block_forward.7} parent=0 // pred_check
    _
  $region3: #{block_forward.7} parent=0 // pred_check_branch
    %18 = sbr.rel (0) target = $region5
  $region4: #{block_forward.7} parent=0 // pred_region
    _
  $region5: #{block_forward.7} parent=0 // pred_fallthru
    _
  // Predicated region
  $region6: #{block_forward.7} parent=0 // pred_check
    _
  $region7: #{block_forward.7} parent=0 // pred_check_branch
    %20 = sbr.rel (0) target = $region9
  $region8: #{block_forward.7} parent=0 // pred_region
    _
  $region9: #{block_forward.7} parent=0 // pred_fallthru
    _
  // Predicated region
  $region10: #{block_forward.7} parent=0 // pred_check
    _
  $region11: #{block_forward.7} parent=0 // pred_check_branch
    %22 = sbr.rel (0) target = $region13
  $region12: #{block_forward.7} parent=0 // pred_region
    _
  $region13: #{block_forward.7} parent=0 // pred_fallthru
    _
  // Predicated region
  $region14: #{block_forward.7} parent=0 // pred_check
    _
  $region15: #{block_forward.7} parent=0 // pred_check_branch
    %24 = sbr.rel (0) target = $region17
  $region16: #{block_forward.7} parent=0 // pred_region
    _
  $region17: #{block_forward.7} parent=0 // pred_fallthru
    _
  // Predicated region
  $region18: #{block_forward.7} parent=0 // pred_check
    _
  $region19: #{block_forward.7} parent=0 // pred_check_branch
    %26 = sbr.rel (0) target = $region21
  $region20: #{block_forward.7} parent=0 // pred_region
    _
  $region21: #{block_forward.7} parent=0 // pred_fallthru
    _
  // Predicated region
  $region22: #{block_forward.7} parent=0 // pred_check
    _
  $region23: #{block_forward.7} parent=0 // pred_check_branch
    %28 = sbr.rel (0) target = $region25
  $region24: #{block_forward.7} parent=0 // pred_region
    _
  $region25: #{block_forward.7} parent=0 // pred_fallthru
    _
  // Predicated region
  $region26: #{block_forward.7} parent=0 // pred_check
    _
  $region27: #{block_forward.7} parent=0 // pred_check_branch
    %30 = sbr.rel (0) target = $region29
  $region28: #{block_forward.7} parent=0 // pred_region
    _
  $region29: #{block_forward.7} parent=0 // pred_fallthru
    _
  // Predicated region
  $region30: #{block_forward.7} parent=0 // pred_check
    _
  $region31: #{block_forward.7} parent=0 // pred_check_branch
    %32 = sbr.rel (0) target = $region33
  $region32: #{block_forward.7} parent=0 // pred_region
    _
  $region33: #{block_forward.7} parent=0 // pred_fallthru
    _
  // Predicated region
  $region34: #{block_forward.7} parent=0 // pred_check
    _
  $region35: #{block_forward.7} parent=0 // pred_check_branch
    %34 = sbr.rel (0) target = $region37
  $region36: #{block_forward.7} parent=0 // pred_region
    _
  $region37: #{block_forward.7} parent=0 // pred_fallthru
    _
  %v36 = vld [vmem:[%s0] sm:$0xff]
  %v37 = vld [vmem:[%s0 + $0x8] sm:$0xff]
  %v38 = vld [vmem:[%s0 + $0x10] sm:$0xff]
  %v39 = vld [vmem:[%s0 + $0x18] sm:$0xff]
  %v40 = vld [vmem:[%s1] sm:$0x1]
  %v42 = vlaneseq
  %v43 = vshrl.u32 %v42, 7
  %v44 = vsub.s32 0, %v43
  %v45 = vrot.slane %v40, %v44
  %v47 = vmul.f32 %v36, %v45
  %v48 = vmul.f32 %v37, %v45
  %v49 = vmul.f32 %v38, %v45
  %v50 = vmul.f32 %v39, %v45
  %v51 = vld [vmem:[%s2] sm:$0x1]
  %v53 = vlaneseq
  %v54 = vshrl.u32 %v53, 7
  %v55 = vsub.s32 0, %v54
  %v56 = vrot.slane %v51, %v55
  %v58 = vadd.f32 %v47, %v56
  %v59 = vadd.f32 %v48, %v56
  %v60 = vadd.f32 %v49, %v56
  %v61 = vadd.f32 %v50, %v56
  %v62 = vpack.c.bf16 %v59, %v58
  %v63 = vpack.c.bf16 %v61, %v60
  %v64 = vld [vmem:[%s3] sm:$0xf]
  %v65 = vld [vmem:[%s3 + $0x4] sm:$0xf]
  %v66 = vld [vmem:[%s3 + $0x8] sm:$0xf]
  %v67 = vld [vmem:[%s3 + $0xc] sm:$0xf]
  %v68 = vld [vmem:[%s3 + $0x10] sm:$0xf]
  %v69 = vld [vmem:[%s3 + $0x14] sm:$0xf]
  %v70 = vld [vmem:[%s3 + $0x18] sm:$0xf]
  %v71 = vld [vmem:[%s3 + $0x1c] sm:$0xf]
  %v72 = vld [vmem:[%s6] sm:$0x1]
  %v74 = vlaneseq
  %v75 = vshrl.u32 %v74, 7
  %v76 = vsub.s32 0, %v75
  %v77 = vrot.slane %v72, %v76
  %v87 = vunpack.c.l.b16 %v64
  %v88 = vunpack.c.l.b16 %v65
  %v89 = vunpack.c.l.b16 %v66
  %v90 = vunpack.c.l.b16 %v67
  %v91 = vunpack.c.l.b16 %v68
  %v92 = vunpack.c.l.b16 %v69
  %v93 = vunpack.c.l.b16 %v70
  %v94 = vunpack.c.l.b16 %v71
  %v95 = vpack.c.b16 %v88, %v87
  %v96 = vpack.c.b16 %v90, %v89
  %v97 = vpack.c.b16 %v92, %v91
  %v98 = vpack.c.b16 %v94, %v93
  %vm103 = vcmask 523264
  %v105 = vsel %vm103, %v62, 0
  %v108 = vsel %vm103, %v63, 0
  %110 = vmatprep.subr.bf16.mxu0 0
  %111 = vmatpush1.bf16.msra.mxu0 0
  %112 = vmatprep.subr.bf16.mxu0 0
  %113 = vmatpush1.bf16.msra.mxu0 0
  %114 = vmatprep.subr.bf16.mxu0 0
  %115 = vmatpush1.bf16.msra.mxu0 0
  %116 = vmatprep.subr.bf16.mxu0 0
  %117 = vmatpush1.bf16.msra.mxu0 0
  %118 = vmatprep.subr.bf16.mxu0 0
  %119 = vmatpush1.bf16.msra.mxu0 %v98
  %120 = vmatprep.subr.bf16.mxu0 0
  %121 = vmatpush1.bf16.msra.mxu0 %v97
  %122 = vmatprep.subr.bf16.mxu0 0
  %123 = vmatpush1.bf16.msra.mxu0 %v96
  %124 = vmatprep.subr.bf16.mxu0 0
  %125 = vmatpush1.bf16.msra.mxu0 %v95
  %126 = vmatprep.subr.bf16.mxu0 0
  %127 = vmatpush2.bf16.msra.mxu0 0
  %128 = vmatprep.subr.bf16.mxu0 0
  %129 = vmatpush2.bf16.msra.mxu0 0
  %130 = vmatprep.subr.bf16.mxu0 0
  %131 = vmatpush2.bf16.msra.mxu0 0
  %132 = vmatprep.subr.bf16.mxu0 0
  %133 = vmatpush2.bf16.msra.mxu0 0
  %134 = vmatprep.subr.bf16.mxu0 0
  %135 = vmatpush2.bf16.msra.mxu0 0
  %136 = vmatprep.subr.bf16.mxu0 0
  %137 = vmatpush2.bf16.msra.mxu0 0
  %138 = vmatprep.subr.bf16.mxu0 0
  %139 = vmatpush2.bf16.msra.mxu0 0
  %140 = vmatprep.subr.bf16.mxu0 0
  %141 = vmatpush2.bf16.msra.mxu0 0
  %142 = vmatprep.mubr.bf16.mxu0 0
  %143 = vmatmul.mubr.bf16.gmra.mxu0 %v105
  %v144 = vpop.f32.mrf.mxu0
  %v145 = vadd.f32 %v77, %v144
  %v146 = vpop.f32.mrf.mxu0
  %v147 = vpop.f32.mrf.mxu0
  %v148 = vadd.f32 %v77, %v147
  %v149 = vpop.f32.mrf.mxu0
  %150 = vmatprep.mubr.bf16.mxu0 0
  %151 = vmatmul.mubr.bf16.gmra.mxu0 %v108
  %v152 = vpop.f32.mrf.mxu0
  %v153 = vadd.f32 %v77, %v152
  %v154 = vpop.f32.mrf.mxu0
  %v155 = vpop.f32.mrf.mxu0
  %v156 = vadd.f32 %v77, %v155
  %v157 = vpop.f32.mrf.mxu0
  %158 = vdwg.mxu0
  %159 = vst.msk [vmem:[%s9] sm:$0xff] %vm103, %v145
  %160 = vst.msk [vmem:[%s9 + $0x8] sm:$0xff] %vm103, %v148
  %161 = vst.msk [vmem:[%s9 + $0x10] sm:$0xff] %vm103, %v153
  %162 = vst.msk [vmem:[%s9 + $0x18] sm:$0xff] %vm103, %v156
  %v163 = vld [vmem:[%s4] sm:$0xf]
  %v164 = vld [vmem:[%s4 + $0x4] sm:$0xf]
  %v165 = vld [vmem:[%s4 + $0x8] sm:$0xf]
  %v166 = vld [vmem:[%s4 + $0xc] sm:$0xf]
  %v167 = vld [vmem:[%s4 + $0x10] sm:$0xf]
  %v168 = vld [vmem:[%s4 + $0x14] sm:$0xf]
  %v169 = vld [vmem:[%s4 + $0x18] sm:$0xf]
  %v170 = vld [vmem:[%s4 + $0x1c] sm:$0xf]
  %v171 = vld [vmem:[%s7] sm:$0x1]
  %v173 = vlaneseq
  %v174 = vshrl.u32 %v173, 7
  %v175 = vsub.s32 0, %v174
  %v176 = vrot.slane %v171, %v175
  %v186 = vunpack.c.l.b16 %v163
  %v187 = vunpack.c.l.b16 %v164
  %v188 = vunpack.c.l.b16 %v165
  %v189 = vunpack.c.l.b16 %v166
  %v190 = vunpack.c.l.b16 %v167
  %v191 = vunpack.c.l.b16 %v168
  %v192 = vunpack.c.l.b16 %v169
  %v193 = vunpack.c.l.b16 %v170
  %v194 = vpack.c.b16 %v187, %v186
  %v195 = vpack.c.b16 %v189, %v188
  %v196 = vpack.c.b16 %v191, %v190
  %v197 = vpack.c.b16 %v193, %v192
  %202 = vmatprep.subr.bf16.mxu0 0
  %203 = vmatpush1.bf16.msra.mxu0 0
  %204 = vmatprep.subr.bf16.mxu0 0
  %205 = vmatpush1.bf16.msra.mxu0 0
  %206 = vmatprep.subr.bf16.mxu0 0
  %207 = vmatpush1.bf16.msra.mxu0 0
  %208 = vmatprep.subr.bf16.mxu0 0
  %209 = vmatpush1.bf16.msra.mxu0 0
  %210 = vmatprep.subr.bf16.mxu0 0
  %211 = vmatpush1.bf16.msra.mxu0 %v197
  %212 = vmatprep.subr.bf16.mxu0 0
  %213 = vmatpush1.bf16.msra.mxu0 %v196
  %214 = vmatprep.subr.bf16.mxu0 0
  %215 = vmatpush1.bf16.msra.mxu0 %v195
  %216 = vmatprep.subr.bf16.mxu0 0
  %217 = vmatpush1.bf16.msra.mxu0 %v194
  %218 = vmatprep.subr.bf16.mxu0 0
  %219 = vmatpush2.bf16.msra.mxu0 0
  %220 = vmatprep.subr.bf16.mxu0 0
  %221 = vmatpush2.bf16.msra.mxu0 0
  %222 = vmatprep.subr.bf16.mxu0 0
  %223 = vmatpush2.bf16.msra.mxu0 0
  %224 = vmatprep.subr.bf16.mxu0 0
  %225 = vmatpush2.bf16.msra.mxu0 0
  %226 = vmatprep.subr.bf16.mxu0 0
  %227 = vmatpush2.bf16.msra.mxu0 0
  %228 = vmatprep.subr.bf16.mxu0 0
  %229 = vmatpush2.bf16.msra.mxu0 0
  %230 = vmatprep.subr.bf16.mxu0 0
  %231 = vmatpush2.bf16.msra.mxu0 0
  %232 = vmatprep.subr.bf16.mxu0 0
  %233 = vmatpush2.bf16.msra.mxu0 0
  %234 = vmatprep.mubr.bf16.mxu0 0
  %235 = vmatmul.mubr.bf16.gmra.mxu0 %v105
  %v236 = vpop.f32.mrf.mxu0
  %v237 = vadd.f32 %v176, %v236
  %v238 = vpop.f32.mrf.mxu0
  %v239 = vpop.f32.mrf.mxu0
  %v240 = vadd.f32 %v176, %v239
  %v241 = vpop.f32.mrf.mxu0
  %242 = vmatprep.mubr.bf16.mxu0 0
  %243 = vmatmul.mubr.bf16.gmra.mxu0 %v108
  %v244 = vpop.f32.mrf.mxu0
  %v245 = vadd.f32 %v176, %v244
  %v246 = vpop.f32.mrf.mxu0
  %v247 = vpop.f32.mrf.mxu0
  %v248 = vadd.f32 %v176, %v247
  %v249 = vpop.f32.mrf.mxu0
  %250 = vdwg.mxu0
  %251 = vst.msk [vmem:[%s10] sm:$0xff] %vm103, %v237
  %252 = vst.msk [vmem:[%s10 + $0x8] sm:$0xff] %vm103, %v240
  %253 = vst.msk [vmem:[%s10 + $0x10] sm:$0xff] %vm103, %v245
  %254 = vst.msk [vmem:[%s10 + $0x18] sm:$0xff] %vm103, %v248
  %v255 = vld [vmem:[%s5] sm:$0xf]
  %v256 = vld [vmem:[%s5 + $0x4] sm:$0xf]
  %v257 = vld [vmem:[%s5 + $0x8] sm:$0xf]
  %v258 = vld [vmem:[%s5 + $0xc] sm:$0xf]
  %v259 = vld [vmem:[%s5 + $0x10] sm:$0xf]
  %v260 = vld [vmem:[%s5 + $0x14] sm:$0xf]
  %v261 = vld [vmem:[%s5 + $0x18] sm:$0xf]
  %v262 = vld [vmem:[%s5 + $0x1c] sm:$0xf]
  %v263 = vld [vmem:[%s8] sm:$0x1]
  %v265 = vlaneseq
  %v266 = vshrl.u32 %v265, 7
  %v267 = vsub.s32 0, %v266
  %v268 = vrot.slane %v263, %v267
  %v278 = vunpack.c.l.b16 %v255
  %v279 = vunpack.c.l.b16 %v256
  %v280 = vunpack.c.l.b16 %v257
  %v281 = vunpack.c.l.b16 %v258
  %v282 = vunpack.c.l.b16 %v259
  %v283 = vunpack.c.l.b16 %v260
  %v284 = vunpack.c.l.b16 %v261
  %v285 = vunpack.c.l.b16 %v262
  %v286 = vpack.c.b16 %v279, %v278
  %v287 = vpack.c.b16 %v281, %v280
  %v288 = vpack.c.b16 %v283, %v282
  %v289 = vpack.c.b16 %v285, %v284
  %294 = vmatprep.subr.bf16.mxu0 0
  %295 = vmatpush1.bf16.msra.mxu0 0
  %296 = vmatprep.subr.bf16.mxu0 0
  %297 = vmatpush1.bf16.msra.mxu0 0
  %298 = vmatprep.subr.bf16.mxu0 0
  %299 = vmatpush1.bf16.msra.mxu0 0
  %300 = vmatprep.subr.bf16.mxu0 0
  %301 = vmatpush1.bf16.msra.mxu0 0
  %302 = vmatprep.subr.bf16.mxu0 0
  %303 = vmatpush1.bf16.msra.mxu0 %v289
  %304 = vmatprep.subr.bf16.mxu0 0
  %305 = vmatpush1.bf16.msra.mxu0 %v288
  %306 = vmatprep.subr.bf16.mxu0 0
  %307 = vmatpush1.bf16.msra.mxu0 %v287
  %308 = vmatprep.subr.bf16.mxu0 0
  %309 = vmatpush1.bf16.msra.mxu0 %v286
  %310 = vmatprep.subr.bf16.mxu0 0
  %311 = vmatpush2.bf16.msra.mxu0 0
  %312 = vmatprep.subr.bf16.mxu0 0
  %313 = vmatpush2.bf16.msra.mxu0 0
  %314 = vmatprep.subr.bf16.mxu0 0
  %315 = vmatpush2.bf16.msra.mxu0 0
  %316 = vmatprep.subr.bf16.mxu0 0
  %317 = vmatpush2.bf16.msra.mxu0 0
  %318 = vmatprep.subr.bf16.mxu0 0
  %319 = vmatpush2.bf16.msra.mxu0 0
  %320 = vmatprep.subr.bf16.mxu0 0
  %321 = vmatpush2.bf16.msra.mxu0 0
  %322 = vmatprep.subr.bf16.mxu0 0
  %323 = vmatpush2.bf16.msra.mxu0 0
  %324 = vmatprep.subr.bf16.mxu0 0
  %325 = vmatpush2.bf16.msra.mxu0 0
  %326 = vmatprep.mubr.bf16.mxu0 0
  %327 = vmatmul.mubr.bf16.gmra.mxu0 %v105
  %v328 = vpop.f32.mrf.mxu0
  %v329 = vadd.f32 %v268, %v328
  %v330 = vpop.f32.mrf.mxu0
  %v331 = vpop.f32.mrf.mxu0
  %v332 = vadd.f32 %v268, %v331
  %v333 = vpop.f32.mrf.mxu0
  %334 = vmatprep.mubr.bf16.mxu0 0
  %335 = vmatmul.mubr.bf16.gmra.mxu0 %v108
  %v336 = vpop.f32.mrf.mxu0
  %v337 = vadd.f32 %v268, %v336
  %v338 = vpop.f32.mrf.mxu0
  %v339 = vpop.f32.mrf.mxu0
  %v340 = vadd.f32 %v268, %v339
  %v341 = vpop.f32.mrf.mxu0
  %342 = vdwg.mxu0
  %343 = vst.msk [vmem:[%s11] sm:$0xff] %vm103, %v329
  %344 = vst.msk [vmem:[%s11 + $0x8] sm:$0xff] %vm103, %v332
  %345 = vst.msk [vmem:[%s11 + $0x10] sm:$0xff] %vm103, %v337
  %346 = vst.msk [vmem:[%s11 + $0x18] sm:$0xff] %vm103, %v340
  // Predicated region
  $region38: #{block_forward.7} parent=0 // pred_check
    _
  $region39: #{block_forward.7} parent=0 // pred_check_branch
    %348 = sbr.rel (0) target = $region41
  $region40: #{block_forward.7} parent=0 // pred_region
    _
  $region41: #{block_forward.7} parent=0 // pred_fallthru
    _
  // Predicated region
  $region42: #{block_forward.7} parent=0 // pred_check
    _
  $region43: #{block_forward.7} parent=0 // pred_check_branch
    %350 = sbr.rel (0) target = $region45
  $region44: #{block_forward.7} parent=0 // pred_region
    _
  $region45: #{block_forward.7} parent=0 // pred_fallthru
    _
  // Predicated region
  $region46: #{block_forward.7} parent=0 // pred_check
    _
  $region47: #{block_forward.7} parent=0 // pred_check_branch
    %352 = sbr.rel (0) target = $region49
  $region48: #{block_forward.7} parent=0 // pred_region
    _
  $region49: #{block_forward.7} parent=0 // pred_fallthru
    _
  // Predicated region
  $region50: #{block_forward.7} parent=0 // pred_check
    _
  $region51: #{block_forward.7} parent=0 // pred_check_branch
    %354 = sbr.rel (0) target = $region53
  $region52: #{block_forward.7} parent=0 // pred_region
    _
  $region53: #{block_forward.7} parent=0 // pred_fallthru
    _
  // Predicated region
  $region54: #{block_forward.7} parent=0 // pred_check
    _
  $region55: #{block_forward.7} parent=0 // pred_check_branch
    %356 = sbr.rel (0) target = $region57
  $region56: #{block_forward.7} parent=0 // pred_region
    _
  $region57: #{block_forward.7} parent=0 // pred_fallthru
    _
  // Predicated region
  $region58: #{block_forward.7} parent=0 // pred_check
    _
  $region59: #{block_forward.7} parent=0 // pred_check_branch
    %358 = sbr.rel (0) target = $region61
  $region60: #{block_forward.7} parent=0 // pred_region
    _
  $region61: #{block_forward.7} parent=0 // pred_fallthru
    _

// kernel: block_forward.11
$region0: #{block_forward.11}
  #allocation0 [shape = 'u32[]', space=smem, size = 0x4, offset = 0x4, fixed_abs, tag = 'smem constant byte address 0x4 - core index']
  #allocation1 [shape = 'u32[144,128]{1,0:T(1,128)}', space=vmem, size = 0x12000, scoped, tag = 'internal scratch']
  #allocation2 [shape = 'f32[32,64]{1,0:T(8,128)}', space=vmem, size = 0x4000, scoped, tag = 'scratch operand']
  %s0 = inlined_call_operand.vmem [shape: f32[2,16,1], index: 0, kind: input, shape index: {}]
  %s1 = inlined_call_operand.vmem [shape: f32[2,16,64], index: 1, kind: input, shape index: {}]
  %s2 = inlined_call_operand.vmem [shape: f32[1,64], index: 2, kind: input, shape index: {}]
  %s3 = inlined_call_operand.vmem [shape: f32[1,64], index: 3, kind: input, shape index: {}]
  %s4 = inlined_call_operand.vmem [shape: bf16[64,64], index: 4, kind: input, shape index: {}]
  %s5 = inlined_call_operand.vmem [shape: f32[1,64], index: 5, kind: input, shape index: {}]
  %s6 = inlined_call_operand.vmem [shape: bf16[64,64], index: 6, kind: input, shape index: {}]
  %s7 = inlined_call_operand.vmem [shape: f32[1,64], index: 7, kind: input, shape index: {}]
  %s8 = inlined_call_operand.vmem [shape: f32[7,64], index: 8, kind: input, shape index: {}]
  %s9 = inlined_call_operand.vmem [shape: f32[2,16,64], index: 9, kind: output, shape index: {0}]
  %s10 = inlined_call_operand.vmem [shape: f32[2,1,64], index: 10, kind: output, shape index: {1}]
  %s11 = inlined_call_operand.vmem [shape: f32[2,1,64], index: 11, kind: output, shape index: {2}]
  %12 = xla_tuple %s9, %s10, %s11
  %s13 = sld [smem:[#allocation0]]
  $region85: #{block_forward.11} parent=0
    _
  %s15 = ssub.s32 1, %s13
  %s16 = scalar_select 0, %s15, %s13
  loop: start=0, step=1, limit=4
  $region2: #{block_forward.11} parent=0 // loop_pre_header
    _
  $region3: #{block_forward.11} parent=0 // loop_header
    %s18 = sphi 0, %s22
    %p19 = scmp.ge.s32.totalorder %s18, 4
    %s28 = sphi 0, %s30
    %s31 = sphi 0, %s28
    %s32 = sphi 0, %s31
    %s48 = sphi 0, %s32
    %s54 = sphi 0, %s56
    %s57 = sphi 0, %s54
    %s58 = sphi 0, %s57
    %s74 = sphi 0, %s58
    %s78 = sphi 0, %s78
    %s80 = sphi 0, %s78
    %s81 = sphi 0, %s80
    %s95 = sphi 0, %s81
    %s99 = sphi 0, %s99
    %s101 = sphi 0, %s99
    %s102 = sphi 0, %s101
    %s116 = sphi 0, %s102
    %s120 = sphi 0, %s120
    %s122 = sphi 0, %s120
    %s123 = sphi 0, %s122
    %s137 = sphi 0, %s123
    %s141 = sphi 0, %s141
    %s143 = sphi 0, %s141
    %s144 = sphi 0, %s143
    %s158 = sphi 0, %s144
    %s162 = sphi 0, %s162
    %s164 = sphi 0, %s162
    %s165 = sphi 0, %s164
    %s179 = sphi 0, %s165
    %s183 = sphi 0, %s183
    %s185 = sphi 0, %s183
    %s186 = sphi 0, %s185
    %s200 = sphi 0, %s186
    %s204 = sphi 0, %s204
    %s206 = sphi 0, %s204
    %s207 = sphi 0, %s206
    %s221 = sphi 0, %s207
    %s227 = sphi 0, %s229
    %s230 = sphi 0, %s227
    %s231 = sphi 0, %s230
    %s247 = sphi 0, %s231
    %s253 = sphi 0, %s255
    %s256 = sphi 0, %s253
    %s257 = sphi 0, %s256
    %s273 = sphi 0, %s257
    %s279 = sphi 0, %s281
    %s282 = sphi 0, %s279
    %s283 = sphi 0, %s282
    %s299 = sphi 0, %s283
  $region4: #{block_forward.11} parent=0 // loop_header_branch
    %21 = sbr.rel (%p19) target = $region8
  $region5: #{block_forward.11} parent=0 // loop_body
    %s23 = ssub.s32 %s18, 1
    %s24 = ssub.s32 %s18, 2
    %s25 = sadd.s32 %s18, 1
    %s26 = ssub.s32 %s18, %s25
    %p27 = scmp.eq.s32.totalorder %s26, 0
    %s29 = sadd.s32 %s28, 1
    %s30 = scalar_select %p27, %s28, %s29
    %p33 = pneg %p27
    %p34 = scmp.eq.s32.totalorder %s18, 1
    %p35 = por %p33, %p34
    %p36 = scmp.ne.s32.totalorder %s28, %s31
    %p37 = scmp.eq.s32.totalorder %s18, 0
    %p38 = por %p36, %p37
    %p39 = scmp.ne.s32.totalorder %s28, %s31
    %p40 = scmp.eq.s32.totalorder %s23, 1
    %p41 = por %p39, %p40
    %p42 = scmp.ne.s32.totalorder %s31, %s32
    %p43 = scmp.eq.s32.totalorder %s23, 0
    %p44 = por %p42, %p43
    %p45 = scmp.ne.s32.totalorder %s31, %s32
    %p46 = scmp.eq.s32.totalorder %s24, 1
    %p47 = por %p45, %p46
    %p49 = scmp.ne.s32.totalorder %s32, %s48
    %p50 = scmp.eq.s32.totalorder %s24, 0
    %p51 = por %p49, %p50
    %s52 = ssub.s32 %s18, %s25
    %p53 = scmp.eq.s32.totalorder %s52, 0
    %s55 = sadd.s32 %s54, 1
    %s56 = scalar_select %p53, %s54, %s55
    %p59 = pneg %p53
    %p60 = scmp.eq.s32.totalorder %s18, 1
    %p61 = por %p59, %p60
    %p62 = scmp.ne.s32.totalorder %s54, %s57
    %p63 = scmp.eq.s32.totalorder %s18, 0
    %p64 = por %p62, %p63
    %p65 = scmp.ne.s32.totalorder %s54, %s57
    %p66 = scmp.eq.s32.totalorder %s23, 1
    %p67 = por %p65, %p66
    %p68 = scmp.ne.s32.totalorder %s57, %s58
    %p69 = scmp.eq.s32.totalorder %s23, 0
    %p70 = por %p68, %p69
    %p71 = scmp.ne.s32.totalorder %s57, %s58
    %p72 = scmp.eq.s32.totalorder %s24, 1
    %p73 = por %p71, %p72
    %p75 = scmp.ne.s32.totalorder %s58, %s74
    %p76 = scmp.eq.s32.totalorder %s24, 0
    %p77 = por %p75, %p76
    %s79 = sadd.s32 %s78, 1
    %p82 = scmp.eq.s32.totalorder %s18, 1
    %p83 = scmp.ne.s32.totalorder %s78, %s80
    %p84 = scmp.eq.s32.totalorder %s18, 0
    %p85 = por %p83, %p84
    %p86 = scmp.ne.s32.totalorder %s78, %s80
    %p87 = scmp.eq.s32.totalorder %s23, 1
    %p88 = por %p86, %p87
    %p89 = scmp.ne.s32.totalorder %s80, %s81
    %p90 = scmp.eq.s32.totalorder %s23, 0
    %p91 = por %p89, %p90
    %p92 = scmp.ne.s32.totalorder %s80, %s81
    %p93 = scmp.eq.s32.totalorder %s24, 1
    %p94 = por %p92, %p93
    %p96 = scmp.ne.s32.totalorder %s81, %s95
    %p97 = scmp.eq.s32.totalorder %s24, 0
    %p98 = por %p96, %p97
    %s100 = sadd.s32 %s99, 1
    %p103 = scmp.eq.s32.totalorder %s18, 1
    %p104 = scmp.ne.s32.totalorder %s99, %s101
    %p105 = scmp.eq.s32.totalorder %s18, 0
    %p106 = por %p104, %p105
    %p107 = scmp.ne.s32.totalorder %s99, %s101
    %p108 = scmp.eq.s32.totalorder %s23, 1
    %p109 = por %p107, %p108
    %p110 = scmp.ne.s32.totalorder %s101, %s102
    %p111 = scmp.eq.s32.totalorder %s23, 0
    %p112 = por %p110, %p111
    %p113 = scmp.ne.s32.totalorder %s101, %s102
    %p114 = scmp.eq.s32.totalorder %s24, 1
    %p115 = por %p113, %p114
    %p117 = scmp.ne.s32.totalorder %s102, %s116
    %p118 = scmp.eq.s32.totalorder %s24, 0
    %p119 = por %p117, %p118
    %s121 = sadd.s32 %s120, 1
    %p124 = scmp.eq.s32.totalorder %s18, 1
    %p125 = scmp.ne.s32.totalorder %s120, %s122
    %p126 = scmp.eq.s32.totalorder %s18, 0
    %p127 = por %p125, %p126
    %p128 = scmp.ne.s32.totalorder %s120, %s122
    %p129 = scmp.eq.s32.totalorder %s23, 1
    %p130 = por %p128, %p129
    %p131 = scmp.ne.s32.totalorder %s122, %s123
    %p132 = scmp.eq.s32.totalorder %s23, 0
    %p133 = por %p131, %p132
    %p134 = scmp.ne.s32.totalorder %s122, %s123
    %p135 = scmp.eq.s32.totalorder %s24, 1
    %p136 = por %p134, %p135
    %p138 = scmp.ne.s32.totalorder %s123, %s137
    %p139 = scmp.eq.s32.totalorder %s24, 0
    %p140 = por %p138, %p139
    %s142 = sadd.s32 %s141, 1
    %p145 = scmp.eq.s32.totalorder %s18, 1
    %p146 = scmp.ne.s32.totalorder %s141, %s143
    %p147 = scmp.eq.s32.totalorder %s18, 0
    %p148 = por %p146, %p147
    %p149 = scmp.ne.s32.totalorder %s141, %s143
    %p150 = scmp.eq.s32.totalorder %s23, 1
    %p151 = por %p149, %p150
    %p152 = scmp.ne.s32.totalorder %s143, %s144
    %p153 = scmp.eq.s32.totalorder %s23, 0
    %p154 = por %p152, %p153
    %p155 = scmp.ne.s32.totalorder %s143, %s144
    %p156 = scmp.eq.s32.totalorder %s24, 1
    %p157 = por %p155, %p156
    %p159 = scmp.ne.s32.totalorder %s144, %s158
    %p160 = scmp.eq.s32.totalorder %s24, 0
    %p161 = por %p159, %p160
    %s163 = sadd.s32 %s162, 1
    %p166 = scmp.eq.s32.totalorder %s18, 1
    %p167 = scmp.ne.s32.totalorder %s162, %s164
    %p168 = scmp.eq.s32.totalorder %s18, 0
    %p169 = por %p167, %p168
    %p170 = scmp.ne.s32.totalorder %s162, %s164
    %p171 = scmp.eq.s32.totalorder %s23, 1
    %p172 = por %p170, %p171
    %p173 = scmp.ne.s32.totalorder %s164, %s165
    %p174 = scmp.eq.s32.totalorder %s23, 0
    %p175 = por %p173, %p174
    %p176 = scmp.ne.s32.totalorder %s164, %s165
    %p177 = scmp.eq.s32.totalorder %s24, 1
    %p178 = por %p176, %p177
    %p180 = scmp.ne.s32.totalorder %s165, %s179
    %p181 = scmp.eq.s32.totalorder %s24, 0
    %p182 = por %p180, %p181
    %s184 = sadd.s32 %s183, 1
    %p187 = scmp.eq.s32.totalorder %s18, 1
    %p188 = scmp.ne.s32.totalorder %s183, %s185
    %p189 = scmp.eq.s32.totalorder %s18, 0
    %p190 = por %p188, %p189
    %p191 = scmp.ne.s32.totalorder %s183, %s185
    %p192 = scmp.eq.s32.totalorder %s23, 1
    %p193 = por %p191, %p192
    %p194 = scmp.ne.s32.totalorder %s185, %s186
    %p195 = scmp.eq.s32.totalorder %s23, 0
    %p196 = por %p194, %p195
    %p197 = scmp.ne.s32.totalorder %s185, %s186
    %p198 = scmp.eq.s32.totalorder %s24, 1
    %p199 = por %p197, %p198
    %p201 = scmp.ne.s32.totalorder %s186, %s200
    %p202 = scmp.eq.s32.totalorder %s24, 0
    %p203 = por %p201, %p202
    %s205 = sadd.s32 %s204, 1
    %p208 = scmp.eq.s32.totalorder %s18, 1
    %p209 = scmp.ne.s32.totalorder %s204, %s206
    %p210 = scmp.eq.s32.totalorder %s18, 0
    %p211 = por %p209, %p210
    %p212 = scmp.ne.s32.totalorder %s204, %s206
    %p213 = scmp.eq.s32.totalorder %s23, 1
    %p214 = por %p212, %p213
    %p215 = scmp.ne.s32.totalorder %s206, %s207
    %p216 = scmp.eq.s32.totalorder %s23, 0
    %p217 = por %p215, %p216
    %p218 = scmp.ne.s32.totalorder %s206, %s207
    %p219 = scmp.eq.s32.totalorder %s24, 1
    %p220 = por %p218, %p219
    %p222 = scmp.ne.s32.totalorder %s207, %s221
    %p223 = scmp.eq.s32.totalorder %s24, 0
    %p224 = por %p222, %p223
    %s225 = ssub.s32 %s18, %s25
    %p226 = scmp.eq.s32.totalorder %s225, 0
    %s228 = sadd.s32 %s227, 1
    %s229 = scalar_select %p226, %s227, %s228
    %p232 = pneg %p226
    %p233 = scmp.eq.s32.totalorder %s18, 1
    %p234 = por %p232, %p233
    %p235 = scmp.ne.s32.totalorder %s227, %s230
    %p236 = scmp.eq.s32.totalorder %s18, 0
    %p237 = por %p235, %p236
    %p238 = scmp.ne.s32.totalorder %s227, %s230
    %p239 = scmp.eq.s32.totalorder %s23, 1
    %p240 = por %p238, %p239
    %p241 = scmp.ne.s32.totalorder %s230, %s231
    %p242 = scmp.eq.s32.totalorder %s23, 0
    %p243 = por %p241, %p242
    %p244 = scmp.ne.s32.totalorder %s230, %s231
    %p245 = scmp.eq.s32.totalorder %s24, 1
    %p246 = por %p244, %p245
    %p248 = scmp.ne.s32.totalorder %s231, %s247
    %p249 = scmp.eq.s32.totalorder %s24, 0
    %p250 = por %p248, %p249
    %s251 = ssub.s32 %s18, %s25
    %p252 = scmp.eq.s32.totalorder %s251, 0
    %s254 = sadd.s32 %s253, 1
    %s255 = scalar_select %p252, %s253, %s254
    %p258 = pneg %p252
    %p259 = scmp.eq.s32.totalorder %s18, 1
    %p260 = por %p258, %p259
    %p261 = scmp.ne.s32.totalorder %s253, %s256
    %p262 = scmp.eq.s32.totalorder %s18, 0
    %p263 = por %p261, %p262
    %p264 = scmp.ne.s32.totalorder %s253, %s256
    %p265 = scmp.eq.s32.totalorder %s23, 1
    %p266 = por %p264, %p265
    %p267 = scmp.ne.s32.totalorder %s256, %s257
    %p268 = scmp.eq.s32.totalorder %s23, 0
    %p269 = por %p267, %p268
    %p270 = scmp.ne.s32.totalorder %s256, %s257
    %p271 = scmp.eq.s32.totalorder %s24, 1
    %p272 = por %p270, %p271
    %p274 = scmp.ne.s32.totalorder %s257, %s273
    %p275 = scmp.eq.s32.totalorder %s24, 0
    %p276 = por %p274, %p275
    %s277 = ssub.s32 %s18, %s25
    %p278 = scmp.eq.s32.totalorder %s277, 0
    %s280 = sadd.s32 %s279, 1
    %s281 = scalar_select %p278, %s279, %s280
    %p284 = pneg %p278
    %p285 = scmp.eq.s32.totalorder %s18, 1
    %p286 = por %p284, %p285
    %p287 = scmp.ne.s32.totalorder %s279, %s282
    %p288 = scmp.eq.s32.totalorder %s18, 0
    %p289 = por %p287, %p288
    %p290 = scmp.ne.s32.totalorder %s279, %s282
    %p291 = scmp.eq.s32.totalorder %s23, 1
    %p292 = por %p290, %p291
    %p293 = scmp.ne.s32.totalorder %s282, %s283
    %p294 = scmp.eq.s32.totalorder %s23, 0
    %p295 = por %p293, %p294
    %p296 = scmp.ne.s32.totalorder %s282, %s283
    %p297 = scmp.eq.s32.totalorder %s24, 1
    %p298 = por %p296, %p297
    %p300 = scmp.ne.s32.totalorder %s283, %s299
    %p301 = scmp.eq.s32.totalorder %s24, 0
    %p302 = por %p300, %p301
    %p303 = scmp.le.s32.totalorder 1, %s18
    %p304 = scmp.lt.s32.totalorder %s18, 3
    %p305 = pnand %p303, %p304
    %p306 = pneg %p305
    // Predicated region
    $region9: #{block_forward.11} parent=5 // pred_check
      _
    $region10: #{block_forward.11} parent=5 // pred_check_branch
      %308 = sbr.rel (%p305) target = $region12
    $region11: #{block_forward.11} parent=5 // pred_region
      %s309 = ssub.s32 %s18, 1
      // Predicated region
      $region13: #{block_forward.11} parent=11 // pred_check
        %p310 = pneg %p91
      $region14: #{block_forward.11} parent=11 // pred_check_branch
        %312 = sbr.rel (%p310) target = $region16
      $region15: #{block_forward.11} parent=11 // pred_region
        _
      $region16: #{block_forward.11} parent=11 // pred_fallthru
        _
      // Predicated region
      $region17: #{block_forward.11} parent=11 // pred_check
        %p313 = pneg %p112
      $region18: #{block_forward.11} parent=11 // pred_check_branch
        %315 = sbr.rel (%p313) target = $region20
      $region19: #{block_forward.11} parent=11 // pred_region
        _
      $region20: #{block_forward.11} parent=11 // pred_fallthru
        _
      // Predicated region
      $region21: #{block_forward.11} parent=11 // pred_check
        %p316 = pneg %p133
      $region22: #{block_forward.11} parent=11 // pred_check_branch
        %318 = sbr.rel (%p316) target = $region24
      $region23: #{block_forward.11} parent=11 // pred_region
        _
      $region24: #{block_forward.11} parent=11 // pred_fallthru
        _
      // Predicated region
      $region25: #{block_forward.11} parent=11 // pred_check
        %p319 = pneg %p154
      $region26: #{block_forward.11} parent=11 // pred_check_branch
        %321 = sbr.rel (%p319) target = $region28
      $region27: #{block_forward.11} parent=11 // pred_region
        _
      $region28: #{block_forward.11} parent=11 // pred_fallthru
        _
      // Predicated region
      $region29: #{block_forward.11} parent=11 // pred_check
        %p322 = pneg %p175
      $region30: #{block_forward.11} parent=11 // pred_check_branch
        %324 = sbr.rel (%p322) target = $region32
      $region31: #{block_forward.11} parent=11 // pred_region
        _
      $region32: #{block_forward.11} parent=11 // pred_fallthru
        _
      // Predicated region
      $region33: #{block_forward.11} parent=11 // pred_check
        %p325 = pneg %p196
      $region34: #{block_forward.11} parent=11 // pred_check_branch
        %327 = sbr.rel (%p325) target = $region36
      $region35: #{block_forward.11} parent=11 // pred_region
        _
      $region36: #{block_forward.11} parent=11 // pred_fallthru
        _
      // Predicated region
      $region37: #{block_forward.11} parent=11 // pred_check
        %p328 = pneg %p217
      $region38: #{block_forward.11} parent=11 // pred_check_branch
        %330 = sbr.rel (%p328) target = $region40
      $region39: #{block_forward.11} parent=11 // pred_region
        _
      $region40: #{block_forward.11} parent=11 // pred_fallthru
        _
    $region12: #{block_forward.11} parent=5 // pred_fallthru
      _
    %p331 = scmp.lt.s32.totalorder %s18, 2
    // Predicated region
    $region41: #{block_forward.11} parent=5 // pred_check
      %p332 = pneg %p331
    $region42: #{block_forward.11} parent=5 // pred_check_branch
      %334 = sbr.rel (%p332) target = $region44
    $region43: #{block_forward.11} parent=5 // pred_region
      // Predicated region
      $region45: #{block_forward.11} parent=43 // pred_check
        %p335 = pneg %p38
      $region46: #{block_forward.11} parent=43 // pred_check_branch
        %337 = sbr.rel (%p335) target = $region48
      $region47: #{block_forward.11} parent=43 // pred_region
        %p338 = scmp.lt.s32.totalorder %s18, 1
        %s339 = scalar_select %p338, %s18, 1
        %s340 = smul.addr %s339, 2
        %s341 = smul.addr %s340, 8
        %s342 = scalar_lea.vmem %s0, %s341
      $region48: #{block_forward.11} parent=43 // pred_fallthru
        _
      // Predicated region
      $region49: #{block_forward.11} parent=43 // pred_check
        %p343 = pneg %p64
      $region50: #{block_forward.11} parent=43 // pred_check_branch
        %345 = sbr.rel (%p343) target = $region52
      $region51: #{block_forward.11} parent=43 // pred_region
        %p346 = scmp.lt.s32.totalorder %s18, 1
        %s347 = scalar_select %p346, %s18, 1
        %s348 = smul.addr %s347, 2
        %s349 = smul.addr %s348, 8
        %s350 = scalar_lea.vmem %s1, %s349
      $region52: #{block_forward.11} parent=43 // pred_fallthru
        _
    $region44: #{block_forward.11} parent=5 // pred_fallthru
      _
    %p351 = scmp.le.s32.totalorder 1, %s18
    %p352 = scmp.lt.s32.totalorder %s18, 3
    %p353 = pnand %p351, %p352
    %p354 = pneg %p353
    // Predicated region
    $region53: #{block_forward.11} parent=5 // pred_check
      _
    $region54: #{block_forward.11} parent=5 // pred_check_branch
      %356 = sbr.rel (%p353) target = $region56
    $region55: #{block_forward.11} parent=5 // pred_region
      %s357 = ssub.s32 %s18, 1
      %p358 = scmp.lt.s32.totalorder %s23, 1
      %s359 = scalar_select %p358, %s23, 1
      %s360 = smul.addr %s359, 2
      %s361 = smul.addr %s360, 8
      %s362 = scalar_lea.vmem %s0, %s361
      %p363 = pneg %p44
      %p364 = pneg %p41
      %p365 = scmp.lt.s32.totalorder %s23, 1
      %s366 = scalar_select %p365, %s23, 1
      %s367 = smul.addr %s366, 2
      %s368 = smul.addr %s367, 8
      %s369 = scalar_lea.vmem %s1, %s368
      %p370 = pneg %p70
      %p371 = pneg %p67
      %p372 = pneg %p91
      %p373 = pneg %p88
      %p374 = pneg %p112
      %p375 = pneg %p109
      %p376 = pneg %p133
      %p377 = pneg %p130
      %p378 = pneg %p154
      %p379 = pneg %p151
      %p380 = pneg %p175
      %p381 = pneg %p172
      %p382 = pneg %p196
      %p383 = pneg %p193
      %p384 = pneg %p217
      %p385 = pneg %p214
      %p386 = pneg %p243
      %p387 = pneg %p240
      %p388 = scmp.lt.s32.totalorder %s23, 1
      %s389 = scalar_select %p388, %s23, 1
      %s390 = smul.addr %s389, 2
      %s391 = smul.addr %s390, 8
      %s392 = scalar_lea.vmem %s9, %s391
      %p393 = pneg %p269
      %p394 = pneg %p266
      %p395 = scmp.lt.s32.totalorder %s23, 1
      %s396 = scalar_select %p395, %s23, 1
      %s397 = scalar_lea.vmem %s10, %s396
      %p398 = pneg %p295
      %p399 = pneg %p292
      %p400 = scmp.lt.s32.totalorder %s23, 1
      %s401 = scalar_select %p400, %s23, 1
      %s402 = scalar_lea.vmem %s11, %s401
      %p403 = scmp.lt.s32.totalorder %s23, 1
      %s404 = scalar_select %p403, %s23, 1
      %s405 = smul.addr %s404, 2
      %s406 = smul.addr %s405, 8
      %s407 = scalar_lea.vmem %s0, %s406
      %p408 = scmp.lt.s32.totalorder %s23, 1
      %s409 = scalar_select %p408, %s23, 1
      %s410 = smul.addr %s409, 2
      %s411 = smul.addr %s410, 8
      %s412 = scalar_lea.vmem %s1, %s411
      %p413 = scmp.lt.s32.totalorder %s23, 1
      %s414 = scalar_select %p413, %s23, 1
      %s415 = smul.addr %s414, 2
      %s416 = smul.addr %s415, 8
      %s417 = scalar_lea.vmem %s9, %s416
      %p418 = scmp.lt.s32.totalorder %s23, 1
      %s419 = scalar_select %p418, %s23, 1
      %s420 = scalar_lea.vmem %s10, %s419
      %p421 = scmp.lt.s32.totalorder %s23, 1
      %s422 = scalar_select %p421, %s23, 1
      %s423 = scalar_lea.vmem %s11, %s422
      %v425 = vld [vmem:[%s407] sm:$0xff]
      %v426 = vld [vmem:[%s407 + $0x8] sm:$0xff]
      %v427 = vld [vmem:[%s412] sm:$0xff]
      %v428 = vld [vmem:[%s412 + $0x8] sm:$0xff]
      %v429 = vld [vmem:[%s2] sm:$0x1]
      %v431 = vlaneseq
      %v432 = vshrl.u32 %v431, 7
      %v433 = vsub.s32 0, %v432
      %v434 = vrot.slane %v429, %v433
      %v436 = vmul.f32 %v427, %v434
      %v437 = vmul.f32 %v428, %v434
      %v438 = vld [vmem:[%s3] sm:$0x1]
      %v440 = vlaneseq
      %v441 = vshrl.u32 %v440, 7
      %v442 = vsub.s32 0, %v441
      %v443 = vrot.slane %v438, %v442
      %v445 = vadd.f32 %v436, %v443
      %v446 = vadd.f32 %v437, %v443
      %448 = vset.pattern.permute.xlu0 0
      %449 = vperm.xlu0 %448, %v425
      %v450 = vpop.permute.xlu0 %449
      %453 = vset.pattern.permute.xlu0 0
      %454 = vperm.xlu0 %453, %v426
      %v455 = vpop.permute.xlu0 %454
      %v457 = vmul.f32 %v445, %v450
      %v458 = vmul.f32 %v446, %v455
      %v459 = vpack.c.bf16 %v458, %v457
      %v460 = vld [vmem:[%s4] sm:$0xf]
      %v461 = vld [vmem:[%s4 + $0x4] sm:$0xf]
      %v462 = vld [vmem:[%s4 + $0x8] sm:$0xf]
      %v463 = vld [vmem:[%s4 + $0xc] sm:$0xf]
      %v464 = vld [vmem:[%s4 + $0x10] sm:$0xf]
      %v465 = vld [vmem:[%s4 + $0x14] sm:$0xf]
      %v466 = vld [vmem:[%s4 + $0x18] sm:$0xf]
      %v467 = vld [vmem:[%s4 + $0x1c] sm:$0xf]
      %v468 = vld [vmem:[%s5] sm:$0x1]
      %v470 = vlaneseq
      %v471 = vshrl.u32 %v470, 7
      %v472 = vsub.s32 0, %v471
      %v473 = vrot.slane %v468, %v472
      %v483 = vunpack.c.l.b16 %v460
      %v484 = vunpack.c.l.b16 %v461
      %v485 = vunpack.c.l.b16 %v462
      %v486 = vunpack.c.l.b16 %v463
      %v487 = vunpack.c.l.b16 %v464
      %v488 = vunpack.c.l.b16 %v465
      %v489 = vunpack.c.l.b16 %v466
      %v490 = vunpack.c.l.b16 %v467
      %v491 = vpack.c.b16 %v484, %v483
      %v492 = vpack.c.b16 %v486, %v485
      %v493 = vpack.c.b16 %v488, %v487
      %v494 = vpack.c.b16 %v490, %v489
      %vm499 = vcmask 523264
      %v501 = vsel %vm499, %v459, 0
      %503 = vmatprep.subr.bf16.mxu0 0
      %504 = vmatpush1.bf16.msra.mxu0 0
      %505 = vmatprep.subr.bf16.mxu0 0
      %506 = vmatpush1.bf16.msra.mxu0 0
      %507 = vmatprep.subr.bf16.mxu0 0
      %508 = vmatpush1.bf16.msra.mxu0 0
      %509 = vmatprep.subr.bf16.mxu0 0
      %510 = vmatpush1.bf16.msra.mxu0 0
      %511 = vmatprep.subr.bf16.mxu0 0
      %512 = vmatpush1.bf16.msra.mxu0 %v494
      %513 = vmatprep.subr.bf16.mxu0 0
      %514 = vmatpush1.bf16.msra.mxu0 %v493
      %515 = vmatprep.subr.bf16.mxu0 0
      %516 = vmatpush1.bf16.msra.mxu0 %v492
      %517 = vmatprep.subr.bf16.mxu0 0
      %518 = vmatpush1.bf16.msra.mxu0 %v491
      %519 = vmatprep.subr.bf16.mxu0 0
      %520 = vmatpush2.bf16.msra.mxu0 0
      %521 = vmatprep.subr.bf16.mxu0 0
      %522 = vmatpush2.bf16.msra.mxu0 0
      %523 = vmatprep.subr.bf16.mxu0 0
      %524 = vmatpush2.bf16.msra.mxu0 0
      %525 = vmatprep.subr.bf16.mxu0 0
      %526 = vmatpush2.bf16.msra.mxu0 0
      %527 = vmatprep.subr.bf16.mxu0 0
      %528 = vmatpush2.bf16.msra.mxu0 0
      %529 = vmatprep.subr.bf16.mxu0 0
      %530 = vmatpush2.bf16.msra.mxu0 0
      %531 = vmatprep.subr.bf16.mxu0 0
      %532 = vmatpush2.bf16.msra.mxu0 0
      %533 = vmatprep.subr.bf16.mxu0 0
      %534 = vmatpush2.bf16.msra.mxu0 0
      %535 = vmatprep.mubr.bf16.mxu0 0
      %536 = vmatmul.mubr.bf16.gmra.mxu0 %v501
      %v537 = vpop.f32.mrf.mxu0
      %v538 = vadd.f32 %v473, %v537
      %v539 = vpop.f32.mrf.mxu0
      %v540 = vpop.f32.mrf.mxu0
      %v541 = vadd.f32 %v473, %v540
      %v542 = vpop.f32.mrf.mxu0
      %543 = vdwg.mxu0
      %v544 = vld [vmem:[%s6] sm:$0xf]
      %v545 = vld [vmem:[%s6 + $0x4] sm:$0xf]
      %v546 = vld [vmem:[%s6 + $0x8] sm:$0xf]
      %v547 = vld [vmem:[%s6 + $0xc] sm:$0xf]
      %v548 = vld [vmem:[%s6 + $0x10] sm:$0xf]
      %v549 = vld [vmem:[%s6 + $0x14] sm:$0xf]
      %v550 = vld [vmem:[%s6 + $0x18] sm:$0xf]
      %v551 = vld [vmem:[%s6 + $0x1c] sm:$0xf]
      %v552 = vld [vmem:[%s7] sm:$0x1]
      %v554 = vlaneseq
      %v555 = vshrl.u32 %v554, 7
      %v556 = vsub.s32 0, %v555
      %v557 = vrot.slane %v552, %v556
      %v567 = vunpack.c.l.b16 %v544
      %v568 = vunpack.c.l.b16 %v545
      %v569 = vunpack.c.l.b16 %v546
      %v570 = vunpack.c.l.b16 %v547
      %v571 = vunpack.c.l.b16 %v548
      %v572 = vunpack.c.l.b16 %v549
      %v573 = vunpack.c.l.b16 %v550
      %v574 = vunpack.c.l.b16 %v551
      %v575 = vpack.c.b16 %v568, %v567
      %v576 = vpack.c.b16 %v570, %v569
      %v577 = vpack.c.b16 %v572, %v571
      %v578 = vpack.c.b16 %v574, %v573
      %583 = vmatprep.subr.bf16.mxu0 0
      %584 = vmatpush1.bf16.msra.mxu0 0
      %585 = vmatprep.subr.bf16.mxu0 0
      %586 = vmatpush1.bf16.msra.mxu0 0
      %587 = vmatprep.subr.bf16.mxu0 0
      %588 = vmatpush1.bf16.msra.mxu0 0
      %589 = vmatprep.subr.bf16.mxu0 0
      %590 = vmatpush1.bf16.msra.mxu0 0
      %591 = vmatprep.subr.bf16.mxu0 0
      %592 = vmatpush1.bf16.msra.mxu0 %v578
      %593 = vmatprep.subr.bf16.mxu0 0
      %594 = vmatpush1.bf16.msra.mxu0 %v577
      %595 = vmatprep.subr.bf16.mxu0 0
      %596 = vmatpush1.bf16.msra.mxu0 %v576
      %597 = vmatprep.subr.bf16.mxu0 0
      %598 = vmatpush1.bf16.msra.mxu0 %v575
      %599 = vmatprep.subr.bf16.mxu0 0
      %600 = vmatpush2.bf16.msra.mxu0 0
      %601 = vmatprep.subr.bf16.mxu0 0
      %602 = vmatpush2.bf16.msra.mxu0 0
      %603 = vmatprep.subr.bf16.mxu0 0
      %604 = vmatpush2.bf16.msra.mxu0 0
      %605 = vmatprep.subr.bf16.mxu0 0
      %606 = vmatpush2.bf16.msra.mxu0 0
      %607 = vmatprep.subr.bf16.mxu0 0
      %608 = vmatpush2.bf16.msra.mxu0 0
      %609 = vmatprep.subr.bf16.mxu0 0
      %610 = vmatpush2.bf16.msra.mxu0 0
      %611 = vmatprep.subr.bf16.mxu0 0
      %612 = vmatpush2.bf16.msra.mxu0 0
      %613 = vmatprep.subr.bf16.mxu0 0
      %614 = vmatpush2.bf16.msra.mxu0 0
      %615 = vmatprep.mubr.bf16.mxu0 0
      %616 = vmatmul.mubr.bf16.gmra.mxu0 %v501
      %v617 = vpop.f32.mrf.mxu0
      %v618 = vadd.f32 %v557, %v617
      %v619 = vpop.f32.mrf.mxu0
      %v620 = vpop.f32.mrf.mxu0
      %v621 = vadd.f32 %v557, %v620
      %v622 = vpop.f32.mrf.mxu0
      %623 = vdwg.mxu0
      %v624 = vxor.u32 %v618, 2147483648
      %v625 = vxor.u32 %v621, 2147483648
      %v626 = vmul.f32 %v624, 1.442695
      %v627 = vpow.pop %v626
      %v628 = vmul.f32 %v625, 1.442695
      %v629 = vpow.pop %v628
      %v630 = vadd.f32 %v627, 1.0
      %v631 = vadd.f32 %v629, 1.0
      %v632 = vrcp.pop %v630
      %v633 = vmul.f32 1.0, %v632
      %v634 = vrcp.pop %v631
      %v635 = vmul.f32 1.0, %v634
      %v636 = vmul.f32 %v538, %v633
      %v637 = vmul.f32 %v541, %v635
      %v638 = vmul.f32 %v636, %v450
      %v639 = vmul.f32 %v637, %v455
      %640 = vst.msk [vmem:[#allocation2] sm:$0xff] %vm499, 0.0
      %641 = vst.msk [vmem:[#allocation2 + $0x8] sm:$0xff] %vm499, 0.0
      %642 = vst.msk [vmem:[#allocation2 + $0x10] sm:$0xff] %vm499, 0.0
      %643 = vst.msk [vmem:[#allocation2 + $0x18] sm:$0xff] %vm499, 0.0
      %644 = vst.msk [vmem:[#allocation2 + $0x8] sm:$0xff] %vm499, %v638
      %645 = vst.msk [vmem:[#allocation2 + $0x10] sm:$0xff] %vm499, %v639
      %v646 = vld [vmem:[#allocation2 + $0x5] sm:$0xff]
      %v647 = vld [vmem:[#allocation2 + $0xd] sm:$0xff]
      %v648 = vld [vmem:[%s8] sm:$0x1]
      %v649 = vlaneseq
      %v650 = vshrl.u32 %v649, 7
      %v651 = vsub.s32 0, %v650
      %v652 = vrot.slane %v648, %v651
      %v653 = vmul.f32 %v646, %v652
      %v654 = vmul.f32 %v647, %v652
      %v655 = vadd.f32 %v653, 0.0
      %v656 = vadd.f32 %v654, 0.0
      %v657 = vld [vmem:[#allocation2 + $0x6] sm:$0xff]
      %v658 = vld [vmem:[#allocation2 + $0xe] sm:$0xff]
      %v659 = vld [vmem:[%s8 + $0x1] sm:$0x1]
      %v660 = vlaneseq
      %v661 = vshrl.u32 %v660, 7
      %v662 = vsub.s32 0, %v661
      %v663 = vrot.slane %v659, %v662
      %v664 = vmul.f32 %v657, %v663
      %v665 = vmul.f32 %v658, %v663
      %v666 = vadd.f32 %v655, %v664
      %v667 = vadd.f32 %v656, %v665
      %v668 = vld [vmem:[#allocation2 + $0x7] sm:$0xff]
      %v669 = vld [vmem:[#allocation2 + $0xf] sm:$0xff]
      %v670 = vld [vmem:[%s8 + $0x2] sm:$0x1]
      %v671 = vlaneseq
      %v672 = vshrl.u32 %v671, 7
      %v673 = vsub.s32 0, %v672
      %v674 = vrot.slane %v670, %v673
      %v675 = vmul.f32 %v668, %v674
      %v676 = vmul.f32 %v669, %v674
      %v677 = vadd.f32 %v666, %v675
      %v678 = vadd.f32 %v667, %v676
      %v679 = vld [vmem:[#allocation2 + $0x8] sm:$0xff]
      %v680 = vld [vmem:[#allocation2 + $0x10] sm:$0xff]
      %v681 = vld [vmem:[%s8 + $0x3] sm:$0x1]
      %v682 = vlaneseq
      %v683 = vshrl.u32 %v682, 7
      %v684 = vsub.s32 0, %v683
      %v685 = vrot.slane %v681, %v684
      %v686 = vmul.f32 %v679, %v685
      %v687 = vmul.f32 %v680, %v685
      %v688 = vadd.f32 %v677, %v686
      %v689 = vadd.f32 %v678, %v687
      %v690 = vld [vmem:[#allocation2 + $0x9] sm:$0xff]
      %v691 = vld [vmem:[#allocation2 + $0x11] sm:$0xff]
      %v692 = vld [vmem:[%s8 + $0x4] sm:$0x1]
      %v693 = vlaneseq
      %v694 = vshrl.u32 %v693, 7
      %v695 = vsub.s32 0, %v694
      %v696 = vrot.slane %v692, %v695
      %v697 = vmul.f32 %v690, %v696
      %v698 = vmul.f32 %v691, %v696
      %v699 = vadd.f32 %v688, %v697
      %v700 = vadd.f32 %v689, %v698
      %v701 = vld [vmem:[#allocation2 + $0xa] sm:$0xff]
      %v702 = vld [vmem:[#allocation2 + $0x12] sm:$0xff]
      %v703 = vld [vmem:[%s8 + $0x5] sm:$0x1]
      %v704 = vlaneseq
      %v705 = vshrl.u32 %v704, 7
      %v706 = vsub.s32 0, %v705
      %v707 = vrot.slane %v703, %v706
      %v708 = vmul.f32 %v701, %v707
      %v709 = vmul.f32 %v702, %v707
      %v710 = vadd.f32 %v699, %v708
      %v711 = vadd.f32 %v700, %v709
      %v712 = vld [vmem:[#allocation2 + $0xb] sm:$0xff]
      %v713 = vld [vmem:[#allocation2 + $0x13] sm:$0xff]
      %v714 = vld [vmem:[%s8 + $0x6] sm:$0x1]
      %v715 = vlaneseq
      %v716 = vshrl.u32 %v715, 7
      %v717 = vsub.s32 0, %v716
      %v718 = vrot.slane %v714, %v717
      %v719 = vmul.f32 %v712, %v718
      %v720 = vmul.f32 %v713, %v718
      %v721 = vadd.f32 %v710, %v719
      %v722 = vadd.f32 %v711, %v720
      %723 = vst.msk [vmem:[%s417] sm:$0xff] %vm499, %v721
      %724 = vst.msk [vmem:[%s417 + $0x8] sm:$0xff] %vm499, %v722
      %v725 = vmul.f32 %v721, %v450
      %v726 = vmul.f32 %v722, %v455
      %v727 = vsel %vm499, %v725, 0.0
      %v728 = vsel %vm499, %v726, 0.0
      %v729 = vadd.f32 %v727, %v728
      %v730 = vrot.slane %v729, 4
      %v731 = vadd.f32 %v729, %v730
      %v732 = vrot.slane %v731, 2
      %v733 = vadd.f32 %v731, %v732
      %v734 = vrot.slane %v733, 1
      %v735 = vadd.f32 %v733, %v734
      %vm736 = vcmask 516096
      %737 = vst.msk [vmem:[%s420] sm:$0x1] %vm736, %v735
      %v738 = vmul.f32 %v725, %v721
      %v739 = vmul.f32 %v726, %v722
      %v740 = vsel %vm499, %v738, 0.0
      %v741 = vsel %vm499, %v739, 0.0
      %v742 = vadd.f32 %v740, %v741
      %v743 = vrot.slane %v742, 4
      %v744 = vadd.f32 %v742, %v743
      %v745 = vrot.slane %v744, 2
      %v746 = vadd.f32 %v744, %v745
      %v747 = vrot.slane %v746, 1
      %v748 = vadd.f32 %v746, %v747
      %749 = vst.msk [vmem:[%s423] sm:$0x1] %vm736, %v748
      %p750 = scmp.lt.s32.totalorder %s23, 1
      %s751 = scalar_select %p750, %s23, 1
      %s752 = smul.addr %s751, 2
      %s753 = smul.addr %s752, 8
      %s754 = scalar_lea.vmem %s9, %s753
      %p755 = scmp.lt.s32.totalorder %s23, 1
      %s756 = scalar_select %p755, %s23, 1
      %s757 = scalar_lea.vmem %s10, %s756
      %p758 = scmp.lt.s32.totalorder %s23, 1
      %s759 = scalar_select %p758, %s23, 1
      %s760 = scalar_lea.vmem %s11, %s759
      // Predicated region
      $region57: #{block_forward.11} parent=55 // pred_check
        %p761 = pneg %p240
      $region58: #{block_forward.11} parent=55 // pred_check_branch
        %763 = sbr.rel (%p761) target = $region60
      $region59: #{block_forward.11} parent=55 // pred_region
        _
      $region60: #{block_forward.11} parent=55 // pred_fallthru
        _
      // Predicated region
      $region61: #{block_forward.11} parent=55 // pred_check
        %p764 = pneg %p266
      $region62: #{block_forward.11} parent=55 // pred_check_branch
        %766 = sbr.rel (%p764) target = $region64
      $region63: #{block_forward.11} parent=55 // pred_region
        _
      $region64: #{block_forward.11} parent=55 // pred_fallthru
        _
      // Predicated region
      $region65: #{block_forward.11} parent=55 // pred_check
        %p767 = pneg %p292
      $region66: #{block_forward.11} parent=55 // pred_check_branch
        %769 = sbr.rel (%p767) target = $region68
      $region67: #{block_forward.11} parent=55 // pred_region
        _
      $region68: #{block_forward.11} parent=55 // pred_fallthru
        _
    $region56: #{block_forward.11} parent=5 // pred_fallthru
      _
    %p770 = scmp.le.s32.totalorder 2, %s18
    // Predicated region
    $region69: #{block_forward.11} parent=5 // pred_check
      %p771 = pneg %p770
    $region70: #{block_forward.11} parent=5 // pred_check_branch
      %773 = sbr.rel (%p771) target = $region72
    $region71: #{block_forward.11} parent=5 // pred_region
      %s774 = ssub.s32 %s18, 2
      // Predicated region
      $region73: #{block_forward.11} parent=71 // pred_check
        %p775 = pneg %p246
      $region74: #{block_forward.11} parent=71 // pred_check_branch
        %777 = sbr.rel (%p775) target = $region76
      $region75: #{block_forward.11} parent=71 // pred_region
        %p778 = scmp.lt.s32.totalorder %s24, 1
        %s779 = scalar_select %p778, %s24, 1
        %s780 = smul.addr %s779, 2
        %s781 = smul.addr %s780, 8
        %s782 = scalar_lea.vmem %s9, %s781
      $region76: #{block_forward.11} parent=71 // pred_fallthru
        _
      // Predicated region
      $region77: #{block_forward.11} parent=71 // pred_check
        %p783 = pneg %p272
      $region78: #{block_forward.11} parent=71 // pred_check_branch
        %785 = sbr.rel (%p783) target = $region80
      $region79: #{block_forward.11} parent=71 // pred_region
        %p786 = scmp.lt.s32.totalorder %s24, 1
        %s787 = scalar_select %p786, %s24, 1
        %s788 = scalar_lea.vmem %s10, %s787
      $region80: #{block_forward.11} parent=71 // pred_fallthru
        _
      // Predicated region
      $region81: #{block_forward.11} parent=71 // pred_check
        %p789 = pneg %p298
      $region82: #{block_forward.11} parent=71 // pred_check_branch
        %791 = sbr.rel (%p789) target = $region84
      $region83: #{block_forward.11} parent=71 // pred_region
        %p792 = scmp.lt.s32.totalorder %s24, 1
        %s793 = scalar_select %p792, %s24, 1
        %s794 = scalar_lea.vmem %s11, %s793
      $region84: #{block_forward.11} parent=71 // pred_fallthru
        _
    $region72: #{block_forward.11} parent=5 // pred_fallthru
      _
  $region6: #{block_forward.11} parent=0 // loop_footer
    %s22 = sadd.s32 1, %s18
  $region7: #{block_forward.11} parent=0 // loop_footer_branch
    %17 = sbr.rel target = $region3
  $region8: #{block_forward.11} parent=0 // loop_exit
    _

// kernel: block_forward.9
$region0: #{block_forward.9}
  #allocation0 [shape = 'u32[]', space=smem, size = 0x4, offset = 0x4, fixed_abs, tag = 'smem constant byte address 0x4 - core index']
  #allocation1 [shape = 'u32[144,128]{1,0:T(1,128)}', space=vmem, size = 0x12000, scoped, tag = 'internal scratch']
  %s0 = inlined_call_operand.vmem [shape: f32[2,1,16], index: 0, kind: input, shape index: {}]
  %s1 = inlined_call_operand.vmem [shape: f32[2,16,1], index: 1, kind: input, shape index: {}]
  %s2 = inlined_call_operand.vmem [shape: f32[2,16,64], index: 2, kind: input, shape index: {}]
  %s3 = inlined_call_operand.vmem [shape: f32[2,16,64], index: 3, kind: input, shape index: {}]
  %s4 = inlined_call_operand.vmem [shape: f32[2,16,64], index: 4, kind: input, shape index: {}]
  %s5 = inlined_call_operand.vmem [shape: f32[2,16,64], index: 5, kind: input, shape index: {}]
  %s6 = inlined_call_operand.vmem [shape: f32[31,64], index: 6, kind: input, shape index: {}]
  %s7 = inlined_call_operand.vmem [shape: f32[4,16], index: 7, kind: input, shape index: {}]
  %s8 = inlined_call_operand.vmem [shape: f32[4,16], index: 8, kind: input, shape index: {}]
  %s9 = inlined_call_operand.vmem [shape: bf16[64,64], index: 9, kind: input, shape index: {}]
  %s10 = inlined_call_operand.vmem [shape: f32[1,64], index: 10, kind: input, shape index: {}]
  %s11 = inlined_call_operand.vmem [shape: f32[2,16,64], index: 11, kind: output, shape index: {}]
  %s12 = sld [smem:[#allocation0]]
  $region77: #{block_forward.9} parent=0
    _
  %s14 = ssub.s32 1, %s12
  %s15 = scalar_select 0, %s14, %s12
  loop: start=0, step=1, limit=4
  $region2: #{block_forward.9} parent=0 // loop_pre_header
    _
  $region3: #{block_forward.9} parent=0 // loop_header
    %s17 = sphi 0, %s21
    %p18 = scmp.ge.s32.totalorder %s17, 4
    %s27 = sphi 0, %s29
    %s30 = sphi 0, %s27
    %s31 = sphi 0, %s30
    %s47 = sphi 0, %s31
    %s53 = sphi 0, %s55
    %s56 = sphi 0, %s53
    %s57 = sphi 0, %s56
    %s73 = sphi 0, %s57
    %s79 = sphi 0, %s81
    %s82 = sphi 0, %s79
    %s83 = sphi 0, %s82
    %s99 = sphi 0, %s83
    %s105 = sphi 0, %s107
    %s108 = sphi 0, %s105
    %s109 = sphi 0, %s108
    %s125 = sphi 0, %s109
    %s131 = sphi 0, %s133
    %s134 = sphi 0, %s131
    %s135 = sphi 0, %s134
    %s151 = sphi 0, %s135
    %s157 = sphi 0, %s159
    %s160 = sphi 0, %s157
    %s161 = sphi 0, %s160
    %s177 = sphi 0, %s161
    %s181 = sphi 0, %s181
    %s183 = sphi 0, %s181
    %s184 = sphi 0, %s183
    %s198 = sphi 0, %s184
    %s202 = sphi 0, %s202
    %s204 = sphi 0, %s202
    %s205 = sphi 0, %s204
    %s219 = sphi 0, %s205
    %s223 = sphi 0, %s223
    %s225 = sphi 0, %s223
    %s226 = sphi 0, %s225
    %s240 = sphi 0, %s226
    %s244 = sphi 0, %s244
    %s246 = sphi 0, %s244
    %s247 = sphi 0, %s246
    %s261 = sphi 0, %s247
    %s265 = sphi 0, %s265
    %s267 = sphi 0, %s265
    %s268 = sphi 0, %s267
    %s282 = sphi 0, %s268
    %s288 = sphi 0, %s290
    %s291 = sphi 0, %s288
    %s292 = sphi 0, %s291
    %s308 = sphi 0, %s292
  $region4: #{block_forward.9} parent=0 // loop_header_branch
    %20 = sbr.rel (%p18) target = $region8
  $region5: #{block_forward.9} parent=0 // loop_body
    %s22 = ssub.s32 %s17, 1
    %s23 = ssub.s32 %s17, 2
    %s24 = sadd.s32 %s17, 1
    %s25 = ssub.s32 %s17, %s24
    %p26 = scmp.eq.s32.totalorder %s25, 0
    %s28 = sadd.s32 %s27, 1
    %s29 = scalar_select %p26, %s27, %s28
    %p32 = pneg %p26
    %p33 = scmp.eq.s32.totalorder %s17, 1
    %p34 = por %p32, %p33
    %p35 = scmp.ne.s32.totalorder %s27, %s30
    %p36 = scmp.eq.s32.totalorder %s17, 0
    %p37 = por %p35, %p36
    %p38 = scmp.ne.s32.totalorder %s27, %s30
    %p39 = scmp.eq.s32.totalorder %s22, 1
    %p40 = por %p38, %p39
    %p41 = scmp.ne.s32.totalorder %s30, %s31
    %p42 = scmp.eq.s32.totalorder %s22, 0
    %p43 = por %p41, %p42
    %p44 = scmp.ne.s32.totalorder %s30, %s31
    %p45 = scmp.eq.s32.totalorder %s23, 1
    %p46 = por %p44, %p45
    %p48 = scmp.ne.s32.totalorder %s31, %s47
    %p49 = scmp.eq.s32.totalorder %s23, 0
    %p50 = por %p48, %p49
    %s51 = ssub.s32 %s17, %s24
    %p52 = scmp.eq.s32.totalorder %s51, 0
    %s54 = sadd.s32 %s53, 1
    %s55 = scalar_select %p52, %s53, %s54
    %p58 = pneg %p52
    %p59 = scmp.eq.s32.totalorder %s17, 1
    %p60 = por %p58, %p59
    %p61 = scmp.ne.s32.totalorder %s53, %s56
    %p62 = scmp.eq.s32.totalorder %s17, 0
    %p63 = por %p61, %p62
    %p64 = scmp.ne.s32.totalorder %s53, %s56
    %p65 = scmp.eq.s32.totalorder %s22, 1
    %p66 = por %p64, %p65
    %p67 = scmp.ne.s32.totalorder %s56, %s57
    %p68 = scmp.eq.s32.totalorder %s22, 0
    %p69 = por %p67, %p68
    %p70 = scmp.ne.s32.totalorder %s56, %s57
    %p71 = scmp.eq.s32.totalorder %s23, 1
    %p72 = por %p70, %p71
    %p74 = scmp.ne.s32.totalorder %s57, %s73
    %p75 = scmp.eq.s32.totalorder %s23, 0
    %p76 = por %p74, %p75
    %s77 = ssub.s32 %s17, %s24
    %p78 = scmp.eq.s32.totalorder %s77, 0
    %s80 = sadd.s32 %s79, 1
    %s81 = scalar_select %p78, %s79, %s80
    %p84 = pneg %p78
    %p85 = scmp.eq.s32.totalorder %s17, 1
    %p86 = por %p84, %p85
    %p87 = scmp.ne.s32.totalorder %s79, %s82
    %p88 = scmp.eq.s32.totalorder %s17, 0
    %p89 = por %p87, %p88
    %p90 = scmp.ne.s32.totalorder %s79, %s82
    %p91 = scmp.eq.s32.totalorder %s22, 1
    %p92 = por %p90, %p91
    %p93 = scmp.ne.s32.totalorder %s82, %s83
    %p94 = scmp.eq.s32.totalorder %s22, 0
    %p95 = por %p93, %p94
    %p96 = scmp.ne.s32.totalorder %s82, %s83
    %p97 = scmp.eq.s32.totalorder %s23, 1
    %p98 = por %p96, %p97
    %p100 = scmp.ne.s32.totalorder %s83, %s99
    %p101 = scmp.eq.s32.totalorder %s23, 0
    %p102 = por %p100, %p101
    %s103 = ssub.s32 %s17, %s24
    %p104 = scmp.eq.s32.totalorder %s103, 0
    %s106 = sadd.s32 %s105, 1
    %s107 = scalar_select %p104, %s105, %s106
    %p110 = pneg %p104
    %p111 = scmp.eq.s32.totalorder %s17, 1
    %p112 = por %p110, %p111
    %p113 = scmp.ne.s32.totalorder %s105, %s108
    %p114 = scmp.eq.s32.totalorder %s17, 0
    %p115 = por %p113, %p114
    %p116 = scmp.ne.s32.totalorder %s105, %s108
    %p117 = scmp.eq.s32.totalorder %s22, 1
    %p118 = por %p116, %p117
    %p119 = scmp.ne.s32.totalorder %s108, %s109
    %p120 = scmp.eq.s32.totalorder %s22, 0
    %p121 = por %p119, %p120
    %p122 = scmp.ne.s32.totalorder %s108, %s109
    %p123 = scmp.eq.s32.totalorder %s23, 1
    %p124 = por %p122, %p123
    %p126 = scmp.ne.s32.totalorder %s109, %s125
    %p127 = scmp.eq.s32.totalorder %s23, 0
    %p128 = por %p126, %p127
    %s129 = ssub.s32 %s17, %s24
    %p130 = scmp.eq.s32.totalorder %s129, 0
    %s132 = sadd.s32 %s131, 1
    %s133 = scalar_select %p130, %s131, %s132
    %p136 = pneg %p130
    %p137 = scmp.eq.s32.totalorder %s17, 1
    %p138 = por %p136, %p137
    %p139 = scmp.ne.s32.totalorder %s131, %s134
    %p140 = scmp.eq.s32.totalorder %s17, 0
    %p141 = por %p139, %p140
    %p142 = scmp.ne.s32.totalorder %s131, %s134
    %p143 = scmp.eq.s32.totalorder %s22, 1
    %p144 = por %p142, %p143
    %p145 = scmp.ne.s32.totalorder %s134, %s135
    %p146 = scmp.eq.s32.totalorder %s22, 0
    %p147 = por %p145, %p146
    %p148 = scmp.ne.s32.totalorder %s134, %s135
    %p149 = scmp.eq.s32.totalorder %s23, 1
    %p150 = por %p148, %p149
    %p152 = scmp.ne.s32.totalorder %s135, %s151
    %p153 = scmp.eq.s32.totalorder %s23, 0
    %p154 = por %p152, %p153
    %s155 = ssub.s32 %s17, %s24
    %p156 = scmp.eq.s32.totalorder %s155, 0
    %s158 = sadd.s32 %s157, 1
    %s159 = scalar_select %p156, %s157, %s158
    %p162 = pneg %p156
    %p163 = scmp.eq.s32.totalorder %s17, 1
    %p164 = por %p162, %p163
    %p165 = scmp.ne.s32.totalorder %s157, %s160
    %p166 = scmp.eq.s32.totalorder %s17, 0
    %p167 = por %p165, %p166
    %p168 = scmp.ne.s32.totalorder %s157, %s160
    %p169 = scmp.eq.s32.totalorder %s22, 1
    %p170 = por %p168, %p169
    %p171 = scmp.ne.s32.totalorder %s160, %s161
    %p172 = scmp.eq.s32.totalorder %s22, 0
    %p173 = por %p171, %p172
    %p174 = scmp.ne.s32.totalorder %s160, %s161
    %p175 = scmp.eq.s32.totalorder %s23, 1
    %p176 = por %p174, %p175
    %p178 = scmp.ne.s32.totalorder %s161, %s177
    %p179 = scmp.eq.s32.totalorder %s23, 0
    %p180 = por %p178, %p179
    %s182 = sadd.s32 %s181, 1
    %p185 = scmp.eq.s32.totalorder %s17, 1
    %p186 = scmp.ne.s32.totalorder %s181, %s183
    %p187 = scmp.eq.s32.totalorder %s17, 0
    %p188 = por %p186, %p187
    %p189 = scmp.ne.s32.totalorder %s181, %s183
    %p190 = scmp.eq.s32.totalorder %s22, 1
    %p191 = por %p189, %p190
    %p192 = scmp.ne.s32.totalorder %s183, %s184
    %p193 = scmp.eq.s32.totalorder %s22, 0
    %p194 = por %p192, %p193
    %p195 = scmp.ne.s32.totalorder %s183, %s184
    %p196 = scmp.eq.s32.totalorder %s23, 1
    %p197 = por %p195, %p196
    %p199 = scmp.ne.s32.totalorder %s184, %s198
    %p200 = scmp.eq.s32.totalorder %s23, 0
    %p201 = por %p199, %p200
    %s203 = sadd.s32 %s202, 1
    %p206 = scmp.eq.s32.totalorder %s17, 1
    %p207 = scmp.ne.s32.totalorder %s202, %s204
    %p208 = scmp.eq.s32.totalorder %s17, 0
    %p209 = por %p207, %p208
    %p210 = scmp.ne.s32.totalorder %s202, %s204
    %p211 = scmp.eq.s32.totalorder %s22, 1
    %p212 = por %p210, %p211
    %p213 = scmp.ne.s32.totalorder %s204, %s205
    %p214 = scmp.eq.s32.totalorder %s22, 0
    %p215 = por %p213, %p214
    %p216 = scmp.ne.s32.totalorder %s204, %s205
    %p217 = scmp.eq.s32.totalorder %s23, 1
    %p218 = por %p216, %p217
    %p220 = scmp.ne.s32.totalorder %s205, %s219
    %p221 = scmp.eq.s32.totalorder %s23, 0
    %p222 = por %p220, %p221
    %s224 = sadd.s32 %s223, 1
    %p227 = scmp.eq.s32.totalorder %s17, 1
    %p228 = scmp.ne.s32.totalorder %s223, %s225
    %p229 = scmp.eq.s32.totalorder %s17, 0
    %p230 = por %p228, %p229
    %p231 = scmp.ne.s32.totalorder %s223, %s225
    %p232 = scmp.eq.s32.totalorder %s22, 1
    %p233 = por %p231, %p232
    %p234 = scmp.ne.s32.totalorder %s225, %s226
    %p235 = scmp.eq.s32.totalorder %s22, 0
    %p236 = por %p234, %p235
    %p237 = scmp.ne.s32.totalorder %s225, %s226
    %p238 = scmp.eq.s32.totalorder %s23, 1
    %p239 = por %p237, %p238
    %p241 = scmp.ne.s32.totalorder %s226, %s240
    %p242 = scmp.eq.s32.totalorder %s23, 0
    %p243 = por %p241, %p242
    %s245 = sadd.s32 %s244, 1
    %p248 = scmp.eq.s32.totalorder %s17, 1
    %p249 = scmp.ne.s32.totalorder %s244, %s246
    %p250 = scmp.eq.s32.totalorder %s17, 0
    %p251 = por %p249, %p250
    %p252 = scmp.ne.s32.totalorder %s244, %s246
    %p253 = scmp.eq.s32.totalorder %s22, 1
    %p254 = por %p252, %p253
    %p255 = scmp.ne.s32.totalorder %s246, %s247
    %p256 = scmp.eq.s32.totalorder %s22, 0
    %p257 = por %p255, %p256
    %p258 = scmp.ne.s32.totalorder %s246, %s247
    %p259 = scmp.eq.s32.totalorder %s23, 1
    %p260 = por %p258, %p259
    %p262 = scmp.ne.s32.totalorder %s247, %s261
    %p263 = scmp.eq.s32.totalorder %s23, 0
    %p264 = por %p262, %p263
    %s266 = sadd.s32 %s265, 1
    %p269 = scmp.eq.s32.totalorder %s17, 1
    %p270 = scmp.ne.s32.totalorder %s265, %s267
    %p271 = scmp.eq.s32.totalorder %s17, 0
    %p272 = por %p270, %p271
    %p273 = scmp.ne.s32.totalorder %s265, %s267
    %p274 = scmp.eq.s32.totalorder %s22, 1
    %p275 = por %p273, %p274
    %p276 = scmp.ne.s32.totalorder %s267, %s268
    %p277 = scmp.eq.s32.totalorder %s22, 0
    %p278 = por %p276, %p277
    %p279 = scmp.ne.s32.totalorder %s267, %s268
    %p280 = scmp.eq.s32.totalorder %s23, 1
    %p281 = por %p279, %p280
    %p283 = scmp.ne.s32.totalorder %s268, %s282
    %p284 = scmp.eq.s32.totalorder %s23, 0
    %p285 = por %p283, %p284
    %s286 = ssub.s32 %s17, %s24
    %p287 = scmp.eq.s32.totalorder %s286, 0
    %s289 = sadd.s32 %s288, 1
    %s290 = scalar_select %p287, %s288, %s289
    %p293 = pneg %p287
    %p294 = scmp.eq.s32.totalorder %s17, 1
    %p295 = por %p293, %p294
    %p296 = scmp.ne.s32.totalorder %s288, %s291
    %p297 = scmp.eq.s32.totalorder %s17, 0
    %p298 = por %p296, %p297
    %p299 = scmp.ne.s32.totalorder %s288, %s291
    %p300 = scmp.eq.s32.totalorder %s22, 1
    %p301 = por %p299, %p300
    %p302 = scmp.ne.s32.totalorder %s291, %s292
    %p303 = scmp.eq.s32.totalorder %s22, 0
    %p304 = por %p302, %p303
    %p305 = scmp.ne.s32.totalorder %s291, %s292
    %p306 = scmp.eq.s32.totalorder %s23, 1
    %p307 = por %p305, %p306
    %p309 = scmp.ne.s32.totalorder %s292, %s308
    %p310 = scmp.eq.s32.totalorder %s23, 0
    %p311 = por %p309, %p310
    %p312 = scmp.le.s32.totalorder 1, %s17
    %p313 = scmp.lt.s32.totalorder %s17, 3
    %p314 = pnand %p312, %p313
    %p315 = pneg %p314
    // Predicated region
    $region9: #{block_forward.9} parent=5 // pred_check
      _
    $region10: #{block_forward.9} parent=5 // pred_check_branch
      %317 = sbr.rel (%p314) target = $region12
    $region11: #{block_forward.9} parent=5 // pred_region
      %s318 = ssub.s32 %s17, 1
      // Predicated region
      $region13: #{block_forward.9} parent=11 // pred_check
        %p319 = pneg %p194
      $region14: #{block_forward.9} parent=11 // pred_check_branch
        %321 = sbr.rel (%p319) target = $region16
      $region15: #{block_forward.9} parent=11 // pred_region
        _
      $region16: #{block_forward.9} parent=11 // pred_fallthru
        _
      // Predicated region
      $region17: #{block_forward.9} parent=11 // pred_check
        %p322 = pneg %p215
      $region18: #{block_forward.9} parent=11 // pred_check_branch
        %324 = sbr.rel (%p322) target = $region20
      $region19: #{block_forward.9} parent=11 // pred_region
        _
      $region20: #{block_forward.9} parent=11 // pred_fallthru
        _
      // Predicated region
      $region21: #{block_forward.9} parent=11 // pred_check
        %p325 = pneg %p236
      $region22: #{block_forward.9} parent=11 // pred_check_branch
        %327 = sbr.rel (%p325) target = $region24
      $region23: #{block_forward.9} parent=11 // pred_region
        _
      $region24: #{block_forward.9} parent=11 // pred_fallthru
        _
      // Predicated region
      $region25: #{block_forward.9} parent=11 // pred_check
        %p328 = pneg %p257
      $region26: #{block_forward.9} parent=11 // pred_check_branch
        %330 = sbr.rel (%p328) target = $region28
      $region27: #{block_forward.9} parent=11 // pred_region
        _
      $region28: #{block_forward.9} parent=11 // pred_fallthru
        _
      // Predicated region
      $region29: #{block_forward.9} parent=11 // pred_check
        %p331 = pneg %p278
      $region30: #{block_forward.9} parent=11 // pred_check_branch
        %333 = sbr.rel (%p331) target = $region32
      $region31: #{block_forward.9} parent=11 // pred_region
        _
      $region32: #{block_forward.9} parent=11 // pred_fallthru
        _
    $region12: #{block_forward.9} parent=5 // pred_fallthru
      _
    %p334 = scmp.lt.s32.totalorder %s17, 2
    // Predicated region
    $region33: #{block_forward.9} parent=5 // pred_check
      %p335 = pneg %p334
    $region34: #{block_forward.9} parent=5 // pred_check_branch
      %337 = sbr.rel (%p335) target = $region36
    $region35: #{block_forward.9} parent=5 // pred_region
      // Predicated region
      $region37: #{block_forward.9} parent=35 // pred_check
        %p338 = pneg %p37
      $region38: #{block_forward.9} parent=35 // pred_check_branch
        %340 = sbr.rel (%p338) target = $region40
      $region39: #{block_forward.9} parent=35 // pred_region
        %p341 = scmp.lt.s32.totalorder %s17, 1
        %s342 = scalar_select %p341, %s17, 1
        %s343 = scalar_lea.vmem %s0, %s342
      $region40: #{block_forward.9} parent=35 // pred_fallthru
        _
      // Predicated region
      $region41: #{block_forward.9} parent=35 // pred_check
        %p344 = pneg %p63
      $region42: #{block_forward.9} parent=35 // pred_check_branch
        %346 = sbr.rel (%p344) target = $region44
      $region43: #{block_forward.9} parent=35 // pred_region
        %p347 = scmp.lt.s32.totalorder %s17, 1
        %s348 = scalar_select %p347, %s17, 1
        %s349 = smul.addr %s348, 2
        %s350 = smul.addr %s349, 8
        %s351 = scalar_lea.vmem %s1, %s350
      $region44: #{block_forward.9} parent=35 // pred_fallthru
        _
      // Predicated region
      $region45: #{block_forward.9} parent=35 // pred_check
        %p352 = pneg %p89
      $region46: #{block_forward.9} parent=35 // pred_check_branch
        %354 = sbr.rel (%p352) target = $region48
      $region47: #{block_forward.9} parent=35 // pred_region
        %p355 = scmp.lt.s32.totalorder %s17, 1
        %s356 = scalar_select %p355, %s17, 1
        %s357 = smul.addr %s356, 2
        %s358 = smul.addr %s357, 8
        %s359 = scalar_lea.vmem %s2, %s358
      $region48: #{block_forward.9} parent=35 // pred_fallthru
        _
      // Predicated region
      $region49: #{block_forward.9} parent=35 // pred_check
        %p360 = pneg %p115
      $region50: #{block_forward.9} parent=35 // pred_check_branch
        %362 = sbr.rel (%p360) target = $region52
      $region51: #{block_forward.9} parent=35 // pred_region
        %p363 = scmp.lt.s32.totalorder %s17, 1
        %s364 = scalar_select %p363, %s17, 1
        %s365 = smul.addr %s364, 2
        %s366 = smul.addr %s365, 8
        %s367 = scalar_lea.vmem %s3, %s366
      $region52: #{block_forward.9} parent=35 // pred_fallthru
        _
      // Predicated region
      $region53: #{block_forward.9} parent=35 // pred_check
        %p368 = pneg %p141
      $region54: #{block_forward.9} parent=35 // pred_check_branch
        %370 = sbr.rel (%p368) target = $region56
      $region55: #{block_forward.9} parent=35 // pred_region
        %p371 = scmp.lt.s32.totalorder %s17, 1
        %s372 = scalar_select %p371, %s17, 1
        %s373 = smul.addr %s372, 2
        %s374 = smul.addr %s373, 8
        %s375 = scalar_lea.vmem %s4, %s374
      $region56: #{block_forward.9} parent=35 // pred_fallthru
        _
      // Predicated region
      $region57: #{block_forward.9} parent=35 // pred_check
        %p376 = pneg %p167
      $region58: #{block_forward.9} parent=35 // pred_check_branch
        %378 = sbr.rel (%p376) target = $region60
      $region59: #{block_forward.9} parent=35 // pred_region
        %p379 = scmp.lt.s32.totalorder %s17, 1
        %s380 = scalar_select %p379, %s17, 1
        %s381 = smul.addr %s380, 2
        %s382 = smul.addr %s381, 8
        %s383 = scalar_lea.vmem %s5, %s382
      $region60: #{block_forward.9} parent=35 // pred_fallthru
        _
    $region36: #{block_forward.9} parent=5 // pred_fallthru
      _
    %p384 = scmp.le.s32.totalorder 1, %s17
    %p385 = scmp.lt.s32.totalorder %s17, 3
    %p386 = pnand %p384, %p385
    %p387 = pneg %p386
    // Predicated region
    $region61: #{block_forward.9} parent=5 // pred_check
      _
    $region62: #{block_forward.9} parent=5 // pred_check_branch
      %389 = sbr.rel (%p386) target = $region64
    $region63: #{block_forward.9} parent=5 // pred_region
      %s390 = ssub.s32 %s17, 1
      %p391 = scmp.lt.s32.totalorder %s22, 1
      %s392 = scalar_select %p391, %s22, 1
      %s393 = scalar_lea.vmem %s0, %s392
      %p394 = pneg %p43
      %p395 = pneg %p40
      %p396 = scmp.lt.s32.totalorder %s22, 1
      %s397 = scalar_select %p396, %s22, 1
      %s398 = smul.addr %s397, 2
      %s399 = smul.addr %s398, 8
      %s400 = scalar_lea.vmem %s1, %s399
      %p401 = pneg %p69
      %p402 = pneg %p66
      %p403 = scmp.lt.s32.totalorder %s22, 1
      %s404 = scalar_select %p403, %s22, 1
      %s405 = smul.addr %s404, 2
      %s406 = smul.addr %s405, 8
      %s407 = scalar_lea.vmem %s2, %s406
      %p408 = pneg %p95
      %p409 = pneg %p92
      %p410 = scmp.lt.s32.totalorder %s22, 1
      %s411 = scalar_select %p410, %s22, 1
      %s412 = smul.addr %s411, 2
      %s413 = smul.addr %s412, 8
      %s414 = scalar_lea.vmem %s3, %s413
      %p415 = pneg %p121
      %p416 = pneg %p118
      %p417 = scmp.lt.s32.totalorder %s22, 1
      %s418 = scalar_select %p417, %s22, 1
      %s419 = smul.addr %s418, 2
      %s420 = smul.addr %s419, 8
      %s421 = scalar_lea.vmem %s4, %s420
      %p422 = pneg %p147
      %p423 = pneg %p144
      %p424 = scmp.lt.s32.totalorder %s22, 1
      %s425 = scalar_select %p424, %s22, 1
      %s426 = smul.addr %s425, 2
      %s427 = smul.addr %s426, 8
      %s428 = scalar_lea.vmem %s5, %s427
      %p429 = pneg %p173
      %p430 = pneg %p170
      %p431 = pneg %p194
      %p432 = pneg %p191
      %p433 = pneg %p215
      %p434 = pneg %p212
      %p435 = pneg %p236
      %p436 = pneg %p233
      %p437 = pneg %p257
      %p438 = pneg %p254
      %p439 = pneg %p278
      %p440 = pneg %p275
      %p441 = pneg %p304
      %p442 = pneg %p301
      %p443 = scmp.lt.s32.totalorder %s22, 1
      %s444 = scalar_select %p443, %s22, 1
      %s445 = smul.addr %s444, 2
      %s446 = smul.addr %s445, 8
      %s447 = scalar_lea.vmem %s11, %s446
      %p448 = scmp.lt.s32.totalorder %s22, 1
      %s449 = scalar_select %p448, %s22, 1
      %s450 = scalar_lea.vmem %s0, %s449
      %p451 = scmp.lt.s32.totalorder %s22, 1
      %s452 = scalar_select %p451, %s22, 1
      %s453 = smul.addr %s452, 2
      %s454 = smul.addr %s453, 8
      %s455 = scalar_lea.vmem %s1, %s454
      %p456 = scmp.lt.s32.totalorder %s22, 1
      %s457 = scalar_select %p456, %s22, 1
      %s458 = smul.addr %s457, 2
      %s459 = smul.addr %s458, 8
      %s460 = scalar_lea.vmem %s2, %s459
      %p461 = scmp.lt.s32.totalorder %s22, 1
      %s462 = scalar_select %p461, %s22, 1
      %s463 = smul.addr %s462, 2
      %s464 = smul.addr %s463, 8
      %s465 = scalar_lea.vmem %s3, %s464
      %p466 = scmp.lt.s32.totalorder %s22, 1
      %s467 = scalar_select %p466, %s22, 1
      %s468 = smul.addr %s467, 2
      %s469 = smul.addr %s468, 8
      %s470 = scalar_lea.vmem %s4, %s469
      %p471 = scmp.lt.s32.totalorder %s22, 1
      %s472 = scalar_select %p471, %s22, 1
      %s473 = smul.addr %s472, 2
      %s474 = smul.addr %s473, 8
      %s475 = scalar_lea.vmem %s5, %s474
      %p476 = scmp.lt.s32.totalorder %s22, 1
      %s477 = scalar_select %p476, %s22, 1
      %s478 = smul.addr %s477, 2
      %s479 = smul.addr %s478, 8
      %s480 = scalar_lea.vmem %s11, %s479
      %v482 = vld [vmem:[%s450] sm:$0x1]
      %v483 = vld [vmem:[%s455] sm:$0xff]
      %v484 = vld [vmem:[%s455 + $0x8] sm:$0xff]
      %486 = vset.pattern.permute.xlu0 0
      %487 = vperm.xlu0 %486, %v483
      %v488 = vpop.permute.xlu0 %487
      %491 = vset.pattern.permute.xlu0 0
      %492 = vperm.xlu0 %491, %v484
      %v493 = vpop.permute.xlu0 %492
      %v496 = vlaneseq
      %v497 = vshrl.u32 %v496, 7
      %v498 = vsub.s32 0, %v497
      %v499 = vrot.slane %v482, %v498
      %v501 = vmul.f32 %v488, %v499
      %v502 = vmul.f32 %v493, %v499
      %vm503 = vcmp.gt.f32.partialorder %v501, 0.5
      %vm504 = vcmp.gt.f32.partialorder %v502, 0.5
      %v505 = vld [vmem:[%s465] sm:$0xff]
      %v506 = vld [vmem:[%s465 + $0x8] sm:$0xff]
      %v507 = vld [vmem:[%s470] sm:$0xff]
      %v508 = vld [vmem:[%s470 + $0x8] sm:$0xff]
      %v509 = vpack.c.bf16 %v508, %v507
      %v510 = vld [vmem:[%s475] sm:$0xff]
      %v511 = vld [vmem:[%s475 + $0x8] sm:$0xff]
      %v512 = vpack.c.bf16 %v511, %v510
      %v513 = vld [vmem:[%s6] sm:$0xff]
      %v514 = vld [vmem:[%s6 + $0x8] sm:$0xff]
      %v515 = vld [vmem:[%s6 + $0x10] sm:$0xff]
      %v516 = vld [vmem:[%s6 + $0x18] sm:$0x7f]
      %v517 = vpack.c.bf16 %v514, %v513
      %v518 = vpack.c.bf16 %v516, %v515
      %v519 = vld [vmem:[%s7] sm:$0xf]
      %v520 = vld [vmem:[%s8] sm:$0xf]
      %v521 = vld [vmem:[%s9] sm:$0xf]
      %v522 = vld [vmem:[%s9 + $0x4] sm:$0xf]
      %v523 = vld [vmem:[%s9 + $0x8] sm:$0xf]
      %v524 = vld [vmem:[%s9 + $0xc] sm:$0xf]
      %v525 = vld [vmem:[%s9 + $0x10] sm:$0xf]
      %v526 = vld [vmem:[%s9 + $0x14] sm:$0xf]
      %v527 = vld [vmem:[%s9 + $0x18] sm:$0xf]
      %v528 = vld [vmem:[%s9 + $0x1c] sm:$0xf]
      %v529 = vld [vmem:[%s460] sm:$0xff]
      %v530 = vld [vmem:[%s460 + $0x8] sm:$0xff]
      %v531 = vld [vmem:[%s10] sm:$0x1]
      %v533 = vlaneseq
      %v534 = vshrl.u32 %v533, 7
      %v535 = vsub.s32 0, %v534
      %v536 = vrot.slane %v531, %v535
      %v538 = vadd.f32 %v529, %v536
      %v539 = vadd.f32 %v530, %v536
      %v540 = vlaneseq
      %v541 = vshrl.u32 %v540, 7
      %v542 = vsub.s32 0, %v541
      %v543 = vrot.slane %v519, %v542
      %v544 = vadd.f32 %v505, %v543
      %v545 = vadd.f32 %v506, %v543
      %v546 = vpack.c.bf16 %v545, %v544
      %v547 = vlaneseq
      %v548 = vshrl.u32 %v547, 7
      %v549 = vsub.s32 0, %v548
      %v550 = vrot.slane %v520, %v549
      %v551 = vadd.f32 %v505, %v550
      %v552 = vadd.f32 %v506, %v550
      %v553 = vpack.c.bf16 %v552, %v551
      %vm554 = vcmask 130048
      %v556 = vsel %vm554, %v553, 0
      %v559 = vsel %vm554, %v517, 0
      %v562 = vsel %vm554, %v518, 0
      %564 = vmatprep.subr.bf16.mxu0 0
      %565 = vmatpush1.bf16.xpose.msra.mxu0 0
      %566 = vmatprep.subr.bf16.mxu0 0
      %567 = vmatpush1.bf16.xpose.msra.mxu0 0
      %568 = vmatprep.subr.bf16.mxu0 0
      %569 = vmatpush1.bf16.xpose.msra.mxu0 0
      %570 = vmatprep.subr.bf16.mxu0 0
      %571 = vmatpush1.bf16.xpose.msra.mxu0 0
      %572 = vmatprep.subr.bf16.mxu0 0
      %573 = vmatpush1.bf16.xpose.msra.mxu0 0
      %574 = vmatprep.subr.bf16.mxu0 0
      %575 = vmatpush1.bf16.xpose.msra.mxu0 0
      %576 = vmatprep.subr.bf16.mxu0 0
      %577 = vmatpush1.bf16.xpose.msra.mxu0 %v562
      %578 = vmatprep.subr.bf16.mxu0 0
      %579 = vmatpush1.bf16.xpose.msra.mxu0 %v559
      %580 = vmatprep.subr.bf16.mxu0 0
      %581 = vmatpush2.bf16.xpose.msra.mxu0 0
      %582 = vmatprep.subr.bf16.mxu0 0
      %583 = vmatpush2.bf16.xpose.msra.mxu0 0
      %584 = vmatprep.subr.bf16.mxu0 0
      %585 = vmatpush2.bf16.xpose.msra.mxu0 0
      %586 = vmatprep.subr.bf16.mxu0 0
      %587 = vmatpush2.bf16.xpose.msra.mxu0 0
      %588 = vmatprep.subr.bf16.mxu0 0
      %589 = vmatpush2.bf16.xpose.msra.mxu0 0
      %590 = vmatprep.subr.bf16.mxu0 0
      %591 = vmatpush2.bf16.xpose.msra.mxu0 0
      %592 = vmatprep.subr.bf16.mxu0 0
      %593 = vmatpush2.bf16.xpose.msra.mxu0 0
      %594 = vmatprep.subr.bf16.mxu0 0
      %595 = vmatpush2.bf16.xpose.msra.mxu0 0
      %596 = vmatprep.mubr.bf16.mxu0 0
      %597 = vmatmul.mubr.bf16.gmra.mxu0 %v556
      %v598 = vpop.f32.mrf.mxu0
      %v599 = vadd.f32 0.0, %v598
      %v600 = vpop.f32.mrf.mxu0
      %v601 = vpop.f32.mrf.mxu0
      %v602 = vadd.f32 0.0, %v601
      %v603 = vpop.f32.mrf.mxu0
      %604 = vdwg.mxu0
      %v605 = vlaneseq
      %v606 = vshrl.u32 %v605, 7
      %v607 = vadd.s32 %v606, 8
      %v608 = vsub.s32 15, %v606
      %v609 = vsub.s32 15, %v607
      %v610 = vand.u32 %v608, 1
      %v611 = vand.u32 %v609, 1
      %vm612 = vcmp.eq.s32.totalorder %v610, 1
      %vm613 = vcmp.eq.s32.totalorder %v611, 1
      %616 = vrot.lane.b32.xlu0 %v599, 1
      %v617 = vpop.permute.xlu0 %616
      %618 = vrot.lane.b32.xlu0 %v602, 1
      %v619 = vpop.permute.xlu0 %618
      %v622 = vsel %vm612, %v599, %v617
      %v623 = vsel %vm613, %v602, %v619
      %v624 = vshra.s32 %v608, 1
      %v625 = vshra.s32 %v609, 1
      %v626 = vand.u32 %v624, 1
      %v627 = vand.u32 %v625, 1
      %vm628 = vcmp.eq.s32.totalorder %v626, 1
      %vm629 = vcmp.eq.s32.totalorder %v627, 1
      %632 = vrot.lane.b32.xlu0 %v622, 2
      %v633 = vpop.permute.xlu0 %632
      %634 = vrot.lane.b32.xlu0 %v623, 2
      %v635 = vpop.permute.xlu0 %634
      %v638 = vsel %vm628, %v622, %v633
      %v639 = vsel %vm629, %v623, %v635
      %v640 = vshra.s32 %v608, 2
      %v641 = vshra.s32 %v609, 2
      %v642 = vand.u32 %v640, 1
      %v643 = vand.u32 %v641, 1
      %vm644 = vcmp.eq.s32.totalorder %v642, 1
      %vm645 = vcmp.eq.s32.totalorder %v643, 1
      %648 = vrot.lane.b32.xlu0 %v638, 4
      %v649 = vpop.permute.xlu0 %648
      %650 = vrot.lane.b32.xlu0 %v639, 4
      %v651 = vpop.permute.xlu0 %650
      %v654 = vsel %vm644, %v638, %v649
      %v655 = vsel %vm645, %v639, %v651
      %v656 = vshra.s32 %v608, 3
      %v657 = vshra.s32 %v609, 3
      %v658 = vand.u32 %v656, 1
      %v659 = vand.u32 %v657, 1
      %vm660 = vcmp.eq.s32.totalorder %v658, 1
      %vm661 = vcmp.eq.s32.totalorder %v659, 1
      %664 = vrot.lane.b32.xlu0 %v654, 8
      %v665 = vpop.permute.xlu0 %664
      %666 = vrot.lane.b32.xlu0 %v655, 8
      %v667 = vpop.permute.xlu0 %666
      %v670 = vsel %vm660, %v654, %v665
      %v671 = vsel %vm661, %v655, %v667
      %674 = vrot.lane.b32.xlu0 %v670, 113
      %v675 = vpop.permute.xlu0 %674
      %676 = vrot.lane.b32.xlu0 %v671, 113
      %v677 = vpop.permute.xlu0 %676
      %v681 = vsel %vm554, %v546, 0
      %v684 = vsel %vm554, %v509, 0
      %686 = vmatprep.subr.bf16.mxu0 0
      %687 = vmatpush1.bf16.xpose.msra.mxu0 0
      %688 = vmatprep.subr.bf16.mxu0 0
      %689 = vmatpush1.bf16.xpose.msra.mxu0 0
      %690 = vmatprep.subr.bf16.mxu0 0
      %691 = vmatpush1.bf16.xpose.msra.mxu0 0
      %692 = vmatprep.subr.bf16.mxu0 0
      %693 = vmatpush1.bf16.xpose.msra.mxu0 0
      %694 = vmatprep.subr.bf16.mxu0 0
      %695 = vmatpush1.bf16.xpose.msra.mxu0 0
      %696 = vmatprep.subr.bf16.mxu0 0
      %697 = vmatpush1.bf16.xpose.msra.mxu0 0
      %698 = vmatprep.subr.bf16.mxu0 0
      %699 = vmatpush1.bf16.xpose.msra.mxu0 0
      %700 = vmatprep.subr.bf16.mxu0 0
      %701 = vmatpush1.bf16.xpose.msra.mxu0 %v684
      %702 = vmatprep.subr.bf16.mxu0 0
      %703 = vmatpush2.bf16.xpose.msra.mxu0 0
      %704 = vmatprep.subr.bf16.mxu0 0
      %705 = vmatpush2.bf16.xpose.msra.mxu0 0
      %706 = vmatprep.subr.bf16.mxu0 0
      %707 = vmatpush2.bf16.xpose.msra.mxu0 0
      %708 = vmatprep.subr.bf16.mxu0 0
      %709 = vmatpush2.bf16.xpose.msra.mxu0 0
      %710 = vmatprep.subr.bf16.mxu0 0
      %711 = vmatpush2.bf16.xpose.msra.mxu0 0
      %712 = vmatprep.subr.bf16.mxu0 0
      %713 = vmatpush2.bf16.xpose.msra.mxu0 0
      %714 = vmatprep.subr.bf16.mxu0 0
      %715 = vmatpush2.bf16.xpose.msra.mxu0 0
      %716 = vmatprep.subr.bf16.mxu0 0
      %717 = vmatpush2.bf16.xpose.msra.mxu0 0
      %718 = vmatprep.mubr.bf16.mxu0 0
      %719 = vmatmul.mubr.bf16.gmra.mxu0 %v681
      %v720 = vpop.f32.mrf.mxu0
      %v721 = vadd.f32 %v675, %v720
      %v722 = vpop.f32.mrf.mxu0
      %v723 = vpop.f32.mrf.mxu0
      %v724 = vadd.f32 %v677, %v723
      %v725 = vpop.f32.mrf.mxu0
      %726 = vdwg.mxu0
      %v727 = vmul.f32 %v721, 0.25
      %v728 = vmul.f32 %v724, 0.25
      %v729 = vsel %vm503, %v727, -1e+09
      %v730 = vsel %vm504, %v728, -1e+09
      %v731 = vsel %vm554, %v729, -inf
      %732 = vmax.xlane.f32.xlu0 %v731
      %v733 = vpop.xlane.xlu0 %732
      %v734 = vsel %vm554, %v730, -inf
      %735 = vmax.xlane.f32.xlu0 %v734
      %v736 = vpop.xlane.xlu0 %735
      %v737 = vsub.f32 %v729, %v733
      %v738 = vsub.f32 %v730, %v736
      %v739 = vmul.f32 %v737, 1.442695
      %v740 = vpow.pop %v739
      %v741 = vmul.f32 %v738, 1.442695
      %v742 = vpow.pop %v741
      %v743 = vsel %vm554, %v740, 0.0
      %744 = vadd.xlane.f32.xlu0 %v743
      %v745 = vpop.xlane.xlu0 %744
      %v746 = vsel %vm554, %v742, 0.0
      %747 = vadd.xlane.f32.xlu0 %v746
      %v748 = vpop.xlane.xlu0 %747
      %v749 = vrcp.pop %v745
      %v750 = vrcp.pop %v748
      %v751 = vmul.f32 %v740, %v749
      %v752 = vmul.f32 %v742, %v750
      %v753 = vpack.c.bf16 %v752, %v751
      %v755 = vsel %vm554, %v753, 0
      %757 = vmatprep.subr.bf16.mxu0 0
      %758 = vmatpush1.bf16.msra.mxu0 0
      %759 = vmatprep.subr.bf16.mxu0 0
      %760 = vmatpush1.bf16.msra.mxu0 0
      %761 = vmatprep.subr.bf16.mxu0 0
      %762 = vmatpush1.bf16.msra.mxu0 0
      %763 = vmatprep.subr.bf16.mxu0 0
      %764 = vmatpush1.bf16.msra.mxu0 0
      %765 = vmatprep.subr.bf16.mxu0 0
      %766 = vmatpush1.bf16.msra.mxu0 0
      %767 = vmatprep.subr.bf16.mxu0 0
      %768 = vmatpush1.bf16.msra.mxu0 0
      %769 = vmatprep.subr.bf16.mxu0 0
      %770 = vmatpush1.bf16.msra.mxu0 0
      %771 = vmatprep.subr.bf16.mxu0 0
      %772 = vmatpush1.bf16.msra.mxu0 %v512
      %773 = vmatprep.subr.bf16.mxu0 0
      %774 = vmatpush2.bf16.msra.mxu0 0
      %775 = vmatprep.subr.bf16.mxu0 0
      %776 = vmatpush2.bf16.msra.mxu0 0
      %777 = vmatprep.subr.bf16.mxu0 0
      %778 = vmatpush2.bf16.msra.mxu0 0
      %779 = vmatprep.subr.bf16.mxu0 0
      %780 = vmatpush2.bf16.msra.mxu0 0
      %781 = vmatprep.subr.bf16.mxu0 0
      %782 = vmatpush2.bf16.msra.mxu0 0
      %783 = vmatprep.subr.bf16.mxu0 0
      %784 = vmatpush2.bf16.msra.mxu0 0
      %785 = vmatprep.subr.bf16.mxu0 0
      %786 = vmatpush2.bf16.msra.mxu0 0
      %787 = vmatprep.subr.bf16.mxu0 0
      %788 = vmatpush2.bf16.msra.mxu0 0
      %789 = vmatprep.mubr.bf16.mxu0 0
      %790 = vmatmul.mubr.bf16.gmra.mxu0 %v755
      %v791 = vpop.f32.mrf.mxu0
      %v792 = vadd.f32 0.0, %v791
      %v793 = vpop.f32.mrf.mxu0
      %v794 = vpop.f32.mrf.mxu0
      %v795 = vadd.f32 0.0, %v794
      %v796 = vpop.f32.mrf.mxu0
      %797 = vdwg.mxu0
      %v798 = vpack.c.bf16 %v795, %v792
      %v801 = vunpack.c.l.b16 %v521
      %v802 = vunpack.c.l.b16 %v522
      %v803 = vpack.c.b16 %v802, %v801
      %v806 = vsel %vm554, %v798, 0
      %808 = vmatprep.subr.bf16.mxu0 0
      %809 = vmatpush1.bf16.msra.mxu0 0
      %810 = vmatprep.subr.bf16.mxu0 0
      %811 = vmatpush1.bf16.msra.mxu0 0
      %812 = vmatprep.subr.bf16.mxu0 0
      %813 = vmatpush1.bf16.msra.mxu0 0
      %814 = vmatprep.subr.bf16.mxu0 0
      %815 = vmatpush1.bf16.msra.mxu0 0
      %816 = vmatprep.subr.bf16.mxu0 0
      %817 = vmatpush1.bf16.msra.mxu0 0
      %818 = vmatprep.subr.bf16.mxu0 0
      %819 = vmatpush1.bf16.msra.mxu0 0
      %820 = vmatprep.subr.bf16.mxu0 0
      %821 = vmatpush1.bf16.msra.mxu0 0
      %822 = vmatprep.subr.bf16.mxu0 0
      %823 = vmatpush1.bf16.msra.mxu0 %v803
      %824 = vmatprep.subr.bf16.mxu0 0
      %825 = vmatpush2.bf16.msra.mxu0 0
      %826 = vmatprep.subr.bf16.mxu0 0
      %827 = vmatpush2.bf16.msra.mxu0 0
      %828 = vmatprep.subr.bf16.mxu0 0
      %829 = vmatpush2.bf16.msra.mxu0 0
      %830 = vmatprep.subr.bf16.mxu0 0
      %831 = vmatpush2.bf16.msra.mxu0 0
      %832 = vmatprep.subr.bf16.mxu0 0
      %833 = vmatpush2.bf16.msra.mxu0 0
      %834 = vmatprep.subr.bf16.mxu0 0
      %835 = vmatpush2.bf16.msra.mxu0 0
      %836 = vmatprep.subr.bf16.mxu0 0
      %837 = vmatpush2.bf16.msra.mxu0 0
      %838 = vmatprep.subr.bf16.mxu0 0
      %839 = vmatpush2.bf16.msra.mxu0 0
      %840 = vmatprep.mubr.bf16.mxu0 0
      %841 = vmatmul.mubr.bf16.gmra.mxu0 %v806
      %v842 = vpop.f32.mrf.mxu0
      %v843 = vadd.f32 0.0, %v842
      %v844 = vpop.f32.mrf.mxu0
      %v845 = vpop.f32.mrf.mxu0
      %v846 = vadd.f32 0.0, %v845
      %v847 = vpop.f32.mrf.mxu0
      %848 = vdwg.mxu0
      %v849 = vadd.f32 %v538, %v843
      %v850 = vadd.f32 %v539, %v846
      %v851 = vlaneseq
      %v852 = vshrl.u32 %v851, 7
      %v853 = vsub.s32 1, %v852
      %v854 = vrot.slane %v519, %v853
      %856 = vrot.lane.b32.xlu0 %v854, 16
      %v857 = vpop.permute.xlu0 %856
      %v859 = vadd.f32 %v505, %v857
      %v860 = vadd.f32 %v506, %v857
      %v861 = vpack.c.bf16 %v860, %v859
      %v862 = vlaneseq
      %v863 = vshrl.u32 %v862, 7
      %v864 = vsub.s32 1, %v863
      %v865 = vrot.slane %v520, %v864
      %867 = vrot.lane.b32.xlu0 %v865, 16
      %v868 = vpop.permute.xlu0 %867
      %v870 = vadd.f32 %v505, %v868
      %v871 = vadd.f32 %v506, %v868
      %v872 = vpack.c.bf16 %v871, %v870
      %874 = vrot.lane.b32.xlu0 %v872, 112
      %v875 = vpop.permute.xlu0 %874
      %878 = vrot.lane.b32.xlu0 %v517, 112
      %v879 = vpop.permute.xlu0 %878
      %880 = vrot.lane.b32.xlu0 %v518, 112
      %v881 = vpop.permute.xlu0 %880
      %v883 = vsel %vm554, %v875, 0
      %v886 = vsel %vm554, %v879, 0
      %v889 = vsel %vm554, %v881, 0
      %891 = vmatprep.subr.bf16.mxu0 0
      %892 = vmatpush1.bf16.xpose.msra.mxu0 0
      %893 = vmatprep.subr.bf16.mxu0 0
      %894 = vmatpush1.bf16.xpose.msra.mxu0 0
      %895 = vmatprep.subr.bf16.mxu0 0
      %896 = vmatpush1.bf16.xpose.msra.mxu0 0
      %897 = vmatprep.subr.bf16.mxu0 0
      %898 = vmatpush1.bf16.xpose.msra.mxu0 0
      %899 = vmatprep.subr.bf16.mxu0 0
      %900 = vmatpush1.bf16.xpose.msra.mxu0 0
      %901 = vmatprep.subr.bf16.mxu0 0
      %902 = vmatpush1.bf16.xpose.msra.mxu0 0
      %903 = vmatprep.subr.bf16.mxu0 0
      %904 = vmatpush1.bf16.xpose.msra.mxu0 %v889
      %905 = vmatprep.subr.bf16.mxu0 0
      %906 = vmatpush1.bf16.xpose.msra.mxu0 %v886
      %907 = vmatprep.subr.bf16.mxu0 0
      %908 = vmatpush2.bf16.xpose.msra.mxu0 0
      %909 = vmatprep.subr.bf16.mxu0 0
      %910 = vmatpush2.bf16.xpose.msra.mxu0 0
      %911 = vmatprep.subr.bf16.mxu0 0
      %912 = vmatpush2.bf16.xpose.msra.mxu0 0
      %913 = vmatprep.subr.bf16.mxu0 0
      %914 = vmatpush2.bf16.xpose.msra.mxu0 0
      %915 = vmatprep.subr.bf16.mxu0 0
      %916 = vmatpush2.bf16.xpose.msra.mxu0 0
      %917 = vmatprep.subr.bf16.mxu0 0
      %918 = vmatpush2.bf16.xpose.msra.mxu0 0
      %919 = vmatprep.subr.bf16.mxu0 0
      %920 = vmatpush2.bf16.xpose.msra.mxu0 0
      %921 = vmatprep.subr.bf16.mxu0 0
      %922 = vmatpush2.bf16.xpose.msra.mxu0 0
      %923 = vmatprep.mubr.bf16.mxu0 0
      %924 = vmatmul.mubr.bf16.gmra.mxu0 %v883
      %v925 = vpop.f32.mrf.mxu0
      %v926 = vadd.f32 0.0, %v925
      %v927 = vpop.f32.mrf.mxu0
      %v928 = vpop.f32.mrf.mxu0
      %v929 = vadd.f32 0.0, %v928
      %v930 = vpop.f32.mrf.mxu0
      %931 = vdwg.mxu0
      %934 = vrot.lane.b32.xlu0 %v926, 1
      %v935 = vpop.permute.xlu0 %934
      %936 = vrot.lane.b32.xlu0 %v929, 1
      %v937 = vpop.permute.xlu0 %936
      %v940 = vsel %vm612, %v926, %v935
      %v941 = vsel %vm613, %v929, %v937
      %944 = vrot.lane.b32.xlu0 %v940, 2
      %v945 = vpop.permute.xlu0 %944
      %946 = vrot.lane.b32.xlu0 %v941, 2
      %v947 = vpop.permute.xlu0 %946
      %v950 = vsel %vm628, %v940, %v945
      %v951 = vsel %vm629, %v941, %v947
      %954 = vrot.lane.b32.xlu0 %v950, 4
      %v955 = vpop.permute.xlu0 %954
      %956 = vrot.lane.b32.xlu0 %v951, 4
      %v957 = vpop.permute.xlu0 %956
      %v960 = vsel %vm644, %v950, %v955
      %v961 = vsel %vm645, %v951, %v957
      %964 = vrot.lane.b32.xlu0 %v960, 8
      %v965 = vpop.permute.xlu0 %964
      %966 = vrot.lane.b32.xlu0 %v961, 8
      %v967 = vpop.permute.xlu0 %966
      %v970 = vsel %vm660, %v960, %v965
      %v971 = vsel %vm661, %v961, %v967
      %973 = vrot.lane.b32.xlu0 %v861, 112
      %v974 = vpop.permute.xlu0 %973
      %976 = vrot.lane.b32.xlu0 %v509, 112
      %v977 = vpop.permute.xlu0 %976
      %980 = vrot.lane.b32.xlu0 %v970, 113
      %v981 = vpop.permute.xlu0 %980
      %982 = vrot.lane.b32.xlu0 %v971, 113
      %v983 = vpop.permute.xlu0 %982
      %v987 = vsel %vm554, %v974, 0
      %v990 = vsel %vm554, %v977, 0
      %992 = vmatprep.subr.bf16.mxu0 0
      %993 = vmatpush1.bf16.xpose.msra.mxu0 0
      %994 = vmatprep.subr.bf16.mxu0 0
      %995 = vmatpush1.bf16.xpose.msra.mxu0 0
      %996 = vmatprep.subr.bf16.mxu0 0
      %997 = vmatpush1.bf16.xpose.msra.mxu0 0
      %998 = vmatprep.subr.bf16.mxu0 0
      %999 = vmatpush1.bf16.xpose.msra.mxu0 0
      %1000 = vmatprep.subr.bf16.mxu0 0
      %1001 = vmatpush1.bf16.xpose.msra.mxu0 0
      %1002 = vmatprep.subr.bf16.mxu0 0
      %1003 = vmatpush1.bf16.xpose.msra.mxu0 0
      %1004 = vmatprep.subr.bf16.mxu0 0
      %1005 = vmatpush1.bf16.xpose.msra.mxu0 0
      %1006 = vmatprep.subr.bf16.mxu0 0
      %1007 = vmatpush1.bf16.xpose.msra.mxu0 %v990
      %1008 = vmatprep.subr.bf16.mxu0 0
      %1009 = vmatpush2.bf16.xpose.msra.mxu0 0
      %1010 = vmatprep.subr.bf16.mxu0 0
      %1011 = vmatpush2.bf16.xpose.msra.mxu0 0
      %1012 = vmatprep.subr.bf16.mxu0 0
      %1013 = vmatpush2.bf16.xpose.msra.mxu0 0
      %1014 = vmatprep.subr.bf16.mxu0 0
      %1015 = vmatpush2.bf16.xpose.msra.mxu0 0
      %1016 = vmatprep.subr.bf16.mxu0 0
      %1017 = vmatpush2.bf16.xpose.msra.mxu0 0
      %1018 = vmatprep.subr.bf16.mxu0 0
      %1019 = vmatpush2.bf16.xpose.msra.mxu0 0
      %1020 = vmatprep.subr.bf16.mxu0 0
      %1021 = vmatpush2.bf16.xpose.msra.mxu0 0
      %1022 = vmatprep.subr.bf16.mxu0 0
      %1023 = vmatpush2.bf16.xpose.msra.mxu0 0
      %1024 = vmatprep.mubr.bf16.mxu0 0
      %1025 = vmatmul.mubr.bf16.gmra.mxu0 %v987
      %v1026 = vpop.f32.mrf.mxu0
      %v1027 = vadd.f32 %v981, %v1026
      %v1028 = vpop.f32.mrf.mxu0
      %v1029 = vpop.f32.mrf.mxu0
      %v1030 = vadd.f32 %v983, %v1029
      %v1031 = vpop.f32.mrf.mxu0
      %1032 = vdwg.mxu0
      %v1033 = vmul.f32 %v1027, 0.25
      %v1034 = vmul.f32 %v1030, 0.25
      %v1035 = vsel %vm503, %v1033, -1e+09
      %v1036 = vsel %vm504, %v1034, -1e+09
      %v1037 = vsel %vm554, %v1035, -inf
      %1038 = vmax.xlane.f32.xlu0 %v1037
      %v1039 = vpop.xlane.xlu0 %1038
      %v1040 = vsel %vm554, %v1036, -inf
      %1041 = vmax.xlane.f32.xlu0 %v1040
      %v1042 = vpop.xlane.xlu0 %1041
      %v1043 = vsub.f32 %v1035, %v1039
      %v1044 = vsub.f32 %v1036, %v1042
      %v1045 = vmul.f32 %v1043, 1.442695
      %v1046 = vpow.pop %v1045
      %v1047 = vmul.f32 %v1044, 1.442695
      %v1048 = vpow.pop %v1047
      %v1049 = vsel %vm554, %v1046, 0.0
      %1050 = vadd.xlane.f32.xlu0 %v1049
      %v1051 = vpop.xlane.xlu0 %1050
      %v1052 = vsel %vm554, %v1048, 0.0
      %1053 = vadd.xlane.f32.xlu0 %v1052
      %v1054 = vpop.xlane.xlu0 %1053
      %v1055 = vrcp.pop %v1051
      %v1056 = vrcp.pop %v1054
      %v1057 = vmul.f32 %v1046, %v1055
      %v1058 = vmul.f32 %v1048, %v1056
      %v1059 = vpack.c.bf16 %v1058, %v1057
      %1061 = vrot.lane.b32.xlu0 %v512, 112
      %v1062 = vpop.permute.xlu0 %1061
      %v1065 = vsel %vm554, %v1059, 0
      %1067 = vmatprep.subr.bf16.mxu0 0
      %1068 = vmatpush1.bf16.msra.mxu0 0
      %1069 = vmatprep.subr.bf16.mxu0 0
      %1070 = vmatpush1.bf16.msra.mxu0 0
      %1071 = vmatprep.subr.bf16.mxu0 0
      %1072 = vmatpush1.bf16.msra.mxu0 0
      %1073 = vmatprep.subr.bf16.mxu0 0
      %1074 = vmatpush1.bf16.msra.mxu0 0
      %1075 = vmatprep.subr.bf16.mxu0 0
      %1076 = vmatpush1.bf16.msra.mxu0 0
      %1077 = vmatprep.subr.bf16.mxu0 0
      %1078 = vmatpush1.bf16.msra.mxu0 0
      %1079 = vmatprep.subr.bf16.mxu0 0
      %1080 = vmatpush1.bf16.msra.mxu0 0
      %1081 = vmatprep.subr.bf16.mxu0 0
      %1082 = vmatpush1.bf16.msra.mxu0 %v1062
      %1083 = vmatprep.subr.bf16.mxu0 0
      %1084 = vmatpush2.bf16.msra.mxu0 0
      %1085 = vmatprep.subr.bf16.mxu0 0
      %1086 = vmatpush2.bf16.msra.mxu0 0
      %1087 = vmatprep.subr.bf16.mxu0 0
      %1088 = vmatpush2.bf16.msra.mxu0 0
      %1089 = vmatprep.subr.bf16.mxu0 0
      %1090 = vmatpush2.bf16.msra.mxu0 0
      %1091 = vmatprep.subr.bf16.mxu0 0
      %1092 = vmatpush2.bf16.msra.mxu0 0
      %1093 = vmatprep.subr.bf16.mxu0 0
      %1094 = vmatpush2.bf16.msra.mxu0 0
      %1095 = vmatprep.subr.bf16.mxu0 0
      %1096 = vmatpush2.bf16.msra.mxu0 0
      %1097 = vmatprep.subr.bf16.mxu0 0
      %1098 = vmatpush2.bf16.msra.mxu0 0
      %1099 = vmatprep.mubr.bf16.mxu0 0
      %1100 = vmatmul.mubr.bf16.gmra.mxu0 %v1065
      %v1101 = vpop.f32.mrf.mxu0
      %v1102 = vadd.f32 0.0, %v1101
      %v1103 = vpop.f32.mrf.mxu0
      %v1104 = vpop.f32.mrf.mxu0
      %v1105 = vadd.f32 0.0, %v1104
      %v1106 = vpop.f32.mrf.mxu0
      %1107 = vdwg.mxu0
      %v1108 = vpack.c.bf16 %v1105, %v1102
      %v1111 = vunpack.c.l.b16 %v523
      %v1112 = vunpack.c.l.b16 %v524
      %v1113 = vpack.c.b16 %v1112, %v1111
      %v1116 = vsel %vm554, %v1108, 0
      %1118 = vmatprep.subr.bf16.mxu0 0
      %1119 = vmatpush1.bf16.msra.mxu0 0
      %1120 = vmatprep.subr.bf16.mxu0 0
      %1121 = vmatpush1.bf16.msra.mxu0 0
      %1122 = vmatprep.subr.bf16.mxu0 0
      %1123 = vmatpush1.bf16.msra.mxu0 0
      %1124 = vmatprep.subr.bf16.mxu0 0
      %1125 = vmatpush1.bf16.msra.mxu0 0
      %1126 = vmatprep.subr.bf16.mxu0 0
      %1127 = vmatpush1.bf16.msra.mxu0 0
      %1128 = vmatprep.subr.bf16.mxu0 0
      %1129 = vmatpush1.bf16.msra.mxu0 0
      %1130 = vmatprep.subr.bf16.mxu0 0
      %1131 = vmatpush1.bf16.msra.mxu0 0
      %1132 = vmatprep.subr.bf16.mxu0 0
      %1133 = vmatpush1.bf16.msra.mxu0 %v1113
      %1134 = vmatprep.subr.bf16.mxu0 0
      %1135 = vmatpush2.bf16.msra.mxu0 0
      %1136 = vmatprep.subr.bf16.mxu0 0
      %1137 = vmatpush2.bf16.msra.mxu0 0
      %1138 = vmatprep.subr.bf16.mxu0 0
      %1139 = vmatpush2.bf16.msra.mxu0 0
      %1140 = vmatprep.subr.bf16.mxu0 0
      %1141 = vmatpush2.bf16.msra.mxu0 0
      %1142 = vmatprep.subr.bf16.mxu0 0
      %1143 = vmatpush2.bf16.msra.mxu0 0
      %1144 = vmatprep.subr.bf16.mxu0 0
      %1145 = vmatpush2.bf16.msra.mxu0 0
      %1146 = vmatprep.subr.bf16.mxu0 0
      %1147 = vmatpush2.bf16.msra.mxu0 0
      %1148 = vmatprep.subr.bf16.mxu0 0
      %1149 = vmatpush2.bf16.msra.mxu0 0
      %1150 = vmatprep.mubr.bf16.mxu0 0
      %1151 = vmatmul.mubr.bf16.gmra.mxu0 %v1116
      %v1152 = vpop.f32.mrf.mxu0
      %v1153 = vadd.f32 0.0, %v1152
      %v1154 = vpop.f32.mrf.mxu0
      %v1155 = vpop.f32.mrf.mxu0
      %v1156 = vadd.f32 0.0, %v1155
      %v1157 = vpop.f32.mrf.mxu0
      %1158 = vdwg.mxu0
      %v1159 = vadd.f32 %v849, %v1153
      %v1160 = vadd.f32 %v850, %v1156
      %v1161 = vlaneseq
      %v1162 = vshrl.u32 %v1161, 7
      %v1163 = vsub.s32 2, %v1162
      %v1164 = vrot.slane %v519, %v1163
      %1166 = vrot.lane.b32.xlu0 %v1164, 32
      %v1167 = vpop.permute.xlu0 %1166
      %v1169 = vadd.f32 %v505, %v1167
      %v1170 = vadd.f32 %v506, %v1167
      %v1171 = vpack.c.bf16 %v1170, %v1169
      %v1172 = vlaneseq
      %v1173 = vshrl.u32 %v1172, 7
      %v1174 = vsub.s32 2, %v1173
      %v1175 = vrot.slane %v520, %v1174
      %1177 = vrot.lane.b32.xlu0 %v1175, 32
      %v1178 = vpop.permute.xlu0 %1177
      %v1180 = vadd.f32 %v505, %v1178
      %v1181 = vadd.f32 %v506, %v1178
      %v1182 = vpack.c.bf16 %v1181, %v1180
      %1184 = vrot.lane.b32.xlu0 %v1182, 96
      %v1185 = vpop.permute.xlu0 %1184
      %1186 = vrot.lane.b32.xlu0 %v517, 96
      %v1187 = vpop.permute.xlu0 %1186
      %1188 = vrot.lane.b32.xlu0 %v518, 96
      %v1189 = vpop.permute.xlu0 %1188
      %v1191 = vsel %vm554, %v1185, 0
      %v1194 = vsel %vm554, %v1187, 0
      %v1197 = vsel %vm554, %v1189, 0
      %1199 = vmatprep.subr.bf16.mxu0 0
      %1200 = vmatpush1.bf16.xpose.msra.mxu0 0
      %1201 = vmatprep.subr.bf16.mxu0 0
      %1202 = vmatpush1.bf16.xpose.msra.mxu0 0
      %1203 = vmatprep.subr.bf16.mxu0 0
      %1204 = vmatpush1.bf16.xpose.msra.mxu0 0
      %1205 = vmatprep.subr.bf16.mxu0 0
      %1206 = vmatpush1.bf16.xpose.msra.mxu0 0
      %1207 = vmatprep.subr.bf16.mxu0 0
      %1208 = vmatpush1.bf16.xpose.msra.mxu0 0
      %1209 = vmatprep.subr.bf16.mxu0 0
      %1210 = vmatpush1.bf16.xpose.msra.mxu0 0
      %1211 = vmatprep.subr.bf16.mxu0 0
      %1212 = vmatpush1.bf16.xpose.msra.mxu0 %v1197
      %1213 = vmatprep.subr.bf16.mxu0 0
      %1214 = vmatpush1.bf16.xpose.msra.mxu0 %v1194
      %1215 = vmatprep.subr.bf16.mxu0 0
      %1216 = vmatpush2.bf16.xpose.msra.mxu0 0
      %1217 = vmatprep.subr.bf16.mxu0 0
      %1218 = vmatpush2.bf16.xpose.msra.mxu0 0
      %1219 = vmatprep.subr.bf16.mxu0 0
      %1220 = vmatpush2.bf16.xpose.msra.mxu0 0
      %1221 = vmatprep.subr.bf16.mxu0 0
      %1222 = vmatpush2.bf16.xpose.msra.mxu0 0
      %1223 = vmatprep.subr.bf16.mxu0 0
      %1224 = vmatpush2.bf16.xpose.msra.mxu0 0
      %1225 = vmatprep.subr.bf16.mxu0 0
      %1226 = vmatpush2.bf16.xpose.msra.mxu0 0
      %1227 = vmatprep.subr.bf16.mxu0 0
      %1228 = vmatpush2.bf16.xpose.msra.mxu0 0
      %1229 = vmatprep.subr.bf16.mxu0 0
      %1230 = vmatpush2.bf16.xpose.msra.mxu0 0
      %1231 = vmatprep.mubr.bf16.mxu0 0
      %1232 = vmatmul.mubr.bf16.gmra.mxu0 %v1191
      %v1233 = vpop.f32.mrf.mxu0
      %v1234 = vadd.f32 0.0, %v1233
      %v1235 = vpop.f32.mrf.mxu0
      %v1236 = vpop.f32.mrf.mxu0
      %v1237 = vadd.f32 0.0, %v1236
      %v1238 = vpop.f32.mrf.mxu0
      %1239 = vdwg.mxu0
      %1242 = vrot.lane.b32.xlu0 %v1234, 1
      %v1243 = vpop.permute.xlu0 %1242
      %1244 = vrot.lane.b32.xlu0 %v1237, 1
      %v1245 = vpop.permute.xlu0 %1244
      %v1248 = vsel %vm612, %v1234, %v1243
      %v1249 = vsel %vm613, %v1237, %v1245
      %1252 = vrot.lane.b32.xlu0 %v1248, 2
      %v1253 = vpop.permute.xlu0 %1252
      %1254 = vrot.lane.b32.xlu0 %v1249, 2
      %v1255 = vpop.permute.xlu0 %1254
      %v1258 = vsel %vm628, %v1248, %v1253
      %v1259 = vsel %vm629, %v1249, %v1255
      %1262 = vrot.lane.b32.xlu0 %v1258, 4
      %v1263 = vpop.permute.xlu0 %1262
      %1264 = vrot.lane.b32.xlu0 %v1259, 4
      %v1265 = vpop.permute.xlu0 %1264
      %v1268 = vsel %vm644, %v1258, %v1263
      %v1269 = vsel %vm645, %v1259, %v1265
      %1272 = vrot.lane.b32.xlu0 %v1268, 8
      %v1273 = vpop.permute.xlu0 %1272
      %1274 = vrot.lane.b32.xlu0 %v1269, 8
      %v1275 = vpop.permute.xlu0 %1274
      %v1278 = vsel %vm660, %v1268, %v1273
      %v1279 = vsel %vm661, %v1269, %v1275
      %1281 = vrot.lane.b32.xlu0 %v1171, 96
      %v1282 = vpop.permute.xlu0 %1281
      %1283 = vrot.lane.b32.xlu0 %v509, 96
      %v1284 = vpop.permute.xlu0 %1283
      %1287 = vrot.lane.b32.xlu0 %v1278, 113
      %v1288 = vpop.permute.xlu0 %1287
      %1289 = vrot.lane.b32.xlu0 %v1279, 113
      %v1290 = vpop.permute.xlu0 %1289
      %v1294 = vsel %vm554, %v1282, 0
      %v1297 = vsel %vm554, %v1284, 0
      %1299 = vmatprep.subr.bf16.mxu0 0
      %1300 = vmatpush1.bf16.xpose.msra.mxu0 0
      %1301 = vmatprep.subr.bf16.mxu0 0
      %1302 = vmatpush1.bf16.xpose.msra.mxu0 0
      %1303 = vmatprep.subr.bf16.mxu0 0
      %1304 = vmatpush1.bf16.xpose.msra.mxu0 0
      %1305 = vmatprep.subr.bf16.mxu0 0
      %1306 = vmatpush1.bf16.xpose.msra.mxu0 0
      %1307 = vmatprep.subr.bf16.mxu0 0
      %1308 = vmatpush1.bf16.xpose.msra.mxu0 0
      %1309 = vmatprep.subr.bf16.mxu0 0
      %1310 = vmatpush1.bf16.xpose.msra.mxu0 0
      %1311 = vmatprep.subr.bf16.mxu0 0
      %1312 = vmatpush1.bf16.xpose.msra.mxu0 0
      %1313 = vmatprep.subr.bf16.mxu0 0
      %1314 = vmatpush1.bf16.xpose.msra.mxu0 %v1297
      %1315 = vmatprep.subr.bf16.mxu0 0
      %1316 = vmatpush2.bf16.xpose.msra.mxu0 0
      %1317 = vmatprep.subr.bf16.mxu0 0
      %1318 = vmatpush2.bf16.xpose.msra.mxu0 0
      %1319 = vmatprep.subr.bf16.mxu0 0
      %1320 = vmatpush2.bf16.xpose.msra.mxu0 0
      %1321 = vmatprep.subr.bf16.mxu0 0
      %1322 = vmatpush2.bf16.xpose.msra.mxu0 0
      %1323 = vmatprep.subr.bf16.mxu0 0
      %1324 = vmatpush2.bf16.xpose.msra.mxu0 0
      %1325 = vmatprep.subr.bf16.mxu0 0
      %1326 = vmatpush2.bf16.xpose.msra.mxu0 0
      %1327 = vmatprep.subr.bf16.mxu0 0
      %1328 = vmatpush2.bf16.xpose.msra.mxu0 0
      %1329 = vmatprep.subr.bf16.mxu0 0
      %1330 = vmatpush2.bf16.xpose.msra.mxu0 0
      %1331 = vmatprep.mubr.bf16.mxu0 0
      %1332 = vmatmul.mubr.bf16.gmra.mxu0 %v1294
      %v1333 = vpop.f32.mrf.mxu0
      %v1334 = vadd.f32 %v1288, %v1333
      %v1335 = vpop.f32.mrf.mxu0
      %v1336 = vpop.f32.mrf.mxu0
      %v1337 = vadd.f32 %v1290, %v1336
      %v1338 = vpop.f32.mrf.mxu0
      %1339 = vdwg.mxu0
      %v1340 = vmul.f32 %v1334, 0.25
      %v1341 = vmul.f32 %v1337, 0.25
      %v1342 = vsel %vm503, %v1340, -1e+09
      %v1343 = vsel %vm504, %v1341, -1e+09
      %v1344 = vsel %vm554, %v1342, -inf
      %1345 = vmax.xlane.f32.xlu0 %v1344
      %v1346 = vpop.xlane.xlu0 %1345
      %v1347 = vsel %vm554, %v1343, -inf
      %1348 = vmax.xlane.f32.xlu0 %v1347
      %v1349 = vpop.xlane.xlu0 %1348
      %v1350 = vsub.f32 %v1342, %v1346
      %v1351 = vsub.f32 %v1343, %v1349
      %v1352 = vmul.f32 %v1350, 1.442695
      %v1353 = vpow.pop %v1352
      %v1354 = vmul.f32 %v1351, 1.442695
      %v1355 = vpow.pop %v1354
      %v1356 = vsel %vm554, %v1353, 0.0
      %1357 = vadd.xlane.f32.xlu0 %v1356
      %v1358 = vpop.xlane.xlu0 %1357
      %v1359 = vsel %vm554, %v1355, 0.0
      %1360 = vadd.xlane.f32.xlu0 %v1359
      %v1361 = vpop.xlane.xlu0 %1360
      %v1362 = vrcp.pop %v1358
      %v1363 = vrcp.pop %v1361
      %v1364 = vmul.f32 %v1353, %v1362
      %v1365 = vmul.f32 %v1355, %v1363
      %v1366 = vpack.c.bf16 %v1365, %v1364
      %1367 = vrot.lane.b32.xlu0 %v512, 96
      %v1368 = vpop.permute.xlu0 %1367
      %v1371 = vsel %vm554, %v1366, 0
      %1373 = vmatprep.subr.bf16.mxu0 0
      %1374 = vmatpush1.bf16.msra.mxu0 0
      %1375 = vmatprep.subr.bf16.mxu0 0
      %1376 = vmatpush1.bf16.msra.mxu0 0
      %1377 = vmatprep.subr.bf16.mxu0 0
      %1378 = vmatpush1.bf16.msra.mxu0 0
      %1379 = vmatprep.subr.bf16.mxu0 0
      %1380 = vmatpush1.bf16.msra.mxu0 0
      %1381 = vmatprep.subr.bf16.mxu0 0
      %1382 = vmatpush1.bf16.msra.mxu0 0
      %1383 = vmatprep.subr.bf16.mxu0 0
      %1384 = vmatpush1.bf16.msra.mxu0 0
      %1385 = vmatprep.subr.bf16.mxu0 0
      %1386 = vmatpush1.bf16.msra.mxu0 0
      %1387 = vmatprep.subr.bf16.mxu0 0
      %1388 = vmatpush1.bf16.msra.mxu0 %v1368
      %1389 = vmatprep.subr.bf16.mxu0 0
      %1390 = vmatpush2.bf16.msra.mxu0 0
      %1391 = vmatprep.subr.bf16.mxu0 0
      %1392 = vmatpush2.bf16.msra.mxu0 0
      %1393 = vmatprep.subr.bf16.mxu0 0
      %1394 = vmatpush2.bf16.msra.mxu0 0
      %1395 = vmatprep.subr.bf16.mxu0 0
      %1396 = vmatpush2.bf16.msra.mxu0 0
      %1397 = vmatprep.subr.bf16.mxu0 0
      %1398 = vmatpush2.bf16.msra.mxu0 0
      %1399 = vmatprep.subr.bf16.mxu0 0
      %1400 = vmatpush2.bf16.msra.mxu0 0
      %1401 = vmatprep.subr.bf16.mxu0 0
      %1402 = vmatpush2.bf16.msra.mxu0 0
      %1403 = vmatprep.subr.bf16.mxu0 0
      %1404 = vmatpush2.bf16.msra.mxu0 0
      %1405 = vmatprep.mubr.bf16.mxu0 0
      %1406 = vmatmul.mubr.bf16.gmra.mxu0 %v1371
      %v1407 = vpop.f32.mrf.mxu0
      %v1408 = vadd.f32 0.0, %v1407
      %v1409 = vpop.f32.mrf.mxu0
      %v1410 = vpop.f32.mrf.mxu0
      %v1411 = vadd.f32 0.0, %v1410
      %v1412 = vpop.f32.mrf.mxu0
      %1413 = vdwg.mxu0
      %v1414 = vpack.c.bf16 %v1411, %v1408
      %v1417 = vunpack.c.l.b16 %v525
      %v1418 = vunpack.c.l.b16 %v526
      %v1419 = vpack.c.b16 %v1418, %v1417
      %v1422 = vsel %vm554, %v1414, 0
      %1424 = vmatprep.subr.bf16.mxu0 0
      %1425 = vmatpush1.bf16.msra.mxu0 0
      %1426 = vmatprep.subr.bf16.mxu0 0
      %1427 = vmatpush1.bf16.msra.mxu0 0
      %1428 = vmatprep.subr.bf16.mxu0 0
      %1429 = vmatpush1.bf16.msra.mxu0 0
      %1430 = vmatprep.subr.bf16.mxu0 0
      %1431 = vmatpush1.bf16.msra.mxu0 0
      %1432 = vmatprep.subr.bf16.mxu0 0
      %1433 = vmatpush1.bf16.msra.mxu0 0
      %1434 = vmatprep.subr.bf16.mxu0 0
      %1435 = vmatpush1.bf16.msra.mxu0 0
      %1436 = vmatprep.subr.bf16.mxu0 0
      %1437 = vmatpush1.bf16.msra.mxu0 0
      %1438 = vmatprep.subr.bf16.mxu0 0
      %1439 = vmatpush1.bf16.msra.mxu0 %v1419
      %1440 = vmatprep.subr.bf16.mxu0 0
      %1441 = vmatpush2.bf16.msra.mxu0 0
      %1442 = vmatprep.subr.bf16.mxu0 0
      %1443 = vmatpush2.bf16.msra.mxu0 0
      %1444 = vmatprep.subr.bf16.mxu0 0
      %1445 = vmatpush2.bf16.msra.mxu0 0
      %1446 = vmatprep.subr.bf16.mxu0 0
      %1447 = vmatpush2.bf16.msra.mxu0 0
      %1448 = vmatprep.subr.bf16.mxu0 0
      %1449 = vmatpush2.bf16.msra.mxu0 0
      %1450 = vmatprep.subr.bf16.mxu0 0
      %1451 = vmatpush2.bf16.msra.mxu0 0
      %1452 = vmatprep.subr.bf16.mxu0 0
      %1453 = vmatpush2.bf16.msra.mxu0 0
      %1454 = vmatprep.subr.bf16.mxu0 0
      %1455 = vmatpush2.bf16.msra.mxu0 0
      %1456 = vmatprep.mubr.bf16.mxu0 0
      %1457 = vmatmul.mubr.bf16.gmra.mxu0 %v1422
      %v1458 = vpop.f32.mrf.mxu0
      %v1459 = vadd.f32 0.0, %v1458
      %v1460 = vpop.f32.mrf.mxu0
      %v1461 = vpop.f32.mrf.mxu0
      %v1462 = vadd.f32 0.0, %v1461
      %v1463 = vpop.f32.mrf.mxu0
      %1464 = vdwg.mxu0
      %v1465 = vadd.f32 %v1159, %v1459
      %v1466 = vadd.f32 %v1160, %v1462
      %v1467 = vlaneseq
      %v1468 = vshrl.u32 %v1467, 7
      %v1469 = vsub.s32 3, %v1468
      %v1470 = vrot.slane %v519, %v1469
      %1472 = vrot.lane.b32.xlu0 %v1470, 48
      %v1473 = vpop.permute.xlu0 %1472
      %v1475 = vadd.f32 %v505, %v1473
      %v1476 = vadd.f32 %v506, %v1473
      %v1477 = vpack.c.bf16 %v1476, %v1475
      %v1478 = vlaneseq
      %v1479 = vshrl.u32 %v1478, 7
      %v1480 = vsub.s32 3, %v1479
      %v1481 = vrot.slane %v520, %v1480
      %1483 = vrot.lane.b32.xlu0 %v1481, 48
      %v1484 = vpop.permute.xlu0 %1483
      %v1486 = vadd.f32 %v505, %v1484
      %v1487 = vadd.f32 %v506, %v1484
      %v1488 = vpack.c.bf16 %v1487, %v1486
      %1490 = vrot.lane.b32.xlu0 %v1488, 80
      %v1491 = vpop.permute.xlu0 %1490
      %1492 = vrot.lane.b32.xlu0 %v517, 80
      %v1493 = vpop.permute.xlu0 %1492
      %1494 = vrot.lane.b32.xlu0 %v518, 80
      %v1495 = vpop.permute.xlu0 %1494
      %v1497 = vsel %vm554, %v1491, 0
      %v1500 = vsel %vm554, %v1493, 0
      %v1503 = vsel %vm554, %v1495, 0
      %1505 = vmatprep.subr.bf16.mxu0 0
      %1506 = vmatpush1.bf16.xpose.msra.mxu0 0
      %1507 = vmatprep.subr.bf16.mxu0 0
      %1508 = vmatpush1.bf16.xpose.msra.mxu0 0
      %1509 = vmatprep.subr.bf16.mxu0 0
      %1510 = vmatpush1.bf16.xpose.msra.mxu0 0
      %1511 = vmatprep.subr.bf16.mxu0 0
      %1512 = vmatpush1.bf16.xpose.msra.mxu0 0
      %1513 = vmatprep.subr.bf16.mxu0 0
      %1514 = vmatpush1.bf16.xpose.msra.mxu0 0
      %1515 = vmatprep.subr.bf16.mxu0 0
      %1516 = vmatpush1.bf16.xpose.msra.mxu0 0
      %1517 = vmatprep.subr.bf16.mxu0 0
      %1518 = vmatpush1.bf16.xpose.msra.mxu0 %v1503
      %1519 = vmatprep.subr.bf16.mxu0 0
      %1520 = vmatpush1.bf16.xpose.msra.mxu0 %v1500
      %1521 = vmatprep.subr.bf16.mxu0 0
      %1522 = vmatpush2.bf16.xpose.msra.mxu0 0
      %1523 = vmatprep.subr.bf16.mxu0 0
      %1524 = vmatpush2.bf16.xpose.msra.mxu0 0
      %1525 = vmatprep.subr.bf16.mxu0 0
      %1526 = vmatpush2.bf16.xpose.msra.mxu0 0
      %1527 = vmatprep.subr.bf16.mxu0 0
      %1528 = vmatpush2.bf16.xpose.msra.mxu0 0
      %1529 = vmatprep.subr.bf16.mxu0 0
      %1530 = vmatpush2.bf16.xpose.msra.mxu0 0
      %1531 = vmatprep.subr.bf16.mxu0 0
      %1532 = vmatpush2.bf16.xpose.msra.mxu0 0
      %1533 = vmatprep.subr.bf16.mxu0 0
      %1534 = vmatpush2.bf16.xpose.msra.mxu0 0
      %1535 = vmatprep.subr.bf16.mxu0 0
      %1536 = vmatpush2.bf16.xpose.msra.mxu0 0
      %1537 = vmatprep.mubr.bf16.mxu0 0
      %1538 = vmatmul.mubr.bf16.gmra.mxu0 %v1497
      %v1539 = vpop.f32.mrf.mxu0
      %v1540 = vadd.f32 0.0, %v1539
      %v1541 = vpop.f32.mrf.mxu0
      %v1542 = vpop.f32.mrf.mxu0
      %v1543 = vadd.f32 0.0, %v1542
      %v1544 = vpop.f32.mrf.mxu0
      %1545 = vdwg.mxu0
      %1548 = vrot.lane.b32.xlu0 %v1540, 1
      %v1549 = vpop.permute.xlu0 %1548
      %1550 = vrot.lane.b32.xlu0 %v1543, 1
      %v1551 = vpop.permute.xlu0 %1550
      %v1554 = vsel %vm612, %v1540, %v1549
      %v1555 = vsel %vm613, %v1543, %v1551
      %1558 = vrot.lane.b32.xlu0 %v1554, 2
      %v1559 = vpop.permute.xlu0 %1558
      %1560 = vrot.lane.b32.xlu0 %v1555, 2
      %v1561 = vpop.permute.xlu0 %1560
      %v1564 = vsel %vm628, %v1554, %v1559
      %v1565 = vsel %vm629, %v1555, %v1561
      %1568 = vrot.lane.b32.xlu0 %v1564, 4
      %v1569 = vpop.permute.xlu0 %1568
      %1570 = vrot.lane.b32.xlu0 %v1565, 4
      %v1571 = vpop.permute.xlu0 %1570
      %v1574 = vsel %vm644, %v1564, %v1569
      %v1575 = vsel %vm645, %v1565, %v1571
      %1578 = vrot.lane.b32.xlu0 %v1574, 8
      %v1579 = vpop.permute.xlu0 %1578
      %1580 = vrot.lane.b32.xlu0 %v1575, 8
      %v1581 = vpop.permute.xlu0 %1580
      %v1584 = vsel %vm660, %v1574, %v1579
      %v1585 = vsel %vm661, %v1575, %v1581
      %1587 = vrot.lane.b32.xlu0 %v1477, 80
      %v1588 = vpop.permute.xlu0 %1587
      %1589 = vrot.lane.b32.xlu0 %v509, 80
      %v1590 = vpop.permute.xlu0 %1589
      %1593 = vrot.lane.b32.xlu0 %v1584, 113
      %v1594 = vpop.permute.xlu0 %1593
      %1595 = vrot.lane.b32.xlu0 %v1585, 113
      %v1596 = vpop.permute.xlu0 %1595
      %v1600 = vsel %vm554, %v1588, 0
      %v1603 = vsel %vm554, %v1590, 0
      %1605 = vmatprep.subr.bf16.mxu0 0
      %1606 = vmatpush1.bf16.xpose.msra.mxu0 0
      %1607 = vmatprep.subr.bf16.mxu0 0
      %1608 = vmatpush1.bf16.xpose.msra.mxu0 0
      %1609 = vmatprep.subr.bf16.mxu0 0
      %1610 = vmatpush1.bf16.xpose.msra.mxu0 0
      %1611 = vmatprep.subr.bf16.mxu0 0
      %1612 = vmatpush1.bf16.xpose.msra.mxu0 0
      %1613 = vmatprep.subr.bf16.mxu0 0
      %1614 = vmatpush1.bf16.xpose.msra.mxu0 0
      %1615 = vmatprep.subr.bf16.mxu0 0
      %1616 = vmatpush1.bf16.xpose.msra.mxu0 0
      %1617 = vmatprep.subr.bf16.mxu0 0
      %1618 = vmatpush1.bf16.xpose.msra.mxu0 0
      %1619 = vmatprep.subr.bf16.mxu0 0
      %1620 = vmatpush1.bf16.xpose.msra.mxu0 %v1603
      %1621 = vmatprep.subr.bf16.mxu0 0
      %1622 = vmatpush2.bf16.xpose.msra.mxu0 0
      %1623 = vmatprep.subr.bf16.mxu0 0
      %1624 = vmatpush2.bf16.xpose.msra.mxu0 0
      %1625 = vmatprep.subr.bf16.mxu0 0
      %1626 = vmatpush2.bf16.xpose.msra.mxu0 0
      %1627 = vmatprep.subr.bf16.mxu0 0
      %1628 = vmatpush2.bf16.xpose.msra.mxu0 0
      %1629 = vmatprep.subr.bf16.mxu0 0
      %1630 = vmatpush2.bf16.xpose.msra.mxu0 0
      %1631 = vmatprep.subr.bf16.mxu0 0
      %1632 = vmatpush2.bf16.xpose.msra.mxu0 0
      %1633 = vmatprep.subr.bf16.mxu0 0
      %1634 = vmatpush2.bf16.xpose.msra.mxu0 0
      %1635 = vmatprep.subr.bf16.mxu0 0
      %1636 = vmatpush2.bf16.xpose.msra.mxu0 0
      %1637 = vmatprep.mubr.bf16.mxu0 0
      %1638 = vmatmul.mubr.bf16.gmra.mxu0 %v1600
      %v1639 = vpop.f32.mrf.mxu0
      %v1640 = vadd.f32 %v1594, %v1639
      %v1641 = vpop.f32.mrf.mxu0
      %v1642 = vpop.f32.mrf.mxu0
      %v1643 = vadd.f32 %v1596, %v1642
      %v1644 = vpop.f32.mrf.mxu0
      %1645 = vdwg.mxu0
      %v1646 = vmul.f32 %v1640, 0.25
      %v1647 = vmul.f32 %v1643, 0.25
      %v1648 = vsel %vm503, %v1646, -1e+09
      %v1649 = vsel %vm504, %v1647, -1e+09
      %v1650 = vsel %vm554, %v1648, -inf
      %1651 = vmax.xlane.f32.xlu0 %v1650
      %v1652 = vpop.xlane.xlu0 %1651
      %v1653 = vsel %vm554, %v1649, -inf
      %1654 = vmax.xlane.f32.xlu0 %v1653
      %v1655 = vpop.xlane.xlu0 %1654
      %v1656 = vsub.f32 %v1648, %v1652
      %v1657 = vsub.f32 %v1649, %v1655
      %v1658 = vmul.f32 %v1656, 1.442695
      %v1659 = vpow.pop %v1658
      %v1660 = vmul.f32 %v1657, 1.442695
      %v1661 = vpow.pop %v1660
      %v1662 = vsel %vm554, %v1659, 0.0
      %1663 = vadd.xlane.f32.xlu0 %v1662
      %v1664 = vpop.xlane.xlu0 %1663
      %v1665 = vsel %vm554, %v1661, 0.0
      %1666 = vadd.xlane.f32.xlu0 %v1665
      %v1667 = vpop.xlane.xlu0 %1666
      %v1668 = vrcp.pop %v1664
      %v1669 = vrcp.pop %v1667
      %v1670 = vmul.f32 %v1659, %v1668
      %v1671 = vmul.f32 %v1661, %v1669
      %v1672 = vpack.c.bf16 %v1671, %v1670
      %1673 = vrot.lane.b32.xlu0 %v512, 80
      %v1674 = vpop.permute.xlu0 %1673
      %v1677 = vsel %vm554, %v1672, 0
      %1679 = vmatprep.subr.bf16.mxu0 0
      %1680 = vmatpush1.bf16.msra.mxu0 0
      %1681 = vmatprep.subr.bf16.mxu0 0
      %1682 = vmatpush1.bf16.msra.mxu0 0
      %1683 = vmatprep.subr.bf16.mxu0 0
      %1684 = vmatpush1.bf16.msra.mxu0 0
      %1685 = vmatprep.subr.bf16.mxu0 0
      %1686 = vmatpush1.bf16.msra.mxu0 0
      %1687 = vmatprep.subr.bf16.mxu0 0
      %1688 = vmatpush1.bf16.msra.mxu0 0
      %1689 = vmatprep.subr.bf16.mxu0 0
      %1690 = vmatpush1.bf16.msra.mxu0 0
      %1691 = vmatprep.subr.bf16.mxu0 0
      %1692 = vmatpush1.bf16.msra.mxu0 0
      %1693 = vmatprep.subr.bf16.mxu0 0
      %1694 = vmatpush1.bf16.msra.mxu0 %v1674
      %1695 = vmatprep.subr.bf16.mxu0 0
      %1696 = vmatpush2.bf16.msra.mxu0 0
      %1697 = vmatprep.subr.bf16.mxu0 0
      %1698 = vmatpush2.bf16.msra.mxu0 0
      %1699 = vmatprep.subr.bf16.mxu0 0
      %1700 = vmatpush2.bf16.msra.mxu0 0
      %1701 = vmatprep.subr.bf16.mxu0 0
      %1702 = vmatpush2.bf16.msra.mxu0 0
      %1703 = vmatprep.subr.bf16.mxu0 0
      %1704 = vmatpush2.bf16.msra.mxu0 0
      %1705 = vmatprep.subr.bf16.mxu0 0
      %1706 = vmatpush2.bf16.msra.mxu0 0
      %1707 = vmatprep.subr.bf16.mxu0 0
      %1708 = vmatpush2.bf16.msra.mxu0 0
      %1709 = vmatprep.subr.bf16.mxu0 0
      %1710 = vmatpush2.bf16.msra.mxu0 0
      %1711 = vmatprep.mubr.bf16.mxu0 0
      %1712 = vmatmul.mubr.bf16.gmra.mxu0 %v1677
      %v1713 = vpop.f32.mrf.mxu0
      %v1714 = vadd.f32 0.0, %v1713
      %v1715 = vpop.f32.mrf.mxu0
      %v1716 = vpop.f32.mrf.mxu0
      %v1717 = vadd.f32 0.0, %v1716
      %v1718 = vpop.f32.mrf.mxu0
      %1719 = vdwg.mxu0
      %v1720 = vpack.c.bf16 %v1717, %v1714
      %v1723 = vunpack.c.l.b16 %v527
      %v1724 = vunpack.c.l.b16 %v528
      %v1725 = vpack.c.b16 %v1724, %v1723
      %v1728 = vsel %vm554, %v1720, 0
      %1730 = vmatprep.subr.bf16.mxu0 0
      %1731 = vmatpush1.bf16.msra.mxu0 0
      %1732 = vmatprep.subr.bf16.mxu0 0
      %1733 = vmatpush1.bf16.msra.mxu0 0
      %1734 = vmatprep.subr.bf16.mxu0 0
      %1735 = vmatpush1.bf16.msra.mxu0 0
      %1736 = vmatprep.subr.bf16.mxu0 0
      %1737 = vmatpush1.bf16.msra.mxu0 0
      %1738 = vmatprep.subr.bf16.mxu0 0
      %1739 = vmatpush1.bf16.msra.mxu0 0
      %1740 = vmatprep.subr.bf16.mxu0 0
      %1741 = vmatpush1.bf16.msra.mxu0 0
      %1742 = vmatprep.subr.bf16.mxu0 0
      %1743 = vmatpush1.bf16.msra.mxu0 0
      %1744 = vmatprep.subr.bf16.mxu0 0
      %1745 = vmatpush1.bf16.msra.mxu0 %v1725
      %1746 = vmatprep.subr.bf16.mxu0 0
      %1747 = vmatpush2.bf16.msra.mxu0 0
      %1748 = vmatprep.subr.bf16.mxu0 0
      %1749 = vmatpush2.bf16.msra.mxu0 0
      %1750 = vmatprep.subr.bf16.mxu0 0
      %1751 = vmatpush2.bf16.msra.mxu0 0
      %1752 = vmatprep.subr.bf16.mxu0 0
      %1753 = vmatpush2.bf16.msra.mxu0 0
      %1754 = vmatprep.subr.bf16.mxu0 0
      %1755 = vmatpush2.bf16.msra.mxu0 0
      %1756 = vmatprep.subr.bf16.mxu0 0
      %1757 = vmatpush2.bf16.msra.mxu0 0
      %1758 = vmatprep.subr.bf16.mxu0 0
      %1759 = vmatpush2.bf16.msra.mxu0 0
      %1760 = vmatprep.subr.bf16.mxu0 0
      %1761 = vmatpush2.bf16.msra.mxu0 0
      %1762 = vmatprep.mubr.bf16.mxu0 0
      %1763 = vmatmul.mubr.bf16.gmra.mxu0 %v1728
      %v1764 = vpop.f32.mrf.mxu0
      %v1765 = vadd.f32 0.0, %v1764
      %v1766 = vpop.f32.mrf.mxu0
      %v1767 = vpop.f32.mrf.mxu0
      %v1768 = vadd.f32 0.0, %v1767
      %v1769 = vpop.f32.mrf.mxu0
      %1770 = vdwg.mxu0
      %v1771 = vadd.f32 %v1465, %v1765
      %v1772 = vadd.f32 %v1466, %v1768
      %vm1773 = vcmask 523264
      %1774 = vst.msk [vmem:[%s480] sm:$0xff] %vm1773, %v1771
      %1775 = vst.msk [vmem:[%s480 + $0x8] sm:$0xff] %vm1773, %v1772
      %p1776 = scmp.lt.s32.totalorder %s22, 1
      %s1777 = scalar_select %p1776, %s22, 1
      %s1778 = smul.addr %s1777, 2
      %s1779 = smul.addr %s1778, 8
      %s1780 = scalar_lea.vmem %s11, %s1779
      // Predicated region
      $region65: #{block_forward.9} parent=63 // pred_check
        %p1781 = pneg %p301
      $region66: #{block_forward.9} parent=63 // pred_check_branch
        %1783 = sbr.rel (%p1781) target = $region68
      $region67: #{block_forward.9} parent=63 // pred_region
        _
      $region68: #{block_forward.9} parent=63 // pred_fallthru
        _
    $region64: #{block_forward.9} parent=5 // pred_fallthru
      _
    %p1784 = scmp.le.s32.totalorder 2, %s17
    // Predicated region
    $region69: #{block_forward.9} parent=5 // pred_check
      %p1785 = pneg %p1784
    $region70: #{block_forward.9} parent=5 // pred_check_branch
      %1787 = sbr.rel (%p1785) target = $region72
    $region71: #{block_forward.9} parent=5 // pred_region
      %s1788 = ssub.s32 %s17, 2
      // Predicated region
      $region73: #{block_forward.9} parent=71 // pred_check
        %p1789 = pneg %p307
      $region74: #{block_forward.9} parent=71 // pred_check_branch
        %1791 = sbr.rel (%p1789) target = $region76
      $region75: #{block_forward.9} parent=71 // pred_region
        %p1792 = scmp.lt.s32.totalorder %s23, 1
        %s1793 = scalar_select %p1792, %s23, 1
        %s1794 = smul.addr %s1793, 2
        %s1795 = smul.addr %s1794, 8
        %s1796 = scalar_lea.vmem %s11, %s1795
      $region76: #{block_forward.9} parent=71 // pred_fallthru
        _
    $region72: #{block_forward.9} parent=5 // pred_fallthru
      _
  $region6: #{block_forward.9} parent=0 // loop_footer
    %s21 = sadd.s32 1, %s17
  $region7: #{block_forward.9} parent=0 // loop_footer_branch
    %16 = sbr.rel target = $region3
  $region8: #{block_forward.9} parent=0 // loop_exit
    _

// kernel: block_forward.10
$region0: #{block_forward.10}
  #allocation0 [shape = 'u32[]', space=smem, size = 0x4, offset = 0x4, fixed_abs, tag = 'smem constant byte address 0x4 - core index']
  #allocation1 [shape = 'u32[144,128]{1,0:T(1,128)}', space=vmem, size = 0x12000, scoped, tag = 'internal scratch']
  %s0 = inlined_call_operand.vmem [shape: f32[32,64], index: 0, kind: input, shape index: {}]
  %s1 = inlined_call_operand.vmem [shape: f32[32,1], index: 1, kind: input, shape index: {}]
  %s2 = inlined_call_operand.vmem [shape: f32[1,64], index: 2, kind: input, shape index: {}]
  %s3 = inlined_call_operand.vmem [shape: f32[1,64], index: 3, kind: input, shape index: {}]
  %s4 = inlined_call_operand.vmem [shape: f32[1,64], index: 4, kind: input, shape index: {}]
  %s5 = inlined_call_operand.vmem [shape: f32[1,64], index: 5, kind: input, shape index: {}]
  %s6 = inlined_call_operand.vmem [shape: bf16[64,256], index: 6, kind: input, shape index: {}]
  %s7 = inlined_call_operand.vmem [shape: f32[1,256], index: 7, kind: input, shape index: {}]
  %s8 = inlined_call_operand.vmem [shape: bf16[256,64], index: 8, kind: input, shape index: {}]
  %s9 = inlined_call_operand.vmem [shape: f32[1,64], index: 9, kind: input, shape index: {}]
  %s10 = inlined_call_operand.vmem [shape: f32[1,64], index: 10, kind: input, shape index: {}]
  %s11 = inlined_call_operand.vmem [shape: f32[1,64], index: 11, kind: input, shape index: {}]
  %s12 = inlined_call_operand.vmem [shape: f32[32,64], index: 12, kind: output, shape index: {}]
  %s13 = sld [smem:[#allocation0]]
  $region58: #{block_forward.10} parent=0
    _
  %s15 = ssub.s32 1, %s13
  %s16 = scalar_select 0, %s15, %s13
  // Predicated region
  $region2: #{block_forward.10} parent=0 // pred_check
    _
  $region3: #{block_forward.10} parent=0 // pred_check_branch
    %18 = sbr.rel (0) target = $region5
  $region4: #{block_forward.10} parent=0 // pred_region
    _
  $region5: #{block_forward.10} parent=0 // pred_fallthru
    _
  // Predicated region
  $region6: #{block_forward.10} parent=0 // pred_check
    _
  $region7: #{block_forward.10} parent=0 // pred_check_branch
    %20 = sbr.rel (0) target = $region9
  $region8: #{block_forward.10} parent=0 // pred_region
    _
  $region9: #{block_forward.10} parent=0 // pred_fallthru
    _
  // Predicated region
  $region10: #{block_forward.10} parent=0 // pred_check
    _
  $region11: #{block_forward.10} parent=0 // pred_check_branch
    %22 = sbr.rel (0) target = $region13
  $region12: #{block_forward.10} parent=0 // pred_region
    _
  $region13: #{block_forward.10} parent=0 // pred_fallthru
    _
  // Predicated region
  $region14: #{block_forward.10} parent=0 // pred_check
    _
  $region15: #{block_forward.10} parent=0 // pred_check_branch
    %24 = sbr.rel (0) target = $region17
  $region16: #{block_forward.10} parent=0 // pred_region
    _
  $region17: #{block_forward.10} parent=0 // pred_fallthru
    _
  // Predicated region
  $region18: #{block_forward.10} parent=0 // pred_check
    _
  $region19: #{block_forward.10} parent=0 // pred_check_branch
    %26 = sbr.rel (0) target = $region21
  $region20: #{block_forward.10} parent=0 // pred_region
    _
  $region21: #{block_forward.10} parent=0 // pred_fallthru
    _
  // Predicated region
  $region22: #{block_forward.10} parent=0 // pred_check
    _
  $region23: #{block_forward.10} parent=0 // pred_check_branch
    %28 = sbr.rel (0) target = $region25
  $region24: #{block_forward.10} parent=0 // pred_region
    _
  $region25: #{block_forward.10} parent=0 // pred_fallthru
    _
  // Predicated region
  $region26: #{block_forward.10} parent=0 // pred_check
    _
  $region27: #{block_forward.10} parent=0 // pred_check_branch
    %30 = sbr.rel (0) target = $region29
  $region28: #{block_forward.10} parent=0 // pred_region
    _
  $region29: #{block_forward.10} parent=0 // pred_fallthru
    _
  // Predicated region
  $region30: #{block_forward.10} parent=0 // pred_check
    _
  $region31: #{block_forward.10} parent=0 // pred_check_branch
    %32 = sbr.rel (0) target = $region33
  $region32: #{block_forward.10} parent=0 // pred_region
    _
  $region33: #{block_forward.10} parent=0 // pred_fallthru
    _
  // Predicated region
  $region34: #{block_forward.10} parent=0 // pred_check
    _
  $region35: #{block_forward.10} parent=0 // pred_check_branch
    %34 = sbr.rel (0) target = $region37
  $region36: #{block_forward.10} parent=0 // pred_region
    _
  $region37: #{block_forward.10} parent=0 // pred_fallthru
    _
  // Predicated region
  $region38: #{block_forward.10} parent=0 // pred_check
    _
  $region39: #{block_forward.10} parent=0 // pred_check_branch
    %36 = sbr.rel (0) target = $region41
  $region40: #{block_forward.10} parent=0 // pred_region
    _
  $region41: #{block_forward.10} parent=0 // pred_fallthru
    _
  // Predicated region
  $region42: #{block_forward.10} parent=0 // pred_check
    _
  $region43: #{block_forward.10} parent=0 // pred_check_branch
    %38 = sbr.rel (0) target = $region45
  $region44: #{block_forward.10} parent=0 // pred_region
    _
  $region45: #{block_forward.10} parent=0 // pred_fallthru
    _
  // Predicated region
  $region46: #{block_forward.10} parent=0 // pred_check
    _
  $region47: #{block_forward.10} parent=0 // pred_check_branch
    %40 = sbr.rel (0) target = $region49
  $region48: #{block_forward.10} parent=0 // pred_region
    _
  $region49: #{block_forward.10} parent=0 // pred_fallthru
    _
  %v42 = vld [vmem:[%s0] sm:$0xff]
  %v43 = vld [vmem:[%s0 + $0x8] sm:$0xff]
  %v44 = vld [vmem:[%s0 + $0x10] sm:$0xff]
  %v45 = vld [vmem:[%s0 + $0x18] sm:$0xff]
  %vm46 = vcmask 523264
  %v47 = vsel %vm46, %v42, 0.0
  %48 = vadd.xlane.f32.xlu0 %v47
  %v49 = vpop.xlane.xlu0 %48
  %v50 = vsel %vm46, %v43, 0.0
  %51 = vadd.xlane.f32.xlu0 %v50
  %v52 = vpop.xlane.xlu0 %51
  %v53 = vsel %vm46, %v44, 0.0
  %54 = vadd.xlane.f32.xlu0 %v53
  %v55 = vpop.xlane.xlu0 %54
  %v56 = vsel %vm46, %v45, 0.0
  %57 = vadd.xlane.f32.xlu0 %v56
  %v58 = vpop.xlane.xlu0 %57
  %v59 = vrcp.pop 64.0
  %v60 = vmul.f32 %v49, %v59
  %v61 = vmul.f32 %v52, %v59
  %v62 = vmul.f32 %v55, %v59
  %v63 = vmul.f32 %v58, %v59
  %v64 = vsub.f32 %v42, %v60
  %v65 = vsub.f32 %v43, %v61
  %v66 = vsub.f32 %v44, %v62
  %v67 = vsub.f32 %v45, %v63
  %v68 = vmul.f32 %v64, %v64
  %v69 = vmul.f32 %v65, %v65
  %v70 = vmul.f32 %v66, %v66
  %v71 = vmul.f32 %v67, %v67
  %v72 = vsel %vm46, %v68, 0.0
  %73 = vadd.xlane.f32.xlu0 %v72
  %v74 = vpop.xlane.xlu0 %73
  %v75 = vsel %vm46, %v69, 0.0
  %76 = vadd.xlane.f32.xlu0 %v75
  %v77 = vpop.xlane.xlu0 %76
  %v78 = vsel %vm46, %v70, 0.0
  %79 = vadd.xlane.f32.xlu0 %v78
  %v80 = vpop.xlane.xlu0 %79
  %v81 = vsel %vm46, %v71, 0.0
  %82 = vadd.xlane.f32.xlu0 %v81
  %v83 = vpop.xlane.xlu0 %82
  %v84 = vmul.f32 %v74, %v59
  %v85 = vmul.f32 %v77, %v59
  %v86 = vmul.f32 %v80, %v59
  %v87 = vmul.f32 %v83, %v59
  %v88 = vadd.f32 %v84, 1e-05
  %v89 = vadd.f32 %v85, 1e-05
  %v90 = vadd.f32 %v86, 1e-05
  %v91 = vadd.f32 %v87, 1e-05
  %v92 = vrsqrt.pop %v88
  %v93 = vrsqrt.pop %v89
  %v94 = vrsqrt.pop %v90
  %v95 = vrsqrt.pop %v91
  %v96 = vmul.f32 %v64, %v92
  %v97 = vmul.f32 %v65, %v93
  %v98 = vmul.f32 %v66, %v94
  %v99 = vmul.f32 %v67, %v95
  %v100 = vld [vmem:[%s2] sm:$0x1]
  %v102 = vlaneseq
  %v103 = vshrl.u32 %v102, 7
  %v104 = vsub.s32 0, %v103
  %v105 = vrot.slane %v100, %v104
  %v107 = vmul.f32 %v96, %v105
  %v108 = vmul.f32 %v97, %v105
  %v109 = vmul.f32 %v98, %v105
  %v110 = vmul.f32 %v99, %v105
  %v111 = vld [vmem:[%s3] sm:$0x1]
  %v113 = vlaneseq
  %v114 = vshrl.u32 %v113, 7
  %v115 = vsub.s32 0, %v114
  %v116 = vrot.slane %v111, %v115
  %v118 = vadd.f32 %v107, %v116
  %v119 = vadd.f32 %v108, %v116
  %v120 = vadd.f32 %v109, %v116
  %v121 = vadd.f32 %v110, %v116
  %v122 = vld [vmem:[%s4] sm:$0x1]
  %v124 = vlaneseq
  %v125 = vshrl.u32 %v124, 7
  %v126 = vsub.s32 0, %v125
  %v127 = vrot.slane %v122, %v126
  %v129 = vmul.f32 %v118, %v127
  %v130 = vmul.f32 %v119, %v127
  %v131 = vmul.f32 %v120, %v127
  %v132 = vmul.f32 %v121, %v127
  %v133 = vld [vmem:[%s5] sm:$0x1]
  %v135 = vlaneseq
  %v136 = vshrl.u32 %v135, 7
  %v137 = vsub.s32 0, %v136
  %v138 = vrot.slane %v133, %v137
  %v140 = vadd.f32 %v129, %v138
  %v141 = vadd.f32 %v130, %v138
  %v142 = vadd.f32 %v131, %v138
  %v143 = vadd.f32 %v132, %v138
  %v144 = vpack.c.bf16 %v141, %v140
  %v145 = vpack.c.bf16 %v143, %v142
  %v146 = vld [vmem:[%s6] sm:$0xff]
  %v147 = vld [vmem:[%s6 + $0x8] sm:$0xff]
  %v148 = vld [vmem:[%s6 + $0x10] sm:$0xff]
  %v149 = vld [vmem:[%s6 + $0x18] sm:$0xff]
  %v150 = vld [vmem:[%s6 + $0x20] sm:$0xff]
  %v151 = vld [vmem:[%s6 + $0x28] sm:$0xff]
  %v152 = vld [vmem:[%s6 + $0x30] sm:$0xff]
  %v153 = vld [vmem:[%s6 + $0x38] sm:$0xff]
  %v154 = vld [vmem:[%s7] sm:$0x3]
  %v156 = vlaneseq
  %v157 = vshrl.u32 %v156, 7
  %v158 = vsub.s32 0, %v157
  %v159 = vrot.slane %v154, %v158
  %v160 = vlaneseq
  %v161 = vshrl.u32 %v160, 7
  %v162 = vsub.s32 1, %v161
  %v163 = vrot.slane %v154, %v162
  %v174 = vunpack.c.l.b16 %v146
  %v175 = vunpack.c.h.b16 %v146
  %v176 = vunpack.c.l.b16 %v147
  %v177 = vunpack.c.h.b16 %v147
  %v178 = vunpack.c.l.b16 %v148
  %v179 = vunpack.c.h.b16 %v148
  %v180 = vunpack.c.l.b16 %v149
  %v181 = vunpack.c.h.b16 %v149
  %v182 = vunpack.c.l.b16 %v150
  %v183 = vunpack.c.h.b16 %v150
  %v184 = vunpack.c.l.b16 %v151
  %v185 = vunpack.c.h.b16 %v151
  %v186 = vunpack.c.l.b16 %v152
  %v187 = vunpack.c.h.b16 %v152
  %v188 = vunpack.c.l.b16 %v153
  %v189 = vunpack.c.h.b16 %v153
  %v190 = vpack.c.b16 %v176, %v174
  %v191 = vpack.c.b16 %v177, %v175
  %v192 = vpack.c.b16 %v180, %v178
  %v193 = vpack.c.b16 %v181, %v179
  %v194 = vpack.c.b16 %v184, %v182
  %v195 = vpack.c.b16 %v185, %v183
  %v196 = vpack.c.b16 %v188, %v186
  %v197 = vpack.c.b16 %v189, %v187
  %v207 = vsel %vm46, %v144, 0
  %v210 = vsel %vm46, %v145, 0
  %212 = vmatprep.subr.bf16.mxu0 0
  %213 = vmatpush1.bf16.msra.mxu0 0
  %214 = vmatprep.subr.bf16.mxu0 0
  %215 = vmatpush1.bf16.msra.mxu0 0
  %216 = vmatprep.subr.bf16.mxu0 0
  %217 = vmatpush1.bf16.msra.mxu0 0
  %218 = vmatprep.subr.bf16.mxu0 0
  %219 = vmatpush1.bf16.msra.mxu0 0
  %220 = vmatprep.subr.bf16.mxu0 %v197
  %221 = vmatpush1.bf16.msra.mxu0 %v196
  %222 = vmatprep.subr.bf16.mxu0 %v195
  %223 = vmatpush1.bf16.msra.mxu0 %v194
  %224 = vmatprep.subr.bf16.mxu0 %v193
  %225 = vmatpush1.bf16.msra.mxu0 %v192
  %226 = vmatprep.subr.bf16.mxu0 %v191
  %227 = vmatpush1.bf16.msra.mxu0 %v190
  %228 = vmatprep.subr.bf16.mxu0 0
  %229 = vmatpush2.bf16.msra.mxu0 0
  %230 = vmatprep.subr.bf16.mxu0 0
  %231 = vmatpush2.bf16.msra.mxu0 0
  %232 = vmatprep.subr.bf16.mxu0 0
  %233 = vmatpush2.bf16.msra.mxu0 0
  %234 = vmatprep.subr.bf16.mxu0 0
  %235 = vmatpush2.bf16.msra.mxu0 0
  %236 = vmatprep.subr.bf16.mxu0 0
  %237 = vmatpush2.bf16.msra.mxu0 0
  %238 = vmatprep.subr.bf16.mxu0 0
  %239 = vmatpush2.bf16.msra.mxu0 0
  %240 = vmatprep.subr.bf16.mxu0 0
  %241 = vmatpush2.bf16.msra.mxu0 0
  %242 = vmatprep.subr.bf16.mxu0 0
  %243 = vmatpush2.bf16.msra.mxu0 0
  %244 = vmatprep.mubr.bf16.mxu0 0
  %245 = vmatmul.mubr.bf16.gmra.mxu0 %v207
  %v246 = vpop.f32.mrf.mxu0
  %v247 = vadd.f32 %v159, %v246
  %v248 = vpop.f32.mrf.mxu0
  %v249 = vadd.f32 %v163, %v248
  %v250 = vpop.f32.mrf.mxu0
  %v251 = vadd.f32 %v159, %v250
  %v252 = vpop.f32.mrf.mxu0
  %v253 = vadd.f32 %v163, %v252
  %254 = vmatprep.mubr.bf16.mxu0 0
  %255 = vmatmul.mubr.bf16.gmra.mxu0 %v210
  %v256 = vpop.f32.mrf.mxu0
  %v257 = vadd.f32 %v159, %v256
  %v258 = vpop.f32.mrf.mxu0
  %v259 = vadd.f32 %v163, %v258
  %v260 = vpop.f32.mrf.mxu0
  %v261 = vadd.f32 %v159, %v260
  %v262 = vpop.f32.mrf.mxu0
  %v263 = vadd.f32 %v163, %v262
  %264 = vdwg.mxu0
  %v265 = vxor.u32 %v247, 2147483648
  %v266 = vxor.u32 %v249, 2147483648
  %v267 = vxor.u32 %v251, 2147483648
  %v268 = vxor.u32 %v253, 2147483648
  %v269 = vxor.u32 %v257, 2147483648
  %v270 = vxor.u32 %v259, 2147483648
  %v271 = vxor.u32 %v261, 2147483648
  %v272 = vxor.u32 %v263, 2147483648
  %v273 = vmul.f32 %v265, 1.442695
  %v274 = vpow.pop %v273
  %v275 = vmul.f32 %v266, 1.442695
  %v276 = vpow.pop %v275
  %v277 = vmul.f32 %v267, 1.442695
  %v278 = vpow.pop %v277
  %v279 = vmul.f32 %v268, 1.442695
  %v280 = vpow.pop %v279
  %v281 = vmul.f32 %v269, 1.442695
  %v282 = vpow.pop %v281
  %v283 = vmul.f32 %v270, 1.442695
  %v284 = vpow.pop %v283
  %v285 = vmul.f32 %v271, 1.442695
  %v286 = vpow.pop %v285
  %v287 = vmul.f32 %v272, 1.442695
  %v288 = vpow.pop %v287
  %v289 = vadd.f32 %v274, 1.0
  %v290 = vadd.f32 %v276, 1.0
  %v291 = vadd.f32 %v278, 1.0
  %v292 = vadd.f32 %v280, 1.0
  %v293 = vadd.f32 %v282, 1.0
  %v294 = vadd.f32 %v284, 1.0
  %v295 = vadd.f32 %v286, 1.0
  %v296 = vadd.f32 %v288, 1.0
  %v297 = vrcp.pop %v289
  %v298 = vmul.f32 1.0, %v297
  %v299 = vrcp.pop %v290
  %v300 = vmul.f32 1.0, %v299
  %v301 = vrcp.pop %v291
  %v302 = vmul.f32 1.0, %v301
  %v303 = vrcp.pop %v292
  %v304 = vmul.f32 1.0, %v303
  %v305 = vrcp.pop %v293
  %v306 = vmul.f32 1.0, %v305
  %v307 = vrcp.pop %v294
  %v308 = vmul.f32 1.0, %v307
  %v309 = vrcp.pop %v295
  %v310 = vmul.f32 1.0, %v309
  %v311 = vrcp.pop %v296
  %v312 = vmul.f32 1.0, %v311
  %v313 = vmul.f32 %v247, %v298
  %v314 = vmul.f32 %v249, %v300
  %v315 = vmul.f32 %v251, %v302
  %v316 = vmul.f32 %v253, %v304
  %v317 = vmul.f32 %v257, %v306
  %v318 = vmul.f32 %v259, %v308
  %v319 = vmul.f32 %v261, %v310
  %v320 = vmul.f32 %v263, %v312
  %v321 = vpack.c.bf16 %v315, %v313
  %v322 = vpack.c.bf16 %v316, %v314
  %v323 = vpack.c.bf16 %v319, %v317
  %v324 = vpack.c.bf16 %v320, %v318
  %v325 = vld [vmem:[%s8] sm:$0xf]
  %v326 = vld [vmem:[%s8 + $0x4] sm:$0xf]
  %v327 = vld [vmem:[%s8 + $0x8] sm:$0xf]
  %v328 = vld [vmem:[%s8 + $0xc] sm:$0xf]
  %v329 = vld [vmem:[%s8 + $0x10] sm:$0xf]
  %v330 = vld [vmem:[%s8 + $0x14] sm:$0xf]
  %v331 = vld [vmem:[%s8 + $0x18] sm:$0xf]
  %v332 = vld [vmem:[%s8 + $0x1c] sm:$0xf]
  %v333 = vld [vmem:[%s8 + $0x20] sm:$0xf]
  %v334 = vld [vmem:[%s8 + $0x24] sm:$0xf]
  %v335 = vld [vmem:[%s8 + $0x28] sm:$0xf]
  %v336 = vld [vmem:[%s8 + $0x2c] sm:$0xf]
  %v337 = vld [vmem:[%s8 + $0x30] sm:$0xf]
  %v338 = vld [vmem:[%s8 + $0x34] sm:$0xf]
  %v339 = vld [vmem:[%s8 + $0x38] sm:$0xf]
  %v340 = vld [vmem:[%s8 + $0x3c] sm:$0xf]
  %v341 = vld [vmem:[%s8 + $0x40] sm:$0xf]
  %v342 = vld [vmem:[%s8 + $0x44] sm:$0xf]
  %v343 = vld [vmem:[%s8 + $0x48] sm:$0xf]
  %v344 = vld [vmem:[%s8 + $0x4c] sm:$0xf]
  %v345 = vld [vmem:[%s8 + $0x50] sm:$0xf]
  %v346 = vld [vmem:[%s8 + $0x54] sm:$0xf]
  %v347 = vld [vmem:[%s8 + $0x58] sm:$0xf]
  %v348 = vld [vmem:[%s8 + $0x5c] sm:$0xf]
  %v349 = vld [vmem:[%s8 + $0x60] sm:$0xf]
  %v350 = vld [vmem:[%s8 + $0x64] sm:$0xf]
  %v351 = vld [vmem:[%s8 + $0x68] sm:$0xf]
  %v352 = vld [vmem:[%s8 + $0x6c] sm:$0xf]
  %v353 = vld [vmem:[%s8 + $0x70] sm:$0xf]
  %v354 = vld [vmem:[%s8 + $0x74] sm:$0xf]
  %v355 = vld [vmem:[%s8 + $0x78] sm:$0xf]
  %v356 = vld [vmem:[%s8 + $0x7c] sm:$0xf]
  %v357 = vld [vmem:[%s9] sm:$0x1]
  %v359 = vlaneseq
  %v360 = vshrl.u32 %v359, 7
  %v361 = vsub.s32 0, %v360
  %v362 = vrot.slane %v357, %v361
  %v396 = vunpack.c.l.b16 %v325
  %v397 = vunpack.c.l.b16 %v326
  %v398 = vunpack.c.l.b16 %v327
  %v399 = vunpack.c.l.b16 %v328
  %v400 = vunpack.c.l.b16 %v329
  %v401 = vunpack.c.l.b16 %v330
  %v402 = vunpack.c.l.b16 %v331
  %v403 = vunpack.c.l.b16 %v332
  %v404 = vunpack.c.l.b16 %v333
  %v405 = vunpack.c.l.b16 %v334
  %v406 = vunpack.c.l.b16 %v335
  %v407 = vunpack.c.l.b16 %v336
  %v408 = vunpack.c.l.b16 %v337
  %v409 = vunpack.c.l.b16 %v338
  %v410 = vunpack.c.l.b16 %v339
  %v411 = vunpack.c.l.b16 %v340
  %v412 = vunpack.c.l.b16 %v341
  %v413 = vunpack.c.l.b16 %v342
  %v414 = vunpack.c.l.b16 %v343
  %v415 = vunpack.c.l.b16 %v344
  %v416 = vunpack.c.l.b16 %v345
  %v417 = vunpack.c.l.b16 %v346
  %v418 = vunpack.c.l.b16 %v347
  %v419 = vunpack.c.l.b16 %v348
  %v420 = vunpack.c.l.b16 %v349
  %v421 = vunpack.c.l.b16 %v350
  %v422 = vunpack.c.l.b16 %v351
  %v423 = vunpack.c.l.b16 %v352
  %v424 = vunpack.c.l.b16 %v353
  %v425 = vunpack.c.l.b16 %v354
  %v426 = vunpack.c.l.b16 %v355
  %v427 = vunpack.c.l.b16 %v356
  %v428 = vpack.c.b16 %v397, %v396
  %v429 = vpack.c.b16 %v399, %v398
  %v430 = vpack.c.b16 %v401, %v400
  %v431 = vpack.c.b16 %v403, %v402
  %v432 = vpack.c.b16 %v405, %v404
  %v433 = vpack.c.b16 %v407, %v406
  %v434 = vpack.c.b16 %v409, %v408
  %v435 = vpack.c.b16 %v411, %v410
  %v436 = vpack.c.b16 %v413, %v412
  %v437 = vpack.c.b16 %v415, %v414
  %v438 = vpack.c.b16 %v417, %v416
  %v439 = vpack.c.b16 %v419, %v418
  %v440 = vpack.c.b16 %v421, %v420
  %v441 = vpack.c.b16 %v423, %v422
  %v442 = vpack.c.b16 %v425, %v424
  %v443 = vpack.c.b16 %v427, %v426
  %460 = vmatprep.subr.bf16.mxu0 0
  %461 = vmatpush1.bf16.msra.mxu0 %v435
  %462 = vmatprep.subr.bf16.mxu0 0
  %463 = vmatpush1.bf16.msra.mxu0 %v434
  %464 = vmatprep.subr.bf16.mxu0 0
  %465 = vmatpush1.bf16.msra.mxu0 %v433
  %466 = vmatprep.subr.bf16.mxu0 0
  %467 = vmatpush1.bf16.msra.mxu0 %v432
  %468 = vmatprep.subr.bf16.mxu0 0
  %469 = vmatpush1.bf16.msra.mxu0 %v431
  %470 = vmatprep.subr.bf16.mxu0 0
  %471 = vmatpush1.bf16.msra.mxu0 %v430
  %472 = vmatprep.subr.bf16.mxu0 0
  %473 = vmatpush1.bf16.msra.mxu0 %v429
  %474 = vmatprep.subr.bf16.mxu0 0
  %475 = vmatpush1.bf16.msra.mxu0 %v428
  %476 = vmatprep.subr.bf16.mxu0 0
  %477 = vmatpush2.bf16.msra.mxu0 %v443
  %478 = vmatprep.subr.bf16.mxu0 0
  %479 = vmatpush2.bf16.msra.mxu0 %v442
  %480 = vmatprep.subr.bf16.mxu0 0
  %481 = vmatpush2.bf16.msra.mxu0 %v441
  %482 = vmatprep.subr.bf16.mxu0 0
  %483 = vmatpush2.bf16.msra.mxu0 %v440
  %484 = vmatprep.subr.bf16.mxu0 0
  %485 = vmatpush2.bf16.msra.mxu0 %v439
  %486 = vmatprep.subr.bf16.mxu0 0
  %487 = vmatpush2.bf16.msra.mxu0 %v438
  %488 = vmatprep.subr.bf16.mxu0 0
  %489 = vmatpush2.bf16.msra.mxu0 %v437
  %490 = vmatprep.subr.bf16.mxu0 0
  %491 = vmatpush2.bf16.msra.mxu0 %v436
  %492 = vmatprep.mubr.bf16.mxu0 %v322
  %493 = vmatmul.mubr.bf16.gmra.mxu0 %v321
  %v494 = vpop.f32.mrf.mxu0
  %v495 = vadd.f32 %v362, %v494
  %v496 = vpop.f32.mrf.mxu0
  %v497 = vpop.f32.mrf.mxu0
  %v498 = vadd.f32 %v362, %v497
  %v499 = vpop.f32.mrf.mxu0
  %500 = vmatprep.mubr.bf16.mxu0 %v324
  %501 = vmatmul.mubr.bf16.gmra.mxu0 %v323
  %v502 = vpop.f32.mrf.mxu0
  %v503 = vadd.f32 %v362, %v502
  %v504 = vpop.f32.mrf.mxu0
  %v505 = vpop.f32.mrf.mxu0
  %v506 = vadd.f32 %v362, %v505
  %v507 = vpop.f32.mrf.mxu0
  %508 = vdwg.mxu0
  %v509 = vadd.f32 %v118, %v495
  %v510 = vadd.f32 %v119, %v498
  %v511 = vadd.f32 %v120, %v503
  %v512 = vadd.f32 %v121, %v506
  %v513 = vsel %vm46, %v509, 0.0
  %514 = vadd.xlane.f32.xlu0 %v513
  %v515 = vpop.xlane.xlu0 %514
  %v516 = vsel %vm46, %v510, 0.0
  %517 = vadd.xlane.f32.xlu0 %v516
  %v518 = vpop.xlane.xlu0 %517
  %v519 = vsel %vm46, %v511, 0.0
  %520 = vadd.xlane.f32.xlu0 %v519
  %v521 = vpop.xlane.xlu0 %520
  %v522 = vsel %vm46, %v512, 0.0
  %523 = vadd.xlane.f32.xlu0 %v522
  %v524 = vpop.xlane.xlu0 %523
  %v525 = vmul.f32 %v515, %v59
  %v526 = vmul.f32 %v518, %v59
  %v527 = vmul.f32 %v521, %v59
  %v528 = vmul.f32 %v524, %v59
  %v529 = vsub.f32 %v509, %v525
  %v530 = vsub.f32 %v510, %v526
  %v531 = vsub.f32 %v511, %v527
  %v532 = vsub.f32 %v512, %v528
  %v533 = vmul.f32 %v529, %v529
  %v534 = vmul.f32 %v530, %v530
  %v535 = vmul.f32 %v531, %v531
  %v536 = vmul.f32 %v532, %v532
  %v537 = vsel %vm46, %v533, 0.0
  %538 = vadd.xlane.f32.xlu0 %v537
  %v539 = vpop.xlane.xlu0 %538
  %v540 = vsel %vm46, %v534, 0.0
  %541 = vadd.xlane.f32.xlu0 %v540
  %v542 = vpop.xlane.xlu0 %541
  %v543 = vsel %vm46, %v535, 0.0
  %544 = vadd.xlane.f32.xlu0 %v543
  %v545 = vpop.xlane.xlu0 %544
  %v546 = vsel %vm46, %v536, 0.0
  %547 = vadd.xlane.f32.xlu0 %v546
  %v548 = vpop.xlane.xlu0 %547
  %v549 = vmul.f32 %v539, %v59
  %v550 = vmul.f32 %v542, %v59
  %v551 = vmul.f32 %v545, %v59
  %v552 = vmul.f32 %v548, %v59
  %v553 = vadd.f32 %v549, 1e-05
  %v554 = vadd.f32 %v550, 1e-05
  %v555 = vadd.f32 %v551, 1e-05
  %v556 = vadd.f32 %v552, 1e-05
  %v557 = vrsqrt.pop %v553
  %v558 = vrsqrt.pop %v554
  %v559 = vrsqrt.pop %v555
  %v560 = vrsqrt.pop %v556
  %v561 = vmul.f32 %v529, %v557
  %v562 = vmul.f32 %v530, %v558
  %v563 = vmul.f32 %v531, %v559
  %v564 = vmul.f32 %v532, %v560
  %v565 = vld [vmem:[%s10] sm:$0x1]
  %v567 = vlaneseq
  %v568 = vshrl.u32 %v567, 7
  %v569 = vsub.s32 0, %v568
  %v570 = vrot.slane %v565, %v569
  %v572 = vmul.f32 %v561, %v570
  %v573 = vmul.f32 %v562, %v570
  %v574 = vmul.f32 %v563, %v570
  %v575 = vmul.f32 %v564, %v570
  %v576 = vld [vmem:[%s11] sm:$0x1]
  %v578 = vlaneseq
  %v579 = vshrl.u32 %v578, 7
  %v580 = vsub.s32 0, %v579
  %v581 = vrot.slane %v576, %v580
  %v583 = vadd.f32 %v572, %v581
  %v584 = vadd.f32 %v573, %v581
  %v585 = vadd.f32 %v574, %v581
  %v586 = vadd.f32 %v575, %v581
  %v587 = vld [vmem:[%s1] sm:$0xff]
  %v588 = vld [vmem:[%s1 + $0x8] sm:$0xff]
  %v589 = vld [vmem:[%s1 + $0x10] sm:$0xff]
  %v590 = vld [vmem:[%s1 + $0x18] sm:$0xff]
  %vm591 = vcmp.gt.f32.partialorder %v587, 0.5
  %vm592 = vcmp.gt.f32.partialorder %v588, 0.5
  %vm593 = vcmp.gt.f32.partialorder %v589, 0.5
  %vm594 = vcmp.gt.f32.partialorder %v590, 0.5
  %v595 = vsel %vm591, 1, 0
  %v596 = vsel %vm592, 1, 0
  %v597 = vsel %vm593, 1, 0
  %v598 = vsel %vm594, 1, 0
  %599 = vset.pattern.permute.xlu0 0
  %600 = vperm.xlu0 %599, %v595
  %v601 = vpop.permute.xlu0 %600
  %602 = vset.pattern.permute.xlu0 0
  %603 = vperm.xlu0 %602, %v596
  %v604 = vpop.permute.xlu0 %603
  %605 = vset.pattern.permute.xlu0 0
  %606 = vperm.xlu0 %605, %v597
  %v607 = vpop.permute.xlu0 %606
  %608 = vset.pattern.permute.xlu0 0
  %609 = vperm.xlu0 %608, %v598
  %v610 = vpop.permute.xlu0 %609
  %vm611 = vcmp.eq.s32.totalorder %v601, 1
  %vm612 = vcmp.eq.s32.totalorder %v604, 1
  %vm613 = vcmp.eq.s32.totalorder %v607, 1
  %vm614 = vcmp.eq.s32.totalorder %v610, 1
  %v615 = vsel %vm611, %v583, %v42
  %v616 = vsel %vm612, %v584, %v43
  %v617 = vsel %vm613, %v585, %v44
  %v618 = vsel %vm614, %v586, %v45
  %619 = vst.msk [vmem:[%s12] sm:$0xff] %vm46, %v615
  %620 = vst.msk [vmem:[%s12 + $0x8] sm:$0xff] %vm46, %v616
  %621 = vst.msk [vmem:[%s12 + $0x10] sm:$0xff] %vm46, %v617
  %622 = vst.msk [vmem:[%s12 + $0x18] sm:$0xff] %vm46, %v618
  // Predicated region
  $region50: #{block_forward.10} parent=0 // pred_check
    _
  $region51: #{block_forward.10} parent=0 // pred_check_branch
    %624 = sbr.rel (0) target = $region53
  $region52: #{block_forward.10} parent=0 // pred_region
    _
  $region53: #{block_forward.10} parent=0 // pred_fallthru
    _
  // Predicated region
  $region54: #{block_forward.10} parent=0 // pred_check
    _
  $region55: #{block_forward.10} parent=0 // pred_check_branch
    %626 = sbr.rel (0) target = $region57
  $region56: #{block_forward.10} parent=0 // pred_region
    _
  $region57: #{block_forward.10} parent=0 // pred_fallthru
    _

// kernel: block_forward.12
$region0: #{block_forward.12}
  #allocation0 [shape = 'u32[]', space=smem, size = 0x4, offset = 0x4, fixed_abs, tag = 'smem constant byte address 0x4 - core index']
  #allocation1 [shape = 'u32[144,128]{1,0:T(1,128)}', space=vmem, size = 0x12000, scoped, tag = 'internal scratch']
  %s0 = inlined_call_operand.vmem [shape: f32[32,64], index: 0, kind: input, shape index: {}]
  %s1 = inlined_call_operand.vmem [shape: f32[32,64], index: 1, kind: input, shape index: {}]
  %s2 = inlined_call_operand.vmem [shape: f32[32,1], index: 2, kind: input, shape index: {}]
  %s3 = inlined_call_operand.vmem [shape: f32[1,64], index: 3, kind: input, shape index: {}]
  %s4 = inlined_call_operand.vmem [shape: f32[1,64], index: 4, kind: input, shape index: {}]
  %s5 = inlined_call_operand.vmem [shape: f32[1,64], index: 5, kind: input, shape index: {}]
  %s6 = inlined_call_operand.vmem [shape: f32[1,64], index: 6, kind: input, shape index: {}]
  %s7 = inlined_call_operand.vmem [shape: bf16[64,64], index: 7, kind: input, shape index: {}]
  %s8 = inlined_call_operand.vmem [shape: f32[1,64], index: 8, kind: input, shape index: {}]
  %s9 = inlined_call_operand.vmem [shape: f32[32,64], index: 9, kind: output, shape index: {}]
  %s10 = sld [smem:[#allocation0]]
  $region46: #{block_forward.12} parent=0
    _
  %s12 = ssub.s32 1, %s10
  %s13 = scalar_select 0, %s12, %s10
  // Predicated region
  $region2: #{block_forward.12} parent=0 // pred_check
    _
  $region3: #{block_forward.12} parent=0 // pred_check_branch
    %15 = sbr.rel (0) target = $region5
  $region4: #{block_forward.12} parent=0 // pred_region
    _
  $region5: #{block_forward.12} parent=0 // pred_fallthru
    _
  // Predicated region
  $region6: #{block_forward.12} parent=0 // pred_check
    _
  $region7: #{block_forward.12} parent=0 // pred_check_branch
    %17 = sbr.rel (0) target = $region9
  $region8: #{block_forward.12} parent=0 // pred_region
    _
  $region9: #{block_forward.12} parent=0 // pred_fallthru
    _
  // Predicated region
  $region10: #{block_forward.12} parent=0 // pred_check
    _
  $region11: #{block_forward.12} parent=0 // pred_check_branch
    %19 = sbr.rel (0) target = $region13
  $region12: #{block_forward.12} parent=0 // pred_region
    _
  $region13: #{block_forward.12} parent=0 // pred_fallthru
    _
  // Predicated region
  $region14: #{block_forward.12} parent=0 // pred_check
    _
  $region15: #{block_forward.12} parent=0 // pred_check_branch
    %21 = sbr.rel (0) target = $region17
  $region16: #{block_forward.12} parent=0 // pred_region
    _
  $region17: #{block_forward.12} parent=0 // pred_fallthru
    _
  // Predicated region
  $region18: #{block_forward.12} parent=0 // pred_check
    _
  $region19: #{block_forward.12} parent=0 // pred_check_branch
    %23 = sbr.rel (0) target = $region21
  $region20: #{block_forward.12} parent=0 // pred_region
    _
  $region21: #{block_forward.12} parent=0 // pred_fallthru
    _
  // Predicated region
  $region22: #{block_forward.12} parent=0 // pred_check
    _
  $region23: #{block_forward.12} parent=0 // pred_check_branch
    %25 = sbr.rel (0) target = $region25
  $region24: #{block_forward.12} parent=0 // pred_region
    _
  $region25: #{block_forward.12} parent=0 // pred_fallthru
    _
  // Predicated region
  $region26: #{block_forward.12} parent=0 // pred_check
    _
  $region27: #{block_forward.12} parent=0 // pred_check_branch
    %27 = sbr.rel (0) target = $region29
  $region28: #{block_forward.12} parent=0 // pred_region
    _
  $region29: #{block_forward.12} parent=0 // pred_fallthru
    _
  // Predicated region
  $region30: #{block_forward.12} parent=0 // pred_check
    _
  $region31: #{block_forward.12} parent=0 // pred_check_branch
    %29 = sbr.rel (0) target = $region33
  $region32: #{block_forward.12} parent=0 // pred_region
    _
  $region33: #{block_forward.12} parent=0 // pred_fallthru
    _
  // Predicated region
  $region34: #{block_forward.12} parent=0 // pred_check
    _
  $region35: #{block_forward.12} parent=0 // pred_check_branch
    %31 = sbr.rel (0) target = $region37
  $region36: #{block_forward.12} parent=0 // pred_region
    _
  $region37: #{block_forward.12} parent=0 // pred_fallthru
    _
  %v33 = vld [vmem:[%s4] sm:$0x1]
  %v34 = vadd.f32 %v33, 1e-05
  %v35 = vrsqrt.pop %v34
  %v36 = vld [vmem:[%s1] sm:$0xff]
  %v37 = vld [vmem:[%s1 + $0x8] sm:$0xff]
  %v38 = vld [vmem:[%s1 + $0x10] sm:$0xff]
  %v39 = vld [vmem:[%s1 + $0x18] sm:$0xff]
  %v40 = vld [vmem:[%s3] sm:$0x1]
  %v42 = vlaneseq
  %v43 = vshrl.u32 %v42, 7
  %v44 = vsub.s32 0, %v43
  %v45 = vrot.slane %v40, %v44
  %v47 = vsub.f32 %v36, %v45
  %v48 = vsub.f32 %v37, %v45
  %v49 = vsub.f32 %v38, %v45
  %v50 = vsub.f32 %v39, %v45
  %v52 = vlaneseq
  %v53 = vshrl.u32 %v52, 7
  %v54 = vsub.s32 0, %v53
  %v55 = vrot.slane %v35, %v54
  %v57 = vmul.f32 %v47, %v55
  %v58 = vmul.f32 %v48, %v55
  %v59 = vmul.f32 %v49, %v55
  %v60 = vmul.f32 %v50, %v55
  %v61 = vld [vmem:[%s5] sm:$0x1]
  %v63 = vlaneseq
  %v64 = vshrl.u32 %v63, 7
  %v65 = vsub.s32 0, %v64
  %v66 = vrot.slane %v61, %v65
  %v68 = vmul.f32 %v57, %v66
  %v69 = vmul.f32 %v58, %v66
  %v70 = vmul.f32 %v59, %v66
  %v71 = vmul.f32 %v60, %v66
  %v72 = vld [vmem:[%s6] sm:$0x1]
  %v74 = vlaneseq
  %v75 = vshrl.u32 %v74, 7
  %v76 = vsub.s32 0, %v75
  %v77 = vrot.slane %v72, %v76
  %v79 = vadd.f32 %v68, %v77
  %v80 = vadd.f32 %v69, %v77
  %v81 = vadd.f32 %v70, %v77
  %v82 = vadd.f32 %v71, %v77
  %v83 = vxor.u32 %v79, 2147483648
  %v84 = vxor.u32 %v80, 2147483648
  %v85 = vxor.u32 %v81, 2147483648
  %v86 = vxor.u32 %v82, 2147483648
  %v87 = vmul.f32 %v83, 1.442695
  %v88 = vpow.pop %v87
  %v89 = vmul.f32 %v84, 1.442695
  %v90 = vpow.pop %v89
  %v91 = vmul.f32 %v85, 1.442695
  %v92 = vpow.pop %v91
  %v93 = vmul.f32 %v86, 1.442695
  %v94 = vpow.pop %v93
  %v95 = vadd.f32 %v88, 1.0
  %v96 = vadd.f32 %v90, 1.0
  %v97 = vadd.f32 %v92, 1.0
  %v98 = vadd.f32 %v94, 1.0
  %v99 = vrcp.pop %v95
  %v100 = vmul.f32 1.0, %v99
  %v101 = vrcp.pop %v96
  %v102 = vmul.f32 1.0, %v101
  %v103 = vrcp.pop %v97
  %v104 = vmul.f32 1.0, %v103
  %v105 = vrcp.pop %v98
  %v106 = vmul.f32 1.0, %v105
  %v107 = vmul.f32 %v79, %v100
  %v108 = vmul.f32 %v80, %v102
  %v109 = vmul.f32 %v81, %v104
  %v110 = vmul.f32 %v82, %v106
  %v111 = vpack.c.bf16 %v108, %v107
  %v112 = vpack.c.bf16 %v110, %v109
  %v113 = vld [vmem:[%s7] sm:$0xf]
  %v114 = vld [vmem:[%s7 + $0x4] sm:$0xf]
  %v115 = vld [vmem:[%s7 + $0x8] sm:$0xf]
  %v116 = vld [vmem:[%s7 + $0xc] sm:$0xf]
  %v117 = vld [vmem:[%s7 + $0x10] sm:$0xf]
  %v118 = vld [vmem:[%s7 + $0x14] sm:$0xf]
  %v119 = vld [vmem:[%s7 + $0x18] sm:$0xf]
  %v120 = vld [vmem:[%s7 + $0x1c] sm:$0xf]
  %v121 = vld [vmem:[%s8] sm:$0x1]
  %v123 = vlaneseq
  %v124 = vshrl.u32 %v123, 7
  %v125 = vsub.s32 0, %v124
  %v126 = vrot.slane %v121, %v125
  %v136 = vunpack.c.l.b16 %v113
  %v137 = vunpack.c.l.b16 %v114
  %v138 = vunpack.c.l.b16 %v115
  %v139 = vunpack.c.l.b16 %v116
  %v140 = vunpack.c.l.b16 %v117
  %v141 = vunpack.c.l.b16 %v118
  %v142 = vunpack.c.l.b16 %v119
  %v143 = vunpack.c.l.b16 %v120
  %v144 = vpack.c.b16 %v137, %v136
  %v145 = vpack.c.b16 %v139, %v138
  %v146 = vpack.c.b16 %v141, %v140
  %v147 = vpack.c.b16 %v143, %v142
  %vm152 = vcmask 523264
  %v154 = vsel %vm152, %v111, 0
  %v157 = vsel %vm152, %v112, 0
  %159 = vmatprep.subr.bf16.mxu0 0
  %160 = vmatpush1.bf16.msra.mxu0 0
  %161 = vmatprep.subr.bf16.mxu0 0
  %162 = vmatpush1.bf16.msra.mxu0 0
  %163 = vmatprep.subr.bf16.mxu0 0
  %164 = vmatpush1.bf16.msra.mxu0 0
  %165 = vmatprep.subr.bf16.mxu0 0
  %166 = vmatpush1.bf16.msra.mxu0 0
  %167 = vmatprep.subr.bf16.mxu0 0
  %168 = vmatpush1.bf16.msra.mxu0 %v147
  %169 = vmatprep.subr.bf16.mxu0 0
  %170 = vmatpush1.bf16.msra.mxu0 %v146
  %171 = vmatprep.subr.bf16.mxu0 0
  %172 = vmatpush1.bf16.msra.mxu0 %v145
  %173 = vmatprep.subr.bf16.mxu0 0
  %174 = vmatpush1.bf16.msra.mxu0 %v144
  %175 = vmatprep.subr.bf16.mxu0 0
  %176 = vmatpush2.bf16.msra.mxu0 0
  %177 = vmatprep.subr.bf16.mxu0 0
  %178 = vmatpush2.bf16.msra.mxu0 0
  %179 = vmatprep.subr.bf16.mxu0 0
  %180 = vmatpush2.bf16.msra.mxu0 0
  %181 = vmatprep.subr.bf16.mxu0 0
  %182 = vmatpush2.bf16.msra.mxu0 0
  %183 = vmatprep.subr.bf16.mxu0 0
  %184 = vmatpush2.bf16.msra.mxu0 0
  %185 = vmatprep.subr.bf16.mxu0 0
  %186 = vmatpush2.bf16.msra.mxu0 0
  %187 = vmatprep.subr.bf16.mxu0 0
  %188 = vmatpush2.bf16.msra.mxu0 0
  %189 = vmatprep.subr.bf16.mxu0 0
  %190 = vmatpush2.bf16.msra.mxu0 0
  %191 = vmatprep.mubr.bf16.mxu0 0
  %192 = vmatmul.mubr.bf16.gmra.mxu0 %v154
  %v193 = vpop.f32.mrf.mxu0
  %v194 = vadd.f32 %v126, %v193
  %v195 = vpop.f32.mrf.mxu0
  %v196 = vpop.f32.mrf.mxu0
  %v197 = vadd.f32 %v126, %v196
  %v198 = vpop.f32.mrf.mxu0
  %199 = vmatprep.mubr.bf16.mxu0 0
  %200 = vmatmul.mubr.bf16.gmra.mxu0 %v157
  %v201 = vpop.f32.mrf.mxu0
  %v202 = vadd.f32 %v126, %v201
  %v203 = vpop.f32.mrf.mxu0
  %v204 = vpop.f32.mrf.mxu0
  %v205 = vadd.f32 %v126, %v204
  %v206 = vpop.f32.mrf.mxu0
  %207 = vdwg.mxu0
  %v208 = vld [vmem:[%s0] sm:$0xff]
  %v209 = vld [vmem:[%s0 + $0x8] sm:$0xff]
  %v210 = vld [vmem:[%s0 + $0x10] sm:$0xff]
  %v211 = vld [vmem:[%s0 + $0x18] sm:$0xff]
  %v212 = vld [vmem:[%s2] sm:$0xff]
  %v213 = vld [vmem:[%s2 + $0x8] sm:$0xff]
  %v214 = vld [vmem:[%s2 + $0x10] sm:$0xff]
  %v215 = vld [vmem:[%s2 + $0x18] sm:$0xff]
  %217 = vset.pattern.permute.xlu0 0
  %218 = vperm.xlu0 %217, %v212
  %v219 = vpop.permute.xlu0 %218
  %222 = vset.pattern.permute.xlu0 0
  %223 = vperm.xlu0 %222, %v213
  %v224 = vpop.permute.xlu0 %223
  %227 = vset.pattern.permute.xlu0 0
  %228 = vperm.xlu0 %227, %v214
  %v229 = vpop.permute.xlu0 %228
  %232 = vset.pattern.permute.xlu0 0
  %233 = vperm.xlu0 %232, %v215
  %v234 = vpop.permute.xlu0 %233
  %v236 = vmul.f32 %v194, %v219
  %v237 = vmul.f32 %v197, %v224
  %v238 = vmul.f32 %v202, %v229
  %v239 = vmul.f32 %v205, %v234
  %v240 = vadd.f32 %v208, %v236
  %v241 = vadd.f32 %v209, %v237
  %v242 = vadd.f32 %v210, %v238
  %v243 = vadd.f32 %v211, %v239
  %244 = vst.msk [vmem:[%s9] sm:$0xff] %vm152, %v240
  %245 = vst.msk [vmem:[%s9 + $0x8] sm:$0xff] %vm152, %v241
  %246 = vst.msk [vmem:[%s9 + $0x10] sm:$0xff] %vm152, %v242
  %247 = vst.msk [vmem:[%s9 + $0x18] sm:$0xff] %vm152, %v243
  // Predicated region
  $region38: #{block_forward.12} parent=0 // pred_check
    _
  $region39: #{block_forward.12} parent=0 // pred_check_branch
    %249 = sbr.rel (0) target = $region41
  $region40: #{block_forward.12} parent=0 // pred_region
    _
  $region41: #{block_forward.12} parent=0 // pred_fallthru
    _
  // Predicated region
  $region42: #{block_forward.12} parent=0 // pred_check
    _
  $region43: #{block_forward.12} parent=0 // pred_check_branch
    %251 = sbr.rel (0) target = $region45
  $region44: #{block_forward.12} parent=0 // pred_region
    _
  $region45: #{block_forward.12} parent=0 // pred_fallthru
    _

// kernel: block_forward.13
$region0: #{block_forward.13}
  #allocation0 [shape = 'u32[]', space=smem, size = 0x4, offset = 0x4, fixed_abs, tag = 'smem constant byte address 0x4 - core index']
  #allocation1 [shape = 'u32[144,128]{1,0:T(1,128)}', space=vmem, size = 0x12000, scoped, tag = 'internal scratch']
  %s0 = inlined_call_operand.vmem [shape: f32[32,64], index: 0, kind: input, shape index: {}]
  %s1 = inlined_call_operand.vmem [shape: f32[32,1], index: 1, kind: input, shape index: {}]
  %s2 = inlined_call_operand.vmem [shape: f32[1,64], index: 2, kind: input, shape index: {}]
  %s3 = inlined_call_operand.vmem [shape: f32[1,64], index: 3, kind: input, shape index: {}]
  %s4 = inlined_call_operand.vmem [shape: f32[1,64], index: 4, kind: input, shape index: {}]
  %s5 = inlined_call_operand.vmem [shape: f32[1,64], index: 5, kind: input, shape index: {}]
  %s6 = inlined_call_operand.vmem [shape: bf16[64,256], index: 6, kind: input, shape index: {}]
  %s7 = inlined_call_operand.vmem [shape: f32[1,256], index: 7, kind: input, shape index: {}]
  %s8 = inlined_call_operand.vmem [shape: bf16[256,64], index: 8, kind: input, shape index: {}]
  %s9 = inlined_call_operand.vmem [shape: f32[1,64], index: 9, kind: input, shape index: {}]
  %s10 = inlined_call_operand.vmem [shape: f32[1,64], index: 10, kind: input, shape index: {}]
  %s11 = inlined_call_operand.vmem [shape: f32[1,64], index: 11, kind: input, shape index: {}]
  %s12 = inlined_call_operand.hbm [shape: f32[32,64], index: 12, kind: output, shape index: {}]
  %s13 = sld [smem:[#allocation0]]
  $region58: #{block_forward.13} parent=0
    _
  %s15 = ssub.s32 1, %s13
  %s16 = scalar_select 0, %s15, %s13
  $region1: #{block_forward.13} parent=0
    #allocation2 [shape = 'u8[16384]{0}', space=vmem, size = 0x4000, scoped, tag = 'output window, operand 0, single buffered']
    #allocation3 [shape = 's32[1]{0}', space=sflag, size = 0x4, scoped, tag = 'scoped memory for block_forward.13']
    %17 = vsyncpa [#allocation3], 0
    // Predicated region
    $region2: #{block_forward.13} parent=1 // pred_check
      _
    $region3: #{block_forward.13} parent=1 // pred_check_branch
      %19 = sbr.rel (0) target = $region5
    $region4: #{block_forward.13} parent=1 // pred_region
      _
    $region5: #{block_forward.13} parent=1 // pred_fallthru
      _
    // Predicated region
    $region6: #{block_forward.13} parent=1 // pred_check
      _
    $region7: #{block_forward.13} parent=1 // pred_check_branch
      %21 = sbr.rel (0) target = $region9
    $region8: #{block_forward.13} parent=1 // pred_region
      _
    $region9: #{block_forward.13} parent=1 // pred_fallthru
      _
    // Predicated region
    $region10: #{block_forward.13} parent=1 // pred_check
      _
    $region11: #{block_forward.13} parent=1 // pred_check_branch
      %23 = sbr.rel (0) target = $region13
    $region12: #{block_forward.13} parent=1 // pred_region
      _
    $region13: #{block_forward.13} parent=1 // pred_fallthru
      _
    // Predicated region
    $region14: #{block_forward.13} parent=1 // pred_check
      _
    $region15: #{block_forward.13} parent=1 // pred_check_branch
      %25 = sbr.rel (0) target = $region17
    $region16: #{block_forward.13} parent=1 // pred_region
      _
    $region17: #{block_forward.13} parent=1 // pred_fallthru
      _
    // Predicated region
    $region18: #{block_forward.13} parent=1 // pred_check
      _
    $region19: #{block_forward.13} parent=1 // pred_check_branch
      %27 = sbr.rel (0) target = $region21
    $region20: #{block_forward.13} parent=1 // pred_region
      _
    $region21: #{block_forward.13} parent=1 // pred_fallthru
      _
    // Predicated region
    $region22: #{block_forward.13} parent=1 // pred_check
      _
    $region23: #{block_forward.13} parent=1 // pred_check_branch
      %29 = sbr.rel (0) target = $region25
    $region24: #{block_forward.13} parent=1 // pred_region
      _
    $region25: #{block_forward.13} parent=1 // pred_fallthru
      _
    // Predicated region
    $region26: #{block_forward.13} parent=1 // pred_check
      _
    $region27: #{block_forward.13} parent=1 // pred_check_branch
      %31 = sbr.rel (0) target = $region29
    $region28: #{block_forward.13} parent=1 // pred_region
      _
    $region29: #{block_forward.13} parent=1 // pred_fallthru
      _
    // Predicated region
    $region30: #{block_forward.13} parent=1 // pred_check
      _
    $region31: #{block_forward.13} parent=1 // pred_check_branch
      %33 = sbr.rel (0) target = $region33
    $region32: #{block_forward.13} parent=1 // pred_region
      _
    $region33: #{block_forward.13} parent=1 // pred_fallthru
      _
    // Predicated region
    $region34: #{block_forward.13} parent=1 // pred_check
      _
    $region35: #{block_forward.13} parent=1 // pred_check_branch
      %35 = sbr.rel (0) target = $region37
    $region36: #{block_forward.13} parent=1 // pred_region
      _
    $region37: #{block_forward.13} parent=1 // pred_fallthru
      _
    // Predicated region
    $region38: #{block_forward.13} parent=1 // pred_check
      _
    $region39: #{block_forward.13} parent=1 // pred_check_branch
      %37 = sbr.rel (0) target = $region41
    $region40: #{block_forward.13} parent=1 // pred_region
      _
    $region41: #{block_forward.13} parent=1 // pred_fallthru
      _
    // Predicated region
    $region42: #{block_forward.13} parent=1 // pred_check
      _
    $region43: #{block_forward.13} parent=1 // pred_check_branch
      %39 = sbr.rel (0) target = $region45
    $region44: #{block_forward.13} parent=1 // pred_region
      _
    $region45: #{block_forward.13} parent=1 // pred_fallthru
      _
    // Predicated region
    $region46: #{block_forward.13} parent=1 // pred_check
      _
    $region47: #{block_forward.13} parent=1 // pred_check_branch
      %41 = sbr.rel (0) target = $region49
    $region48: #{block_forward.13} parent=1 // pred_region
      _
    $region49: #{block_forward.13} parent=1 // pred_fallthru
      _
    %v43 = vld [vmem:[%s0] sm:$0xff]
    %v44 = vld [vmem:[%s0 + $0x8] sm:$0xff]
    %v45 = vld [vmem:[%s0 + $0x10] sm:$0xff]
    %v46 = vld [vmem:[%s0 + $0x18] sm:$0xff]
    %vm47 = vcmask 523264
    %v48 = vsel %vm47, %v43, 0.0
    %49 = vadd.xlane.f32.xlu0 %v48
    %v50 = vpop.xlane.xlu0 %49
    %v51 = vsel %vm47, %v44, 0.0
    %52 = vadd.xlane.f32.xlu0 %v51
    %v53 = vpop.xlane.xlu0 %52
    %v54 = vsel %vm47, %v45, 0.0
    %55 = vadd.xlane.f32.xlu0 %v54
    %v56 = vpop.xlane.xlu0 %55
    %v57 = vsel %vm47, %v46, 0.0
    %58 = vadd.xlane.f32.xlu0 %v57
    %v59 = vpop.xlane.xlu0 %58
    %v60 = vrcp.pop 64.0
    %v61 = vmul.f32 %v50, %v60
    %v62 = vmul.f32 %v53, %v60
    %v63 = vmul.f32 %v56, %v60
    %v64 = vmul.f32 %v59, %v60
    %v65 = vsub.f32 %v43, %v61
    %v66 = vsub.f32 %v44, %v62
    %v67 = vsub.f32 %v45, %v63
    %v68 = vsub.f32 %v46, %v64
    %v69 = vmul.f32 %v65, %v65
    %v70 = vmul.f32 %v66, %v66
    %v71 = vmul.f32 %v67, %v67
    %v72 = vmul.f32 %v68, %v68
    %v73 = vsel %vm47, %v69, 0.0
    %74 = vadd.xlane.f32.xlu0 %v73
    %v75 = vpop.xlane.xlu0 %74
    %v76 = vsel %vm47, %v70, 0.0
    %77 = vadd.xlane.f32.xlu0 %v76
    %v78 = vpop.xlane.xlu0 %77
    %v79 = vsel %vm47, %v71, 0.0
    %80 = vadd.xlane.f32.xlu0 %v79
    %v81 = vpop.xlane.xlu0 %80
    %v82 = vsel %vm47, %v72, 0.0
    %83 = vadd.xlane.f32.xlu0 %v82
    %v84 = vpop.xlane.xlu0 %83
    %v85 = vmul.f32 %v75, %v60
    %v86 = vmul.f32 %v78, %v60
    %v87 = vmul.f32 %v81, %v60
    %v88 = vmul.f32 %v84, %v60
    %v89 = vadd.f32 %v85, 1e-05
    %v90 = vadd.f32 %v86, 1e-05
    %v91 = vadd.f32 %v87, 1e-05
    %v92 = vadd.f32 %v88, 1e-05
    %v93 = vrsqrt.pop %v89
    %v94 = vrsqrt.pop %v90
    %v95 = vrsqrt.pop %v91
    %v96 = vrsqrt.pop %v92
    %v97 = vmul.f32 %v65, %v93
    %v98 = vmul.f32 %v66, %v94
    %v99 = vmul.f32 %v67, %v95
    %v100 = vmul.f32 %v68, %v96
    %v101 = vld [vmem:[%s2] sm:$0x1]
    %v103 = vlaneseq
    %v104 = vshrl.u32 %v103, 7
    %v105 = vsub.s32 0, %v104
    %v106 = vrot.slane %v101, %v105
    %v108 = vmul.f32 %v97, %v106
    %v109 = vmul.f32 %v98, %v106
    %v110 = vmul.f32 %v99, %v106
    %v111 = vmul.f32 %v100, %v106
    %v112 = vld [vmem:[%s3] sm:$0x1]
    %v114 = vlaneseq
    %v115 = vshrl.u32 %v114, 7
    %v116 = vsub.s32 0, %v115
    %v117 = vrot.slane %v112, %v116
    %v119 = vadd.f32 %v108, %v117
    %v120 = vadd.f32 %v109, %v117
    %v121 = vadd.f32 %v110, %v117
    %v122 = vadd.f32 %v111, %v117
    %v123 = vld [vmem:[%s4] sm:$0x1]
    %v125 = vlaneseq
    %v126 = vshrl.u32 %v125, 7
    %v127 = vsub.s32 0, %v126
    %v128 = vrot.slane %v123, %v127
    %v130 = vmul.f32 %v119, %v128
    %v131 = vmul.f32 %v120, %v128
    %v132 = vmul.f32 %v121, %v128
    %v133 = vmul.f32 %v122, %v128
    %v134 = vld [vmem:[%s5] sm:$0x1]
    %v136 = vlaneseq
    %v137 = vshrl.u32 %v136, 7
    %v138 = vsub.s32 0, %v137
    %v139 = vrot.slane %v134, %v138
    %v141 = vadd.f32 %v130, %v139
    %v142 = vadd.f32 %v131, %v139
    %v143 = vadd.f32 %v132, %v139
    %v144 = vadd.f32 %v133, %v139
    %v145 = vpack.c.bf16 %v142, %v141
    %v146 = vpack.c.bf16 %v144, %v143
    %v147 = vld [vmem:[%s6] sm:$0xff]
    %v148 = vld [vmem:[%s6 + $0x8] sm:$0xff]
    %v149 = vld [vmem:[%s6 + $0x10] sm:$0xff]
    %v150 = vld [vmem:[%s6 + $0x18] sm:$0xff]
    %v151 = vld [vmem:[%s6 + $0x20] sm:$0xff]
    %v152 = vld [vmem:[%s6 + $0x28] sm:$0xff]
    %v153 = vld [vmem:[%s6 + $0x30] sm:$0xff]
    %v154 = vld [vmem:[%s6 + $0x38] sm:$0xff]
    %v155 = vld [vmem:[%s7] sm:$0x3]
    %v157 = vlaneseq
    %v158 = vshrl.u32 %v157, 7
    %v159 = vsub.s32 0, %v158
    %v160 = vrot.slane %v155, %v159
    %v161 = vlaneseq
    %v162 = vshrl.u32 %v161, 7
    %v163 = vsub.s32 1, %v162
    %v164 = vrot.slane %v155, %v163
    %v175 = vunpack.c.l.b16 %v147
    %v176 = vunpack.c.h.b16 %v147
    %v177 = vunpack.c.l.b16 %v148
    %v178 = vunpack.c.h.b16 %v148
    %v179 = vunpack.c.l.b16 %v149
    %v180 = vunpack.c.h.b16 %v149
    %v181 = vunpack.c.l.b16 %v150
    %v182 = vunpack.c.h.b16 %v150
    %v183 = vunpack.c.l.b16 %v151
    %v184 = vunpack.c.h.b16 %v151
    %v185 = vunpack.c.l.b16 %v152
    %v186 = vunpack.c.h.b16 %v152
    %v187 = vunpack.c.l.b16 %v153
    %v188 = vunpack.c.h.b16 %v153
    %v189 = vunpack.c.l.b16 %v154
    %v190 = vunpack.c.h.b16 %v154
    %v191 = vpack.c.b16 %v177, %v175
    %v192 = vpack.c.b16 %v178, %v176
    %v193 = vpack.c.b16 %v181, %v179
    %v194 = vpack.c.b16 %v182, %v180
    %v195 = vpack.c.b16 %v185, %v183
    %v196 = vpack.c.b16 %v186, %v184
    %v197 = vpack.c.b16 %v189, %v187
    %v198 = vpack.c.b16 %v190, %v188
    %v208 = vsel %vm47, %v145, 0
    %v211 = vsel %vm47, %v146, 0
    %213 = vmatprep.subr.bf16.mxu0 0
    %214 = vmatpush1.bf16.msra.mxu0 0
    %215 = vmatprep.subr.bf16.mxu0 0
    %216 = vmatpush1.bf16.msra.mxu0 0
    %217 = vmatprep.subr.bf16.mxu0 0
    %218 = vmatpush1.bf16.msra.mxu0 0
    %219 = vmatprep.subr.bf16.mxu0 0
    %220 = vmatpush1.bf16.msra.mxu0 0
    %221 = vmatprep.subr.bf16.mxu0 %v198
    %222 = vmatpush1.bf16.msra.mxu0 %v197
    %223 = vmatprep.subr.bf16.mxu0 %v196
    %224 = vmatpush1.bf16.msra.mxu0 %v195
    %225 = vmatprep.subr.bf16.mxu0 %v194
    %226 = vmatpush1.bf16.msra.mxu0 %v193
    %227 = vmatprep.subr.bf16.mxu0 %v192
    %228 = vmatpush1.bf16.msra.mxu0 %v191
    %229 = vmatprep.subr.bf16.mxu0 0
    %230 = vmatpush2.bf16.msra.mxu0 0
    %231 = vmatprep.subr.bf16.mxu0 0
    %232 = vmatpush2.bf16.msra.mxu0 0
    %233 = vmatprep.subr.bf16.mxu0 0
    %234 = vmatpush2.bf16.msra.mxu0 0
    %235 = vmatprep.subr.bf16.mxu0 0
    %236 = vmatpush2.bf16.msra.mxu0 0
    %237 = vmatprep.subr.bf16.mxu0 0
    %238 = vmatpush2.bf16.msra.mxu0 0
    %239 = vmatprep.subr.bf16.mxu0 0
    %240 = vmatpush2.bf16.msra.mxu0 0
    %241 = vmatprep.subr.bf16.mxu0 0
    %242 = vmatpush2.bf16.msra.mxu0 0
    %243 = vmatprep.subr.bf16.mxu0 0
    %244 = vmatpush2.bf16.msra.mxu0 0
    %245 = vmatprep.mubr.bf16.mxu0 0
    %246 = vmatmul.mubr.bf16.gmra.mxu0 %v208
    %v247 = vpop.f32.mrf.mxu0
    %v248 = vadd.f32 %v160, %v247
    %v249 = vpop.f32.mrf.mxu0
    %v250 = vadd.f32 %v164, %v249
    %v251 = vpop.f32.mrf.mxu0
    %v252 = vadd.f32 %v160, %v251
    %v253 = vpop.f32.mrf.mxu0
    %v254 = vadd.f32 %v164, %v253
    %255 = vmatprep.mubr.bf16.mxu0 0
    %256 = vmatmul.mubr.bf16.gmra.mxu0 %v211
    %v257 = vpop.f32.mrf.mxu0
    %v258 = vadd.f32 %v160, %v257
    %v259 = vpop.f32.mrf.mxu0
    %v260 = vadd.f32 %v164, %v259
    %v261 = vpop.f32.mrf.mxu0
    %v262 = vadd.f32 %v160, %v261
    %v263 = vpop.f32.mrf.mxu0
    %v264 = vadd.f32 %v164, %v263
    %265 = vdwg.mxu0
    %v266 = vxor.u32 %v248, 2147483648
    %v267 = vxor.u32 %v250, 2147483648
    %v268 = vxor.u32 %v252, 2147483648
    %v269 = vxor.u32 %v254, 2147483648
    %v270 = vxor.u32 %v258, 2147483648
    %v271 = vxor.u32 %v260, 2147483648
    %v272 = vxor.u32 %v262, 2147483648
    %v273 = vxor.u32 %v264, 2147483648
    %v274 = vmul.f32 %v266, 1.442695
    %v275 = vpow.pop %v274
    %v276 = vmul.f32 %v267, 1.442695
    %v277 = vpow.pop %v276
    %v278 = vmul.f32 %v268, 1.442695
    %v279 = vpow.pop %v278
    %v280 = vmul.f32 %v269, 1.442695
    %v281 = vpow.pop %v280
    %v282 = vmul.f32 %v270, 1.442695
    %v283 = vpow.pop %v282
    %v284 = vmul.f32 %v271, 1.442695
    %v285 = vpow.pop %v284
    %v286 = vmul.f32 %v272, 1.442695
    %v287 = vpow.pop %v286
    %v288 = vmul.f32 %v273, 1.442695
    %v289 = vpow.pop %v288
    %v290 = vadd.f32 %v275, 1.0
    %v291 = vadd.f32 %v277, 1.0
    %v292 = vadd.f32 %v279, 1.0
    %v293 = vadd.f32 %v281, 1.0
    %v294 = vadd.f32 %v283, 1.0
    %v295 = vadd.f32 %v285, 1.0
    %v296 = vadd.f32 %v287, 1.0
    %v297 = vadd.f32 %v289, 1.0
    %v298 = vrcp.pop %v290
    %v299 = vmul.f32 1.0, %v298
    %v300 = vrcp.pop %v291
    %v301 = vmul.f32 1.0, %v300
    %v302 = vrcp.pop %v292
    %v303 = vmul.f32 1.0, %v302
    %v304 = vrcp.pop %v293
    %v305 = vmul.f32 1.0, %v304
    %v306 = vrcp.pop %v294
    %v307 = vmul.f32 1.0, %v306
    %v308 = vrcp.pop %v295
    %v309 = vmul.f32 1.0, %v308
    %v310 = vrcp.pop %v296
    %v311 = vmul.f32 1.0, %v310
    %v312 = vrcp.pop %v297
    %v313 = vmul.f32 1.0, %v312
    %v314 = vmul.f32 %v248, %v299
    %v315 = vmul.f32 %v250, %v301
    %v316 = vmul.f32 %v252, %v303
    %v317 = vmul.f32 %v254, %v305
    %v318 = vmul.f32 %v258, %v307
    %v319 = vmul.f32 %v260, %v309
    %v320 = vmul.f32 %v262, %v311
    %v321 = vmul.f32 %v264, %v313
    %v322 = vpack.c.bf16 %v316, %v314
    %v323 = vpack.c.bf16 %v317, %v315
    %v324 = vpack.c.bf16 %v320, %v318
    %v325 = vpack.c.bf16 %v321, %v319
    %v326 = vld [vmem:[%s8] sm:$0xf]
    %v327 = vld [vmem:[%s8 + $0x4] sm:$0xf]
    %v328 = vld [vmem:[%s8 + $0x8] sm:$0xf]
    %v329 = vld [vmem:[%s8 + $0xc] sm:$0xf]
    %v330 = vld [vmem:[%s8 + $0x10] sm:$0xf]
    %v331 = vld [vmem:[%s8 + $0x14] sm:$0xf]
    %v332 = vld [vmem:[%s8 + $0x18] sm:$0xf]
    %v333 = vld [vmem:[%s8 + $0x1c] sm:$0xf]
    %v334 = vld [vmem:[%s8 + $0x20] sm:$0xf]
    %v335 = vld [vmem:[%s8 + $0x24] sm:$0xf]
    %v336 = vld [vmem:[%s8 + $0x28] sm:$0xf]
    %v337 = vld [vmem:[%s8 + $0x2c] sm:$0xf]
    %v338 = vld [vmem:[%s8 + $0x30] sm:$0xf]
    %v339 = vld [vmem:[%s8 + $0x34] sm:$0xf]
    %v340 = vld [vmem:[%s8 + $0x38] sm:$0xf]
    %v341 = vld [vmem:[%s8 + $0x3c] sm:$0xf]
    %v342 = vld [vmem:[%s8 + $0x40] sm:$0xf]
    %v343 = vld [vmem:[%s8 + $0x44] sm:$0xf]
    %v344 = vld [vmem:[%s8 + $0x48] sm:$0xf]
    %v345 = vld [vmem:[%s8 + $0x4c] sm:$0xf]
    %v346 = vld [vmem:[%s8 + $0x50] sm:$0xf]
    %v347 = vld [vmem:[%s8 + $0x54] sm:$0xf]
    %v348 = vld [vmem:[%s8 + $0x58] sm:$0xf]
    %v349 = vld [vmem:[%s8 + $0x5c] sm:$0xf]
    %v350 = vld [vmem:[%s8 + $0x60] sm:$0xf]
    %v351 = vld [vmem:[%s8 + $0x64] sm:$0xf]
    %v352 = vld [vmem:[%s8 + $0x68] sm:$0xf]
    %v353 = vld [vmem:[%s8 + $0x6c] sm:$0xf]
    %v354 = vld [vmem:[%s8 + $0x70] sm:$0xf]
    %v355 = vld [vmem:[%s8 + $0x74] sm:$0xf]
    %v356 = vld [vmem:[%s8 + $0x78] sm:$0xf]
    %v357 = vld [vmem:[%s8 + $0x7c] sm:$0xf]
    %v358 = vld [vmem:[%s9] sm:$0x1]
    %v360 = vlaneseq
    %v361 = vshrl.u32 %v360, 7
    %v362 = vsub.s32 0, %v361
    %v363 = vrot.slane %v358, %v362
    %v397 = vunpack.c.l.b16 %v326
    %v398 = vunpack.c.l.b16 %v327
    %v399 = vunpack.c.l.b16 %v328
    %v400 = vunpack.c.l.b16 %v329
    %v401 = vunpack.c.l.b16 %v330
    %v402 = vunpack.c.l.b16 %v331
    %v403 = vunpack.c.l.b16 %v332
    %v404 = vunpack.c.l.b16 %v333
    %v405 = vunpack.c.l.b16 %v334
    %v406 = vunpack.c.l.b16 %v335
    %v407 = vunpack.c.l.b16 %v336
    %v408 = vunpack.c.l.b16 %v337
    %v409 = vunpack.c.l.b16 %v338
    %v410 = vunpack.c.l.b16 %v339
    %v411 = vunpack.c.l.b16 %v340
    %v412 = vunpack.c.l.b16 %v341
    %v413 = vunpack.c.l.b16 %v342
    %v414 = vunpack.c.l.b16 %v343
    %v415 = vunpack.c.l.b16 %v344
    %v416 = vunpack.c.l.b16 %v345
    %v417 = vunpack.c.l.b16 %v346
    %v418 = vunpack.c.l.b16 %v347
    %v419 = vunpack.c.l.b16 %v348
    %v420 = vunpack.c.l.b16 %v349
    %v421 = vunpack.c.l.b16 %v350
    %v422 = vunpack.c.l.b16 %v351
    %v423 = vunpack.c.l.b16 %v352
    %v424 = vunpack.c.l.b16 %v353
    %v425 = vunpack.c.l.b16 %v354
    %v426 = vunpack.c.l.b16 %v355
    %v427 = vunpack.c.l.b16 %v356
    %v428 = vunpack.c.l.b16 %v357
    %v429 = vpack.c.b16 %v398, %v397
    %v430 = vpack.c.b16 %v400, %v399
    %v431 = vpack.c.b16 %v402, %v401
    %v432 = vpack.c.b16 %v404, %v403
    %v433 = vpack.c.b16 %v406, %v405
    %v434 = vpack.c.b16 %v408, %v407
    %v435 = vpack.c.b16 %v410, %v409
    %v436 = vpack.c.b16 %v412, %v411
    %v437 = vpack.c.b16 %v414, %v413
    %v438 = vpack.c.b16 %v416, %v415
    %v439 = vpack.c.b16 %v418, %v417
    %v440 = vpack.c.b16 %v420, %v419
    %v441 = vpack.c.b16 %v422, %v421
    %v442 = vpack.c.b16 %v424, %v423
    %v443 = vpack.c.b16 %v426, %v425
    %v444 = vpack.c.b16 %v428, %v427
    %461 = vmatprep.subr.bf16.mxu0 0
    %462 = vmatpush1.bf16.msra.mxu0 %v436
    %463 = vmatprep.subr.bf16.mxu0 0
    %464 = vmatpush1.bf16.msra.mxu0 %v435
    %465 = vmatprep.subr.bf16.mxu0 0
    %466 = vmatpush1.bf16.msra.mxu0 %v434
    %467 = vmatprep.subr.bf16.mxu0 0
    %468 = vmatpush1.bf16.msra.mxu0 %v433
    %469 = vmatprep.subr.bf16.mxu0 0
    %470 = vmatpush1.bf16.msra.mxu0 %v432
    %471 = vmatprep.subr.bf16.mxu0 0
    %472 = vmatpush1.bf16.msra.mxu0 %v431
    %473 = vmatprep.subr.bf16.mxu0 0
    %474 = vmatpush1.bf16.msra.mxu0 %v430
    %475 = vmatprep.subr.bf16.mxu0 0
    %476 = vmatpush1.bf16.msra.mxu0 %v429
    %477 = vmatprep.subr.bf16.mxu0 0
    %478 = vmatpush2.bf16.msra.mxu0 %v444
    %479 = vmatprep.subr.bf16.mxu0 0
    %480 = vmatpush2.bf16.msra.mxu0 %v443
    %481 = vmatprep.subr.bf16.mxu0 0
    %482 = vmatpush2.bf16.msra.mxu0 %v442
    %483 = vmatprep.subr.bf16.mxu0 0
    %484 = vmatpush2.bf16.msra.mxu0 %v441
    %485 = vmatprep.subr.bf16.mxu0 0
    %486 = vmatpush2.bf16.msra.mxu0 %v440
    %487 = vmatprep.subr.bf16.mxu0 0
    %488 = vmatpush2.bf16.msra.mxu0 %v439
    %489 = vmatprep.subr.bf16.mxu0 0
    %490 = vmatpush2.bf16.msra.mxu0 %v438
    %491 = vmatprep.subr.bf16.mxu0 0
    %492 = vmatpush2.bf16.msra.mxu0 %v437
    %493 = vmatprep.mubr.bf16.mxu0 %v323
    %494 = vmatmul.mubr.bf16.gmra.mxu0 %v322
    %v495 = vpop.f32.mrf.mxu0
    %v496 = vadd.f32 %v363, %v495
    %v497 = vpop.f32.mrf.mxu0
    %v498 = vpop.f32.mrf.mxu0
    %v499 = vadd.f32 %v363, %v498
    %v500 = vpop.f32.mrf.mxu0
    %501 = vmatprep.mubr.bf16.mxu0 %v325
    %502 = vmatmul.mubr.bf16.gmra.mxu0 %v324
    %v503 = vpop.f32.mrf.mxu0
    %v504 = vadd.f32 %v363, %v503
    %v505 = vpop.f32.mrf.mxu0
    %v506 = vpop.f32.mrf.mxu0
    %v507 = vadd.f32 %v363, %v506
    %v508 = vpop.f32.mrf.mxu0
    %509 = vdwg.mxu0
    %v510 = vadd.f32 %v119, %v496
    %v511 = vadd.f32 %v120, %v499
    %v512 = vadd.f32 %v121, %v504
    %v513 = vadd.f32 %v122, %v507
    %v514 = vsel %vm47, %v510, 0.0
    %515 = vadd.xlane.f32.xlu0 %v514
    %v516 = vpop.xlane.xlu0 %515
    %v517 = vsel %vm47, %v511, 0.0
    %518 = vadd.xlane.f32.xlu0 %v517
    %v519 = vpop.xlane.xlu0 %518
    %v520 = vsel %vm47, %v512, 0.0
    %521 = vadd.xlane.f32.xlu0 %v520
    %v522 = vpop.xlane.xlu0 %521
    %v523 = vsel %vm47, %v513, 0.0
    %524 = vadd.xlane.f32.xlu0 %v523
    %v525 = vpop.xlane.xlu0 %524
    %v526 = vmul.f32 %v516, %v60
    %v527 = vmul.f32 %v519, %v60
    %v528 = vmul.f32 %v522, %v60
    %v529 = vmul.f32 %v525, %v60
    %v530 = vsub.f32 %v510, %v526
    %v531 = vsub.f32 %v511, %v527
    %v532 = vsub.f32 %v512, %v528
    %v533 = vsub.f32 %v513, %v529
    %v534 = vmul.f32 %v530, %v530
    %v535 = vmul.f32 %v531, %v531
    %v536 = vmul.f32 %v532, %v532
    %v537 = vmul.f32 %v533, %v533
    %v538 = vsel %vm47, %v534, 0.0
    %539 = vadd.xlane.f32.xlu0 %v538
    %v540 = vpop.xlane.xlu0 %539
    %v541 = vsel %vm47, %v535, 0.0
    %542 = vadd.xlane.f32.xlu0 %v541
    %v543 = vpop.xlane.xlu0 %542
    %v544 = vsel %vm47, %v536, 0.0
    %545 = vadd.xlane.f32.xlu0 %v544
    %v546 = vpop.xlane.xlu0 %545
    %v547 = vsel %vm47, %v537, 0.0
    %548 = vadd.xlane.f32.xlu0 %v547
    %v549 = vpop.xlane.xlu0 %548
    %v550 = vmul.f32 %v540, %v60
    %v551 = vmul.f32 %v543, %v60
    %v552 = vmul.f32 %v546, %v60
    %v553 = vmul.f32 %v549, %v60
    %v554 = vadd.f32 %v550, 1e-05
    %v555 = vadd.f32 %v551, 1e-05
    %v556 = vadd.f32 %v552, 1e-05
    %v557 = vadd.f32 %v553, 1e-05
    %v558 = vrsqrt.pop %v554
    %v559 = vrsqrt.pop %v555
    %v560 = vrsqrt.pop %v556
    %v561 = vrsqrt.pop %v557
    %v562 = vmul.f32 %v530, %v558
    %v563 = vmul.f32 %v531, %v559
    %v564 = vmul.f32 %v532, %v560
    %v565 = vmul.f32 %v533, %v561
    %v566 = vld [vmem:[%s10] sm:$0x1]
    %v568 = vlaneseq
    %v569 = vshrl.u32 %v568, 7
    %v570 = vsub.s32 0, %v569
    %v571 = vrot.slane %v566, %v570
    %v573 = vmul.f32 %v562, %v571
    %v574 = vmul.f32 %v563, %v571
    %v575 = vmul.f32 %v564, %v571
    %v576 = vmul.f32 %v565, %v571
    %v577 = vld [vmem:[%s11] sm:$0x1]
    %v579 = vlaneseq
    %v580 = vshrl.u32 %v579, 7
    %v581 = vsub.s32 0, %v580
    %v582 = vrot.slane %v577, %v581
    %v584 = vadd.f32 %v573, %v582
    %v585 = vadd.f32 %v574, %v582
    %v586 = vadd.f32 %v575, %v582
    %v587 = vadd.f32 %v576, %v582
    %v588 = vld [vmem:[%s1] sm:$0xff]
    %v589 = vld [vmem:[%s1 + $0x8] sm:$0xff]
    %v590 = vld [vmem:[%s1 + $0x10] sm:$0xff]
    %v591 = vld [vmem:[%s1 + $0x18] sm:$0xff]
    %vm592 = vcmp.gt.f32.partialorder %v588, 0.5
    %vm593 = vcmp.gt.f32.partialorder %v589, 0.5
    %vm594 = vcmp.gt.f32.partialorder %v590, 0.5
    %vm595 = vcmp.gt.f32.partialorder %v591, 0.5
    %v596 = vsel %vm592, 1, 0
    %v597 = vsel %vm593, 1, 0
    %v598 = vsel %vm594, 1, 0
    %v599 = vsel %vm595, 1, 0
    %600 = vset.pattern.permute.xlu0 0
    %601 = vperm.xlu0 %600, %v596
    %v602 = vpop.permute.xlu0 %601
    %603 = vset.pattern.permute.xlu0 0
    %604 = vperm.xlu0 %603, %v597
    %v605 = vpop.permute.xlu0 %604
    %606 = vset.pattern.permute.xlu0 0
    %607 = vperm.xlu0 %606, %v598
    %v608 = vpop.permute.xlu0 %607
    %609 = vset.pattern.permute.xlu0 0
    %610 = vperm.xlu0 %609, %v599
    %v611 = vpop.permute.xlu0 %610
    %vm612 = vcmp.eq.s32.totalorder %v602, 1
    %vm613 = vcmp.eq.s32.totalorder %v605, 1
    %vm614 = vcmp.eq.s32.totalorder %v608, 1
    %vm615 = vcmp.eq.s32.totalorder %v611, 1
    %v616 = vsel %vm612, %v584, %v43
    %v617 = vsel %vm613, %v585, %v44
    %v618 = vsel %vm614, %v586, %v45
    %v619 = vsel %vm615, %v587, %v46
    %620 = vst.msk [vmem:[#allocation2] sm:$0xff] %vm47, %v616
    %621 = vst.msk [vmem:[#allocation2 + $0x8] sm:$0xff] %vm47, %v617
    %622 = vst.msk [vmem:[#allocation2 + $0x10] sm:$0xff] %vm47, %v618
    %623 = vst.msk [vmem:[#allocation2 + $0x18] sm:$0xff] %vm47, %v619
    // Predicated region
    $region50: #{block_forward.13} parent=1 // pred_check
      _
    $region51: #{block_forward.13} parent=1 // pred_check_branch
      %625 = sbr.rel (0) target = $region53
    $region52: #{block_forward.13} parent=1 // pred_region
      %s627 = ssub.s32 512, 512
      %628 = vsyncadd [#allocation3], %s627
      %s629 = sshll.u32 [#allocation2], 4
      %s630 = int_to_ptr.vmem [resolvable:$true] %s629
      %635 = dma.vmem_to_hbm [thread:$0]  %s630, 512, %s12, [#allocation3], 128, 128, 8
    $region53: #{block_forward.13} parent=1 // pred_fallthru
      _
    // Predicated region
    $region54: #{block_forward.13} parent=1 // pred_check
      _
    $region55: #{block_forward.13} parent=1 // pred_check_branch
      %637 = sbr.rel (0) target = $region57
    $region56: #{block_forward.13} parent=1 // pred_region
      %638 = dma.done [#allocation3], 512
    $region57: #{block_forward.13} parent=1 // pred_fallthru
      _
    %639 = vsyncpa [#allocation3], 1

</llo_original>
